<compile_context>
chip_gen: v7x
topology: tpu7x:2x2x1
jax: 0.10.0
libtpu: 0.0.40
codegen_flags: <defaults>
</compile_context>

<pallas_src>
import functools

import jax
import jax.numpy as jnp
from jax.experimental import pallas as pl
from jax.experimental.pallas import tpu as pltpu


# ---- model dimensions (MNIST-style: 28x28 single-channel input) ------------
KH = KW = 5
H_IN = W_IN = 28
OH1 = OW1 = H_IN - KH + 1          # 24 (conv1 output spatial)
PH1 = PW1 = OH1 // 2               # 12 (after 2x2 pool)
OH2 = OW2 = PH1 - KH + 1           # 8  (conv2 output spatial)
PH2 = PW2 = OH2 // 2               # 4  (after 2x2 pool)
C1 = 10                            # conv1 out channels (per branch)
C2 = 20                            # conv2 out channels
FC1 = 50
NCLS = 10
K1 = KH * KW                       # 25
ROWS1 = PH1 * PW1                  # 144 pooled conv1 rows per batch element
ROWS2 = OH2 * OW2                  # 64 conv2 rows per batch element


# ---------------------------------------------------------------------------
# Fused kernel: whole forward pass for one block of `bblk` batch elements.
# ---------------------------------------------------------------------------
def _fused_kernel(pa_ref, pb_ref, w1_ref, b1_ref, w2_ref, b2_ref,
                  fc1w_ref, fc1b_ref, fc2w_ref, fc2b_ref, out_ref, *, bblk):
    f32 = jnp.float32
    pa = pa_ref[...]                                   # (4, bblk*144, 25)
    pb = pb_ref[...]
    w1 = w1_ref[...]                                   # (50, 20) block-diag

    # --- conv1 (both branches fused via block-diag weight). One matmul per
    #     2x2-pool offset; maxpool == max over the 4 offsets. ----------------
    ys = []
    for a in range(4):
        chunk = jnp.concatenate([pa[a], pb[a]], axis=-1)      # (bblk*144, 50)
        ys.append(jnp.dot(chunk, w1, preferred_element_type=f32))
    m = jnp.maximum(jnp.maximum(ys[0], ys[1]), jnp.maximum(ys[2], ys[3]))
    m = jnp.maximum(m + b1_ref[...], 0.0)              # relu(pool(conv)+b)
    s = m[:, :C1] + m[:, C1:]                          # add branches (bblk*144, 10)

    # --- conv2: in-VMEM im2col -> ONE (bblk*64, 250) @ (250, 20) matmul -----
    s3 = s.reshape(bblk, PH1 * PW1, C1)                # (bblk, 144, 10)
    taps = []
    for i in range(KH):
        for j in range(KW):
            rows = [s3[:, (i + r) * PW1 + j:(i + r) * PW1 + j + OW2, :]
                    for r in range(OH2)]               # 8 x (bblk, 8, 10)
            tap = jnp.concatenate(rows, axis=1)        # (bblk, 64, 10)
            taps.append(tap.reshape(bblk * ROWS2, C1))
    p2 = jnp.concatenate(taps, axis=-1)                # (bblk*64, 250)
    y2 = jnp.dot(p2, w2_ref[...], preferred_element_type=f32) + b2_ref[...]
    # Dropout2d is identity in eval mode.

    # --- maxpool(2x2) + relu + flatten (order (qh, qw, c); fc1w permuted) ---
    y2_3 = y2.reshape(bblk, ROWS2, C2)                 # (bblk, 64, 20)
    qcols = []
    for qh in range(PH2):
        for qw in range(PW2):
            cand = [y2_3[:, (2 * qh + dh) * OW2 + 2 * qw + dw, :]
                    for dh in range(2) for dw in range(2)]     # 4 x (bblk, 20)
            m4 = jnp.maximum(jnp.maximum(cand[0], cand[1]),
                             jnp.maximum(cand[2], cand[3]))
            qcols.append(jnp.maximum(m4, 0.0))
    flat = jnp.concatenate(qcols, axis=-1)             # (bblk, 320)

    # --- fc1 + relu (single matmul, K=320) ----------------------------------
    a1 = jnp.maximum(
        jnp.dot(flat, fc1w_ref[...], preferred_element_type=f32) + fc1b_ref[...],
        0.0)                                           # (bblk, 50)
    # F.dropout is identity in eval mode.

    # --- fc2 + stable log_softmax -------------------------------------------
    logits = (jnp.dot(a1, fc2w_ref[...], preferred_element_type=f32)
              + fc2b_ref[...])                         # (bblk, 10)
    z = logits - jnp.max(logits, axis=-1, keepdims=True)
    out = z - jnp.log(jnp.sum(jnp.exp(z), axis=-1, keepdims=True))
    out_ref[...] = out[None, :, :]                     # (1, bblk, 10)


# ---------------------------------------------------------------------------
# Wrapper
# ---------------------------------------------------------------------------
def _pick_block(batch):
    """Largest batch block (<=8) dividing B, preferring an even grid (v7x)."""
    for cand in (8, 4, 2, 1):
        if batch % cand == 0 and (batch // cand) % 2 == 0:
            return cand
    for cand in (8, 4, 2, 1):
        if batch % cand == 0:
            return cand
    return 1


def _im2col_pooled(x):
    """x: (B,1,28,28) -> (4, B*144, 25).

    Chunk a = 2*dh + dw is the position inside the 2x2 maxpool window; within
    a chunk, rows are (b, ph, pw) row-major and cols k = i*5 + j hold
    x[b, 0, 2*ph + dh + i, 2*pw + dw + j].  max over the 4 chunks of the conv
    output == maxpool(conv).
    """
    batch = x.shape[0]
    chunks = []
    for dh in range(2):
        for dw in range(2):
            taps = [x[:, 0,
                      dh + i: dh + i + 2 * PH1 - 1: 2,
                      dw + j: dw + j + 2 * PW1 - 1: 2]
                    for i in range(KH) for j in range(KW)]       # each (B,12,12)
            p = jnp.stack(taps, axis=-1)                         # (B,12,12,25)
            chunks.append(p.reshape(batch * ROWS1, K1))
    return jnp.stack(chunks, axis=0)                             # (4, B*144, 25)


def forward(params, x1, x2):
    batch = x1.shape[0]
    bblk = _pick_block(batch)
    grid = (batch // bblk,)

    pa = _im2col_pooled(x1)
    pb = _im2col_pooled(x2)

    def whole2(shape):
        return pl.BlockSpec(shape, lambda g: (0, 0))

    in_specs = [
        pl.BlockSpec((4, bblk * ROWS1, K1), lambda g: (0, g, 0)),   # patches a
        pl.BlockSpec((4, bblk * ROWS1, K1), lambda g: (0, g, 0)),   # patches b
        whole2((2 * K1, 2 * C1)), whole2((1, 2 * C1)),              # w1, b1
        whole2((K1 * C1, C2)), whole2((1, C2)),                     # w2, b2
        whole2((PH2 * PW2 * C2, FC1)), whole2((1, FC1)),            # fc1w, fc1b
        whole2((FC1, NCLS)), whole2((1, NCLS)),                     # fc2w, fc2b
    ]

    out = pl.pallas_call(
        functools.partial(_fused_kernel, bblk=bblk),
        grid=grid,
        in_specs=in_specs,
        out_specs=pl.BlockSpec((1, bblk, NCLS), lambda g: (g, 0, 0)),
        out_shape=jax.ShapeDtypeStruct((batch // bblk, bblk, NCLS), jnp.float32),
        compiler_params=pltpu.CompilerParams(
            dimension_semantics=("parallel",)),
    )(pa, pb,
      params["w1"], params["b1"], params["w2"], params["b2"],
      params["fc1w"], params["fc1b"], params["fc2w"], params["fc2b"])
    return out.reshape(batch, NCLS)


# ---------------------------------------------------------------------------
# Parameters (PyTorch layout) and one-time kernel-friendly re-layout
# ---------------------------------------------------------------------------
def init_params(key):
    ks = jax.random.split(key, 10)
    n = lambda k, shape, scale: scale * jax.random.normal(k, shape, jnp.float32)
    return {
        "w1a": n(ks[0], (C1, 1, KH, KW), 0.2), "b1a": n(ks[1], (C1,), 0.1),
        "w1b": n(ks[2], (C1, 1, KH, KW), 0.2), "b1b": n(ks[3], (C1,), 0.1),
        "w2":  n(ks[4], (C2, C1, KH, KW), 0.1), "b2": n(ks[5], (C2,), 0.1),
        "fc1w": n(ks[6], (FC1, C2 * PH2 * PW2), 0.05), "fc1b": n(ks[7], (FC1,), 0.05),
        "fc2w": n(ks[8], (NCLS, FC1), 0.1),            "fc2b": n(ks[9], (NCLS,), 0.1),
    }


def prepare_params(tp):
    """One-time re-layout of the PyTorch weights into kernel-friendly form."""
    w1a = tp["w1a"].reshape(C1, K1).T                            # (25, 10)
    w1b = tp["w1b"].reshape(C1, K1).T
    w1 = jnp.zeros((2 * K1, 2 * C1), jnp.float32)
    w1 = w1.at[:K1, :C1].set(w1a).at[K1:, C1:].set(w1b)          # block-diag (50,20)
    return {
        "w1": w1,
        "b1": jnp.concatenate([tp["b1a"], tp["b1b"]]).reshape(1, 2 * C1),
        "w2": tp["w2"].transpose(2, 3, 1, 0).reshape(K1 * C1, C2),   # (250, 20)
        "b2": tp["b2"].reshape(1, C2),
        # torch flatten order is (c, h, w); kernel flattens as (h, w, c)
        "fc1w": tp["fc1w"].reshape(FC1, C2, PH2, PW2)
                          .transpose(2, 3, 1, 0).reshape(PH2 * PW2 * C2, FC1),
        "fc1b": tp["fc1b"].reshape(1, FC1),
        "fc2w": tp["fc2w"].T,                                        # (50, 10)
        "fc2b": tp["fc2b"].reshape(1, NCLS),
    }


def reference_forward(tp, x1, x2):
    """Pure-JAX replica of the PyTorch module (eval mode), for checking."""
    hi = jax.lax.Precision.HIGHEST

    def conv(x, w, b):
        y = jax.lax.conv_general_dilated(
            x, w, (1, 1), "VALID",
            dimension_numbers=("NCHW", "OIHW", "NCHW"), precision=hi)
        return y + b.reshape(1, -1, 1, 1)

    def pool2(x):
        return jax.lax.reduce_window(x, -jnp.inf, jax.lax.max,
                                     (1, 1, 2, 2), (1, 1, 2, 2), "VALID")

    xa = jax.nn.relu(pool2(conv(x1, tp["w1a"], tp["b1a"])))
    xb = jax.nn.relu(pool2(conv(x2, tp["w1b"], tp["b1b"])))
    x = xa + xb
    x = jax.nn.relu(pool2(conv(x, tp["w2"], tp["b2"])))
    x = x.reshape(-1, C2 * PH2 * PW2)
    x = jax.nn.relu(jnp.dot(x, tp["fc1w"].T, precision=hi) + tp["fc1b"])
    x = jnp.dot(x, tp["fc2w"].T, precision=hi) + tp["fc2b"]
    return jax.nn.log_softmax(x, axis=1)


if __name__ == "__main__":
    key = jax.random.PRNGKey(0)
    kp, k1, k2 = jax.random.split(key, 3)
    torch_params = init_params(kp)
    params = prepare_params(torch_params)        # done once, outside jit

    # MNIST-like inputs: flatten to 320 (= 20*4*4) implies 28x28 spatial.
    B = 4
    x1 = jax.random.normal(k1, (B, 1, H_IN, W_IN), jnp.float32)
    x2 = jax.random.normal(k2, (B, 1, H_IN, W_IN), jnp.float32)

    out = jax.jit(forward)(params, x1, x2)
    out = jax.block_until_ready(out)

    assert out.shape == (B, NCLS) and out.dtype == jnp.float32
    # log_softmax rows must (log-)sum to ~0
    assert bool(jnp.all(jnp.abs(jax.scipy.special.logsumexp(out, axis=1)) < 1e-4))
    # cross-check against a pure-JAX replica of the PyTorch forward
    ref = reference_forward(torch_params, x1, x2)
    max_err = float(jnp.max(jnp.abs(out - ref)))
    assert max_err < 5e-2, max_err
    print("KERNEL_OK")
</pallas_src>

<mosaic_0001>
module attributes {stable_mosaic.version = 11 : i64} {
  func.func @_fused_kernel(%arg0: i32, %arg1: memref<4x288x25xf32, #tpu.memory_space<vmem>>, %arg2: memref<4x288x25xf32, #tpu.memory_space<vmem>>, %arg3: memref<50x20xf32, #tpu.memory_space<vmem>>, %arg4: memref<1x20xf32, #tpu.memory_space<vmem>>, %arg5: memref<250x20xf32, #tpu.memory_space<vmem>>, %arg6: memref<1x20xf32, #tpu.memory_space<vmem>>, %arg7: memref<320x50xf32, #tpu.memory_space<vmem>>, %arg8: memref<1x50xf32, #tpu.memory_space<vmem>>, %arg9: memref<50x10xf32, #tpu.memory_space<vmem>>, %arg10: memref<1x10xf32, #tpu.memory_space<vmem>>, %arg11: memref<1x2x10xf32, #tpu.memory_space<vmem>>) attributes {dimension_semantics = [#tpu.dimension_semantics<parallel>], iteration_bounds = array<i64: 2>, scalar_prefetch = 0 : i64, scratch_operands = 0 : i64, tpu.core_type = #tpu.core_type<tc>, window_params = [{transform_indices = @transform_0, window_bounds = array<i64: 4, 288, 25>}, {transform_indices = @transform_1, window_bounds = array<i64: 4, 288, 25>}, {pipeline_mode = #tpu.pipeline_mode<synchronous>, transform_indices = @transform_2, window_bounds = array<i64: 50, 20>}, {pipeline_mode = #tpu.pipeline_mode<synchronous>, transform_indices = @transform_3, window_bounds = array<i64: 1, 20>}, {pipeline_mode = #tpu.pipeline_mode<synchronous>, transform_indices = @transform_4, window_bounds = array<i64: 250, 20>}, {pipeline_mode = #tpu.pipeline_mode<synchronous>, transform_indices = @transform_5, window_bounds = array<i64: 1, 20>}, {pipeline_mode = #tpu.pipeline_mode<synchronous>, transform_indices = @transform_6, window_bounds = array<i64: 320, 50>}, {pipeline_mode = #tpu.pipeline_mode<synchronous>, transform_indices = @transform_7, window_bounds = array<i64: 1, 50>}, {pipeline_mode = #tpu.pipeline_mode<synchronous>, transform_indices = @transform_8, window_bounds = array<i64: 50, 10>}, {pipeline_mode = #tpu.pipeline_mode<synchronous>, transform_indices = @transform_9, window_bounds = array<i64: 1, 10>}, {transform_indices = @transform_10, window_bounds = array<i64: 1, 2, 10>}]} {
    %c0 = arith.constant 0 : index
    %c0_0 = arith.constant 0 : index
    %c0_1 = arith.constant 0 : index
    %0 = vector.load %arg1[%c0, %c0_0, %c0_1] : memref<4x288x25xf32, #tpu.memory_space<vmem>>, vector<4x288x25xf32>
    %c0_2 = arith.constant 0 : index
    %c0_3 = arith.constant 0 : index
    %c0_4 = arith.constant 0 : index
    %1 = vector.load %arg2[%c0_2, %c0_3, %c0_4] : memref<4x288x25xf32, #tpu.memory_space<vmem>>, vector<4x288x25xf32>
    %c0_5 = arith.constant 0 : index
    %c0_6 = arith.constant 0 : index
    %2 = vector.load %arg3[%c0_5, %c0_6] : memref<50x20xf32, #tpu.memory_space<vmem>>, vector<50x20xf32>
    %3 = vector.extract_strided_slice %0 {offsets = [0, 0, 0], sizes = [1, 288, 25], strides = [1, 1, 1]} : vector<4x288x25xf32> to vector<1x288x25xf32>
    %4 = vector.shape_cast %3 : vector<1x288x25xf32> to vector<288x25xf32>
    %5 = vector.extract_strided_slice %1 {offsets = [0, 0, 0], sizes = [1, 288, 25], strides = [1, 1, 1]} : vector<4x288x25xf32> to vector<1x288x25xf32>
    %6 = vector.shape_cast %5 : vector<1x288x25xf32> to vector<288x25xf32>
    %7 = tpu.concatenate %4, %6 in 1 : vector<288x25xf32>, vector<288x25xf32> -> vector<288x50xf32>
    %cst = arith.constant dense<0.000000e+00> : vector<288x20xf32>
    %8 = tpu.matmul %7, %2, %cst {dimension_numbers = #tpu.dot_dimension_numbers<[1], [0], [0], [1], [0, 0, 1, 1], [], []>} : vector<288x50xf32>, vector<50x20xf32>, vector<288x20xf32> -> vector<288x20xf32>
    %9 = vector.extract_strided_slice %0 {offsets = [1, 0, 0], sizes = [1, 288, 25], strides = [1, 1, 1]} : vector<4x288x25xf32> to vector<1x288x25xf32>
    %10 = vector.shape_cast %9 : vector<1x288x25xf32> to vector<288x25xf32>
    %11 = vector.extract_strided_slice %1 {offsets = [1, 0, 0], sizes = [1, 288, 25], strides = [1, 1, 1]} : vector<4x288x25xf32> to vector<1x288x25xf32>
    %12 = vector.shape_cast %11 : vector<1x288x25xf32> to vector<288x25xf32>
    %13 = tpu.concatenate %10, %12 in 1 : vector<288x25xf32>, vector<288x25xf32> -> vector<288x50xf32>
    %cst_7 = arith.constant dense<0.000000e+00> : vector<288x20xf32>
    %14 = tpu.matmul %13, %2, %cst_7 {dimension_numbers = #tpu.dot_dimension_numbers<[1], [0], [0], [1], [0, 0, 1, 1], [], []>} : vector<288x50xf32>, vector<50x20xf32>, vector<288x20xf32> -> vector<288x20xf32>
    %15 = vector.extract_strided_slice %0 {offsets = [2, 0, 0], sizes = [1, 288, 25], strides = [1, 1, 1]} : vector<4x288x25xf32> to vector<1x288x25xf32>
    %16 = vector.shape_cast %15 : vector<1x288x25xf32> to vector<288x25xf32>
    %17 = vector.extract_strided_slice %1 {offsets = [2, 0, 0], sizes = [1, 288, 25], strides = [1, 1, 1]} : vector<4x288x25xf32> to vector<1x288x25xf32>
    %18 = vector.shape_cast %17 : vector<1x288x25xf32> to vector<288x25xf32>
    %19 = tpu.concatenate %16, %18 in 1 : vector<288x25xf32>, vector<288x25xf32> -> vector<288x50xf32>
    %cst_8 = arith.constant dense<0.000000e+00> : vector<288x20xf32>
    %20 = tpu.matmul %19, %2, %cst_8 {dimension_numbers = #tpu.dot_dimension_numbers<[1], [0], [0], [1], [0, 0, 1, 1], [], []>} : vector<288x50xf32>, vector<50x20xf32>, vector<288x20xf32> -> vector<288x20xf32>
    %21 = vector.extract_strided_slice %0 {offsets = [3, 0, 0], sizes = [1, 288, 25], strides = [1, 1, 1]} : vector<4x288x25xf32> to vector<1x288x25xf32>
    %22 = vector.shape_cast %21 : vector<1x288x25xf32> to vector<288x25xf32>
    %23 = vector.extract_strided_slice %1 {offsets = [3, 0, 0], sizes = [1, 288, 25], strides = [1, 1, 1]} : vector<4x288x25xf32> to vector<1x288x25xf32>
    %24 = vector.shape_cast %23 : vector<1x288x25xf32> to vector<288x25xf32>
    %25 = tpu.concatenate %22, %24 in 1 : vector<288x25xf32>, vector<288x25xf32> -> vector<288x50xf32>
    %cst_9 = arith.constant dense<0.000000e+00> : vector<288x20xf32>
    %26 = tpu.matmul %25, %2, %cst_9 {dimension_numbers = #tpu.dot_dimension_numbers<[1], [0], [0], [1], [0, 0, 1, 1], [], []>} : vector<288x50xf32>, vector<50x20xf32>, vector<288x20xf32> -> vector<288x20xf32>
    %27 = arith.maximumf %8, %14 : vector<288x20xf32>
    %28 = arith.maximumf %20, %26 : vector<288x20xf32>
    %29 = arith.maximumf %27, %28 : vector<288x20xf32>
    %c0_10 = arith.constant 0 : index
    %c0_11 = arith.constant 0 : index
    %30 = vector.load %arg4[%c0_10, %c0_11] : memref<1x20xf32, #tpu.memory_space<vmem>>, vector<1x20xf32>
    %31 = vector.broadcast %30 : vector<1x20xf32> to vector<288x20xf32>
    %32 = arith.addf %29, %31 : vector<288x20xf32>
    %cst_12 = arith.constant 0.000000e+00 : f32
    %33 = vector.broadcast %cst_12 : f32 to vector<288x20xf32>
    %34 = arith.maximumf %32, %33 : vector<288x20xf32>
    %35 = vector.extract_strided_slice %34 {offsets = [0, 0], sizes = [288, 10], strides = [1, 1]} : vector<288x20xf32> to vector<288x10xf32>
    %36 = vector.extract_strided_slice %34 {offsets = [0, 10], sizes = [288, 10], strides = [1, 1]} : vector<288x20xf32> to vector<288x10xf32>
    %37 = arith.addf %35, %36 : vector<288x10xf32>
    %38 = vector.shape_cast %37 : vector<288x10xf32> to vector<2x144x10xf32>
    %39 = vector.extract_strided_slice %38 {offsets = [0, 0, 0], sizes = [2, 8, 10], strides = [1, 1, 1]} : vector<2x144x10xf32> to vector<2x8x10xf32>
    %40 = vector.extract_strided_slice %38 {offsets = [0, 12, 0], sizes = [2, 8, 10], strides = [1, 1, 1]} : vector<2x144x10xf32> to vector<2x8x10xf32>
    %41 = vector.extract_strided_slice %38 {offsets = [0, 24, 0], sizes = [2, 8, 10], strides = [1, 1, 1]} : vector<2x144x10xf32> to vector<2x8x10xf32>
    %42 = vector.extract_strided_slice %38 {offsets = [0, 36, 0], sizes = [2, 8, 10], strides = [1, 1, 1]} : vector<2x144x10xf32> to vector<2x8x10xf32>
    %43 = vector.extract_strided_slice %38 {offsets = [0, 48, 0], sizes = [2, 8, 10], strides = [1, 1, 1]} : vector<2x144x10xf32> to vector<2x8x10xf32>
    %44 = vector.extract_strided_slice %38 {offsets = [0, 60, 0], sizes = [2, 8, 10], strides = [1, 1, 1]} : vector<2x144x10xf32> to vector<2x8x10xf32>
    %45 = vector.extract_strided_slice %38 {offsets = [0, 72, 0], sizes = [2, 8, 10], strides = [1, 1, 1]} : vector<2x144x10xf32> to vector<2x8x10xf32>
    %46 = vector.extract_strided_slice %38 {offsets = [0, 84, 0], sizes = [2, 8, 10], strides = [1, 1, 1]} : vector<2x144x10xf32> to vector<2x8x10xf32>
    %47 = tpu.concatenate %39, %40, %41, %42, %43, %44, %45, %46 in 1 : vector<2x8x10xf32>, vector<2x8x10xf32>, vector<2x8x10xf32>, vector<2x8x10xf32>, vector<2x8x10xf32>, vector<2x8x10xf32>, vector<2x8x10xf32>, vector<2x8x10xf32> -> vector<2x64x10xf32>
    %48 = vector.shape_cast %47 : vector<2x64x10xf32> to vector<128x10xf32>
    %49 = vector.extract_strided_slice %38 {offsets = [0, 1, 0], sizes = [2, 8, 10], strides = [1, 1, 1]} : vector<2x144x10xf32> to vector<2x8x10xf32>
    %50 = vector.extract_strided_slice %38 {offsets = [0, 13, 0], sizes = [2, 8, 10], strides = [1, 1, 1]} : vector<2x144x10xf32> to vector<2x8x10xf32>
    %51 = vector.extract_strided_slice %38 {offsets = [0, 25, 0], sizes = [2, 8, 10], strides = [1, 1, 1]} : vector<2x144x10xf32> to vector<2x8x10xf32>
    %52 = vector.extract_strided_slice %38 {offsets = [0, 37, 0], sizes = [2, 8, 10], strides = [1, 1, 1]} : vector<2x144x10xf32> to vector<2x8x10xf32>
    %53 = vector.extract_strided_slice %38 {offsets = [0, 49, 0], sizes = [2, 8, 10], strides = [1, 1, 1]} : vector<2x144x10xf32> to vector<2x8x10xf32>
    %54 = vector.extract_strided_slice %38 {offsets = [0, 61, 0], sizes = [2, 8, 10], strides = [1, 1, 1]} : vector<2x144x10xf32> to vector<2x8x10xf32>
    %55 = vector.extract_strided_slice %38 {offsets = [0, 73, 0], sizes = [2, 8, 10], strides = [1, 1, 1]} : vector<2x144x10xf32> to vector<2x8x10xf32>
    %56 = vector.extract_strided_slice %38 {offsets = [0, 85, 0], sizes = [2, 8, 10], strides = [1, 1, 1]} : vector<2x144x10xf32> to vector<2x8x10xf32>
    %57 = tpu.concatenate %49, %50, %51, %52, %53, %54, %55, %56 in 1 : vector<2x8x10xf32>, vector<2x8x10xf32>, vector<2x8x10xf32>, vector<2x8x10xf32>, vector<2x8x10xf32>, vector<2x8x10xf32>, vector<2x8x10xf32>, vector<2x8x10xf32> -> vector<2x64x10xf32>
    %58 = vector.shape_cast %57 : vector<2x64x10xf32> to vector<128x10xf32>
    %59 = vector.extract_strided_slice %38 {offsets = [0, 2, 0], sizes = [2, 8, 10], strides = [1, 1, 1]} : vector<2x144x10xf32> to vector<2x8x10xf32>
    %60 = vector.extract_strided_slice %38 {offsets = [0, 14, 0], sizes = [2, 8, 10], strides = [1, 1, 1]} : vector<2x144x10xf32> to vector<2x8x10xf32>
    %61 = vector.extract_strided_slice %38 {offsets = [0, 26, 0], sizes = [2, 8, 10], strides = [1, 1, 1]} : vector<2x144x10xf32> to vector<2x8x10xf32>
    %62 = vector.extract_strided_slice %38 {offsets = [0, 38, 0], sizes = [2, 8, 10], strides = [1, 1, 1]} : vector<2x144x10xf32> to vector<2x8x10xf32>
    %63 = vector.extract_strided_slice %38 {offsets = [0, 50, 0], sizes = [2, 8, 10], strides = [1, 1, 1]} : vector<2x144x10xf32> to vector<2x8x10xf32>
    %64 = vector.extract_strided_slice %38 {offsets = [0, 62, 0], sizes = [2, 8, 10], strides = [1, 1, 1]} : vector<2x144x10xf32> to vector<2x8x10xf32>
    %65 = vector.extract_strided_slice %38 {offsets = [0, 74, 0], sizes = [2, 8, 10], strides = [1, 1, 1]} : vector<2x144x10xf32> to vector<2x8x10xf32>
    %66 = vector.extract_strided_slice %38 {offsets = [0, 86, 0], sizes = [2, 8, 10], strides = [1, 1, 1]} : vector<2x144x10xf32> to vector<2x8x10xf32>
    %67 = tpu.concatenate %59, %60, %61, %62, %63, %64, %65, %66 in 1 : vector<2x8x10xf32>, vector<2x8x10xf32>, vector<2x8x10xf32>, vector<2x8x10xf32>, vector<2x8x10xf32>, vector<2x8x10xf32>, vector<2x8x10xf32>, vector<2x8x10xf32> -> vector<2x64x10xf32>
    %68 = vector.shape_cast %67 : vector<2x64x10xf32> to vector<128x10xf32>
    %69 = vector.extract_strided_slice %38 {offsets = [0, 3, 0], sizes = [2, 8, 10], strides = [1, 1, 1]} : vector<2x144x10xf32> to vector<2x8x10xf32>
    %70 = vector.extract_strided_slice %38 {offsets = [0, 15, 0], sizes = [2, 8, 10], strides = [1, 1, 1]} : vector<2x144x10xf32> to vector<2x8x10xf32>
    %71 = vector.extract_strided_slice %38 {offsets = [0, 27, 0], sizes = [2, 8, 10], strides = [1, 1, 1]} : vector<2x144x10xf32> to vector<2x8x10xf32>
    %72 = vector.extract_strided_slice %38 {offsets = [0, 39, 0], sizes = [2, 8, 10], strides = [1, 1, 1]} : vector<2x144x10xf32> to vector<2x8x10xf32>
    %73 = vector.extract_strided_slice %38 {offsets = [0, 51, 0], sizes = [2, 8, 10], strides = [1, 1, 1]} : vector<2x144x10xf32> to vector<2x8x10xf32>
    %74 = vector.extract_strided_slice %38 {offsets = [0, 63, 0], sizes = [2, 8, 10], strides = [1, 1, 1]} : vector<2x144x10xf32> to vector<2x8x10xf32>
    %75 = vector.extract_strided_slice %38 {offsets = [0, 75, 0], sizes = [2, 8, 10], strides = [1, 1, 1]} : vector<2x144x10xf32> to vector<2x8x10xf32>
    %76 = vector.extract_strided_slice %38 {offsets = [0, 87, 0], sizes = [2, 8, 10], strides = [1, 1, 1]} : vector<2x144x10xf32> to vector<2x8x10xf32>
    %77 = tpu.concatenate %69, %70, %71, %72, %73, %74, %75, %76 in 1 : vector<2x8x10xf32>, vector<2x8x10xf32>, vector<2x8x10xf32>, vector<2x8x10xf32>, vector<2x8x10xf32>, vector<2x8x10xf32>, vector<2x8x10xf32>, vector<2x8x10xf32> -> vector<2x64x10xf32>
    %78 = vector.shape_cast %77 : vector<2x64x10xf32> to vector<128x10xf32>
    %79 = vector.extract_strided_slice %38 {offsets = [0, 4, 0], sizes = [2, 8, 10], strides = [1, 1, 1]} : vector<2x144x10xf32> to vector<2x8x10xf32>
    %80 = vector.extract_strided_slice %38 {offsets = [0, 16, 0], sizes = [2, 8, 10], strides = [1, 1, 1]} : vector<2x144x10xf32> to vector<2x8x10xf32>
    %81 = vector.extract_strided_slice %38 {offsets = [0, 28, 0], sizes = [2, 8, 10], strides = [1, 1, 1]} : vector<2x144x10xf32> to vector<2x8x10xf32>
    %82 = vector.extract_strided_slice %38 {offsets = [0, 40, 0], sizes = [2, 8, 10], strides = [1, 1, 1]} : vector<2x144x10xf32> to vector<2x8x10xf32>
    %83 = vector.extract_strided_slice %38 {offsets = [0, 52, 0], sizes = [2, 8, 10], strides = [1, 1, 1]} : vector<2x144x10xf32> to vector<2x8x10xf32>
    %84 = vector.extract_strided_slice %38 {offsets = [0, 64, 0], sizes = [2, 8, 10], strides = [1, 1, 1]} : vector<2x144x10xf32> to vector<2x8x10xf32>
    %85 = vector.extract_strided_slice %38 {offsets = [0, 76, 0], sizes = [2, 8, 10], strides = [1, 1, 1]} : vector<2x144x10xf32> to vector<2x8x10xf32>
    %86 = vector.extract_strided_slice %38 {offsets = [0, 88, 0], sizes = [2, 8, 10], strides = [1, 1, 1]} : vector<2x144x10xf32> to vector<2x8x10xf32>
    %87 = tpu.concatenate %79, %80, %81, %82, %83, %84, %85, %86 in 1 : vector<2x8x10xf32>, vector<2x8x10xf32>, vector<2x8x10xf32>, vector<2x8x10xf32>, vector<2x8x10xf32>, vector<2x8x10xf32>, vector<2x8x10xf32>, vector<2x8x10xf32> -> vector<2x64x10xf32>
    %88 = vector.shape_cast %87 : vector<2x64x10xf32> to vector<128x10xf32>
    %89 = vector.extract_strided_slice %38 {offsets = [0, 12, 0], sizes = [2, 8, 10], strides = [1, 1, 1]} : vector<2x144x10xf32> to vector<2x8x10xf32>
    %90 = vector.extract_strided_slice %38 {offsets = [0, 24, 0], sizes = [2, 8, 10], strides = [1, 1, 1]} : vector<2x144x10xf32> to vector<2x8x10xf32>
    %91 = vector.extract_strided_slice %38 {offsets = [0, 36, 0], sizes = [2, 8, 10], strides = [1, 1, 1]} : vector<2x144x10xf32> to vector<2x8x10xf32>
    %92 = vector.extract_strided_slice %38 {offsets = [0, 48, 0], sizes = [2, 8, 10], strides = [1, 1, 1]} : vector<2x144x10xf32> to vector<2x8x10xf32>
    %93 = vector.extract_strided_slice %38 {offsets = [0, 60, 0], sizes = [2, 8, 10], strides = [1, 1, 1]} : vector<2x144x10xf32> to vector<2x8x10xf32>
    %94 = vector.extract_strided_slice %38 {offsets = [0, 72, 0], sizes = [2, 8, 10], strides = [1, 1, 1]} : vector<2x144x10xf32> to vector<2x8x10xf32>
    %95 = vector.extract_strided_slice %38 {offsets = [0, 84, 0], sizes = [2, 8, 10], strides = [1, 1, 1]} : vector<2x144x10xf32> to vector<2x8x10xf32>
    %96 = vector.extract_strided_slice %38 {offsets = [0, 96, 0], sizes = [2, 8, 10], strides = [1, 1, 1]} : vector<2x144x10xf32> to vector<2x8x10xf32>
    %97 = tpu.concatenate %89, %90, %91, %92, %93, %94, %95, %96 in 1 : vector<2x8x10xf32>, vector<2x8x10xf32>, vector<2x8x10xf32>, vector<2x8x10xf32>, vector<2x8x10xf32>, vector<2x8x10xf32>, vector<2x8x10xf32>, vector<2x8x10xf32> -> vector<2x64x10xf32>
    %98 = vector.shape_cast %97 : vector<2x64x10xf32> to vector<128x10xf32>
    %99 = vector.extract_strided_slice %38 {offsets = [0, 13, 0], sizes = [2, 8, 10], strides = [1, 1, 1]} : vector<2x144x10xf32> to vector<2x8x10xf32>
    %100 = vector.extract_strided_slice %38 {offsets = [0, 25, 0], sizes = [2, 8, 10], strides = [1, 1, 1]} : vector<2x144x10xf32> to vector<2x8x10xf32>
    %101 = vector.extract_strided_slice %38 {offsets = [0, 37, 0], sizes = [2, 8, 10], strides = [1, 1, 1]} : vector<2x144x10xf32> to vector<2x8x10xf32>
    %102 = vector.extract_strided_slice %38 {offsets = [0, 49, 0], sizes = [2, 8, 10], strides = [1, 1, 1]} : vector<2x144x10xf32> to vector<2x8x10xf32>
    %103 = vector.extract_strided_slice %38 {offsets = [0, 61, 0], sizes = [2, 8, 10], strides = [1, 1, 1]} : vector<2x144x10xf32> to vector<2x8x10xf32>
    %104 = vector.extract_strided_slice %38 {offsets = [0, 73, 0], sizes = [2, 8, 10], strides = [1, 1, 1]} : vector<2x144x10xf32> to vector<2x8x10xf32>
    %105 = vector.extract_strided_slice %38 {offsets = [0, 85, 0], sizes = [2, 8, 10], strides = [1, 1, 1]} : vector<2x144x10xf32> to vector<2x8x10xf32>
    %106 = vector.extract_strided_slice %38 {offsets = [0, 97, 0], sizes = [2, 8, 10], strides = [1, 1, 1]} : vector<2x144x10xf32> to vector<2x8x10xf32>
    %107 = tpu.concatenate %99, %100, %101, %102, %103, %104, %105, %106 in 1 : vector<2x8x10xf32>, vector<2x8x10xf32>, vector<2x8x10xf32>, vector<2x8x10xf32>, vector<2x8x10xf32>, vector<2x8x10xf32>, vector<2x8x10xf32>, vector<2x8x10xf32> -> vector<2x64x10xf32>
    %108 = vector.shape_cast %107 : vector<2x64x10xf32> to vector<128x10xf32>
    %109 = vector.extract_strided_slice %38 {offsets = [0, 14, 0], sizes = [2, 8, 10], strides = [1, 1, 1]} : vector<2x144x10xf32> to vector<2x8x10xf32>
    %110 = vector.extract_strided_slice %38 {offsets = [0, 26, 0], sizes = [2, 8, 10], strides = [1, 1, 1]} : vector<2x144x10xf32> to vector<2x8x10xf32>
    %111 = vector.extract_strided_slice %38 {offsets = [0, 38, 0], sizes = [2, 8, 10], strides = [1, 1, 1]} : vector<2x144x10xf32> to vector<2x8x10xf32>
    %112 = vector.extract_strided_slice %38 {offsets = [0, 50, 0], sizes = [2, 8, 10], strides = [1, 1, 1]} : vector<2x144x10xf32> to vector<2x8x10xf32>
    %113 = vector.extract_strided_slice %38 {offsets = [0, 62, 0], sizes = [2, 8, 10], strides = [1, 1, 1]} : vector<2x144x10xf32> to vector<2x8x10xf32>
    %114 = vector.extract_strided_slice %38 {offsets = [0, 74, 0], sizes = [2, 8, 10], strides = [1, 1, 1]} : vector<2x144x10xf32> to vector<2x8x10xf32>
    %115 = vector.extract_strided_slice %38 {offsets = [0, 86, 0], sizes = [2, 8, 10], strides = [1, 1, 1]} : vector<2x144x10xf32> to vector<2x8x10xf32>
    %116 = vector.extract_strided_slice %38 {offsets = [0, 98, 0], sizes = [2, 8, 10], strides = [1, 1, 1]} : vector<2x144x10xf32> to vector<2x8x10xf32>
    %117 = tpu.concatenate %109, %110, %111, %112, %113, %114, %115, %116 in 1 : vector<2x8x10xf32>, vector<2x8x10xf32>, vector<2x8x10xf32>, vector<2x8x10xf32>, vector<2x8x10xf32>, vector<2x8x10xf32>, vector<2x8x10xf32>, vector<2x8x10xf32> -> vector<2x64x10xf32>
    %118 = vector.shape_cast %117 : vector<2x64x10xf32> to vector<128x10xf32>
    %119 = vector.extract_strided_slice %38 {offsets = [0, 15, 0], sizes = [2, 8, 10], strides = [1, 1, 1]} : vector<2x144x10xf32> to vector<2x8x10xf32>
    %120 = vector.extract_strided_slice %38 {offsets = [0, 27, 0], sizes = [2, 8, 10], strides = [1, 1, 1]} : vector<2x144x10xf32> to vector<2x8x10xf32>
    %121 = vector.extract_strided_slice %38 {offsets = [0, 39, 0], sizes = [2, 8, 10], strides = [1, 1, 1]} : vector<2x144x10xf32> to vector<2x8x10xf32>
    %122 = vector.extract_strided_slice %38 {offsets = [0, 51, 0], sizes = [2, 8, 10], strides = [1, 1, 1]} : vector<2x144x10xf32> to vector<2x8x10xf32>
    %123 = vector.extract_strided_slice %38 {offsets = [0, 63, 0], sizes = [2, 8, 10], strides = [1, 1, 1]} : vector<2x144x10xf32> to vector<2x8x10xf32>
    %124 = vector.extract_strided_slice %38 {offsets = [0, 75, 0], sizes = [2, 8, 10], strides = [1, 1, 1]} : vector<2x144x10xf32> to vector<2x8x10xf32>
    %125 = vector.extract_strided_slice %38 {offsets = [0, 87, 0], sizes = [2, 8, 10], strides = [1, 1, 1]} : vector<2x144x10xf32> to vector<2x8x10xf32>
    %126 = vector.extract_strided_slice %38 {offsets = [0, 99, 0], sizes = [2, 8, 10], strides = [1, 1, 1]} : vector<2x144x10xf32> to vector<2x8x10xf32>
    %127 = tpu.concatenate %119, %120, %121, %122, %123, %124, %125, %126 in 1 : vector<2x8x10xf32>, vector<2x8x10xf32>, vector<2x8x10xf32>, vector<2x8x10xf32>, vector<2x8x10xf32>, vector<2x8x10xf32>, vector<2x8x10xf32>, vector<2x8x10xf32> -> vector<2x64x10xf32>
    %128 = vector.shape_cast %127 : vector<2x64x10xf32> to vector<128x10xf32>
    %129 = vector.extract_strided_slice %38 {offsets = [0, 16, 0], sizes = [2, 8, 10], strides = [1, 1, 1]} : vector<2x144x10xf32> to vector<2x8x10xf32>
    %130 = vector.extract_strided_slice %38 {offsets = [0, 28, 0], sizes = [2, 8, 10], strides = [1, 1, 1]} : vector<2x144x10xf32> to vector<2x8x10xf32>
    %131 = vector.extract_strided_slice %38 {offsets = [0, 40, 0], sizes = [2, 8, 10], strides = [1, 1, 1]} : vector<2x144x10xf32> to vector<2x8x10xf32>
    %132 = vector.extract_strided_slice %38 {offsets = [0, 52, 0], sizes = [2, 8, 10], strides = [1, 1, 1]} : vector<2x144x10xf32> to vector<2x8x10xf32>
    %133 = vector.extract_strided_slice %38 {offsets = [0, 64, 0], sizes = [2, 8, 10], strides = [1, 1, 1]} : vector<2x144x10xf32> to vector<2x8x10xf32>
    %134 = vector.extract_strided_slice %38 {offsets = [0, 76, 0], sizes = [2, 8, 10], strides = [1, 1, 1]} : vector<2x144x10xf32> to vector<2x8x10xf32>
    %135 = vector.extract_strided_slice %38 {offsets = [0, 88, 0], sizes = [2, 8, 10], strides = [1, 1, 1]} : vector<2x144x10xf32> to vector<2x8x10xf32>
    %136 = vector.extract_strided_slice %38 {offsets = [0, 100, 0], sizes = [2, 8, 10], strides = [1, 1, 1]} : vector<2x144x10xf32> to vector<2x8x10xf32>
    %137 = tpu.concatenate %129, %130, %131, %132, %133, %134, %135, %136 in 1 : vector<2x8x10xf32>, vector<2x8x10xf32>, vector<2x8x10xf32>, vector<2x8x10xf32>, vector<2x8x10xf32>, vector<2x8x10xf32>, vector<2x8x10xf32>, vector<2x8x10xf32> -> vector<2x64x10xf32>
    %138 = vector.shape_cast %137 : vector<2x64x10xf32> to vector<128x10xf32>
    %139 = vector.extract_strided_slice %38 {offsets = [0, 24, 0], sizes = [2, 8, 10], strides = [1, 1, 1]} : vector<2x144x10xf32> to vector<2x8x10xf32>
    %140 = vector.extract_strided_slice %38 {offsets = [0, 36, 0], sizes = [2, 8, 10], strides = [1, 1, 1]} : vector<2x144x10xf32> to vector<2x8x10xf32>
    %141 = vector.extract_strided_slice %38 {offsets = [0, 48, 0], sizes = [2, 8, 10], strides = [1, 1, 1]} : vector<2x144x10xf32> to vector<2x8x10xf32>
    %142 = vector.extract_strided_slice %38 {offsets = [0, 60, 0], sizes = [2, 8, 10], strides = [1, 1, 1]} : vector<2x144x10xf32> to vector<2x8x10xf32>
    %143 = vector.extract_strided_slice %38 {offsets = [0, 72, 0], sizes = [2, 8, 10], strides = [1, 1, 1]} : vector<2x144x10xf32> to vector<2x8x10xf32>
    %144 = vector.extract_strided_slice %38 {offsets = [0, 84, 0], sizes = [2, 8, 10], strides = [1, 1, 1]} : vector<2x144x10xf32> to vector<2x8x10xf32>
    %145 = vector.extract_strided_slice %38 {offsets = [0, 96, 0], sizes = [2, 8, 10], strides = [1, 1, 1]} : vector<2x144x10xf32> to vector<2x8x10xf32>
    %146 = vector.extract_strided_slice %38 {offsets = [0, 108, 0], sizes = [2, 8, 10], strides = [1, 1, 1]} : vector<2x144x10xf32> to vector<2x8x10xf32>
    %147 = tpu.concatenate %139, %140, %141, %142, %143, %144, %145, %146 in 1 : vector<2x8x10xf32>, vector<2x8x10xf32>, vector<2x8x10xf32>, vector<2x8x10xf32>, vector<2x8x10xf32>, vector<2x8x10xf32>, vector<2x8x10xf32>, vector<2x8x10xf32> -> vector<2x64x10xf32>
    %148 = vector.shape_cast %147 : vector<2x64x10xf32> to vector<128x10xf32>
    %149 = vector.extract_strided_slice %38 {offsets = [0, 25, 0], sizes = [2, 8, 10], strides = [1, 1, 1]} : vector<2x144x10xf32> to vector<2x8x10xf32>
    %150 = vector.extract_strided_slice %38 {offsets = [0, 37, 0], sizes = [2, 8, 10], strides = [1, 1, 1]} : vector<2x144x10xf32> to vector<2x8x10xf32>
    %151 = vector.extract_strided_slice %38 {offsets = [0, 49, 0], sizes = [2, 8, 10], strides = [1, 1, 1]} : vector<2x144x10xf32> to vector<2x8x10xf32>
    %152 = vector.extract_strided_slice %38 {offsets = [0, 61, 0], sizes = [2, 8, 10], strides = [1, 1, 1]} : vector<2x144x10xf32> to vector<2x8x10xf32>
    %153 = vector.extract_strided_slice %38 {offsets = [0, 73, 0], sizes = [2, 8, 10], strides = [1, 1, 1]} : vector<2x144x10xf32> to vector<2x8x10xf32>
    %154 = vector.extract_strided_slice %38 {offsets = [0, 85, 0], sizes = [2, 8, 10], strides = [1, 1, 1]} : vector<2x144x10xf32> to vector<2x8x10xf32>
    %155 = vector.extract_strided_slice %38 {offsets = [0, 97, 0], sizes = [2, 8, 10], strides = [1, 1, 1]} : vector<2x144x10xf32> to vector<2x8x10xf32>
    %156 = vector.extract_strided_slice %38 {offsets = [0, 109, 0], sizes = [2, 8, 10], strides = [1, 1, 1]} : vector<2x144x10xf32> to vector<2x8x10xf32>
    %157 = tpu.concatenate %149, %150, %151, %152, %153, %154, %155, %156 in 1 : vector<2x8x10xf32>, vector<2x8x10xf32>, vector<2x8x10xf32>, vector<2x8x10xf32>, vector<2x8x10xf32>, vector<2x8x10xf32>, vector<2x8x10xf32>, vector<2x8x10xf32> -> vector<2x64x10xf32>
    %158 = vector.shape_cast %157 : vector<2x64x10xf32> to vector<128x10xf32>
    %159 = vector.extract_strided_slice %38 {offsets = [0, 26, 0], sizes = [2, 8, 10], strides = [1, 1, 1]} : vector<2x144x10xf32> to vector<2x8x10xf32>
    %160 = vector.extract_strided_slice %38 {offsets = [0, 38, 0], sizes = [2, 8, 10], strides = [1, 1, 1]} : vector<2x144x10xf32> to vector<2x8x10xf32>
    %161 = vector.extract_strided_slice %38 {offsets = [0, 50, 0], sizes = [2, 8, 10], strides = [1, 1, 1]} : vector<2x144x10xf32> to vector<2x8x10xf32>
    %162 = vector.extract_strided_slice %38 {offsets = [0, 62, 0], sizes = [2, 8, 10], strides = [1, 1, 1]} : vector<2x144x10xf32> to vector<2x8x10xf32>
    %163 = vector.extract_strided_slice %38 {offsets = [0, 74, 0], sizes = [2, 8, 10], strides = [1, 1, 1]} : vector<2x144x10xf32> to vector<2x8x10xf32>
    %164 = vector.extract_strided_slice %38 {offsets = [0, 86, 0], sizes = [2, 8, 10], strides = [1, 1, 1]} : vector<2x144x10xf32> to vector<2x8x10xf32>
    %165 = vector.extract_strided_slice %38 {offsets = [0, 98, 0], sizes = [2, 8, 10], strides = [1, 1, 1]} : vector<2x144x10xf32> to vector<2x8x10xf32>
    %166 = vector.extract_strided_slice %38 {offsets = [0, 110, 0], sizes = [2, 8, 10], strides = [1, 1, 1]} : vector<2x144x10xf32> to vector<2x8x10xf32>
    %167 = tpu.concatenate %159, %160, %161, %162, %163, %164, %165, %166 in 1 : vector<2x8x10xf32>, vector<2x8x10xf32>, vector<2x8x10xf32>, vector<2x8x10xf32>, vector<2x8x10xf32>, vector<2x8x10xf32>, vector<2x8x10xf32>, vector<2x8x10xf32> -> vector<2x64x10xf32>
    %168 = vector.shape_cast %167 : vector<2x64x10xf32> to vector<128x10xf32>
    %169 = vector.extract_strided_slice %38 {offsets = [0, 27, 0], sizes = [2, 8, 10], strides = [1, 1, 1]} : vector<2x144x10xf32> to vector<2x8x10xf32>
    %170 = vector.extract_strided_slice %38 {offsets = [0, 39, 0], sizes = [2, 8, 10], strides = [1, 1, 1]} : vector<2x144x10xf32> to vector<2x8x10xf32>
    %171 = vector.extract_strided_slice %38 {offsets = [0, 51, 0], sizes = [2, 8, 10], strides = [1, 1, 1]} : vector<2x144x10xf32> to vector<2x8x10xf32>
    %172 = vector.extract_strided_slice %38 {offsets = [0, 63, 0], sizes = [2, 8, 10], strides = [1, 1, 1]} : vector<2x144x10xf32> to vector<2x8x10xf32>
    %173 = vector.extract_strided_slice %38 {offsets = [0, 75, 0], sizes = [2, 8, 10], strides = [1, 1, 1]} : vector<2x144x10xf32> to vector<2x8x10xf32>
    %174 = vector.extract_strided_slice %38 {offsets = [0, 87, 0], sizes = [2, 8, 10], strides = [1, 1, 1]} : vector<2x144x10xf32> to vector<2x8x10xf32>
    %175 = vector.extract_strided_slice %38 {offsets = [0, 99, 0], sizes = [2, 8, 10], strides = [1, 1, 1]} : vector<2x144x10xf32> to vector<2x8x10xf32>
    %176 = vector.extract_strided_slice %38 {offsets = [0, 111, 0], sizes = [2, 8, 10], strides = [1, 1, 1]} : vector<2x144x10xf32> to vector<2x8x10xf32>
    %177 = tpu.concatenate %169, %170, %171, %172, %173, %174, %175, %176 in 1 : vector<2x8x10xf32>, vector<2x8x10xf32>, vector<2x8x10xf32>, vector<2x8x10xf32>, vector<2x8x10xf32>, vector<2x8x10xf32>, vector<2x8x10xf32>, vector<2x8x10xf32> -> vector<2x64x10xf32>
    %178 = vector.shape_cast %177 : vector<2x64x10xf32> to vector<128x10xf32>
    %179 = vector.extract_strided_slice %38 {offsets = [0, 28, 0], sizes = [2, 8, 10], strides = [1, 1, 1]} : vector<2x144x10xf32> to vector<2x8x10xf32>
    %180 = vector.extract_strided_slice %38 {offsets = [0, 40, 0], sizes = [2, 8, 10], strides = [1, 1, 1]} : vector<2x144x10xf32> to vector<2x8x10xf32>
    %181 = vector.extract_strided_slice %38 {offsets = [0, 52, 0], sizes = [2, 8, 10], strides = [1, 1, 1]} : vector<2x144x10xf32> to vector<2x8x10xf32>
    %182 = vector.extract_strided_slice %38 {offsets = [0, 64, 0], sizes = [2, 8, 10], strides = [1, 1, 1]} : vector<2x144x10xf32> to vector<2x8x10xf32>
    %183 = vector.extract_strided_slice %38 {offsets = [0, 76, 0], sizes = [2, 8, 10], strides = [1, 1, 1]} : vector<2x144x10xf32> to vector<2x8x10xf32>
    %184 = vector.extract_strided_slice %38 {offsets = [0, 88, 0], sizes = [2, 8, 10], strides = [1, 1, 1]} : vector<2x144x10xf32> to vector<2x8x10xf32>
    %185 = vector.extract_strided_slice %38 {offsets = [0, 100, 0], sizes = [2, 8, 10], strides = [1, 1, 1]} : vector<2x144x10xf32> to vector<2x8x10xf32>
    %186 = vector.extract_strided_slice %38 {offsets = [0, 112, 0], sizes = [2, 8, 10], strides = [1, 1, 1]} : vector<2x144x10xf32> to vector<2x8x10xf32>
    %187 = tpu.concatenate %179, %180, %181, %182, %183, %184, %185, %186 in 1 : vector<2x8x10xf32>, vector<2x8x10xf32>, vector<2x8x10xf32>, vector<2x8x10xf32>, vector<2x8x10xf32>, vector<2x8x10xf32>, vector<2x8x10xf32>, vector<2x8x10xf32> -> vector<2x64x10xf32>
    %188 = vector.shape_cast %187 : vector<2x64x10xf32> to vector<128x10xf32>
    %189 = vector.extract_strided_slice %38 {offsets = [0, 36, 0], sizes = [2, 8, 10], strides = [1, 1, 1]} : vector<2x144x10xf32> to vector<2x8x10xf32>
    %190 = vector.extract_strided_slice %38 {offsets = [0, 48, 0], sizes = [2, 8, 10], strides = [1, 1, 1]} : vector<2x144x10xf32> to vector<2x8x10xf32>
    %191 = vector.extract_strided_slice %38 {offsets = [0, 60, 0], sizes = [2, 8, 10], strides = [1, 1, 1]} : vector<2x144x10xf32> to vector<2x8x10xf32>
    %192 = vector.extract_strided_slice %38 {offsets = [0, 72, 0], sizes = [2, 8, 10], strides = [1, 1, 1]} : vector<2x144x10xf32> to vector<2x8x10xf32>
    %193 = vector.extract_strided_slice %38 {offsets = [0, 84, 0], sizes = [2, 8, 10], strides = [1, 1, 1]} : vector<2x144x10xf32> to vector<2x8x10xf32>
    %194 = vector.extract_strided_slice %38 {offsets = [0, 96, 0], sizes = [2, 8, 10], strides = [1, 1, 1]} : vector<2x144x10xf32> to vector<2x8x10xf32>
    %195 = vector.extract_strided_slice %38 {offsets = [0, 108, 0], sizes = [2, 8, 10], strides = [1, 1, 1]} : vector<2x144x10xf32> to vector<2x8x10xf32>
    %196 = vector.extract_strided_slice %38 {offsets = [0, 120, 0], sizes = [2, 8, 10], strides = [1, 1, 1]} : vector<2x144x10xf32> to vector<2x8x10xf32>
    %197 = tpu.concatenate %189, %190, %191, %192, %193, %194, %195, %196 in 1 : vector<2x8x10xf32>, vector<2x8x10xf32>, vector<2x8x10xf32>, vector<2x8x10xf32>, vector<2x8x10xf32>, vector<2x8x10xf32>, vector<2x8x10xf32>, vector<2x8x10xf32> -> vector<2x64x10xf32>
    %198 = vector.shape_cast %197 : vector<2x64x10xf32> to vector<128x10xf32>
    %199 = vector.extract_strided_slice %38 {offsets = [0, 37, 0], sizes = [2, 8, 10], strides = [1, 1, 1]} : vector<2x144x10xf32> to vector<2x8x10xf32>
    %200 = vector.extract_strided_slice %38 {offsets = [0, 49, 0], sizes = [2, 8, 10], strides = [1, 1, 1]} : vector<2x144x10xf32> to vector<2x8x10xf32>
    %201 = vector.extract_strided_slice %38 {offsets = [0, 61, 0], sizes = [2, 8, 10], strides = [1, 1, 1]} : vector<2x144x10xf32> to vector<2x8x10xf32>
    %202 = vector.extract_strided_slice %38 {offsets = [0, 73, 0], sizes = [2, 8, 10], strides = [1, 1, 1]} : vector<2x144x10xf32> to vector<2x8x10xf32>
    %203 = vector.extract_strided_slice %38 {offsets = [0, 85, 0], sizes = [2, 8, 10], strides = [1, 1, 1]} : vector<2x144x10xf32> to vector<2x8x10xf32>
    %204 = vector.extract_strided_slice %38 {offsets = [0, 97, 0], sizes = [2, 8, 10], strides = [1, 1, 1]} : vector<2x144x10xf32> to vector<2x8x10xf32>
    %205 = vector.extract_strided_slice %38 {offsets = [0, 109, 0], sizes = [2, 8, 10], strides = [1, 1, 1]} : vector<2x144x10xf32> to vector<2x8x10xf32>
    %206 = vector.extract_strided_slice %38 {offsets = [0, 121, 0], sizes = [2, 8, 10], strides = [1, 1, 1]} : vector<2x144x10xf32> to vector<2x8x10xf32>
    %207 = tpu.concatenate %199, %200, %201, %202, %203, %204, %205, %206 in 1 : vector<2x8x10xf32>, vector<2x8x10xf32>, vector<2x8x10xf32>, vector<2x8x10xf32>, vector<2x8x10xf32>, vector<2x8x10xf32>, vector<2x8x10xf32>, vector<2x8x10xf32> -> vector<2x64x10xf32>
    %208 = vector.shape_cast %207 : vector<2x64x10xf32> to vector<128x10xf32>
    %209 = vector.extract_strided_slice %38 {offsets = [0, 38, 0], sizes = [2, 8, 10], strides = [1, 1, 1]} : vector<2x144x10xf32> to vector<2x8x10xf32>
    %210 = vector.extract_strided_slice %38 {offsets = [0, 50, 0], sizes = [2, 8, 10], strides = [1, 1, 1]} : vector<2x144x10xf32> to vector<2x8x10xf32>
    %211 = vector.extract_strided_slice %38 {offsets = [0, 62, 0], sizes = [2, 8, 10], strides = [1, 1, 1]} : vector<2x144x10xf32> to vector<2x8x10xf32>
    %212 = vector.extract_strided_slice %38 {offsets = [0, 74, 0], sizes = [2, 8, 10], strides = [1, 1, 1]} : vector<2x144x10xf32> to vector<2x8x10xf32>
    %213 = vector.extract_strided_slice %38 {offsets = [0, 86, 0], sizes = [2, 8, 10], strides = [1, 1, 1]} : vector<2x144x10xf32> to vector<2x8x10xf32>
    %214 = vector.extract_strided_slice %38 {offsets = [0, 98, 0], sizes = [2, 8, 10], strides = [1, 1, 1]} : vector<2x144x10xf32> to vector<2x8x10xf32>
    %215 = vector.extract_strided_slice %38 {offsets = [0, 110, 0], sizes = [2, 8, 10], strides = [1, 1, 1]} : vector<2x144x10xf32> to vector<2x8x10xf32>
    %216 = vector.extract_strided_slice %38 {offsets = [0, 122, 0], sizes = [2, 8, 10], strides = [1, 1, 1]} : vector<2x144x10xf32> to vector<2x8x10xf32>
    %217 = tpu.concatenate %209, %210, %211, %212, %213, %214, %215, %216 in 1 : vector<2x8x10xf32>, vector<2x8x10xf32>, vector<2x8x10xf32>, vector<2x8x10xf32>, vector<2x8x10xf32>, vector<2x8x10xf32>, vector<2x8x10xf32>, vector<2x8x10xf32> -> vector<2x64x10xf32>
    %218 = vector.shape_cast %217 : vector<2x64x10xf32> to vector<128x10xf32>
    %219 = vector.extract_strided_slice %38 {offsets = [0, 39, 0], sizes = [2, 8, 10], strides = [1, 1, 1]} : vector<2x144x10xf32> to vector<2x8x10xf32>
    %220 = vector.extract_strided_slice %38 {offsets = [0, 51, 0], sizes = [2, 8, 10], strides = [1, 1, 1]} : vector<2x144x10xf32> to vector<2x8x10xf32>
    %221 = vector.extract_strided_slice %38 {offsets = [0, 63, 0], sizes = [2, 8, 10], strides = [1, 1, 1]} : vector<2x144x10xf32> to vector<2x8x10xf32>
    %222 = vector.extract_strided_slice %38 {offsets = [0, 75, 0], sizes = [2, 8, 10], strides = [1, 1, 1]} : vector<2x144x10xf32> to vector<2x8x10xf32>
    %223 = vector.extract_strided_slice %38 {offsets = [0, 87, 0], sizes = [2, 8, 10], strides = [1, 1, 1]} : vector<2x144x10xf32> to vector<2x8x10xf32>
    %224 = vector.extract_strided_slice %38 {offsets = [0, 99, 0], sizes = [2, 8, 10], strides = [1, 1, 1]} : vector<2x144x10xf32> to vector<2x8x10xf32>
    %225 = vector.extract_strided_slice %38 {offsets = [0, 111, 0], sizes = [2, 8, 10], strides = [1, 1, 1]} : vector<2x144x10xf32> to vector<2x8x10xf32>
    %226 = vector.extract_strided_slice %38 {offsets = [0, 123, 0], sizes = [2, 8, 10], strides = [1, 1, 1]} : vector<2x144x10xf32> to vector<2x8x10xf32>
    %227 = tpu.concatenate %219, %220, %221, %222, %223, %224, %225, %226 in 1 : vector<2x8x10xf32>, vector<2x8x10xf32>, vector<2x8x10xf32>, vector<2x8x10xf32>, vector<2x8x10xf32>, vector<2x8x10xf32>, vector<2x8x10xf32>, vector<2x8x10xf32> -> vector<2x64x10xf32>
    %228 = vector.shape_cast %227 : vector<2x64x10xf32> to vector<128x10xf32>
    %229 = vector.extract_strided_slice %38 {offsets = [0, 40, 0], sizes = [2, 8, 10], strides = [1, 1, 1]} : vector<2x144x10xf32> to vector<2x8x10xf32>
    %230 = vector.extract_strided_slice %38 {offsets = [0, 52, 0], sizes = [2, 8, 10], strides = [1, 1, 1]} : vector<2x144x10xf32> to vector<2x8x10xf32>
    %231 = vector.extract_strided_slice %38 {offsets = [0, 64, 0], sizes = [2, 8, 10], strides = [1, 1, 1]} : vector<2x144x10xf32> to vector<2x8x10xf32>
    %232 = vector.extract_strided_slice %38 {offsets = [0, 76, 0], sizes = [2, 8, 10], strides = [1, 1, 1]} : vector<2x144x10xf32> to vector<2x8x10xf32>
    %233 = vector.extract_strided_slice %38 {offsets = [0, 88, 0], sizes = [2, 8, 10], strides = [1, 1, 1]} : vector<2x144x10xf32> to vector<2x8x10xf32>
    %234 = vector.extract_strided_slice %38 {offsets = [0, 100, 0], sizes = [2, 8, 10], strides = [1, 1, 1]} : vector<2x144x10xf32> to vector<2x8x10xf32>
    %235 = vector.extract_strided_slice %38 {offsets = [0, 112, 0], sizes = [2, 8, 10], strides = [1, 1, 1]} : vector<2x144x10xf32> to vector<2x8x10xf32>
    %236 = vector.extract_strided_slice %38 {offsets = [0, 124, 0], sizes = [2, 8, 10], strides = [1, 1, 1]} : vector<2x144x10xf32> to vector<2x8x10xf32>
    %237 = tpu.concatenate %229, %230, %231, %232, %233, %234, %235, %236 in 1 : vector<2x8x10xf32>, vector<2x8x10xf32>, vector<2x8x10xf32>, vector<2x8x10xf32>, vector<2x8x10xf32>, vector<2x8x10xf32>, vector<2x8x10xf32>, vector<2x8x10xf32> -> vector<2x64x10xf32>
    %238 = vector.shape_cast %237 : vector<2x64x10xf32> to vector<128x10xf32>
    %239 = vector.extract_strided_slice %38 {offsets = [0, 48, 0], sizes = [2, 8, 10], strides = [1, 1, 1]} : vector<2x144x10xf32> to vector<2x8x10xf32>
    %240 = vector.extract_strided_slice %38 {offsets = [0, 60, 0], sizes = [2, 8, 10], strides = [1, 1, 1]} : vector<2x144x10xf32> to vector<2x8x10xf32>
    %241 = vector.extract_strided_slice %38 {offsets = [0, 72, 0], sizes = [2, 8, 10], strides = [1, 1, 1]} : vector<2x144x10xf32> to vector<2x8x10xf32>
    %242 = vector.extract_strided_slice %38 {offsets = [0, 84, 0], sizes = [2, 8, 10], strides = [1, 1, 1]} : vector<2x144x10xf32> to vector<2x8x10xf32>
    %243 = vector.extract_strided_slice %38 {offsets = [0, 96, 0], sizes = [2, 8, 10], strides = [1, 1, 1]} : vector<2x144x10xf32> to vector<2x8x10xf32>
    %244 = vector.extract_strided_slice %38 {offsets = [0, 108, 0], sizes = [2, 8, 10], strides = [1, 1, 1]} : vector<2x144x10xf32> to vector<2x8x10xf32>
    %245 = vector.extract_strided_slice %38 {offsets = [0, 120, 0], sizes = [2, 8, 10], strides = [1, 1, 1]} : vector<2x144x10xf32> to vector<2x8x10xf32>
    %246 = vector.extract_strided_slice %38 {offsets = [0, 132, 0], sizes = [2, 8, 10], strides = [1, 1, 1]} : vector<2x144x10xf32> to vector<2x8x10xf32>
    %247 = tpu.concatenate %239, %240, %241, %242, %243, %244, %245, %246 in 1 : vector<2x8x10xf32>, vector<2x8x10xf32>, vector<2x8x10xf32>, vector<2x8x10xf32>, vector<2x8x10xf32>, vector<2x8x10xf32>, vector<2x8x10xf32>, vector<2x8x10xf32> -> vector<2x64x10xf32>
    %248 = vector.shape_cast %247 : vector<2x64x10xf32> to vector<128x10xf32>
    %249 = vector.extract_strided_slice %38 {offsets = [0, 49, 0], sizes = [2, 8, 10], strides = [1, 1, 1]} : vector<2x144x10xf32> to vector<2x8x10xf32>
    %250 = vector.extract_strided_slice %38 {offsets = [0, 61, 0], sizes = [2, 8, 10], strides = [1, 1, 1]} : vector<2x144x10xf32> to vector<2x8x10xf32>
    %251 = vector.extract_strided_slice %38 {offsets = [0, 73, 0], sizes = [2, 8, 10], strides = [1, 1, 1]} : vector<2x144x10xf32> to vector<2x8x10xf32>
    %252 = vector.extract_strided_slice %38 {offsets = [0, 85, 0], sizes = [2, 8, 10], strides = [1, 1, 1]} : vector<2x144x10xf32> to vector<2x8x10xf32>
    %253 = vector.extract_strided_slice %38 {offsets = [0, 97, 0], sizes = [2, 8, 10], strides = [1, 1, 1]} : vector<2x144x10xf32> to vector<2x8x10xf32>
    %254 = vector.extract_strided_slice %38 {offsets = [0, 109, 0], sizes = [2, 8, 10], strides = [1, 1, 1]} : vector<2x144x10xf32> to vector<2x8x10xf32>
    %255 = vector.extract_strided_slice %38 {offsets = [0, 121, 0], sizes = [2, 8, 10], strides = [1, 1, 1]} : vector<2x144x10xf32> to vector<2x8x10xf32>
    %256 = vector.extract_strided_slice %38 {offsets = [0, 133, 0], sizes = [2, 8, 10], strides = [1, 1, 1]} : vector<2x144x10xf32> to vector<2x8x10xf32>
    %257 = tpu.concatenate %249, %250, %251, %252, %253, %254, %255, %256 in 1 : vector<2x8x10xf32>, vector<2x8x10xf32>, vector<2x8x10xf32>, vector<2x8x10xf32>, vector<2x8x10xf32>, vector<2x8x10xf32>, vector<2x8x10xf32>, vector<2x8x10xf32> -> vector<2x64x10xf32>
    %258 = vector.shape_cast %257 : vector<2x64x10xf32> to vector<128x10xf32>
    %259 = vector.extract_strided_slice %38 {offsets = [0, 50, 0], sizes = [2, 8, 10], strides = [1, 1, 1]} : vector<2x144x10xf32> to vector<2x8x10xf32>
    %260 = vector.extract_strided_slice %38 {offsets = [0, 62, 0], sizes = [2, 8, 10], strides = [1, 1, 1]} : vector<2x144x10xf32> to vector<2x8x10xf32>
    %261 = vector.extract_strided_slice %38 {offsets = [0, 74, 0], sizes = [2, 8, 10], strides = [1, 1, 1]} : vector<2x144x10xf32> to vector<2x8x10xf32>
    %262 = vector.extract_strided_slice %38 {offsets = [0, 86, 0], sizes = [2, 8, 10], strides = [1, 1, 1]} : vector<2x144x10xf32> to vector<2x8x10xf32>
    %263 = vector.extract_strided_slice %38 {offsets = [0, 98, 0], sizes = [2, 8, 10], strides = [1, 1, 1]} : vector<2x144x10xf32> to vector<2x8x10xf32>
    %264 = vector.extract_strided_slice %38 {offsets = [0, 110, 0], sizes = [2, 8, 10], strides = [1, 1, 1]} : vector<2x144x10xf32> to vector<2x8x10xf32>
    %265 = vector.extract_strided_slice %38 {offsets = [0, 122, 0], sizes = [2, 8, 10], strides = [1, 1, 1]} : vector<2x144x10xf32> to vector<2x8x10xf32>
    %266 = vector.extract_strided_slice %38 {offsets = [0, 134, 0], sizes = [2, 8, 10], strides = [1, 1, 1]} : vector<2x144x10xf32> to vector<2x8x10xf32>
    %267 = tpu.concatenate %259, %260, %261, %262, %263, %264, %265, %266 in 1 : vector<2x8x10xf32>, vector<2x8x10xf32>, vector<2x8x10xf32>, vector<2x8x10xf32>, vector<2x8x10xf32>, vector<2x8x10xf32>, vector<2x8x10xf32>, vector<2x8x10xf32> -> vector<2x64x10xf32>
    %268 = vector.shape_cast %267 : vector<2x64x10xf32> to vector<128x10xf32>
    %269 = vector.extract_strided_slice %38 {offsets = [0, 51, 0], sizes = [2, 8, 10], strides = [1, 1, 1]} : vector<2x144x10xf32> to vector<2x8x10xf32>
    %270 = vector.extract_strided_slice %38 {offsets = [0, 63, 0], sizes = [2, 8, 10], strides = [1, 1, 1]} : vector<2x144x10xf32> to vector<2x8x10xf32>
    %271 = vector.extract_strided_slice %38 {offsets = [0, 75, 0], sizes = [2, 8, 10], strides = [1, 1, 1]} : vector<2x144x10xf32> to vector<2x8x10xf32>
    %272 = vector.extract_strided_slice %38 {offsets = [0, 87, 0], sizes = [2, 8, 10], strides = [1, 1, 1]} : vector<2x144x10xf32> to vector<2x8x10xf32>
    %273 = vector.extract_strided_slice %38 {offsets = [0, 99, 0], sizes = [2, 8, 10], strides = [1, 1, 1]} : vector<2x144x10xf32> to vector<2x8x10xf32>
    %274 = vector.extract_strided_slice %38 {offsets = [0, 111, 0], sizes = [2, 8, 10], strides = [1, 1, 1]} : vector<2x144x10xf32> to vector<2x8x10xf32>
    %275 = vector.extract_strided_slice %38 {offsets = [0, 123, 0], sizes = [2, 8, 10], strides = [1, 1, 1]} : vector<2x144x10xf32> to vector<2x8x10xf32>
    %276 = vector.extract_strided_slice %38 {offsets = [0, 135, 0], sizes = [2, 8, 10], strides = [1, 1, 1]} : vector<2x144x10xf32> to vector<2x8x10xf32>
    %277 = tpu.concatenate %269, %270, %271, %272, %273, %274, %275, %276 in 1 : vector<2x8x10xf32>, vector<2x8x10xf32>, vector<2x8x10xf32>, vector<2x8x10xf32>, vector<2x8x10xf32>, vector<2x8x10xf32>, vector<2x8x10xf32>, vector<2x8x10xf32> -> vector<2x64x10xf32>
    %278 = vector.shape_cast %277 : vector<2x64x10xf32> to vector<128x10xf32>
    %279 = vector.extract_strided_slice %38 {offsets = [0, 52, 0], sizes = [2, 8, 10], strides = [1, 1, 1]} : vector<2x144x10xf32> to vector<2x8x10xf32>
    %280 = vector.extract_strided_slice %38 {offsets = [0, 64, 0], sizes = [2, 8, 10], strides = [1, 1, 1]} : vector<2x144x10xf32> to vector<2x8x10xf32>
    %281 = vector.extract_strided_slice %38 {offsets = [0, 76, 0], sizes = [2, 8, 10], strides = [1, 1, 1]} : vector<2x144x10xf32> to vector<2x8x10xf32>
    %282 = vector.extract_strided_slice %38 {offsets = [0, 88, 0], sizes = [2, 8, 10], strides = [1, 1, 1]} : vector<2x144x10xf32> to vector<2x8x10xf32>
    %283 = vector.extract_strided_slice %38 {offsets = [0, 100, 0], sizes = [2, 8, 10], strides = [1, 1, 1]} : vector<2x144x10xf32> to vector<2x8x10xf32>
    %284 = vector.extract_strided_slice %38 {offsets = [0, 112, 0], sizes = [2, 8, 10], strides = [1, 1, 1]} : vector<2x144x10xf32> to vector<2x8x10xf32>
    %285 = vector.extract_strided_slice %38 {offsets = [0, 124, 0], sizes = [2, 8, 10], strides = [1, 1, 1]} : vector<2x144x10xf32> to vector<2x8x10xf32>
    %286 = vector.extract_strided_slice %38 {offsets = [0, 136, 0], sizes = [2, 8, 10], strides = [1, 1, 1]} : vector<2x144x10xf32> to vector<2x8x10xf32>
    %287 = tpu.concatenate %279, %280, %281, %282, %283, %284, %285, %286 in 1 : vector<2x8x10xf32>, vector<2x8x10xf32>, vector<2x8x10xf32>, vector<2x8x10xf32>, vector<2x8x10xf32>, vector<2x8x10xf32>, vector<2x8x10xf32>, vector<2x8x10xf32> -> vector<2x64x10xf32>
    %288 = vector.shape_cast %287 : vector<2x64x10xf32> to vector<128x10xf32>
    %289 = tpu.concatenate %48, %58, %68, %78, %88, %98, %108, %118, %128, %138, %148, %158, %168, %178, %188, %198 in 1 : vector<128x10xf32>, vector<128x10xf32>, vector<128x10xf32>, vector<128x10xf32>, vector<128x10xf32>, vector<128x10xf32>, vector<128x10xf32>, vector<128x10xf32>, vector<128x10xf32>, vector<128x10xf32>, vector<128x10xf32>, vector<128x10xf32>, vector<128x10xf32>, vector<128x10xf32>, vector<128x10xf32>, vector<128x10xf32> -> vector<128x160xf32>
    %290 = tpu.concatenate %208, %218, %228, %238, %248, %258, %268, %278, %288 in 1 : vector<128x10xf32>, vector<128x10xf32>, vector<128x10xf32>, vector<128x10xf32>, vector<128x10xf32>, vector<128x10xf32>, vector<128x10xf32>, vector<128x10xf32>, vector<128x10xf32> -> vector<128x90xf32>
    %291 = tpu.concatenate %289, %290 in 1 : vector<128x160xf32>, vector<128x90xf32> -> vector<128x250xf32>
    %c0_13 = arith.constant 0 : index
    %c0_14 = arith.constant 0 : index
    %292 = vector.load %arg5[%c0_13, %c0_14] : memref<250x20xf32, #tpu.memory_space<vmem>>, vector<250x20xf32>
    %cst_15 = arith.constant dense<0.000000e+00> : vector<128x20xf32>
    %293 = tpu.matmul %291, %292, %cst_15 {dimension_numbers = #tpu.dot_dimension_numbers<[1], [0], [0], [1], [0, 0, 1, 1], [], []>} : vector<128x250xf32>, vector<250x20xf32>, vector<128x20xf32> -> vector<128x20xf32>
    %c0_16 = arith.constant 0 : index
    %c0_17 = arith.constant 0 : index
    %294 = vector.load %arg6[%c0_16, %c0_17] : memref<1x20xf32, #tpu.memory_space<vmem>>, vector<1x20xf32>
    %295 = vector.broadcast %294 : vector<1x20xf32> to vector<128x20xf32>
    %296 = arith.addf %293, %295 : vector<128x20xf32>
    %297 = vector.shape_cast %296 : vector<128x20xf32> to vector<2x64x20xf32>
    %298 = vector.extract_strided_slice %297 {offsets = [0, 0, 0], sizes = [2, 1, 20], strides = [1, 1, 1]} : vector<2x64x20xf32> to vector<2x1x20xf32>
    %299 = vector.shape_cast %298 : vector<2x1x20xf32> to vector<2x20xf32>
    %300 = vector.extract_strided_slice %297 {offsets = [0, 1, 0], sizes = [2, 1, 20], strides = [1, 1, 1]} : vector<2x64x20xf32> to vector<2x1x20xf32>
    %301 = vector.shape_cast %300 : vector<2x1x20xf32> to vector<2x20xf32>
    %302 = vector.extract_strided_slice %297 {offsets = [0, 8, 0], sizes = [2, 1, 20], strides = [1, 1, 1]} : vector<2x64x20xf32> to vector<2x1x20xf32>
    %303 = vector.shape_cast %302 : vector<2x1x20xf32> to vector<2x20xf32>
    %304 = vector.extract_strided_slice %297 {offsets = [0, 9, 0], sizes = [2, 1, 20], strides = [1, 1, 1]} : vector<2x64x20xf32> to vector<2x1x20xf32>
    %305 = vector.shape_cast %304 : vector<2x1x20xf32> to vector<2x20xf32>
    %306 = arith.maximumf %299, %301 : vector<2x20xf32>
    %307 = arith.maximumf %303, %305 : vector<2x20xf32>
    %308 = arith.maximumf %306, %307 : vector<2x20xf32>
    %cst_18 = arith.constant 0.000000e+00 : f32
    %309 = vector.broadcast %cst_18 : f32 to vector<2x20xf32>
    %310 = arith.maximumf %308, %309 : vector<2x20xf32>
    %311 = vector.extract_strided_slice %297 {offsets = [0, 2, 0], sizes = [2, 1, 20], strides = [1, 1, 1]} : vector<2x64x20xf32> to vector<2x1x20xf32>
    %312 = vector.shape_cast %311 : vector<2x1x20xf32> to vector<2x20xf32>
    %313 = vector.extract_strided_slice %297 {offsets = [0, 3, 0], sizes = [2, 1, 20], strides = [1, 1, 1]} : vector<2x64x20xf32> to vector<2x1x20xf32>
    %314 = vector.shape_cast %313 : vector<2x1x20xf32> to vector<2x20xf32>
    %315 = vector.extract_strided_slice %297 {offsets = [0, 10, 0], sizes = [2, 1, 20], strides = [1, 1, 1]} : vector<2x64x20xf32> to vector<2x1x20xf32>
    %316 = vector.shape_cast %315 : vector<2x1x20xf32> to vector<2x20xf32>
    %317 = vector.extract_strided_slice %297 {offsets = [0, 11, 0], sizes = [2, 1, 20], strides = [1, 1, 1]} : vector<2x64x20xf32> to vector<2x1x20xf32>
    %318 = vector.shape_cast %317 : vector<2x1x20xf32> to vector<2x20xf32>
    %319 = arith.maximumf %312, %314 : vector<2x20xf32>
    %320 = arith.maximumf %316, %318 : vector<2x20xf32>
    %321 = arith.maximumf %319, %320 : vector<2x20xf32>
    %cst_19 = arith.constant 0.000000e+00 : f32
    %322 = vector.broadcast %cst_19 : f32 to vector<2x20xf32>
    %323 = arith.maximumf %321, %322 : vector<2x20xf32>
    %324 = vector.extract_strided_slice %297 {offsets = [0, 4, 0], sizes = [2, 1, 20], strides = [1, 1, 1]} : vector<2x64x20xf32> to vector<2x1x20xf32>
    %325 = vector.shape_cast %324 : vector<2x1x20xf32> to vector<2x20xf32>
    %326 = vector.extract_strided_slice %297 {offsets = [0, 5, 0], sizes = [2, 1, 20], strides = [1, 1, 1]} : vector<2x64x20xf32> to vector<2x1x20xf32>
    %327 = vector.shape_cast %326 : vector<2x1x20xf32> to vector<2x20xf32>
    %328 = vector.extract_strided_slice %297 {offsets = [0, 12, 0], sizes = [2, 1, 20], strides = [1, 1, 1]} : vector<2x64x20xf32> to vector<2x1x20xf32>
    %329 = vector.shape_cast %328 : vector<2x1x20xf32> to vector<2x20xf32>
    %330 = vector.extract_strided_slice %297 {offsets = [0, 13, 0], sizes = [2, 1, 20], strides = [1, 1, 1]} : vector<2x64x20xf32> to vector<2x1x20xf32>
    %331 = vector.shape_cast %330 : vector<2x1x20xf32> to vector<2x20xf32>
    %332 = arith.maximumf %325, %327 : vector<2x20xf32>
    %333 = arith.maximumf %329, %331 : vector<2x20xf32>
    %334 = arith.maximumf %332, %333 : vector<2x20xf32>
    %cst_20 = arith.constant 0.000000e+00 : f32
    %335 = vector.broadcast %cst_20 : f32 to vector<2x20xf32>
    %336 = arith.maximumf %334, %335 : vector<2x20xf32>
    %337 = vector.extract_strided_slice %297 {offsets = [0, 6, 0], sizes = [2, 1, 20], strides = [1, 1, 1]} : vector<2x64x20xf32> to vector<2x1x20xf32>
    %338 = vector.shape_cast %337 : vector<2x1x20xf32> to vector<2x20xf32>
    %339 = vector.extract_strided_slice %297 {offsets = [0, 7, 0], sizes = [2, 1, 20], strides = [1, 1, 1]} : vector<2x64x20xf32> to vector<2x1x20xf32>
    %340 = vector.shape_cast %339 : vector<2x1x20xf32> to vector<2x20xf32>
    %341 = vector.extract_strided_slice %297 {offsets = [0, 14, 0], sizes = [2, 1, 20], strides = [1, 1, 1]} : vector<2x64x20xf32> to vector<2x1x20xf32>
    %342 = vector.shape_cast %341 : vector<2x1x20xf32> to vector<2x20xf32>
    %343 = vector.extract_strided_slice %297 {offsets = [0, 15, 0], sizes = [2, 1, 20], strides = [1, 1, 1]} : vector<2x64x20xf32> to vector<2x1x20xf32>
    %344 = vector.shape_cast %343 : vector<2x1x20xf32> to vector<2x20xf32>
    %345 = arith.maximumf %338, %340 : vector<2x20xf32>
    %346 = arith.maximumf %342, %344 : vector<2x20xf32>
    %347 = arith.maximumf %345, %346 : vector<2x20xf32>
    %cst_21 = arith.constant 0.000000e+00 : f32
    %348 = vector.broadcast %cst_21 : f32 to vector<2x20xf32>
    %349 = arith.maximumf %347, %348 : vector<2x20xf32>
    %350 = vector.extract_strided_slice %297 {offsets = [0, 16, 0], sizes = [2, 1, 20], strides = [1, 1, 1]} : vector<2x64x20xf32> to vector<2x1x20xf32>
    %351 = vector.shape_cast %350 : vector<2x1x20xf32> to vector<2x20xf32>
    %352 = vector.extract_strided_slice %297 {offsets = [0, 17, 0], sizes = [2, 1, 20], strides = [1, 1, 1]} : vector<2x64x20xf32> to vector<2x1x20xf32>
    %353 = vector.shape_cast %352 : vector<2x1x20xf32> to vector<2x20xf32>
    %354 = vector.extract_strided_slice %297 {offsets = [0, 24, 0], sizes = [2, 1, 20], strides = [1, 1, 1]} : vector<2x64x20xf32> to vector<2x1x20xf32>
    %355 = vector.shape_cast %354 : vector<2x1x20xf32> to vector<2x20xf32>
    %356 = vector.extract_strided_slice %297 {offsets = [0, 25, 0], sizes = [2, 1, 20], strides = [1, 1, 1]} : vector<2x64x20xf32> to vector<2x1x20xf32>
    %357 = vector.shape_cast %356 : vector<2x1x20xf32> to vector<2x20xf32>
    %358 = arith.maximumf %351, %353 : vector<2x20xf32>
    %359 = arith.maximumf %355, %357 : vector<2x20xf32>
    %360 = arith.maximumf %358, %359 : vector<2x20xf32>
    %cst_22 = arith.constant 0.000000e+00 : f32
    %361 = vector.broadcast %cst_22 : f32 to vector<2x20xf32>
    %362 = arith.maximumf %360, %361 : vector<2x20xf32>
    %363 = vector.extract_strided_slice %297 {offsets = [0, 18, 0], sizes = [2, 1, 20], strides = [1, 1, 1]} : vector<2x64x20xf32> to vector<2x1x20xf32>
    %364 = vector.shape_cast %363 : vector<2x1x20xf32> to vector<2x20xf32>
    %365 = vector.extract_strided_slice %297 {offsets = [0, 19, 0], sizes = [2, 1, 20], strides = [1, 1, 1]} : vector<2x64x20xf32> to vector<2x1x20xf32>
    %366 = vector.shape_cast %365 : vector<2x1x20xf32> to vector<2x20xf32>
    %367 = vector.extract_strided_slice %297 {offsets = [0, 26, 0], sizes = [2, 1, 20], strides = [1, 1, 1]} : vector<2x64x20xf32> to vector<2x1x20xf32>
    %368 = vector.shape_cast %367 : vector<2x1x20xf32> to vector<2x20xf32>
    %369 = vector.extract_strided_slice %297 {offsets = [0, 27, 0], sizes = [2, 1, 20], strides = [1, 1, 1]} : vector<2x64x20xf32> to vector<2x1x20xf32>
    %370 = vector.shape_cast %369 : vector<2x1x20xf32> to vector<2x20xf32>
    %371 = arith.maximumf %364, %366 : vector<2x20xf32>
    %372 = arith.maximumf %368, %370 : vector<2x20xf32>
    %373 = arith.maximumf %371, %372 : vector<2x20xf32>
    %cst_23 = arith.constant 0.000000e+00 : f32
    %374 = vector.broadcast %cst_23 : f32 to vector<2x20xf32>
    %375 = arith.maximumf %373, %374 : vector<2x20xf32>
    %376 = vector.extract_strided_slice %297 {offsets = [0, 20, 0], sizes = [2, 1, 20], strides = [1, 1, 1]} : vector<2x64x20xf32> to vector<2x1x20xf32>
    %377 = vector.shape_cast %376 : vector<2x1x20xf32> to vector<2x20xf32>
    %378 = vector.extract_strided_slice %297 {offsets = [0, 21, 0], sizes = [2, 1, 20], strides = [1, 1, 1]} : vector<2x64x20xf32> to vector<2x1x20xf32>
    %379 = vector.shape_cast %378 : vector<2x1x20xf32> to vector<2x20xf32>
    %380 = vector.extract_strided_slice %297 {offsets = [0, 28, 0], sizes = [2, 1, 20], strides = [1, 1, 1]} : vector<2x64x20xf32> to vector<2x1x20xf32>
    %381 = vector.shape_cast %380 : vector<2x1x20xf32> to vector<2x20xf32>
    %382 = vector.extract_strided_slice %297 {offsets = [0, 29, 0], sizes = [2, 1, 20], strides = [1, 1, 1]} : vector<2x64x20xf32> to vector<2x1x20xf32>
    %383 = vector.shape_cast %382 : vector<2x1x20xf32> to vector<2x20xf32>
    %384 = arith.maximumf %377, %379 : vector<2x20xf32>
    %385 = arith.maximumf %381, %383 : vector<2x20xf32>
    %386 = arith.maximumf %384, %385 : vector<2x20xf32>
    %cst_24 = arith.constant 0.000000e+00 : f32
    %387 = vector.broadcast %cst_24 : f32 to vector<2x20xf32>
    %388 = arith.maximumf %386, %387 : vector<2x20xf32>
    %389 = vector.extract_strided_slice %297 {offsets = [0, 22, 0], sizes = [2, 1, 20], strides = [1, 1, 1]} : vector<2x64x20xf32> to vector<2x1x20xf32>
    %390 = vector.shape_cast %389 : vector<2x1x20xf32> to vector<2x20xf32>
    %391 = vector.extract_strided_slice %297 {offsets = [0, 23, 0], sizes = [2, 1, 20], strides = [1, 1, 1]} : vector<2x64x20xf32> to vector<2x1x20xf32>
    %392 = vector.shape_cast %391 : vector<2x1x20xf32> to vector<2x20xf32>
    %393 = vector.extract_strided_slice %297 {offsets = [0, 30, 0], sizes = [2, 1, 20], strides = [1, 1, 1]} : vector<2x64x20xf32> to vector<2x1x20xf32>
    %394 = vector.shape_cast %393 : vector<2x1x20xf32> to vector<2x20xf32>
    %395 = vector.extract_strided_slice %297 {offsets = [0, 31, 0], sizes = [2, 1, 20], strides = [1, 1, 1]} : vector<2x64x20xf32> to vector<2x1x20xf32>
    %396 = vector.shape_cast %395 : vector<2x1x20xf32> to vector<2x20xf32>
    %397 = arith.maximumf %390, %392 : vector<2x20xf32>
    %398 = arith.maximumf %394, %396 : vector<2x20xf32>
    %399 = arith.maximumf %397, %398 : vector<2x20xf32>
    %cst_25 = arith.constant 0.000000e+00 : f32
    %400 = vector.broadcast %cst_25 : f32 to vector<2x20xf32>
    %401 = arith.maximumf %399, %400 : vector<2x20xf32>
    %402 = vector.extract_strided_slice %297 {offsets = [0, 32, 0], sizes = [2, 1, 20], strides = [1, 1, 1]} : vector<2x64x20xf32> to vector<2x1x20xf32>
    %403 = vector.shape_cast %402 : vector<2x1x20xf32> to vector<2x20xf32>
    %404 = vector.extract_strided_slice %297 {offsets = [0, 33, 0], sizes = [2, 1, 20], strides = [1, 1, 1]} : vector<2x64x20xf32> to vector<2x1x20xf32>
    %405 = vector.shape_cast %404 : vector<2x1x20xf32> to vector<2x20xf32>
    %406 = vector.extract_strided_slice %297 {offsets = [0, 40, 0], sizes = [2, 1, 20], strides = [1, 1, 1]} : vector<2x64x20xf32> to vector<2x1x20xf32>
    %407 = vector.shape_cast %406 : vector<2x1x20xf32> to vector<2x20xf32>
    %408 = vector.extract_strided_slice %297 {offsets = [0, 41, 0], sizes = [2, 1, 20], strides = [1, 1, 1]} : vector<2x64x20xf32> to vector<2x1x20xf32>
    %409 = vector.shape_cast %408 : vector<2x1x20xf32> to vector<2x20xf32>
    %410 = arith.maximumf %403, %405 : vector<2x20xf32>
    %411 = arith.maximumf %407, %409 : vector<2x20xf32>
    %412 = arith.maximumf %410, %411 : vector<2x20xf32>
    %cst_26 = arith.constant 0.000000e+00 : f32
    %413 = vector.broadcast %cst_26 : f32 to vector<2x20xf32>
    %414 = arith.maximumf %412, %413 : vector<2x20xf32>
    %415 = vector.extract_strided_slice %297 {offsets = [0, 34, 0], sizes = [2, 1, 20], strides = [1, 1, 1]} : vector<2x64x20xf32> to vector<2x1x20xf32>
    %416 = vector.shape_cast %415 : vector<2x1x20xf32> to vector<2x20xf32>
    %417 = vector.extract_strided_slice %297 {offsets = [0, 35, 0], sizes = [2, 1, 20], strides = [1, 1, 1]} : vector<2x64x20xf32> to vector<2x1x20xf32>
    %418 = vector.shape_cast %417 : vector<2x1x20xf32> to vector<2x20xf32>
    %419 = vector.extract_strided_slice %297 {offsets = [0, 42, 0], sizes = [2, 1, 20], strides = [1, 1, 1]} : vector<2x64x20xf32> to vector<2x1x20xf32>
    %420 = vector.shape_cast %419 : vector<2x1x20xf32> to vector<2x20xf32>
    %421 = vector.extract_strided_slice %297 {offsets = [0, 43, 0], sizes = [2, 1, 20], strides = [1, 1, 1]} : vector<2x64x20xf32> to vector<2x1x20xf32>
    %422 = vector.shape_cast %421 : vector<2x1x20xf32> to vector<2x20xf32>
    %423 = arith.maximumf %416, %418 : vector<2x20xf32>
    %424 = arith.maximumf %420, %422 : vector<2x20xf32>
    %425 = arith.maximumf %423, %424 : vector<2x20xf32>
    %cst_27 = arith.constant 0.000000e+00 : f32
    %426 = vector.broadcast %cst_27 : f32 to vector<2x20xf32>
    %427 = arith.maximumf %425, %426 : vector<2x20xf32>
    %428 = vector.extract_strided_slice %297 {offsets = [0, 36, 0], sizes = [2, 1, 20], strides = [1, 1, 1]} : vector<2x64x20xf32> to vector<2x1x20xf32>
    %429 = vector.shape_cast %428 : vector<2x1x20xf32> to vector<2x20xf32>
    %430 = vector.extract_strided_slice %297 {offsets = [0, 37, 0], sizes = [2, 1, 20], strides = [1, 1, 1]} : vector<2x64x20xf32> to vector<2x1x20xf32>
    %431 = vector.shape_cast %430 : vector<2x1x20xf32> to vector<2x20xf32>
    %432 = vector.extract_strided_slice %297 {offsets = [0, 44, 0], sizes = [2, 1, 20], strides = [1, 1, 1]} : vector<2x64x20xf32> to vector<2x1x20xf32>
    %433 = vector.shape_cast %432 : vector<2x1x20xf32> to vector<2x20xf32>
    %434 = vector.extract_strided_slice %297 {offsets = [0, 45, 0], sizes = [2, 1, 20], strides = [1, 1, 1]} : vector<2x64x20xf32> to vector<2x1x20xf32>
    %435 = vector.shape_cast %434 : vector<2x1x20xf32> to vector<2x20xf32>
    %436 = arith.maximumf %429, %431 : vector<2x20xf32>
    %437 = arith.maximumf %433, %435 : vector<2x20xf32>
    %438 = arith.maximumf %436, %437 : vector<2x20xf32>
    %cst_28 = arith.constant 0.000000e+00 : f32
    %439 = vector.broadcast %cst_28 : f32 to vector<2x20xf32>
    %440 = arith.maximumf %438, %439 : vector<2x20xf32>
    %441 = vector.extract_strided_slice %297 {offsets = [0, 38, 0], sizes = [2, 1, 20], strides = [1, 1, 1]} : vector<2x64x20xf32> to vector<2x1x20xf32>
    %442 = vector.shape_cast %441 : vector<2x1x20xf32> to vector<2x20xf32>
    %443 = vector.extract_strided_slice %297 {offsets = [0, 39, 0], sizes = [2, 1, 20], strides = [1, 1, 1]} : vector<2x64x20xf32> to vector<2x1x20xf32>
    %444 = vector.shape_cast %443 : vector<2x1x20xf32> to vector<2x20xf32>
    %445 = vector.extract_strided_slice %297 {offsets = [0, 46, 0], sizes = [2, 1, 20], strides = [1, 1, 1]} : vector<2x64x20xf32> to vector<2x1x20xf32>
    %446 = vector.shape_cast %445 : vector<2x1x20xf32> to vector<2x20xf32>
    %447 = vector.extract_strided_slice %297 {offsets = [0, 47, 0], sizes = [2, 1, 20], strides = [1, 1, 1]} : vector<2x64x20xf32> to vector<2x1x20xf32>
    %448 = vector.shape_cast %447 : vector<2x1x20xf32> to vector<2x20xf32>
    %449 = arith.maximumf %442, %444 : vector<2x20xf32>
    %450 = arith.maximumf %446, %448 : vector<2x20xf32>
    %451 = arith.maximumf %449, %450 : vector<2x20xf32>
    %cst_29 = arith.constant 0.000000e+00 : f32
    %452 = vector.broadcast %cst_29 : f32 to vector<2x20xf32>
    %453 = arith.maximumf %451, %452 : vector<2x20xf32>
    %454 = vector.extract_strided_slice %297 {offsets = [0, 48, 0], sizes = [2, 1, 20], strides = [1, 1, 1]} : vector<2x64x20xf32> to vector<2x1x20xf32>
    %455 = vector.shape_cast %454 : vector<2x1x20xf32> to vector<2x20xf32>
    %456 = vector.extract_strided_slice %297 {offsets = [0, 49, 0], sizes = [2, 1, 20], strides = [1, 1, 1]} : vector<2x64x20xf32> to vector<2x1x20xf32>
    %457 = vector.shape_cast %456 : vector<2x1x20xf32> to vector<2x20xf32>
    %458 = vector.extract_strided_slice %297 {offsets = [0, 56, 0], sizes = [2, 1, 20], strides = [1, 1, 1]} : vector<2x64x20xf32> to vector<2x1x20xf32>
    %459 = vector.shape_cast %458 : vector<2x1x20xf32> to vector<2x20xf32>
    %460 = vector.extract_strided_slice %297 {offsets = [0, 57, 0], sizes = [2, 1, 20], strides = [1, 1, 1]} : vector<2x64x20xf32> to vector<2x1x20xf32>
    %461 = vector.shape_cast %460 : vector<2x1x20xf32> to vector<2x20xf32>
    %462 = arith.maximumf %455, %457 : vector<2x20xf32>
    %463 = arith.maximumf %459, %461 : vector<2x20xf32>
    %464 = arith.maximumf %462, %463 : vector<2x20xf32>
    %cst_30 = arith.constant 0.000000e+00 : f32
    %465 = vector.broadcast %cst_30 : f32 to vector<2x20xf32>
    %466 = arith.maximumf %464, %465 : vector<2x20xf32>
    %467 = vector.extract_strided_slice %297 {offsets = [0, 50, 0], sizes = [2, 1, 20], strides = [1, 1, 1]} : vector<2x64x20xf32> to vector<2x1x20xf32>
    %468 = vector.shape_cast %467 : vector<2x1x20xf32> to vector<2x20xf32>
    %469 = vector.extract_strided_slice %297 {offsets = [0, 51, 0], sizes = [2, 1, 20], strides = [1, 1, 1]} : vector<2x64x20xf32> to vector<2x1x20xf32>
    %470 = vector.shape_cast %469 : vector<2x1x20xf32> to vector<2x20xf32>
    %471 = vector.extract_strided_slice %297 {offsets = [0, 58, 0], sizes = [2, 1, 20], strides = [1, 1, 1]} : vector<2x64x20xf32> to vector<2x1x20xf32>
    %472 = vector.shape_cast %471 : vector<2x1x20xf32> to vector<2x20xf32>
    %473 = vector.extract_strided_slice %297 {offsets = [0, 59, 0], sizes = [2, 1, 20], strides = [1, 1, 1]} : vector<2x64x20xf32> to vector<2x1x20xf32>
    %474 = vector.shape_cast %473 : vector<2x1x20xf32> to vector<2x20xf32>
    %475 = arith.maximumf %468, %470 : vector<2x20xf32>
    %476 = arith.maximumf %472, %474 : vector<2x20xf32>
    %477 = arith.maximumf %475, %476 : vector<2x20xf32>
    %cst_31 = arith.constant 0.000000e+00 : f32
    %478 = vector.broadcast %cst_31 : f32 to vector<2x20xf32>
    %479 = arith.maximumf %477, %478 : vector<2x20xf32>
    %480 = vector.extract_strided_slice %297 {offsets = [0, 52, 0], sizes = [2, 1, 20], strides = [1, 1, 1]} : vector<2x64x20xf32> to vector<2x1x20xf32>
    %481 = vector.shape_cast %480 : vector<2x1x20xf32> to vector<2x20xf32>
    %482 = vector.extract_strided_slice %297 {offsets = [0, 53, 0], sizes = [2, 1, 20], strides = [1, 1, 1]} : vector<2x64x20xf32> to vector<2x1x20xf32>
    %483 = vector.shape_cast %482 : vector<2x1x20xf32> to vector<2x20xf32>
    %484 = vector.extract_strided_slice %297 {offsets = [0, 60, 0], sizes = [2, 1, 20], strides = [1, 1, 1]} : vector<2x64x20xf32> to vector<2x1x20xf32>
    %485 = vector.shape_cast %484 : vector<2x1x20xf32> to vector<2x20xf32>
    %486 = vector.extract_strided_slice %297 {offsets = [0, 61, 0], sizes = [2, 1, 20], strides = [1, 1, 1]} : vector<2x64x20xf32> to vector<2x1x20xf32>
    %487 = vector.shape_cast %486 : vector<2x1x20xf32> to vector<2x20xf32>
    %488 = arith.maximumf %481, %483 : vector<2x20xf32>
    %489 = arith.maximumf %485, %487 : vector<2x20xf32>
    %490 = arith.maximumf %488, %489 : vector<2x20xf32>
    %cst_32 = arith.constant 0.000000e+00 : f32
    %491 = vector.broadcast %cst_32 : f32 to vector<2x20xf32>
    %492 = arith.maximumf %490, %491 : vector<2x20xf32>
    %493 = vector.extract_strided_slice %297 {offsets = [0, 54, 0], sizes = [2, 1, 20], strides = [1, 1, 1]} : vector<2x64x20xf32> to vector<2x1x20xf32>
    %494 = vector.shape_cast %493 : vector<2x1x20xf32> to vector<2x20xf32>
    %495 = vector.extract_strided_slice %297 {offsets = [0, 55, 0], sizes = [2, 1, 20], strides = [1, 1, 1]} : vector<2x64x20xf32> to vector<2x1x20xf32>
    %496 = vector.shape_cast %495 : vector<2x1x20xf32> to vector<2x20xf32>
    %497 = vector.extract_strided_slice %297 {offsets = [0, 62, 0], sizes = [2, 1, 20], strides = [1, 1, 1]} : vector<2x64x20xf32> to vector<2x1x20xf32>
    %498 = vector.shape_cast %497 : vector<2x1x20xf32> to vector<2x20xf32>
    %499 = vector.extract_strided_slice %297 {offsets = [0, 63, 0], sizes = [2, 1, 20], strides = [1, 1, 1]} : vector<2x64x20xf32> to vector<2x1x20xf32>
    %500 = vector.shape_cast %499 : vector<2x1x20xf32> to vector<2x20xf32>
    %501 = arith.maximumf %494, %496 : vector<2x20xf32>
    %502 = arith.maximumf %498, %500 : vector<2x20xf32>
    %503 = arith.maximumf %501, %502 : vector<2x20xf32>
    %cst_33 = arith.constant 0.000000e+00 : f32
    %504 = vector.broadcast %cst_33 : f32 to vector<2x20xf32>
    %505 = arith.maximumf %503, %504 : vector<2x20xf32>
    %506 = tpu.concatenate %310, %323, %336, %349, %362, %375, %388, %401, %414, %427, %440, %453, %466, %479, %492, %505 in 1 : vector<2x20xf32>, vector<2x20xf32>, vector<2x20xf32>, vector<2x20xf32>, vector<2x20xf32>, vector<2x20xf32>, vector<2x20xf32>, vector<2x20xf32>, vector<2x20xf32>, vector<2x20xf32>, vector<2x20xf32>, vector<2x20xf32>, vector<2x20xf32>, vector<2x20xf32>, vector<2x20xf32>, vector<2x20xf32> -> vector<2x320xf32>
    %c0_34 = arith.constant 0 : index
    %c0_35 = arith.constant 0 : index
    %507 = vector.load %arg7[%c0_34, %c0_35] : memref<320x50xf32, #tpu.memory_space<vmem>>, vector<320x50xf32>
    %cst_36 = arith.constant dense<0.000000e+00> : vector<2x50xf32>
    %508 = tpu.matmul %506, %507, %cst_36 {dimension_numbers = #tpu.dot_dimension_numbers<[1], [0], [0], [1], [0, 0, 1, 1], [], []>} : vector<2x320xf32>, vector<320x50xf32>, vector<2x50xf32> -> vector<2x50xf32>
    %c0_37 = arith.constant 0 : index
    %c0_38 = arith.constant 0 : index
    %509 = vector.load %arg8[%c0_37, %c0_38] : memref<1x50xf32, #tpu.memory_space<vmem>>, vector<1x50xf32>
    %510 = vector.broadcast %509 : vector<1x50xf32> to vector<2x50xf32>
    %511 = arith.addf %508, %510 : vector<2x50xf32>
    %cst_39 = arith.constant 0.000000e+00 : f32
    %512 = vector.broadcast %cst_39 : f32 to vector<2x50xf32>
    %513 = arith.maximumf %511, %512 : vector<2x50xf32>
    %c0_40 = arith.constant 0 : index
    %c0_41 = arith.constant 0 : index
    %514 = vector.load %arg9[%c0_40, %c0_41] : memref<50x10xf32, #tpu.memory_space<vmem>>, vector<50x10xf32>
    %cst_42 = arith.constant dense<0.000000e+00> : vector<2x10xf32>
    %515 = tpu.matmul %513, %514, %cst_42 {dimension_numbers = #tpu.dot_dimension_numbers<[1], [0], [0], [1], [0, 0, 1, 1], [], []>} : vector<2x50xf32>, vector<50x10xf32>, vector<2x10xf32> -> vector<2x10xf32>
    %c0_43 = arith.constant 0 : index
    %c0_44 = arith.constant 0 : index
    %516 = vector.load %arg10[%c0_43, %c0_44] : memref<1x10xf32, #tpu.memory_space<vmem>>, vector<1x10xf32>
    %517 = vector.broadcast %516 : vector<1x10xf32> to vector<2x10xf32>
    %518 = arith.addf %515, %517 : vector<2x10xf32>
    %cst_45 = arith.constant dense<0xFF800000> : vector<2xf32>
    %519 = vector.multi_reduction <maximumf>, %518, %cst_45 [1] : vector<2x10xf32> to vector<2xf32>
    %520 = vector.shape_cast %519 : vector<2xf32> to vector<2x1xf32>
    %521 = vector.broadcast %520 : vector<2x1xf32> to vector<2x10xf32>
    %522 = arith.subf %518, %521 : vector<2x10xf32>
    %523 = math.exp %522 : vector<2x10xf32>
    %cst_46 = arith.constant dense<0.000000e+00> : vector<2xf32>
    %524 = vector.multi_reduction <add>, %523, %cst_46 [1] : vector<2x10xf32> to vector<2xf32>
    %525 = vector.shape_cast %524 : vector<2xf32> to vector<2x1xf32>
    %526 = math.log %525 : vector<2x1xf32>
    %527 = vector.broadcast %526 : vector<2x1xf32> to vector<2x10xf32>
    %528 = arith.subf %522, %527 : vector<2x10xf32>
    %529 = vector.shape_cast %528 : vector<2x10xf32> to vector<1x2x10xf32>
    %c0_47 = arith.constant 0 : index
    %c0_48 = arith.constant 0 : index
    %c0_49 = arith.constant 0 : index
    %530 = vector.load %arg11[%c0_47, %c0_48, %c0_49] : memref<1x2x10xf32, #tpu.memory_space<vmem>>, vector<1x2x10xf32>
    tpu.vector_store %arg11[%c0_47, %c0_48, %c0_49], %529 {strides = array<i32>} : memref<1x2x10xf32, #tpu.memory_space<vmem>>, vector<1x2x10xf32>,
    return
  }
  func.func @transform_0(%arg0: i32) -> (i32, i32, i32) {
    %c0_i32 = arith.constant 0 : i32
    %c0_i32_0 = arith.constant 0 : i32
    %c0_i32_1 = arith.constant 0 : i32
    return %c0_i32, %arg0, %c0_i32_0 : i32, i32, i32
  }
  func.func @transform_1(%arg0: i32) -> (i32, i32, i32) {
    %c0_i32 = arith.constant 0 : i32
    %c0_i32_0 = arith.constant 0 : i32
    %c0_i32_1 = arith.constant 0 : i32
    return %c0_i32, %arg0, %c0_i32_0 : i32, i32, i32
  }
  func.func @transform_2(%arg0: i32) -> (i32, i32) {
    %c0_i32 = arith.constant 0 : i32
    %c0_i32_0 = arith.constant 0 : i32
    %c0_i32_1 = arith.constant 0 : i32
    return %c0_i32, %c0_i32_0 : i32, i32
  }
  func.func @transform_3(%arg0: i32) -> (i32, i32) {
    %c0_i32 = arith.constant 0 : i32
    %c0_i32_0 = arith.constant 0 : i32
    %c0_i32_1 = arith.constant 0 : i32
    return %c0_i32, %c0_i32_0 : i32, i32
  }
  func.func @transform_4(%arg0: i32) -> (i32, i32) {
    %c0_i32 = arith.constant 0 : i32
    %c0_i32_0 = arith.constant 0 : i32
    %c0_i32_1 = arith.constant 0 : i32
    return %c0_i32, %c0_i32_0 : i32, i32
  }
  func.func @transform_5(%arg0: i32) -> (i32, i32) {
    %c0_i32 = arith.constant 0 : i32
    %c0_i32_0 = arith.constant 0 : i32
    %c0_i32_1 = arith.constant 0 : i32
    return %c0_i32, %c0_i32_0 : i32, i32
  }
  func.func @transform_6(%arg0: i32) -> (i32, i32) {
    %c0_i32 = arith.constant 0 : i32
    %c0_i32_0 = arith.constant 0 : i32
    %c0_i32_1 = arith.constant 0 : i32
    return %c0_i32, %c0_i32_0 : i32, i32
  }
  func.func @transform_7(%arg0: i32) -> (i32, i32) {
    %c0_i32 = arith.constant 0 : i32
    %c0_i32_0 = arith.constant 0 : i32
    %c0_i32_1 = arith.constant 0 : i32
    return %c0_i32, %c0_i32_0 : i32, i32
  }
  func.func @transform_8(%arg0: i32) -> (i32, i32) {
    %c0_i32 = arith.constant 0 : i32
    %c0_i32_0 = arith.constant 0 : i32
    %c0_i32_1 = arith.constant 0 : i32
    return %c0_i32, %c0_i32_0 : i32, i32
  }
  func.func @transform_9(%arg0: i32) -> (i32, i32) {
    %c0_i32 = arith.constant 0 : i32
    %c0_i32_0 = arith.constant 0 : i32
    %c0_i32_1 = arith.constant 0 : i32
    return %c0_i32, %c0_i32_0 : i32, i32
  }
  func.func @transform_10(%arg0: i32) -> (i32, i32, i32) {
    %c0_i32 = arith.constant 0 : i32
    %c0_i32_0 = arith.constant 0 : i32
    %c0_i32_1 = arith.constant 0 : i32
    return %arg0, %c0_i32, %c0_i32_0 : i32, i32, i32
  }
}

</mosaic_0001>

<llo_original>
// kernel: forward.1
$region0: #{forward.1}
  #allocation0 [shape = 'u32[]', space=smem, size = 0x4, offset = 0x4, fixed_abs, tag = 'smem constant byte address 0x4 - core index']
  #allocation1 [shape = 'u32[144,128]{1,0:T(1,128)}', space=vmem, size = 0x12000, scoped, tag = 'internal scratch']
  %s0 = inlined_call_operand.vmem [shape: f32[4,576,25], index: 0, kind: input, shape index: {}]
  %s1 = inlined_call_operand.vmem [shape: f32[4,576,25], index: 1, kind: input, shape index: {}]
  %s2 = inlined_call_operand.vmem [shape: f32[50,20], index: 2, kind: input, shape index: {}]
  %s3 = inlined_call_operand.vmem [shape: f32[1,20], index: 3, kind: input, shape index: {}]
  %s4 = inlined_call_operand.vmem [shape: f32[250,20], index: 4, kind: input, shape index: {}]
  %s5 = inlined_call_operand.vmem [shape: f32[1,20], index: 5, kind: input, shape index: {}]
  %s6 = inlined_call_operand.vmem [shape: f32[320,50], index: 6, kind: input, shape index: {}]
  %s7 = inlined_call_operand.vmem [shape: f32[1,50], index: 7, kind: input, shape index: {}]
  %s8 = inlined_call_operand.vmem [shape: f32[50,10], index: 8, kind: input, shape index: {}]
  %s9 = inlined_call_operand.vmem [shape: f32[1,10], index: 9, kind: input, shape index: {}]
  %s10 = inlined_call_operand.hbm [shape: f32[2,2,10], index: 10, kind: output, shape index: {}]
  %s11 = sld [smem:[#allocation0]]
  $region149: #{forward.1} parent=0
    _
  %s13 = ssub.s32 1, %s11
  %s14 = scalar_select 0, %s13, %s11
  $region1: #{forward.1} parent=0
    #allocation2 [shape = 'u8[1179648]{0}', space=vmem, size = 0x120000, scoped, tag = 'input window, operand 0']
    #allocation3 [shape = 'u8[1179648]{0}', space=vmem, size = 0x120000, scoped, tag = 'input window, operand 1']
    #allocation4 [shape = 'u8[2048]{0}', space=vmem, size = 0x800, scoped, tag = 'output window, operand 0']
    #allocation5 [shape = 's32[2]{0}', space=sflag, size = 0x8, scoped, tag = 'scoped memory for forward.1']
    %15 = vsyncpa [#allocation5], 0
    %s16 = scalar_lea.sflag [#allocation5], 1
    %17 = vsyncpa %s16, 0
    loop: start=0, step=1, limit=4
    $region2: #{forward.1} parent=1 // loop_pre_header
      _
    $region3: #{forward.1} parent=1 // loop_header
      %s19 = sphi 0, %s23
      %p20 = scmp.ge.s32.totalorder %s19, 4
      %s29 = sphi 0, %s31
      %s32 = sphi 0, %s29
      %s33 = sphi 0, %s32
      %s49 = sphi 0, %s33
      %s55 = sphi 0, %s57
      %s58 = sphi 0, %s55
      %s59 = sphi 0, %s58
      %s75 = sphi 0, %s59
      %s79 = sphi 0, %s79
      %s81 = sphi 0, %s79
      %s82 = sphi 0, %s81
      %s96 = sphi 0, %s82
      %s100 = sphi 0, %s100
      %s102 = sphi 0, %s100
      %s103 = sphi 0, %s102
      %s117 = sphi 0, %s103
      %s121 = sphi 0, %s121
      %s123 = sphi 0, %s121
      %s124 = sphi 0, %s123
      %s138 = sphi 0, %s124
      %s142 = sphi 0, %s142
      %s144 = sphi 0, %s142
      %s145 = sphi 0, %s144
      %s159 = sphi 0, %s145
      %s163 = sphi 0, %s163
      %s165 = sphi 0, %s163
      %s166 = sphi 0, %s165
      %s180 = sphi 0, %s166
      %s184 = sphi 0, %s184
      %s186 = sphi 0, %s184
      %s187 = sphi 0, %s186
      %s201 = sphi 0, %s187
      %s205 = sphi 0, %s205
      %s207 = sphi 0, %s205
      %s208 = sphi 0, %s207
      %s222 = sphi 0, %s208
      %s226 = sphi 0, %s226
      %s228 = sphi 0, %s226
      %s229 = sphi 0, %s228
      %s243 = sphi 0, %s229
      %s249 = sphi 0, %s251
      %s252 = sphi 0, %s249
      %s253 = sphi 0, %s252
      %s269 = sphi 0, %s253
    $region4: #{forward.1} parent=1 // loop_header_branch
      %22 = sbr.rel (%p20) target = $region8
    $region5: #{forward.1} parent=1 // loop_body
      %s24 = ssub.s32 %s19, 1
      %s25 = ssub.s32 %s19, 2
      %s26 = sadd.s32 %s19, 1
      %s27 = ssub.s32 %s19, %s26
      %p28 = scmp.eq.s32.totalorder %s27, 0
      %s30 = sadd.s32 %s29, 1
      %s31 = scalar_select %p28, %s29, %s30
      %p34 = pneg %p28
      %p35 = scmp.eq.s32.totalorder %s19, 1
      %p36 = por %p34, %p35
      %p37 = scmp.ne.s32.totalorder %s29, %s32
      %p38 = scmp.eq.s32.totalorder %s19, 0
      %p39 = por %p37, %p38
      %p40 = scmp.ne.s32.totalorder %s29, %s32
      %p41 = scmp.eq.s32.totalorder %s24, 1
      %p42 = por %p40, %p41
      %p43 = scmp.ne.s32.totalorder %s32, %s33
      %p44 = scmp.eq.s32.totalorder %s24, 0
      %p45 = por %p43, %p44
      %p46 = scmp.ne.s32.totalorder %s32, %s33
      %p47 = scmp.eq.s32.totalorder %s25, 1
      %p48 = por %p46, %p47
      %p50 = scmp.ne.s32.totalorder %s33, %s49
      %p51 = scmp.eq.s32.totalorder %s25, 0
      %p52 = por %p50, %p51
      %s53 = ssub.s32 %s19, %s26
      %p54 = scmp.eq.s32.totalorder %s53, 0
      %s56 = sadd.s32 %s55, 1
      %s57 = scalar_select %p54, %s55, %s56
      %p60 = pneg %p54
      %p61 = scmp.eq.s32.totalorder %s19, 1
      %p62 = por %p60, %p61
      %p63 = scmp.ne.s32.totalorder %s55, %s58
      %p64 = scmp.eq.s32.totalorder %s19, 0
      %p65 = por %p63, %p64
      %p66 = scmp.ne.s32.totalorder %s55, %s58
      %p67 = scmp.eq.s32.totalorder %s24, 1
      %p68 = por %p66, %p67
      %p69 = scmp.ne.s32.totalorder %s58, %s59
      %p70 = scmp.eq.s32.totalorder %s24, 0
      %p71 = por %p69, %p70
      %p72 = scmp.ne.s32.totalorder %s58, %s59
      %p73 = scmp.eq.s32.totalorder %s25, 1
      %p74 = por %p72, %p73
      %p76 = scmp.ne.s32.totalorder %s59, %s75
      %p77 = scmp.eq.s32.totalorder %s25, 0
      %p78 = por %p76, %p77
      %s80 = sadd.s32 %s79, 1
      %p83 = scmp.eq.s32.totalorder %s19, 1
      %p84 = scmp.ne.s32.totalorder %s79, %s81
      %p85 = scmp.eq.s32.totalorder %s19, 0
      %p86 = por %p84, %p85
      %p87 = scmp.ne.s32.totalorder %s79, %s81
      %p88 = scmp.eq.s32.totalorder %s24, 1
      %p89 = por %p87, %p88
      %p90 = scmp.ne.s32.totalorder %s81, %s82
      %p91 = scmp.eq.s32.totalorder %s24, 0
      %p92 = por %p90, %p91
      %p93 = scmp.ne.s32.totalorder %s81, %s82
      %p94 = scmp.eq.s32.totalorder %s25, 1
      %p95 = por %p93, %p94
      %p97 = scmp.ne.s32.totalorder %s82, %s96
      %p98 = scmp.eq.s32.totalorder %s25, 0
      %p99 = por %p97, %p98
      %s101 = sadd.s32 %s100, 1
      %p104 = scmp.eq.s32.totalorder %s19, 1
      %p105 = scmp.ne.s32.totalorder %s100, %s102
      %p106 = scmp.eq.s32.totalorder %s19, 0
      %p107 = por %p105, %p106
      %p108 = scmp.ne.s32.totalorder %s100, %s102
      %p109 = scmp.eq.s32.totalorder %s24, 1
      %p110 = por %p108, %p109
      %p111 = scmp.ne.s32.totalorder %s102, %s103
      %p112 = scmp.eq.s32.totalorder %s24, 0
      %p113 = por %p111, %p112
      %p114 = scmp.ne.s32.totalorder %s102, %s103
      %p115 = scmp.eq.s32.totalorder %s25, 1
      %p116 = por %p114, %p115
      %p118 = scmp.ne.s32.totalorder %s103, %s117
      %p119 = scmp.eq.s32.totalorder %s25, 0
      %p120 = por %p118, %p119
      %s122 = sadd.s32 %s121, 1
      %p125 = scmp.eq.s32.totalorder %s19, 1
      %p126 = scmp.ne.s32.totalorder %s121, %s123
      %p127 = scmp.eq.s32.totalorder %s19, 0
      %p128 = por %p126, %p127
      %p129 = scmp.ne.s32.totalorder %s121, %s123
      %p130 = scmp.eq.s32.totalorder %s24, 1
      %p131 = por %p129, %p130
      %p132 = scmp.ne.s32.totalorder %s123, %s124
      %p133 = scmp.eq.s32.totalorder %s24, 0
      %p134 = por %p132, %p133
      %p135 = scmp.ne.s32.totalorder %s123, %s124
      %p136 = scmp.eq.s32.totalorder %s25, 1
      %p137 = por %p135, %p136
      %p139 = scmp.ne.s32.totalorder %s124, %s138
      %p140 = scmp.eq.s32.totalorder %s25, 0
      %p141 = por %p139, %p140
      %s143 = sadd.s32 %s142, 1
      %p146 = scmp.eq.s32.totalorder %s19, 1
      %p147 = scmp.ne.s32.totalorder %s142, %s144
      %p148 = scmp.eq.s32.totalorder %s19, 0
      %p149 = por %p147, %p148
      %p150 = scmp.ne.s32.totalorder %s142, %s144
      %p151 = scmp.eq.s32.totalorder %s24, 1
      %p152 = por %p150, %p151
      %p153 = scmp.ne.s32.totalorder %s144, %s145
      %p154 = scmp.eq.s32.totalorder %s24, 0
      %p155 = por %p153, %p154
      %p156 = scmp.ne.s32.totalorder %s144, %s145
      %p157 = scmp.eq.s32.totalorder %s25, 1
      %p158 = por %p156, %p157
      %p160 = scmp.ne.s32.totalorder %s145, %s159
      %p161 = scmp.eq.s32.totalorder %s25, 0
      %p162 = por %p160, %p161
      %s164 = sadd.s32 %s163, 1
      %p167 = scmp.eq.s32.totalorder %s19, 1
      %p168 = scmp.ne.s32.totalorder %s163, %s165
      %p169 = scmp.eq.s32.totalorder %s19, 0
      %p170 = por %p168, %p169
      %p171 = scmp.ne.s32.totalorder %s163, %s165
      %p172 = scmp.eq.s32.totalorder %s24, 1
      %p173 = por %p171, %p172
      %p174 = scmp.ne.s32.totalorder %s165, %s166
      %p175 = scmp.eq.s32.totalorder %s24, 0
      %p176 = por %p174, %p175
      %p177 = scmp.ne.s32.totalorder %s165, %s166
      %p178 = scmp.eq.s32.totalorder %s25, 1
      %p179 = por %p177, %p178
      %p181 = scmp.ne.s32.totalorder %s166, %s180
      %p182 = scmp.eq.s32.totalorder %s25, 0
      %p183 = por %p181, %p182
      %s185 = sadd.s32 %s184, 1
      %p188 = scmp.eq.s32.totalorder %s19, 1
      %p189 = scmp.ne.s32.totalorder %s184, %s186
      %p190 = scmp.eq.s32.totalorder %s19, 0
      %p191 = por %p189, %p190
      %p192 = scmp.ne.s32.totalorder %s184, %s186
      %p193 = scmp.eq.s32.totalorder %s24, 1
      %p194 = por %p192, %p193
      %p195 = scmp.ne.s32.totalorder %s186, %s187
      %p196 = scmp.eq.s32.totalorder %s24, 0
      %p197 = por %p195, %p196
      %p198 = scmp.ne.s32.totalorder %s186, %s187
      %p199 = scmp.eq.s32.totalorder %s25, 1
      %p200 = por %p198, %p199
      %p202 = scmp.ne.s32.totalorder %s187, %s201
      %p203 = scmp.eq.s32.totalorder %s25, 0
      %p204 = por %p202, %p203
      %s206 = sadd.s32 %s205, 1
      %p209 = scmp.eq.s32.totalorder %s19, 1
      %p210 = scmp.ne.s32.totalorder %s205, %s207
      %p211 = scmp.eq.s32.totalorder %s19, 0
      %p212 = por %p210, %p211
      %p213 = scmp.ne.s32.totalorder %s205, %s207
      %p214 = scmp.eq.s32.totalorder %s24, 1
      %p215 = por %p213, %p214
      %p216 = scmp.ne.s32.totalorder %s207, %s208
      %p217 = scmp.eq.s32.totalorder %s24, 0
      %p218 = por %p216, %p217
      %p219 = scmp.ne.s32.totalorder %s207, %s208
      %p220 = scmp.eq.s32.totalorder %s25, 1
      %p221 = por %p219, %p220
      %p223 = scmp.ne.s32.totalorder %s208, %s222
      %p224 = scmp.eq.s32.totalorder %s25, 0
      %p225 = por %p223, %p224
      %s227 = sadd.s32 %s226, 1
      %p230 = scmp.eq.s32.totalorder %s19, 1
      %p231 = scmp.ne.s32.totalorder %s226, %s228
      %p232 = scmp.eq.s32.totalorder %s19, 0
      %p233 = por %p231, %p232
      %p234 = scmp.ne.s32.totalorder %s226, %s228
      %p235 = scmp.eq.s32.totalorder %s24, 1
      %p236 = por %p234, %p235
      %p237 = scmp.ne.s32.totalorder %s228, %s229
      %p238 = scmp.eq.s32.totalorder %s24, 0
      %p239 = por %p237, %p238
      %p240 = scmp.ne.s32.totalorder %s228, %s229
      %p241 = scmp.eq.s32.totalorder %s25, 1
      %p242 = por %p240, %p241
      %p244 = scmp.ne.s32.totalorder %s229, %s243
      %p245 = scmp.eq.s32.totalorder %s25, 0
      %p246 = por %p244, %p245
      %s247 = ssub.s32 %s19, %s26
      %p248 = scmp.eq.s32.totalorder %s247, 0
      %s250 = sadd.s32 %s249, 1
      %s251 = scalar_select %p248, %s249, %s250
      %p254 = pneg %p248
      %p255 = scmp.eq.s32.totalorder %s19, 1
      %p256 = por %p254, %p255
      %p257 = scmp.ne.s32.totalorder %s249, %s252
      %p258 = scmp.eq.s32.totalorder %s19, 0
      %p259 = por %p257, %p258
      %p260 = scmp.ne.s32.totalorder %s249, %s252
      %p261 = scmp.eq.s32.totalorder %s24, 1
      %p262 = por %p260, %p261
      %p263 = scmp.ne.s32.totalorder %s252, %s253
      %p264 = scmp.eq.s32.totalorder %s24, 0
      %p265 = por %p263, %p264
      %p266 = scmp.ne.s32.totalorder %s252, %s253
      %p267 = scmp.eq.s32.totalorder %s25, 1
      %p268 = por %p266, %p267
      %p270 = scmp.ne.s32.totalorder %s253, %s269
      %p271 = scmp.eq.s32.totalorder %s25, 0
      %p272 = por %p270, %p271
      %p273 = scmp.le.s32.totalorder 1, %s19
      %p274 = scmp.lt.s32.totalorder %s19, 3
      %p275 = pnand %p273, %p274
      %p276 = pneg %p275
      // Predicated region
      $region9: #{forward.1} parent=5 // pred_check
        _
      $region10: #{forward.1} parent=5 // pred_check_branch
        %278 = sbr.rel (%p275) target = $region12
      $region11: #{forward.1} parent=5 // pred_region
        %s279 = ssub.s32 %s19, 1
        // Predicated region
        $region13: #{forward.1} parent=11 // pred_check
          %p280 = pneg %p92
        $region14: #{forward.1} parent=11 // pred_check_branch
          %282 = sbr.rel (%p280) target = $region16
        $region15: #{forward.1} parent=11 // pred_region
          _
        $region16: #{forward.1} parent=11 // pred_fallthru
          _
        // Predicated region
        $region17: #{forward.1} parent=11 // pred_check
          %p283 = pneg %p113
        $region18: #{forward.1} parent=11 // pred_check_branch
          %285 = sbr.rel (%p283) target = $region20
        $region19: #{forward.1} parent=11 // pred_region
          _
        $region20: #{forward.1} parent=11 // pred_fallthru
          _
        // Predicated region
        $region21: #{forward.1} parent=11 // pred_check
          %p286 = pneg %p134
        $region22: #{forward.1} parent=11 // pred_check_branch
          %288 = sbr.rel (%p286) target = $region24
        $region23: #{forward.1} parent=11 // pred_region
          _
        $region24: #{forward.1} parent=11 // pred_fallthru
          _
        // Predicated region
        $region25: #{forward.1} parent=11 // pred_check
          %p289 = pneg %p155
        $region26: #{forward.1} parent=11 // pred_check_branch
          %291 = sbr.rel (%p289) target = $region28
        $region27: #{forward.1} parent=11 // pred_region
          _
        $region28: #{forward.1} parent=11 // pred_fallthru
          _
        // Predicated region
        $region29: #{forward.1} parent=11 // pred_check
          %p292 = pneg %p176
        $region30: #{forward.1} parent=11 // pred_check_branch
          %294 = sbr.rel (%p292) target = $region32
        $region31: #{forward.1} parent=11 // pred_region
          _
        $region32: #{forward.1} parent=11 // pred_fallthru
          _
        // Predicated region
        $region33: #{forward.1} parent=11 // pred_check
          %p295 = pneg %p197
        $region34: #{forward.1} parent=11 // pred_check_branch
          %297 = sbr.rel (%p295) target = $region36
        $region35: #{forward.1} parent=11 // pred_region
          _
        $region36: #{forward.1} parent=11 // pred_fallthru
          _
        // Predicated region
        $region37: #{forward.1} parent=11 // pred_check
          %p298 = pneg %p218
        $region38: #{forward.1} parent=11 // pred_check_branch
          %300 = sbr.rel (%p298) target = $region40
        $region39: #{forward.1} parent=11 // pred_region
          _
        $region40: #{forward.1} parent=11 // pred_fallthru
          _
        // Predicated region
        $region41: #{forward.1} parent=11 // pred_check
          %p301 = pneg %p239
        $region42: #{forward.1} parent=11 // pred_check_branch
          %303 = sbr.rel (%p301) target = $region44
        $region43: #{forward.1} parent=11 // pred_region
          _
        $region44: #{forward.1} parent=11 // pred_fallthru
          _
      $region12: #{forward.1} parent=5 // pred_fallthru
        _
      %p304 = scmp.lt.s32.totalorder %s19, 2
      // Predicated region
      $region45: #{forward.1} parent=5 // pred_check
        %p305 = pneg %p304
      $region46: #{forward.1} parent=5 // pred_check_branch
        %307 = sbr.rel (%p305) target = $region48
      $region47: #{forward.1} parent=5 // pred_region
        // Predicated region
        $region49: #{forward.1} parent=47 // pred_check
          %p308 = pneg %p39
        $region50: #{forward.1} parent=47 // pred_check_branch
          %310 = sbr.rel (%p308) target = $region52
        $region51: #{forward.1} parent=47 // pred_region
          %s311 = sand.u32 %s29, 1
          %s312 = sand.u32 %s29, 1
          %s313 = smul.addr %s312, 1152
          %s314 = scalar_lea.vmem [#allocation2], %s313
          %s315 = smul.u32 36, %s19
          %s316 = smul.addr %s315, 8
          %s317 = scalar_lea.vmem %s0, %s316
          // Predicated region
          $region53: #{forward.1} parent=51 // pred_check
            _
          $region54: #{forward.1} parent=51 // pred_check_branch
            %319 = sbr.rel (0) target = $region56
          $region55: #{forward.1} parent=51 // pred_region
            // Predicated region
            $region57: #{forward.1} parent=55 // pred_check
              _
            $region58: #{forward.1} parent=55 // pred_check_branch
              %321 = sbr.rel (0) target = $region60
            $region59: #{forward.1} parent=55 // pred_region
              // Predicated region
              $region72: #{forward.1} parent=59 // pred_check
                _
              $region73: #{forward.1} parent=59 // pred_check_branch
                %622 = sbr.rel (0) target = $region75
              $region74: #{forward.1} parent=59 // pred_region
                loop: start=0, step=1, limit=1
                $region76: #{forward.1} parent=74 // loop_pre_header
                  _
                $region77: #{forward.1} parent=74 // loop_header
                  %s624 = sphi 0, %s628
                  %p625 = scmp.ge.s32.totalorder %s624, 1
                  %s629 = sphi %s317, %s317
                  %s630 = sphi %s314, %s314
                $region78: #{forward.1} parent=74 // loop_header_branch
                  %627 = sbr.rel (%p625) target = $region82
                $region79: #{forward.1} parent=74 // loop_body
                  %v631 = vld [vmem:[%s629] sm:$0xff]
                  %632 = vst [vmem:[%s630] sm:$0xff] %v631
                  %v633 = vld [vmem:[%s629 + $0x8] sm:$0xff]
                  %634 = vst [vmem:[%s630 + $0x8] sm:$0xff] %v633
                  %v635 = vld [vmem:[%s629 + $0x10] sm:$0xff]
                  %636 = vst [vmem:[%s630 + $0x10] sm:$0xff] %v635
                  %v637 = vld [vmem:[%s629 + $0x18] sm:$0xff]
                  %638 = vst [vmem:[%s630 + $0x18] sm:$0xff] %v637
                  %v639 = vld [vmem:[%s629 + $0x20] sm:$0xff]
                  %640 = vst [vmem:[%s630 + $0x20] sm:$0xff] %v639
                  %v641 = vld [vmem:[%s629 + $0x28] sm:$0xff]
                  %642 = vst [vmem:[%s630 + $0x28] sm:$0xff] %v641
                  %v643 = vld [vmem:[%s629 + $0x30] sm:$0xff]
                  %644 = vst [vmem:[%s630 + $0x30] sm:$0xff] %v643
                  %v645 = vld [vmem:[%s629 + $0x38] sm:$0xff]
                  %646 = vst [vmem:[%s630 + $0x38] sm:$0xff] %v645
                  %v647 = vld [vmem:[%s629 + $0x40] sm:$0xff]
                  %648 = vst [vmem:[%s630 + $0x40] sm:$0xff] %v647
                  %v649 = vld [vmem:[%s629 + $0x48] sm:$0xff]
                  %650 = vst [vmem:[%s630 + $0x48] sm:$0xff] %v649
                  %v651 = vld [vmem:[%s629 + $0x50] sm:$0xff]
                  %652 = vst [vmem:[%s630 + $0x50] sm:$0xff] %v651
                  %v653 = vld [vmem:[%s629 + $0x58] sm:$0xff]
                  %654 = vst [vmem:[%s630 + $0x58] sm:$0xff] %v653
                  %v655 = vld [vmem:[%s629 + $0x60] sm:$0xff]
                  %656 = vst [vmem:[%s630 + $0x60] sm:$0xff] %v655
                  %v657 = vld [vmem:[%s629 + $0x68] sm:$0xff]
                  %658 = vst [vmem:[%s630 + $0x68] sm:$0xff] %v657
                  %v659 = vld [vmem:[%s629 + $0x70] sm:$0xff]
                  %660 = vst [vmem:[%s630 + $0x70] sm:$0xff] %v659
                  %v661 = vld [vmem:[%s629 + $0x78] sm:$0xff]
                  %662 = vst [vmem:[%s630 + $0x78] sm:$0xff] %v661
                  %v663 = vld [vmem:[%s629 + $0x80] sm:$0xff]
                  %664 = vst [vmem:[%s630 + $0x80] sm:$0xff] %v663
                  %v665 = vld [vmem:[%s629 + $0x88] sm:$0xff]
                  %666 = vst [vmem:[%s630 + $0x88] sm:$0xff] %v665
                  %v667 = vld [vmem:[%s629 + $0x90] sm:$0xff]
                  %668 = vst [vmem:[%s630 + $0x90] sm:$0xff] %v667
                  %v669 = vld [vmem:[%s629 + $0x98] sm:$0xff]
                  %670 = vst [vmem:[%s630 + $0x98] sm:$0xff] %v669
                  %v671 = vld [vmem:[%s629 + $0xa0] sm:$0xff]
                  %672 = vst [vmem:[%s630 + $0xa0] sm:$0xff] %v671
                  %v673 = vld [vmem:[%s629 + $0xa8] sm:$0xff]
                  %674 = vst [vmem:[%s630 + $0xa8] sm:$0xff] %v673
                  %v675 = vld [vmem:[%s629 + $0xb0] sm:$0xff]
                  %676 = vst [vmem:[%s630 + $0xb0] sm:$0xff] %v675
                  %v677 = vld [vmem:[%s629 + $0xb8] sm:$0xff]
                  %678 = vst [vmem:[%s630 + $0xb8] sm:$0xff] %v677
                  %v679 = vld [vmem:[%s629 + $0xc0] sm:$0xff]
                  %680 = vst [vmem:[%s630 + $0xc0] sm:$0xff] %v679
                  %v681 = vld [vmem:[%s629 + $0xc8] sm:$0xff]
                  %682 = vst [vmem:[%s630 + $0xc8] sm:$0xff] %v681
                  %v683 = vld [vmem:[%s629 + $0xd0] sm:$0xff]
                  %684 = vst [vmem:[%s630 + $0xd0] sm:$0xff] %v683
                  %v685 = vld [vmem:[%s629 + $0xd8] sm:$0xff]
                  %686 = vst [vmem:[%s630 + $0xd8] sm:$0xff] %v685
                  %v687 = vld [vmem:[%s629 + $0xe0] sm:$0xff]
                  %688 = vst [vmem:[%s630 + $0xe0] sm:$0xff] %v687
                  %v689 = vld [vmem:[%s629 + $0xe8] sm:$0xff]
                  %690 = vst [vmem:[%s630 + $0xe8] sm:$0xff] %v689
                  %v691 = vld [vmem:[%s629 + $0xf0] sm:$0xff]
                  %692 = vst [vmem:[%s630 + $0xf0] sm:$0xff] %v691
                  %v693 = vld [vmem:[%s629 + $0xf8] sm:$0xff]
                  %694 = vst [vmem:[%s630 + $0xf8] sm:$0xff] %v693
                  %v695 = vld [vmem:[%s629 + $0x100] sm:$0xff]
                  %696 = vst [vmem:[%s630 + $0x100] sm:$0xff] %v695
                  %v697 = vld [vmem:[%s629 + $0x108] sm:$0xff]
                  %698 = vst [vmem:[%s630 + $0x108] sm:$0xff] %v697
                  %v699 = vld [vmem:[%s629 + $0x110] sm:$0xff]
                  %700 = vst [vmem:[%s630 + $0x110] sm:$0xff] %v699
                  %v701 = vld [vmem:[%s629 + $0x118] sm:$0xff]
                  %702 = vst [vmem:[%s630 + $0x118] sm:$0xff] %v701
                  %v703 = vld [vmem:[%s629 + $0x240] sm:$0xff]
                  %704 = vst [vmem:[%s630 + $0x120] sm:$0xff] %v703
                  %v705 = vld [vmem:[%s629 + $0x248] sm:$0xff]
                  %706 = vst [vmem:[%s630 + $0x128] sm:$0xff] %v705
                  %v707 = vld [vmem:[%s629 + $0x250] sm:$0xff]
                  %708 = vst [vmem:[%s630 + $0x130] sm:$0xff] %v707
                  %v709 = vld [vmem:[%s629 + $0x258] sm:$0xff]
                  %710 = vst [vmem:[%s630 + $0x138] sm:$0xff] %v709
                  %v711 = vld [vmem:[%s629 + $0x260] sm:$0xff]
                  %712 = vst [vmem:[%s630 + $0x140] sm:$0xff] %v711
                  %v713 = vld [vmem:[%s629 + $0x268] sm:$0xff]
                  %714 = vst [vmem:[%s630 + $0x148] sm:$0xff] %v713
                  %v715 = vld [vmem:[%s629 + $0x270] sm:$0xff]
                  %716 = vst [vmem:[%s630 + $0x150] sm:$0xff] %v715
                  %v717 = vld [vmem:[%s629 + $0x278] sm:$0xff]
                  %718 = vst [vmem:[%s630 + $0x158] sm:$0xff] %v717
                  %v719 = vld [vmem:[%s629 + $0x280] sm:$0xff]
                  %720 = vst [vmem:[%s630 + $0x160] sm:$0xff] %v719
                  %v721 = vld [vmem:[%s629 + $0x288] sm:$0xff]
                  %722 = vst [vmem:[%s630 + $0x168] sm:$0xff] %v721
                  %v723 = vld [vmem:[%s629 + $0x290] sm:$0xff]
                  %724 = vst [vmem:[%s630 + $0x170] sm:$0xff] %v723
                  %v725 = vld [vmem:[%s629 + $0x298] sm:$0xff]
                  %726 = vst [vmem:[%s630 + $0x178] sm:$0xff] %v725
                  %v727 = vld [vmem:[%s629 + $0x2a0] sm:$0xff]
                  %728 = vst [vmem:[%s630 + $0x180] sm:$0xff] %v727
                  %v729 = vld [vmem:[%s629 + $0x2a8] sm:$0xff]
                  %730 = vst [vmem:[%s630 + $0x188] sm:$0xff] %v729
                  %v731 = vld [vmem:[%s629 + $0x2b0] sm:$0xff]
                  %732 = vst [vmem:[%s630 + $0x190] sm:$0xff] %v731
                  %v733 = vld [vmem:[%s629 + $0x2b8] sm:$0xff]
                  %734 = vst [vmem:[%s630 + $0x198] sm:$0xff] %v733
                  %v735 = vld [vmem:[%s629 + $0x2c0] sm:$0xff]
                  %736 = vst [vmem:[%s630 + $0x1a0] sm:$0xff] %v735
                  %v737 = vld [vmem:[%s629 + $0x2c8] sm:$0xff]
                  %738 = vst [vmem:[%s630 + $0x1a8] sm:$0xff] %v737
                  %v739 = vld [vmem:[%s629 + $0x2d0] sm:$0xff]
                  %740 = vst [vmem:[%s630 + $0x1b0] sm:$0xff] %v739
                  %v741 = vld [vmem:[%s629 + $0x2d8] sm:$0xff]
                  %742 = vst [vmem:[%s630 + $0x1b8] sm:$0xff] %v741
                  %v743 = vld [vmem:[%s629 + $0x2e0] sm:$0xff]
                  %744 = vst [vmem:[%s630 + $0x1c0] sm:$0xff] %v743
                  %v745 = vld [vmem:[%s629 + $0x2e8] sm:$0xff]
                  %746 = vst [vmem:[%s630 + $0x1c8] sm:$0xff] %v745
                  %v747 = vld [vmem:[%s629 + $0x2f0] sm:$0xff]
                  %748 = vst [vmem:[%s630 + $0x1d0] sm:$0xff] %v747
                  %v749 = vld [vmem:[%s629 + $0x2f8] sm:$0xff]
                  %750 = vst [vmem:[%s630 + $0x1d8] sm:$0xff] %v749
                  %v751 = vld [vmem:[%s629 + $0x300] sm:$0xff]
                  %752 = vst [vmem:[%s630 + $0x1e0] sm:$0xff] %v751
                  %v753 = vld [vmem:[%s629 + $0x308] sm:$0xff]
                  %754 = vst [vmem:[%s630 + $0x1e8] sm:$0xff] %v753
                  %v755 = vld [vmem:[%s629 + $0x310] sm:$0xff]
                  %756 = vst [vmem:[%s630 + $0x1f0] sm:$0xff] %v755
                  %v757 = vld [vmem:[%s629 + $0x318] sm:$0xff]
                  %758 = vst [vmem:[%s630 + $0x1f8] sm:$0xff] %v757
                  %v759 = vld [vmem:[%s629 + $0x320] sm:$0xff]
                  %760 = vst [vmem:[%s630 + $0x200] sm:$0xff] %v759
                  %v761 = vld [vmem:[%s629 + $0x328] sm:$0xff]
                  %762 = vst [vmem:[%s630 + $0x208] sm:$0xff] %v761
                  %v763 = vld [vmem:[%s629 + $0x330] sm:$0xff]
                  %764 = vst [vmem:[%s630 + $0x210] sm:$0xff] %v763
                  %v765 = vld [vmem:[%s629 + $0x338] sm:$0xff]
                  %766 = vst [vmem:[%s630 + $0x218] sm:$0xff] %v765
                  %v767 = vld [vmem:[%s629 + $0x340] sm:$0xff]
                  %768 = vst [vmem:[%s630 + $0x220] sm:$0xff] %v767
                  %v769 = vld [vmem:[%s629 + $0x348] sm:$0xff]
                  %770 = vst [vmem:[%s630 + $0x228] sm:$0xff] %v769
                  %v771 = vld [vmem:[%s629 + $0x350] sm:$0xff]
                  %772 = vst [vmem:[%s630 + $0x230] sm:$0xff] %v771
                  %v773 = vld [vmem:[%s629 + $0x358] sm:$0xff]
                  %774 = vst [vmem:[%s630 + $0x238] sm:$0xff] %v773
                  %v775 = vld [vmem:[%s629 + $0x480] sm:$0xff]
                  %776 = vst [vmem:[%s630 + $0x240] sm:$0xff] %v775
                  %v777 = vld [vmem:[%s629 + $0x488] sm:$0xff]
                  %778 = vst [vmem:[%s630 + $0x248] sm:$0xff] %v777
                  %v779 = vld [vmem:[%s629 + $0x490] sm:$0xff]
                  %780 = vst [vmem:[%s630 + $0x250] sm:$0xff] %v779
                  %v781 = vld [vmem:[%s629 + $0x498] sm:$0xff]
                  %782 = vst [vmem:[%s630 + $0x258] sm:$0xff] %v781
                  %v783 = vld [vmem:[%s629 + $0x4a0] sm:$0xff]
                  %784 = vst [vmem:[%s630 + $0x260] sm:$0xff] %v783
                  %v785 = vld [vmem:[%s629 + $0x4a8] sm:$0xff]
                  %786 = vst [vmem:[%s630 + $0x268] sm:$0xff] %v785
                  %v787 = vld [vmem:[%s629 + $0x4b0] sm:$0xff]
                  %788 = vst [vmem:[%s630 + $0x270] sm:$0xff] %v787
                  %v789 = vld [vmem:[%s629 + $0x4b8] sm:$0xff]
                  %790 = vst [vmem:[%s630 + $0x278] sm:$0xff] %v789
                  %v791 = vld [vmem:[%s629 + $0x4c0] sm:$0xff]
                  %792 = vst [vmem:[%s630 + $0x280] sm:$0xff] %v791
                  %v793 = vld [vmem:[%s629 + $0x4c8] sm:$0xff]
                  %794 = vst [vmem:[%s630 + $0x288] sm:$0xff] %v793
                  %v795 = vld [vmem:[%s629 + $0x4d0] sm:$0xff]
                  %796 = vst [vmem:[%s630 + $0x290] sm:$0xff] %v795
                  %v797 = vld [vmem:[%s629 + $0x4d8] sm:$0xff]
                  %798 = vst [vmem:[%s630 + $0x298] sm:$0xff] %v797
                  %v799 = vld [vmem:[%s629 + $0x4e0] sm:$0xff]
                  %800 = vst [vmem:[%s630 + $0x2a0] sm:$0xff] %v799
                  %v801 = vld [vmem:[%s629 + $0x4e8] sm:$0xff]
                  %802 = vst [vmem:[%s630 + $0x2a8] sm:$0xff] %v801
                  %v803 = vld [vmem:[%s629 + $0x4f0] sm:$0xff]
                  %804 = vst [vmem:[%s630 + $0x2b0] sm:$0xff] %v803
                  %v805 = vld [vmem:[%s629 + $0x4f8] sm:$0xff]
                  %806 = vst [vmem:[%s630 + $0x2b8] sm:$0xff] %v805
                  %v807 = vld [vmem:[%s629 + $0x500] sm:$0xff]
                  %808 = vst [vmem:[%s630 + $0x2c0] sm:$0xff] %v807
                  %v809 = vld [vmem:[%s629 + $0x508] sm:$0xff]
                  %810 = vst [vmem:[%s630 + $0x2c8] sm:$0xff] %v809
                  %v811 = vld [vmem:[%s629 + $0x510] sm:$0xff]
                  %812 = vst [vmem:[%s630 + $0x2d0] sm:$0xff] %v811
                  %v813 = vld [vmem:[%s629 + $0x518] sm:$0xff]
                  %814 = vst [vmem:[%s630 + $0x2d8] sm:$0xff] %v813
                  %v815 = vld [vmem:[%s629 + $0x520] sm:$0xff]
                  %816 = vst [vmem:[%s630 + $0x2e0] sm:$0xff] %v815
                  %v817 = vld [vmem:[%s629 + $0x528] sm:$0xff]
                  %818 = vst [vmem:[%s630 + $0x2e8] sm:$0xff] %v817
                  %v819 = vld [vmem:[%s629 + $0x530] sm:$0xff]
                  %820 = vst [vmem:[%s630 + $0x2f0] sm:$0xff] %v819
                  %v821 = vld [vmem:[%s629 + $0x538] sm:$0xff]
                  %822 = vst [vmem:[%s630 + $0x2f8] sm:$0xff] %v821
                  %v823 = vld [vmem:[%s629 + $0x540] sm:$0xff]
                  %824 = vst [vmem:[%s630 + $0x300] sm:$0xff] %v823
                  %v825 = vld [vmem:[%s629 + $0x548] sm:$0xff]
                  %826 = vst [vmem:[%s630 + $0x308] sm:$0xff] %v825
                  %v827 = vld [vmem:[%s629 + $0x550] sm:$0xff]
                  %828 = vst [vmem:[%s630 + $0x310] sm:$0xff] %v827
                  %v829 = vld [vmem:[%s629 + $0x558] sm:$0xff]
                  %830 = vst [vmem:[%s630 + $0x318] sm:$0xff] %v829
                  %v831 = vld [vmem:[%s629 + $0x560] sm:$0xff]
                  %832 = vst [vmem:[%s630 + $0x320] sm:$0xff] %v831
                  %v833 = vld [vmem:[%s629 + $0x568] sm:$0xff]
                  %834 = vst [vmem:[%s630 + $0x328] sm:$0xff] %v833
                  %v835 = vld [vmem:[%s629 + $0x570] sm:$0xff]
                  %836 = vst [vmem:[%s630 + $0x330] sm:$0xff] %v835
                  %v837 = vld [vmem:[%s629 + $0x578] sm:$0xff]
                  %838 = vst [vmem:[%s630 + $0x338] sm:$0xff] %v837
                  %v839 = vld [vmem:[%s629 + $0x580] sm:$0xff]
                  %840 = vst [vmem:[%s630 + $0x340] sm:$0xff] %v839
                  %v841 = vld [vmem:[%s629 + $0x588] sm:$0xff]
                  %842 = vst [vmem:[%s630 + $0x348] sm:$0xff] %v841
                  %v843 = vld [vmem:[%s629 + $0x590] sm:$0xff]
                  %844 = vst [vmem:[%s630 + $0x350] sm:$0xff] %v843
                  %v845 = vld [vmem:[%s629 + $0x598] sm:$0xff]
                  %846 = vst [vmem:[%s630 + $0x358] sm:$0xff] %v845
                  %v847 = vld [vmem:[%s629 + $0x6c0] sm:$0xff]
                  %848 = vst [vmem:[%s630 + $0x360] sm:$0xff] %v847
                  %v849 = vld [vmem:[%s629 + $0x6c8] sm:$0xff]
                  %850 = vst [vmem:[%s630 + $0x368] sm:$0xff] %v849
                  %v851 = vld [vmem:[%s629 + $0x6d0] sm:$0xff]
                  %852 = vst [vmem:[%s630 + $0x370] sm:$0xff] %v851
                  %v853 = vld [vmem:[%s629 + $0x6d8] sm:$0xff]
                  %854 = vst [vmem:[%s630 + $0x378] sm:$0xff] %v853
                  %v855 = vld [vmem:[%s629 + $0x6e0] sm:$0xff]
                  %856 = vst [vmem:[%s630 + $0x380] sm:$0xff] %v855
                  %v857 = vld [vmem:[%s629 + $0x6e8] sm:$0xff]
                  %858 = vst [vmem:[%s630 + $0x388] sm:$0xff] %v857
                  %v859 = vld [vmem:[%s629 + $0x6f0] sm:$0xff]
                  %860 = vst [vmem:[%s630 + $0x390] sm:$0xff] %v859
                  %v861 = vld [vmem:[%s629 + $0x6f8] sm:$0xff]
                  %862 = vst [vmem:[%s630 + $0x398] sm:$0xff] %v861
                  %v863 = vld [vmem:[%s629 + $0x700] sm:$0xff]
                  %864 = vst [vmem:[%s630 + $0x3a0] sm:$0xff] %v863
                  %v865 = vld [vmem:[%s629 + $0x708] sm:$0xff]
                  %866 = vst [vmem:[%s630 + $0x3a8] sm:$0xff] %v865
                  %v867 = vld [vmem:[%s629 + $0x710] sm:$0xff]
                  %868 = vst [vmem:[%s630 + $0x3b0] sm:$0xff] %v867
                  %v869 = vld [vmem:[%s629 + $0x718] sm:$0xff]
                  %870 = vst [vmem:[%s630 + $0x3b8] sm:$0xff] %v869
                  %v871 = vld [vmem:[%s629 + $0x720] sm:$0xff]
                  %872 = vst [vmem:[%s630 + $0x3c0] sm:$0xff] %v871
                  %v873 = vld [vmem:[%s629 + $0x728] sm:$0xff]
                  %874 = vst [vmem:[%s630 + $0x3c8] sm:$0xff] %v873
                  %v875 = vld [vmem:[%s629 + $0x730] sm:$0xff]
                  %876 = vst [vmem:[%s630 + $0x3d0] sm:$0xff] %v875
                  %v877 = vld [vmem:[%s629 + $0x738] sm:$0xff]
                  %878 = vst [vmem:[%s630 + $0x3d8] sm:$0xff] %v877
                  %v879 = vld [vmem:[%s629 + $0x740] sm:$0xff]
                  %880 = vst [vmem:[%s630 + $0x3e0] sm:$0xff] %v879
                  %v881 = vld [vmem:[%s629 + $0x748] sm:$0xff]
                  %882 = vst [vmem:[%s630 + $0x3e8] sm:$0xff] %v881
                  %v883 = vld [vmem:[%s629 + $0x750] sm:$0xff]
                  %884 = vst [vmem:[%s630 + $0x3f0] sm:$0xff] %v883
                  %v885 = vld [vmem:[%s629 + $0x758] sm:$0xff]
                  %886 = vst [vmem:[%s630 + $0x3f8] sm:$0xff] %v885
                  %v887 = vld [vmem:[%s629 + $0x760] sm:$0xff]
                  %888 = vst [vmem:[%s630 + $0x400] sm:$0xff] %v887
                  %v889 = vld [vmem:[%s629 + $0x768] sm:$0xff]
                  %890 = vst [vmem:[%s630 + $0x408] sm:$0xff] %v889
                  %v891 = vld [vmem:[%s629 + $0x770] sm:$0xff]
                  %892 = vst [vmem:[%s630 + $0x410] sm:$0xff] %v891
                  %v893 = vld [vmem:[%s629 + $0x778] sm:$0xff]
                  %894 = vst [vmem:[%s630 + $0x418] sm:$0xff] %v893
                  %v895 = vld [vmem:[%s629 + $0x780] sm:$0xff]
                  %896 = vst [vmem:[%s630 + $0x420] sm:$0xff] %v895
                  %v897 = vld [vmem:[%s629 + $0x788] sm:$0xff]
                  %898 = vst [vmem:[%s630 + $0x428] sm:$0xff] %v897
                  %v899 = vld [vmem:[%s629 + $0x790] sm:$0xff]
                  %900 = vst [vmem:[%s630 + $0x430] sm:$0xff] %v899
                  %v901 = vld [vmem:[%s629 + $0x798] sm:$0xff]
                  %902 = vst [vmem:[%s630 + $0x438] sm:$0xff] %v901
                  %v903 = vld [vmem:[%s629 + $0x7a0] sm:$0xff]
                  %904 = vst [vmem:[%s630 + $0x440] sm:$0xff] %v903
                  %v905 = vld [vmem:[%s629 + $0x7a8] sm:$0xff]
                  %906 = vst [vmem:[%s630 + $0x448] sm:$0xff] %v905
                  %v907 = vld [vmem:[%s629 + $0x7b0] sm:$0xff]
                  %908 = vst [vmem:[%s630 + $0x450] sm:$0xff] %v907
                  %v909 = vld [vmem:[%s629 + $0x7b8] sm:$0xff]
                  %910 = vst [vmem:[%s630 + $0x458] sm:$0xff] %v909
                  %v911 = vld [vmem:[%s629 + $0x7c0] sm:$0xff]
                  %912 = vst [vmem:[%s630 + $0x460] sm:$0xff] %v911
                  %v913 = vld [vmem:[%s629 + $0x7c8] sm:$0xff]
                  %914 = vst [vmem:[%s630 + $0x468] sm:$0xff] %v913
                  %v915 = vld [vmem:[%s629 + $0x7d0] sm:$0xff]
                  %916 = vst [vmem:[%s630 + $0x470] sm:$0xff] %v915
                  %v917 = vld [vmem:[%s629 + $0x7d8] sm:$0xff]
                  %918 = vst [vmem:[%s630 + $0x478] sm:$0xff] %v917
                $region80: #{forward.1} parent=74 // loop_footer
                  %s628 = sadd.s32 1, %s624
                $region81: #{forward.1} parent=74 // loop_footer_branch
                  %623 = sbr.rel target = $region77
                $region82: #{forward.1} parent=74 // loop_exit
                  _
              $region75: #{forward.1} parent=59 // pred_fallthru
                _
              // Predicated region
              $region83: #{forward.1} parent=59 // pred_check
                _
              $region84: #{forward.1} parent=59 // pred_check_branch
                %920 = sbr.rel target = $region86
              $region85: #{forward.1} parent=59 // pred_region
                _
              $region86: #{forward.1} parent=59 // pred_fallthru
                _
            $region60: #{forward.1} parent=55 // pred_fallthru
              _
            // Predicated region
            $region61: #{forward.1} parent=55 // pred_check
              _
            $region62: #{forward.1} parent=55 // pred_check_branch
              %323 = sbr.rel target = $region64
            $region63: #{forward.1} parent=55 // pred_region
              loop: start=0, step=1, limit=1
              $region65: #{forward.1} parent=63 // loop_pre_header
                _
              $region66: #{forward.1} parent=63 // loop_header
                %s326 = sphi 0, %s330
                %p327 = scmp.ge.s32.totalorder %s326, 1
                %s331 = sphi %s317, %s317
                %s332 = sphi %s314, %s314
              $region67: #{forward.1} parent=63 // loop_header_branch
                %329 = sbr.rel (%p327) target = $region71
              $region68: #{forward.1} parent=63 // loop_body
                %v333 = vld [vmem:[%s331] sm:$0xff]
                %334 = vst [vmem:[%s332] sm:$0xff] %v333
                %v335 = vld [vmem:[%s331 + $0x8] sm:$0xff]
                %336 = vst [vmem:[%s332 + $0x8] sm:$0xff] %v335
                %v337 = vld [vmem:[%s331 + $0x10] sm:$0xff]
                %338 = vst [vmem:[%s332 + $0x10] sm:$0xff] %v337
                %v339 = vld [vmem:[%s331 + $0x18] sm:$0xff]
                %340 = vst [vmem:[%s332 + $0x18] sm:$0xff] %v339
                %v341 = vld [vmem:[%s331 + $0x20] sm:$0xff]
                %342 = vst [vmem:[%s332 + $0x20] sm:$0xff] %v341
                %v343 = vld [vmem:[%s331 + $0x28] sm:$0xff]
                %344 = vst [vmem:[%s332 + $0x28] sm:$0xff] %v343
                %v345 = vld [vmem:[%s331 + $0x30] sm:$0xff]
                %346 = vst [vmem:[%s332 + $0x30] sm:$0xff] %v345
                %v347 = vld [vmem:[%s331 + $0x38] sm:$0xff]
                %348 = vst [vmem:[%s332 + $0x38] sm:$0xff] %v347
                %v349 = vld [vmem:[%s331 + $0x40] sm:$0xff]
                %350 = vst [vmem:[%s332 + $0x40] sm:$0xff] %v349
                %v351 = vld [vmem:[%s331 + $0x48] sm:$0xff]
                %352 = vst [vmem:[%s332 + $0x48] sm:$0xff] %v351
                %v353 = vld [vmem:[%s331 + $0x50] sm:$0xff]
                %354 = vst [vmem:[%s332 + $0x50] sm:$0xff] %v353
                %v355 = vld [vmem:[%s331 + $0x58] sm:$0xff]
                %356 = vst [vmem:[%s332 + $0x58] sm:$0xff] %v355
                %v357 = vld [vmem:[%s331 + $0x60] sm:$0xff]
                %358 = vst [vmem:[%s332 + $0x60] sm:$0xff] %v357
                %v359 = vld [vmem:[%s331 + $0x68] sm:$0xff]
                %360 = vst [vmem:[%s332 + $0x68] sm:$0xff] %v359
                %v361 = vld [vmem:[%s331 + $0x70] sm:$0xff]
                %362 = vst [vmem:[%s332 + $0x70] sm:$0xff] %v361
                %v363 = vld [vmem:[%s331 + $0x78] sm:$0xff]
                %364 = vst [vmem:[%s332 + $0x78] sm:$0xff] %v363
                %v365 = vld [vmem:[%s331 + $0x80] sm:$0xff]
                %366 = vst [vmem:[%s332 + $0x80] sm:$0xff] %v365
                %v367 = vld [vmem:[%s331 + $0x88] sm:$0xff]
                %368 = vst [vmem:[%s332 + $0x88] sm:$0xff] %v367
                %v369 = vld [vmem:[%s331 + $0x90] sm:$0xff]
                %370 = vst [vmem:[%s332 + $0x90] sm:$0xff] %v369
                %v371 = vld [vmem:[%s331 + $0x98] sm:$0xff]
                %372 = vst [vmem:[%s332 + $0x98] sm:$0xff] %v371
                %v373 = vld [vmem:[%s331 + $0xa0] sm:$0xff]
                %374 = vst [vmem:[%s332 + $0xa0] sm:$0xff] %v373
                %v375 = vld [vmem:[%s331 + $0xa8] sm:$0xff]
                %376 = vst [vmem:[%s332 + $0xa8] sm:$0xff] %v375
                %v377 = vld [vmem:[%s331 + $0xb0] sm:$0xff]
                %378 = vst [vmem:[%s332 + $0xb0] sm:$0xff] %v377
                %v379 = vld [vmem:[%s331 + $0xb8] sm:$0xff]
                %380 = vst [vmem:[%s332 + $0xb8] sm:$0xff] %v379
                %v381 = vld [vmem:[%s331 + $0xc0] sm:$0xff]
                %382 = vst [vmem:[%s332 + $0xc0] sm:$0xff] %v381
                %v383 = vld [vmem:[%s331 + $0xc8] sm:$0xff]
                %384 = vst [vmem:[%s332 + $0xc8] sm:$0xff] %v383
                %v385 = vld [vmem:[%s331 + $0xd0] sm:$0xff]
                %386 = vst [vmem:[%s332 + $0xd0] sm:$0xff] %v385
                %v387 = vld [vmem:[%s331 + $0xd8] sm:$0xff]
                %388 = vst [vmem:[%s332 + $0xd8] sm:$0xff] %v387
                %v389 = vld [vmem:[%s331 + $0xe0] sm:$0xff]
                %390 = vst [vmem:[%s332 + $0xe0] sm:$0xff] %v389
                %v391 = vld [vmem:[%s331 + $0xe8] sm:$0xff]
                %392 = vst [vmem:[%s332 + $0xe8] sm:$0xff] %v391
                %v393 = vld [vmem:[%s331 + $0xf0] sm:$0xff]
                %394 = vst [vmem:[%s332 + $0xf0] sm:$0xff] %v393
                %v395 = vld [vmem:[%s331 + $0xf8] sm:$0xff]
                %396 = vst [vmem:[%s332 + $0xf8] sm:$0xff] %v395
                %v397 = vld [vmem:[%s331 + $0x100] sm:$0xff]
                %398 = vst [vmem:[%s332 + $0x100] sm:$0xff] %v397
                %v399 = vld [vmem:[%s331 + $0x108] sm:$0xff]
                %400 = vst [vmem:[%s332 + $0x108] sm:$0xff] %v399
                %v401 = vld [vmem:[%s331 + $0x110] sm:$0xff]
                %402 = vst [vmem:[%s332 + $0x110] sm:$0xff] %v401
                %v403 = vld [vmem:[%s331 + $0x118] sm:$0xff]
                %404 = vst [vmem:[%s332 + $0x118] sm:$0xff] %v403
                %v405 = vld [vmem:[%s331 + $0x240] sm:$0xff]
                %406 = vst [vmem:[%s332 + $0x120] sm:$0xff] %v405
                %v407 = vld [vmem:[%s331 + $0x248] sm:$0xff]
                %408 = vst [vmem:[%s332 + $0x128] sm:$0xff] %v407
                %v409 = vld [vmem:[%s331 + $0x250] sm:$0xff]
                %410 = vst [vmem:[%s332 + $0x130] sm:$0xff] %v409
                %v411 = vld [vmem:[%s331 + $0x258] sm:$0xff]
                %412 = vst [vmem:[%s332 + $0x138] sm:$0xff] %v411
                %v413 = vld [vmem:[%s331 + $0x260] sm:$0xff]
                %414 = vst [vmem:[%s332 + $0x140] sm:$0xff] %v413
                %v415 = vld [vmem:[%s331 + $0x268] sm:$0xff]
                %416 = vst [vmem:[%s332 + $0x148] sm:$0xff] %v415
                %v417 = vld [vmem:[%s331 + $0x270] sm:$0xff]
                %418 = vst [vmem:[%s332 + $0x150] sm:$0xff] %v417
                %v419 = vld [vmem:[%s331 + $0x278] sm:$0xff]
                %420 = vst [vmem:[%s332 + $0x158] sm:$0xff] %v419
                %v421 = vld [vmem:[%s331 + $0x280] sm:$0xff]
                %422 = vst [vmem:[%s332 + $0x160] sm:$0xff] %v421
                %v423 = vld [vmem:[%s331 + $0x288] sm:$0xff]
                %424 = vst [vmem:[%s332 + $0x168] sm:$0xff] %v423
                %v425 = vld [vmem:[%s331 + $0x290] sm:$0xff]
                %426 = vst [vmem:[%s332 + $0x170] sm:$0xff] %v425
                %v427 = vld [vmem:[%s331 + $0x298] sm:$0xff]
                %428 = vst [vmem:[%s332 + $0x178] sm:$0xff] %v427
                %v429 = vld [vmem:[%s331 + $0x2a0] sm:$0xff]
                %430 = vst [vmem:[%s332 + $0x180] sm:$0xff] %v429
                %v431 = vld [vmem:[%s331 + $0x2a8] sm:$0xff]
                %432 = vst [vmem:[%s332 + $0x188] sm:$0xff] %v431
                %v433 = vld [vmem:[%s331 + $0x2b0] sm:$0xff]
                %434 = vst [vmem:[%s332 + $0x190] sm:$0xff] %v433
                %v435 = vld [vmem:[%s331 + $0x2b8] sm:$0xff]
                %436 = vst [vmem:[%s332 + $0x198] sm:$0xff] %v435
                %v437 = vld [vmem:[%s331 + $0x2c0] sm:$0xff]
                %438 = vst [vmem:[%s332 + $0x1a0] sm:$0xff] %v437
                %v439 = vld [vmem:[%s331 + $0x2c8] sm:$0xff]
                %440 = vst [vmem:[%s332 + $0x1a8] sm:$0xff] %v439
                %v441 = vld [vmem:[%s331 + $0x2d0] sm:$0xff]
                %442 = vst [vmem:[%s332 + $0x1b0] sm:$0xff] %v441
                %v443 = vld [vmem:[%s331 + $0x2d8] sm:$0xff]
                %444 = vst [vmem:[%s332 + $0x1b8] sm:$0xff] %v443
                %v445 = vld [vmem:[%s331 + $0x2e0] sm:$0xff]
                %446 = vst [vmem:[%s332 + $0x1c0] sm:$0xff] %v445
                %v447 = vld [vmem:[%s331 + $0x2e8] sm:$0xff]
                %448 = vst [vmem:[%s332 + $0x1c8] sm:$0xff] %v447
                %v449 = vld [vmem:[%s331 + $0x2f0] sm:$0xff]
                %450 = vst [vmem:[%s332 + $0x1d0] sm:$0xff] %v449
                %v451 = vld [vmem:[%s331 + $0x2f8] sm:$0xff]
                %452 = vst [vmem:[%s332 + $0x1d8] sm:$0xff] %v451
                %v453 = vld [vmem:[%s331 + $0x300] sm:$0xff]
                %454 = vst [vmem:[%s332 + $0x1e0] sm:$0xff] %v453
                %v455 = vld [vmem:[%s331 + $0x308] sm:$0xff]
                %456 = vst [vmem:[%s332 + $0x1e8] sm:$0xff] %v455
                %v457 = vld [vmem:[%s331 + $0x310] sm:$0xff]
                %458 = vst [vmem:[%s332 + $0x1f0] sm:$0xff] %v457
                %v459 = vld [vmem:[%s331 + $0x318] sm:$0xff]
                %460 = vst [vmem:[%s332 + $0x1f8] sm:$0xff] %v459
                %v461 = vld [vmem:[%s331 + $0x320] sm:$0xff]
                %462 = vst [vmem:[%s332 + $0x200] sm:$0xff] %v461
                %v463 = vld [vmem:[%s331 + $0x328] sm:$0xff]
                %464 = vst [vmem:[%s332 + $0x208] sm:$0xff] %v463
                %v465 = vld [vmem:[%s331 + $0x330] sm:$0xff]
                %466 = vst [vmem:[%s332 + $0x210] sm:$0xff] %v465
                %v467 = vld [vmem:[%s331 + $0x338] sm:$0xff]
                %468 = vst [vmem:[%s332 + $0x218] sm:$0xff] %v467
                %v469 = vld [vmem:[%s331 + $0x340] sm:$0xff]
                %470 = vst [vmem:[%s332 + $0x220] sm:$0xff] %v469
                %v471 = vld [vmem:[%s331 + $0x348] sm:$0xff]
                %472 = vst [vmem:[%s332 + $0x228] sm:$0xff] %v471
                %v473 = vld [vmem:[%s331 + $0x350] sm:$0xff]
                %474 = vst [vmem:[%s332 + $0x230] sm:$0xff] %v473
                %v475 = vld [vmem:[%s331 + $0x358] sm:$0xff]
                %476 = vst [vmem:[%s332 + $0x238] sm:$0xff] %v475
                %v477 = vld [vmem:[%s331 + $0x480] sm:$0xff]
                %478 = vst [vmem:[%s332 + $0x240] sm:$0xff] %v477
                %v479 = vld [vmem:[%s331 + $0x488] sm:$0xff]
                %480 = vst [vmem:[%s332 + $0x248] sm:$0xff] %v479
                %v481 = vld [vmem:[%s331 + $0x490] sm:$0xff]
                %482 = vst [vmem:[%s332 + $0x250] sm:$0xff] %v481
                %v483 = vld [vmem:[%s331 + $0x498] sm:$0xff]
                %484 = vst [vmem:[%s332 + $0x258] sm:$0xff] %v483
                %v485 = vld [vmem:[%s331 + $0x4a0] sm:$0xff]
                %486 = vst [vmem:[%s332 + $0x260] sm:$0xff] %v485
                %v487 = vld [vmem:[%s331 + $0x4a8] sm:$0xff]
                %488 = vst [vmem:[%s332 + $0x268] sm:$0xff] %v487
                %v489 = vld [vmem:[%s331 + $0x4b0] sm:$0xff]
                %490 = vst [vmem:[%s332 + $0x270] sm:$0xff] %v489
                %v491 = vld [vmem:[%s331 + $0x4b8] sm:$0xff]
                %492 = vst [vmem:[%s332 + $0x278] sm:$0xff] %v491
                %v493 = vld [vmem:[%s331 + $0x4c0] sm:$0xff]
                %494 = vst [vmem:[%s332 + $0x280] sm:$0xff] %v493
                %v495 = vld [vmem:[%s331 + $0x4c8] sm:$0xff]
                %496 = vst [vmem:[%s332 + $0x288] sm:$0xff] %v495
                %v497 = vld [vmem:[%s331 + $0x4d0] sm:$0xff]
                %498 = vst [vmem:[%s332 + $0x290] sm:$0xff] %v497
                %v499 = vld [vmem:[%s331 + $0x4d8] sm:$0xff]
                %500 = vst [vmem:[%s332 + $0x298] sm:$0xff] %v499
                %v501 = vld [vmem:[%s331 + $0x4e0] sm:$0xff]
                %502 = vst [vmem:[%s332 + $0x2a0] sm:$0xff] %v501
                %v503 = vld [vmem:[%s331 + $0x4e8] sm:$0xff]
                %504 = vst [vmem:[%s332 + $0x2a8] sm:$0xff] %v503
                %v505 = vld [vmem:[%s331 + $0x4f0] sm:$0xff]
                %506 = vst [vmem:[%s332 + $0x2b0] sm:$0xff] %v505
                %v507 = vld [vmem:[%s331 + $0x4f8] sm:$0xff]
                %508 = vst [vmem:[%s332 + $0x2b8] sm:$0xff] %v507
                %v509 = vld [vmem:[%s331 + $0x500] sm:$0xff]
                %510 = vst [vmem:[%s332 + $0x2c0] sm:$0xff] %v509
                %v511 = vld [vmem:[%s331 + $0x508] sm:$0xff]
                %512 = vst [vmem:[%s332 + $0x2c8] sm:$0xff] %v511
                %v513 = vld [vmem:[%s331 + $0x510] sm:$0xff]
                %514 = vst [vmem:[%s332 + $0x2d0] sm:$0xff] %v513
                %v515 = vld [vmem:[%s331 + $0x518] sm:$0xff]
                %516 = vst [vmem:[%s332 + $0x2d8] sm:$0xff] %v515
                %v517 = vld [vmem:[%s331 + $0x520] sm:$0xff]
                %518 = vst [vmem:[%s332 + $0x2e0] sm:$0xff] %v517
                %v519 = vld [vmem:[%s331 + $0x528] sm:$0xff]
                %520 = vst [vmem:[%s332 + $0x2e8] sm:$0xff] %v519
                %v521 = vld [vmem:[%s331 + $0x530] sm:$0xff]
                %522 = vst [vmem:[%s332 + $0x2f0] sm:$0xff] %v521
                %v523 = vld [vmem:[%s331 + $0x538] sm:$0xff]
                %524 = vst [vmem:[%s332 + $0x2f8] sm:$0xff] %v523
                %v525 = vld [vmem:[%s331 + $0x540] sm:$0xff]
                %526 = vst [vmem:[%s332 + $0x300] sm:$0xff] %v525
                %v527 = vld [vmem:[%s331 + $0x548] sm:$0xff]
                %528 = vst [vmem:[%s332 + $0x308] sm:$0xff] %v527
                %v529 = vld [vmem:[%s331 + $0x550] sm:$0xff]
                %530 = vst [vmem:[%s332 + $0x310] sm:$0xff] %v529
                %v531 = vld [vmem:[%s331 + $0x558] sm:$0xff]
                %532 = vst [vmem:[%s332 + $0x318] sm:$0xff] %v531
                %v533 = vld [vmem:[%s331 + $0x560] sm:$0xff]
                %534 = vst [vmem:[%s332 + $0x320] sm:$0xff] %v533
                %v535 = vld [vmem:[%s331 + $0x568] sm:$0xff]
                %536 = vst [vmem:[%s332 + $0x328] sm:$0xff] %v535
                %v537 = vld [vmem:[%s331 + $0x570] sm:$0xff]
                %538 = vst [vmem:[%s332 + $0x330] sm:$0xff] %v537
                %v539 = vld [vmem:[%s331 + $0x578] sm:$0xff]
                %540 = vst [vmem:[%s332 + $0x338] sm:$0xff] %v539
                %v541 = vld [vmem:[%s331 + $0x580] sm:$0xff]
                %542 = vst [vmem:[%s332 + $0x340] sm:$0xff] %v541
                %v543 = vld [vmem:[%s331 + $0x588] sm:$0xff]
                %544 = vst [vmem:[%s332 + $0x348] sm:$0xff] %v543
                %v545 = vld [vmem:[%s331 + $0x590] sm:$0xff]
                %546 = vst [vmem:[%s332 + $0x350] sm:$0xff] %v545
                %v547 = vld [vmem:[%s331 + $0x598] sm:$0xff]
                %548 = vst [vmem:[%s332 + $0x358] sm:$0xff] %v547
                %v549 = vld [vmem:[%s331 + $0x6c0] sm:$0xff]
                %550 = vst [vmem:[%s332 + $0x360] sm:$0xff] %v549
                %v551 = vld [vmem:[%s331 + $0x6c8] sm:$0xff]
                %552 = vst [vmem:[%s332 + $0x368] sm:$0xff] %v551
                %v553 = vld [vmem:[%s331 + $0x6d0] sm:$0xff]
                %554 = vst [vmem:[%s332 + $0x370] sm:$0xff] %v553
                %v555 = vld [vmem:[%s331 + $0x6d8] sm:$0xff]
                %556 = vst [vmem:[%s332 + $0x378] sm:$0xff] %v555
                %v557 = vld [vmem:[%s331 + $0x6e0] sm:$0xff]
                %558 = vst [vmem:[%s332 + $0x380] sm:$0xff] %v557
                %v559 = vld [vmem:[%s331 + $0x6e8] sm:$0xff]
                %560 = vst [vmem:[%s332 + $0x388] sm:$0xff] %v559
                %v561 = vld [vmem:[%s331 + $0x6f0] sm:$0xff]
                %562 = vst [vmem:[%s332 + $0x390] sm:$0xff] %v561
                %v563 = vld [vmem:[%s331 + $0x6f8] sm:$0xff]
                %564 = vst [vmem:[%s332 + $0x398] sm:$0xff] %v563
                %v565 = vld [vmem:[%s331 + $0x700] sm:$0xff]
                %566 = vst [vmem:[%s332 + $0x3a0] sm:$0xff] %v565
                %v567 = vld [vmem:[%s331 + $0x708] sm:$0xff]
                %568 = vst [vmem:[%s332 + $0x3a8] sm:$0xff] %v567
                %v569 = vld [vmem:[%s331 + $0x710] sm:$0xff]
                %570 = vst [vmem:[%s332 + $0x3b0] sm:$0xff] %v569
                %v571 = vld [vmem:[%s331 + $0x718] sm:$0xff]
                %572 = vst [vmem:[%s332 + $0x3b8] sm:$0xff] %v571
                %v573 = vld [vmem:[%s331 + $0x720] sm:$0xff]
                %574 = vst [vmem:[%s332 + $0x3c0] sm:$0xff] %v573
                %v575 = vld [vmem:[%s331 + $0x728] sm:$0xff]
                %576 = vst [vmem:[%s332 + $0x3c8] sm:$0xff] %v575
                %v577 = vld [vmem:[%s331 + $0x730] sm:$0xff]
                %578 = vst [vmem:[%s332 + $0x3d0] sm:$0xff] %v577
                %v579 = vld [vmem:[%s331 + $0x738] sm:$0xff]
                %580 = vst [vmem:[%s332 + $0x3d8] sm:$0xff] %v579
                %v581 = vld [vmem:[%s331 + $0x740] sm:$0xff]
                %582 = vst [vmem:[%s332 + $0x3e0] sm:$0xff] %v581
                %v583 = vld [vmem:[%s331 + $0x748] sm:$0xff]
                %584 = vst [vmem:[%s332 + $0x3e8] sm:$0xff] %v583
                %v585 = vld [vmem:[%s331 + $0x750] sm:$0xff]
                %586 = vst [vmem:[%s332 + $0x3f0] sm:$0xff] %v585
                %v587 = vld [vmem:[%s331 + $0x758] sm:$0xff]
                %588 = vst [vmem:[%s332 + $0x3f8] sm:$0xff] %v587
                %v589 = vld [vmem:[%s331 + $0x760] sm:$0xff]
                %590 = vst [vmem:[%s332 + $0x400] sm:$0xff] %v589
                %v591 = vld [vmem:[%s331 + $0x768] sm:$0xff]
                %592 = vst [vmem:[%s332 + $0x408] sm:$0xff] %v591
                %v593 = vld [vmem:[%s331 + $0x770] sm:$0xff]
                %594 = vst [vmem:[%s332 + $0x410] sm:$0xff] %v593
                %v595 = vld [vmem:[%s331 + $0x778] sm:$0xff]
                %596 = vst [vmem:[%s332 + $0x418] sm:$0xff] %v595
                %v597 = vld [vmem:[%s331 + $0x780] sm:$0xff]
                %598 = vst [vmem:[%s332 + $0x420] sm:$0xff] %v597
                %v599 = vld [vmem:[%s331 + $0x788] sm:$0xff]
                %600 = vst [vmem:[%s332 + $0x428] sm:$0xff] %v599
                %v601 = vld [vmem:[%s331 + $0x790] sm:$0xff]
                %602 = vst [vmem:[%s332 + $0x430] sm:$0xff] %v601
                %v603 = vld [vmem:[%s331 + $0x798] sm:$0xff]
                %604 = vst [vmem:[%s332 + $0x438] sm:$0xff] %v603
                %v605 = vld [vmem:[%s331 + $0x7a0] sm:$0xff]
                %606 = vst [vmem:[%s332 + $0x440] sm:$0xff] %v605
                %v607 = vld [vmem:[%s331 + $0x7a8] sm:$0xff]
                %608 = vst [vmem:[%s332 + $0x448] sm:$0xff] %v607
                %v609 = vld [vmem:[%s331 + $0x7b0] sm:$0xff]
                %610 = vst [vmem:[%s332 + $0x450] sm:$0xff] %v609
                %v611 = vld [vmem:[%s331 + $0x7b8] sm:$0xff]
                %612 = vst [vmem:[%s332 + $0x458] sm:$0xff] %v611
                %v613 = vld [vmem:[%s331 + $0x7c0] sm:$0xff]
                %614 = vst [vmem:[%s332 + $0x460] sm:$0xff] %v613
                %v615 = vld [vmem:[%s331 + $0x7c8] sm:$0xff]
                %616 = vst [vmem:[%s332 + $0x468] sm:$0xff] %v615
                %v617 = vld [vmem:[%s331 + $0x7d0] sm:$0xff]
                %618 = vst [vmem:[%s332 + $0x470] sm:$0xff] %v617
                %v619 = vld [vmem:[%s331 + $0x7d8] sm:$0xff]
                %620 = vst [vmem:[%s332 + $0x478] sm:$0xff] %v619
              $region69: #{forward.1} parent=63 // loop_footer
                %s330 = sadd.s32 1, %s326
              $region70: #{forward.1} parent=63 // loop_footer_branch
                %325 = sbr.rel target = $region66
              $region71: #{forward.1} parent=63 // loop_exit
                _
            $region64: #{forward.1} parent=55 // pred_fallthru
              _
          $region56: #{forward.1} parent=51 // pred_fallthru
            _
          %921 = vnop
        $region52: #{forward.1} parent=47 // pred_fallthru
          _
        // Predicated region
        $region87: #{forward.1} parent=47 // pred_check
          %p922 = pneg %p65
        $region88: #{forward.1} parent=47 // pred_check_branch
          %924 = sbr.rel (%p922) target = $region90
        $region89: #{forward.1} parent=47 // pred_region
          %s925 = sand.u32 %s55, 1
          %s926 = sand.u32 %s55, 1
          %s927 = smul.addr %s926, 1152
          %s928 = scalar_lea.vmem [#allocation3], %s927
          %s929 = smul.u32 36, %s19
          %s930 = smul.addr %s929, 8
          %s931 = scalar_lea.vmem %s1, %s930
          // Predicated region
          $region91: #{forward.1} parent=89 // pred_check
            _
          $region92: #{forward.1} parent=89 // pred_check_branch
            %933 = sbr.rel (0) target = $region94
          $region93: #{forward.1} parent=89 // pred_region
            // Predicated region
            $region95: #{forward.1} parent=93 // pred_check
              _
            $region96: #{forward.1} parent=93 // pred_check_branch
              %935 = sbr.rel (0) target = $region98
            $region97: #{forward.1} parent=93 // pred_region
              // Predicated region
              $region110: #{forward.1} parent=97 // pred_check
                _
              $region111: #{forward.1} parent=97 // pred_check_branch
                %1236 = sbr.rel (0) target = $region113
              $region112: #{forward.1} parent=97 // pred_region
                loop: start=0, step=1, limit=1
                $region114: #{forward.1} parent=112 // loop_pre_header
                  _
                $region115: #{forward.1} parent=112 // loop_header
                  %s1238 = sphi 0, %s1242
                  %p1239 = scmp.ge.s32.totalorder %s1238, 1
                  %s1243 = sphi %s931, %s931
                  %s1244 = sphi %s928, %s928
                $region116: #{forward.1} parent=112 // loop_header_branch
                  %1241 = sbr.rel (%p1239) target = $region120
                $region117: #{forward.1} parent=112 // loop_body
                  %v1245 = vld [vmem:[%s1243] sm:$0xff]
                  %1246 = vst [vmem:[%s1244] sm:$0xff] %v1245
                  %v1247 = vld [vmem:[%s1243 + $0x8] sm:$0xff]
                  %1248 = vst [vmem:[%s1244 + $0x8] sm:$0xff] %v1247
                  %v1249 = vld [vmem:[%s1243 + $0x10] sm:$0xff]
                  %1250 = vst [vmem:[%s1244 + $0x10] sm:$0xff] %v1249
                  %v1251 = vld [vmem:[%s1243 + $0x18] sm:$0xff]
                  %1252 = vst [vmem:[%s1244 + $0x18] sm:$0xff] %v1251
                  %v1253 = vld [vmem:[%s1243 + $0x20] sm:$0xff]
                  %1254 = vst [vmem:[%s1244 + $0x20] sm:$0xff] %v1253
                  %v1255 = vld [vmem:[%s1243 + $0x28] sm:$0xff]
                  %1256 = vst [vmem:[%s1244 + $0x28] sm:$0xff] %v1255
                  %v1257 = vld [vmem:[%s1243 + $0x30] sm:$0xff]
                  %1258 = vst [vmem:[%s1244 + $0x30] sm:$0xff] %v1257
                  %v1259 = vld [vmem:[%s1243 + $0x38] sm:$0xff]
                  %1260 = vst [vmem:[%s1244 + $0x38] sm:$0xff] %v1259
                  %v1261 = vld [vmem:[%s1243 + $0x40] sm:$0xff]
                  %1262 = vst [vmem:[%s1244 + $0x40] sm:$0xff] %v1261
                  %v1263 = vld [vmem:[%s1243 + $0x48] sm:$0xff]
                  %1264 = vst [vmem:[%s1244 + $0x48] sm:$0xff] %v1263
                  %v1265 = vld [vmem:[%s1243 + $0x50] sm:$0xff]
                  %1266 = vst [vmem:[%s1244 + $0x50] sm:$0xff] %v1265
                  %v1267 = vld [vmem:[%s1243 + $0x58] sm:$0xff]
                  %1268 = vst [vmem:[%s1244 + $0x58] sm:$0xff] %v1267
                  %v1269 = vld [vmem:[%s1243 + $0x60] sm:$0xff]
                  %1270 = vst [vmem:[%s1244 + $0x60] sm:$0xff] %v1269
                  %v1271 = vld [vmem:[%s1243 + $0x68] sm:$0xff]
                  %1272 = vst [vmem:[%s1244 + $0x68] sm:$0xff] %v1271
                  %v1273 = vld [vmem:[%s1243 + $0x70] sm:$0xff]
                  %1274 = vst [vmem:[%s1244 + $0x70] sm:$0xff] %v1273
                  %v1275 = vld [vmem:[%s1243 + $0x78] sm:$0xff]
                  %1276 = vst [vmem:[%s1244 + $0x78] sm:$0xff] %v1275
                  %v1277 = vld [vmem:[%s1243 + $0x80] sm:$0xff]
                  %1278 = vst [vmem:[%s1244 + $0x80] sm:$0xff] %v1277
                  %v1279 = vld [vmem:[%s1243 + $0x88] sm:$0xff]
                  %1280 = vst [vmem:[%s1244 + $0x88] sm:$0xff] %v1279
                  %v1281 = vld [vmem:[%s1243 + $0x90] sm:$0xff]
                  %1282 = vst [vmem:[%s1244 + $0x90] sm:$0xff] %v1281
                  %v1283 = vld [vmem:[%s1243 + $0x98] sm:$0xff]
                  %1284 = vst [vmem:[%s1244 + $0x98] sm:$0xff] %v1283
                  %v1285 = vld [vmem:[%s1243 + $0xa0] sm:$0xff]
                  %1286 = vst [vmem:[%s1244 + $0xa0] sm:$0xff] %v1285
                  %v1287 = vld [vmem:[%s1243 + $0xa8] sm:$0xff]
                  %1288 = vst [vmem:[%s1244 + $0xa8] sm:$0xff] %v1287
                  %v1289 = vld [vmem:[%s1243 + $0xb0] sm:$0xff]
                  %1290 = vst [vmem:[%s1244 + $0xb0] sm:$0xff] %v1289
                  %v1291 = vld [vmem:[%s1243 + $0xb8] sm:$0xff]
                  %1292 = vst [vmem:[%s1244 + $0xb8] sm:$0xff] %v1291
                  %v1293 = vld [vmem:[%s1243 + $0xc0] sm:$0xff]
                  %1294 = vst [vmem:[%s1244 + $0xc0] sm:$0xff] %v1293
                  %v1295 = vld [vmem:[%s1243 + $0xc8] sm:$0xff]
                  %1296 = vst [vmem:[%s1244 + $0xc8] sm:$0xff] %v1295
                  %v1297 = vld [vmem:[%s1243 + $0xd0] sm:$0xff]
                  %1298 = vst [vmem:[%s1244 + $0xd0] sm:$0xff] %v1297
                  %v1299 = vld [vmem:[%s1243 + $0xd8] sm:$0xff]
                  %1300 = vst [vmem:[%s1244 + $0xd8] sm:$0xff] %v1299
                  %v1301 = vld [vmem:[%s1243 + $0xe0] sm:$0xff]
                  %1302 = vst [vmem:[%s1244 + $0xe0] sm:$0xff] %v1301
                  %v1303 = vld [vmem:[%s1243 + $0xe8] sm:$0xff]
                  %1304 = vst [vmem:[%s1244 + $0xe8] sm:$0xff] %v1303
                  %v1305 = vld [vmem:[%s1243 + $0xf0] sm:$0xff]
                  %1306 = vst [vmem:[%s1244 + $0xf0] sm:$0xff] %v1305
                  %v1307 = vld [vmem:[%s1243 + $0xf8] sm:$0xff]
                  %1308 = vst [vmem:[%s1244 + $0xf8] sm:$0xff] %v1307
                  %v1309 = vld [vmem:[%s1243 + $0x100] sm:$0xff]
                  %1310 = vst [vmem:[%s1244 + $0x100] sm:$0xff] %v1309
                  %v1311 = vld [vmem:[%s1243 + $0x108] sm:$0xff]
                  %1312 = vst [vmem:[%s1244 + $0x108] sm:$0xff] %v1311
                  %v1313 = vld [vmem:[%s1243 + $0x110] sm:$0xff]
                  %1314 = vst [vmem:[%s1244 + $0x110] sm:$0xff] %v1313
                  %v1315 = vld [vmem:[%s1243 + $0x118] sm:$0xff]
                  %1316 = vst [vmem:[%s1244 + $0x118] sm:$0xff] %v1315
                  %v1317 = vld [vmem:[%s1243 + $0x240] sm:$0xff]
                  %1318 = vst [vmem:[%s1244 + $0x120] sm:$0xff] %v1317
                  %v1319 = vld [vmem:[%s1243 + $0x248] sm:$0xff]
                  %1320 = vst [vmem:[%s1244 + $0x128] sm:$0xff] %v1319
                  %v1321 = vld [vmem:[%s1243 + $0x250] sm:$0xff]
                  %1322 = vst [vmem:[%s1244 + $0x130] sm:$0xff] %v1321
                  %v1323 = vld [vmem:[%s1243 + $0x258] sm:$0xff]
                  %1324 = vst [vmem:[%s1244 + $0x138] sm:$0xff] %v1323
                  %v1325 = vld [vmem:[%s1243 + $0x260] sm:$0xff]
                  %1326 = vst [vmem:[%s1244 + $0x140] sm:$0xff] %v1325
                  %v1327 = vld [vmem:[%s1243 + $0x268] sm:$0xff]
                  %1328 = vst [vmem:[%s1244 + $0x148] sm:$0xff] %v1327
                  %v1329 = vld [vmem:[%s1243 + $0x270] sm:$0xff]
                  %1330 = vst [vmem:[%s1244 + $0x150] sm:$0xff] %v1329
                  %v1331 = vld [vmem:[%s1243 + $0x278] sm:$0xff]
                  %1332 = vst [vmem:[%s1244 + $0x158] sm:$0xff] %v1331
                  %v1333 = vld [vmem:[%s1243 + $0x280] sm:$0xff]
                  %1334 = vst [vmem:[%s1244 + $0x160] sm:$0xff] %v1333
                  %v1335 = vld [vmem:[%s1243 + $0x288] sm:$0xff]
                  %1336 = vst [vmem:[%s1244 + $0x168] sm:$0xff] %v1335
                  %v1337 = vld [vmem:[%s1243 + $0x290] sm:$0xff]
                  %1338 = vst [vmem:[%s1244 + $0x170] sm:$0xff] %v1337
                  %v1339 = vld [vmem:[%s1243 + $0x298] sm:$0xff]
                  %1340 = vst [vmem:[%s1244 + $0x178] sm:$0xff] %v1339
                  %v1341 = vld [vmem:[%s1243 + $0x2a0] sm:$0xff]
                  %1342 = vst [vmem:[%s1244 + $0x180] sm:$0xff] %v1341
                  %v1343 = vld [vmem:[%s1243 + $0x2a8] sm:$0xff]
                  %1344 = vst [vmem:[%s1244 + $0x188] sm:$0xff] %v1343
                  %v1345 = vld [vmem:[%s1243 + $0x2b0] sm:$0xff]
                  %1346 = vst [vmem:[%s1244 + $0x190] sm:$0xff] %v1345
                  %v1347 = vld [vmem:[%s1243 + $0x2b8] sm:$0xff]
                  %1348 = vst [vmem:[%s1244 + $0x198] sm:$0xff] %v1347
                  %v1349 = vld [vmem:[%s1243 + $0x2c0] sm:$0xff]
                  %1350 = vst [vmem:[%s1244 + $0x1a0] sm:$0xff] %v1349
                  %v1351 = vld [vmem:[%s1243 + $0x2c8] sm:$0xff]
                  %1352 = vst [vmem:[%s1244 + $0x1a8] sm:$0xff] %v1351
                  %v1353 = vld [vmem:[%s1243 + $0x2d0] sm:$0xff]
                  %1354 = vst [vmem:[%s1244 + $0x1b0] sm:$0xff] %v1353
                  %v1355 = vld [vmem:[%s1243 + $0x2d8] sm:$0xff]
                  %1356 = vst [vmem:[%s1244 + $0x1b8] sm:$0xff] %v1355
                  %v1357 = vld [vmem:[%s1243 + $0x2e0] sm:$0xff]
                  %1358 = vst [vmem:[%s1244 + $0x1c0] sm:$0xff] %v1357
                  %v1359 = vld [vmem:[%s1243 + $0x2e8] sm:$0xff]
                  %1360 = vst [vmem:[%s1244 + $0x1c8] sm:$0xff] %v1359
                  %v1361 = vld [vmem:[%s1243 + $0x2f0] sm:$0xff]
                  %1362 = vst [vmem:[%s1244 + $0x1d0] sm:$0xff] %v1361
                  %v1363 = vld [vmem:[%s1243 + $0x2f8] sm:$0xff]
                  %1364 = vst [vmem:[%s1244 + $0x1d8] sm:$0xff] %v1363
                  %v1365 = vld [vmem:[%s1243 + $0x300] sm:$0xff]
                  %1366 = vst [vmem:[%s1244 + $0x1e0] sm:$0xff] %v1365
                  %v1367 = vld [vmem:[%s1243 + $0x308] sm:$0xff]
                  %1368 = vst [vmem:[%s1244 + $0x1e8] sm:$0xff] %v1367
                  %v1369 = vld [vmem:[%s1243 + $0x310] sm:$0xff]
                  %1370 = vst [vmem:[%s1244 + $0x1f0] sm:$0xff] %v1369
                  %v1371 = vld [vmem:[%s1243 + $0x318] sm:$0xff]
                  %1372 = vst [vmem:[%s1244 + $0x1f8] sm:$0xff] %v1371
                  %v1373 = vld [vmem:[%s1243 + $0x320] sm:$0xff]
                  %1374 = vst [vmem:[%s1244 + $0x200] sm:$0xff] %v1373
                  %v1375 = vld [vmem:[%s1243 + $0x328] sm:$0xff]
                  %1376 = vst [vmem:[%s1244 + $0x208] sm:$0xff] %v1375
                  %v1377 = vld [vmem:[%s1243 + $0x330] sm:$0xff]
                  %1378 = vst [vmem:[%s1244 + $0x210] sm:$0xff] %v1377
                  %v1379 = vld [vmem:[%s1243 + $0x338] sm:$0xff]
                  %1380 = vst [vmem:[%s1244 + $0x218] sm:$0xff] %v1379
                  %v1381 = vld [vmem:[%s1243 + $0x340] sm:$0xff]
                  %1382 = vst [vmem:[%s1244 + $0x220] sm:$0xff] %v1381
                  %v1383 = vld [vmem:[%s1243 + $0x348] sm:$0xff]
                  %1384 = vst [vmem:[%s1244 + $0x228] sm:$0xff] %v1383
                  %v1385 = vld [vmem:[%s1243 + $0x350] sm:$0xff]
                  %1386 = vst [vmem:[%s1244 + $0x230] sm:$0xff] %v1385
                  %v1387 = vld [vmem:[%s1243 + $0x358] sm:$0xff]
                  %1388 = vst [vmem:[%s1244 + $0x238] sm:$0xff] %v1387
                  %v1389 = vld [vmem:[%s1243 + $0x480] sm:$0xff]
                  %1390 = vst [vmem:[%s1244 + $0x240] sm:$0xff] %v1389
                  %v1391 = vld [vmem:[%s1243 + $0x488] sm:$0xff]
                  %1392 = vst [vmem:[%s1244 + $0x248] sm:$0xff] %v1391
                  %v1393 = vld [vmem:[%s1243 + $0x490] sm:$0xff]
                  %1394 = vst [vmem:[%s1244 + $0x250] sm:$0xff] %v1393
                  %v1395 = vld [vmem:[%s1243 + $0x498] sm:$0xff]
                  %1396 = vst [vmem:[%s1244 + $0x258] sm:$0xff] %v1395
                  %v1397 = vld [vmem:[%s1243 + $0x4a0] sm:$0xff]
                  %1398 = vst [vmem:[%s1244 + $0x260] sm:$0xff] %v1397
                  %v1399 = vld [vmem:[%s1243 + $0x4a8] sm:$0xff]
                  %1400 = vst [vmem:[%s1244 + $0x268] sm:$0xff] %v1399
                  %v1401 = vld [vmem:[%s1243 + $0x4b0] sm:$0xff]
                  %1402 = vst [vmem:[%s1244 + $0x270] sm:$0xff] %v1401
                  %v1403 = vld [vmem:[%s1243 + $0x4b8] sm:$0xff]
                  %1404 = vst [vmem:[%s1244 + $0x278] sm:$0xff] %v1403
                  %v1405 = vld [vmem:[%s1243 + $0x4c0] sm:$0xff]
                  %1406 = vst [vmem:[%s1244 + $0x280] sm:$0xff] %v1405
                  %v1407 = vld [vmem:[%s1243 + $0x4c8] sm:$0xff]
                  %1408 = vst [vmem:[%s1244 + $0x288] sm:$0xff] %v1407
                  %v1409 = vld [vmem:[%s1243 + $0x4d0] sm:$0xff]
                  %1410 = vst [vmem:[%s1244 + $0x290] sm:$0xff] %v1409
                  %v1411 = vld [vmem:[%s1243 + $0x4d8] sm:$0xff]
                  %1412 = vst [vmem:[%s1244 + $0x298] sm:$0xff] %v1411
                  %v1413 = vld [vmem:[%s1243 + $0x4e0] sm:$0xff]
                  %1414 = vst [vmem:[%s1244 + $0x2a0] sm:$0xff] %v1413
                  %v1415 = vld [vmem:[%s1243 + $0x4e8] sm:$0xff]
                  %1416 = vst [vmem:[%s1244 + $0x2a8] sm:$0xff] %v1415
                  %v1417 = vld [vmem:[%s1243 + $0x4f0] sm:$0xff]
                  %1418 = vst [vmem:[%s1244 + $0x2b0] sm:$0xff] %v1417
                  %v1419 = vld [vmem:[%s1243 + $0x4f8] sm:$0xff]
                  %1420 = vst [vmem:[%s1244 + $0x2b8] sm:$0xff] %v1419
                  %v1421 = vld [vmem:[%s1243 + $0x500] sm:$0xff]
                  %1422 = vst [vmem:[%s1244 + $0x2c0] sm:$0xff] %v1421
                  %v1423 = vld [vmem:[%s1243 + $0x508] sm:$0xff]
                  %1424 = vst [vmem:[%s1244 + $0x2c8] sm:$0xff] %v1423
                  %v1425 = vld [vmem:[%s1243 + $0x510] sm:$0xff]
                  %1426 = vst [vmem:[%s1244 + $0x2d0] sm:$0xff] %v1425
                  %v1427 = vld [vmem:[%s1243 + $0x518] sm:$0xff]
                  %1428 = vst [vmem:[%s1244 + $0x2d8] sm:$0xff] %v1427
                  %v1429 = vld [vmem:[%s1243 + $0x520] sm:$0xff]
                  %1430 = vst [vmem:[%s1244 + $0x2e0] sm:$0xff] %v1429
                  %v1431 = vld [vmem:[%s1243 + $0x528] sm:$0xff]
                  %1432 = vst [vmem:[%s1244 + $0x2e8] sm:$0xff] %v1431
                  %v1433 = vld [vmem:[%s1243 + $0x530] sm:$0xff]
                  %1434 = vst [vmem:[%s1244 + $0x2f0] sm:$0xff] %v1433
                  %v1435 = vld [vmem:[%s1243 + $0x538] sm:$0xff]
                  %1436 = vst [vmem:[%s1244 + $0x2f8] sm:$0xff] %v1435
                  %v1437 = vld [vmem:[%s1243 + $0x540] sm:$0xff]
                  %1438 = vst [vmem:[%s1244 + $0x300] sm:$0xff] %v1437
                  %v1439 = vld [vmem:[%s1243 + $0x548] sm:$0xff]
                  %1440 = vst [vmem:[%s1244 + $0x308] sm:$0xff] %v1439
                  %v1441 = vld [vmem:[%s1243 + $0x550] sm:$0xff]
                  %1442 = vst [vmem:[%s1244 + $0x310] sm:$0xff] %v1441
                  %v1443 = vld [vmem:[%s1243 + $0x558] sm:$0xff]
                  %1444 = vst [vmem:[%s1244 + $0x318] sm:$0xff] %v1443
                  %v1445 = vld [vmem:[%s1243 + $0x560] sm:$0xff]
                  %1446 = vst [vmem:[%s1244 + $0x320] sm:$0xff] %v1445
                  %v1447 = vld [vmem:[%s1243 + $0x568] sm:$0xff]
                  %1448 = vst [vmem:[%s1244 + $0x328] sm:$0xff] %v1447
                  %v1449 = vld [vmem:[%s1243 + $0x570] sm:$0xff]
                  %1450 = vst [vmem:[%s1244 + $0x330] sm:$0xff] %v1449
                  %v1451 = vld [vmem:[%s1243 + $0x578] sm:$0xff]
                  %1452 = vst [vmem:[%s1244 + $0x338] sm:$0xff] %v1451
                  %v1453 = vld [vmem:[%s1243 + $0x580] sm:$0xff]
                  %1454 = vst [vmem:[%s1244 + $0x340] sm:$0xff] %v1453
                  %v1455 = vld [vmem:[%s1243 + $0x588] sm:$0xff]
                  %1456 = vst [vmem:[%s1244 + $0x348] sm:$0xff] %v1455
                  %v1457 = vld [vmem:[%s1243 + $0x590] sm:$0xff]
                  %1458 = vst [vmem:[%s1244 + $0x350] sm:$0xff] %v1457
                  %v1459 = vld [vmem:[%s1243 + $0x598] sm:$0xff]
                  %1460 = vst [vmem:[%s1244 + $0x358] sm:$0xff] %v1459
                  %v1461 = vld [vmem:[%s1243 + $0x6c0] sm:$0xff]
                  %1462 = vst [vmem:[%s1244 + $0x360] sm:$0xff] %v1461
                  %v1463 = vld [vmem:[%s1243 + $0x6c8] sm:$0xff]
                  %1464 = vst [vmem:[%s1244 + $0x368] sm:$0xff] %v1463
                  %v1465 = vld [vmem:[%s1243 + $0x6d0] sm:$0xff]
                  %1466 = vst [vmem:[%s1244 + $0x370] sm:$0xff] %v1465
                  %v1467 = vld [vmem:[%s1243 + $0x6d8] sm:$0xff]
                  %1468 = vst [vmem:[%s1244 + $0x378] sm:$0xff] %v1467
                  %v1469 = vld [vmem:[%s1243 + $0x6e0] sm:$0xff]
                  %1470 = vst [vmem:[%s1244 + $0x380] sm:$0xff] %v1469
                  %v1471 = vld [vmem:[%s1243 + $0x6e8] sm:$0xff]
                  %1472 = vst [vmem:[%s1244 + $0x388] sm:$0xff] %v1471
                  %v1473 = vld [vmem:[%s1243 + $0x6f0] sm:$0xff]
                  %1474 = vst [vmem:[%s1244 + $0x390] sm:$0xff] %v1473
                  %v1475 = vld [vmem:[%s1243 + $0x6f8] sm:$0xff]
                  %1476 = vst [vmem:[%s1244 + $0x398] sm:$0xff] %v1475
                  %v1477 = vld [vmem:[%s1243 + $0x700] sm:$0xff]
                  %1478 = vst [vmem:[%s1244 + $0x3a0] sm:$0xff] %v1477
                  %v1479 = vld [vmem:[%s1243 + $0x708] sm:$0xff]
                  %1480 = vst [vmem:[%s1244 + $0x3a8] sm:$0xff] %v1479
                  %v1481 = vld [vmem:[%s1243 + $0x710] sm:$0xff]
                  %1482 = vst [vmem:[%s1244 + $0x3b0] sm:$0xff] %v1481
                  %v1483 = vld [vmem:[%s1243 + $0x718] sm:$0xff]
                  %1484 = vst [vmem:[%s1244 + $0x3b8] sm:$0xff] %v1483
                  %v1485 = vld [vmem:[%s1243 + $0x720] sm:$0xff]
                  %1486 = vst [vmem:[%s1244 + $0x3c0] sm:$0xff] %v1485
                  %v1487 = vld [vmem:[%s1243 + $0x728] sm:$0xff]
                  %1488 = vst [vmem:[%s1244 + $0x3c8] sm:$0xff] %v1487
                  %v1489 = vld [vmem:[%s1243 + $0x730] sm:$0xff]
                  %1490 = vst [vmem:[%s1244 + $0x3d0] sm:$0xff] %v1489
                  %v1491 = vld [vmem:[%s1243 + $0x738] sm:$0xff]
                  %1492 = vst [vmem:[%s1244 + $0x3d8] sm:$0xff] %v1491
                  %v1493 = vld [vmem:[%s1243 + $0x740] sm:$0xff]
                  %1494 = vst [vmem:[%s1244 + $0x3e0] sm:$0xff] %v1493
                  %v1495 = vld [vmem:[%s1243 + $0x748] sm:$0xff]
                  %1496 = vst [vmem:[%s1244 + $0x3e8] sm:$0xff] %v1495
                  %v1497 = vld [vmem:[%s1243 + $0x750] sm:$0xff]
                  %1498 = vst [vmem:[%s1244 + $0x3f0] sm:$0xff] %v1497
                  %v1499 = vld [vmem:[%s1243 + $0x758] sm:$0xff]
                  %1500 = vst [vmem:[%s1244 + $0x3f8] sm:$0xff] %v1499
                  %v1501 = vld [vmem:[%s1243 + $0x760] sm:$0xff]
                  %1502 = vst [vmem:[%s1244 + $0x400] sm:$0xff] %v1501
                  %v1503 = vld [vmem:[%s1243 + $0x768] sm:$0xff]
                  %1504 = vst [vmem:[%s1244 + $0x408] sm:$0xff] %v1503
                  %v1505 = vld [vmem:[%s1243 + $0x770] sm:$0xff]
                  %1506 = vst [vmem:[%s1244 + $0x410] sm:$0xff] %v1505
                  %v1507 = vld [vmem:[%s1243 + $0x778] sm:$0xff]
                  %1508 = vst [vmem:[%s1244 + $0x418] sm:$0xff] %v1507
                  %v1509 = vld [vmem:[%s1243 + $0x780] sm:$0xff]
                  %1510 = vst [vmem:[%s1244 + $0x420] sm:$0xff] %v1509
                  %v1511 = vld [vmem:[%s1243 + $0x788] sm:$0xff]
                  %1512 = vst [vmem:[%s1244 + $0x428] sm:$0xff] %v1511
                  %v1513 = vld [vmem:[%s1243 + $0x790] sm:$0xff]
                  %1514 = vst [vmem:[%s1244 + $0x430] sm:$0xff] %v1513
                  %v1515 = vld [vmem:[%s1243 + $0x798] sm:$0xff]
                  %1516 = vst [vmem:[%s1244 + $0x438] sm:$0xff] %v1515
                  %v1517 = vld [vmem:[%s1243 + $0x7a0] sm:$0xff]
                  %1518 = vst [vmem:[%s1244 + $0x440] sm:$0xff] %v1517
                  %v1519 = vld [vmem:[%s1243 + $0x7a8] sm:$0xff]
                  %1520 = vst [vmem:[%s1244 + $0x448] sm:$0xff] %v1519
                  %v1521 = vld [vmem:[%s1243 + $0x7b0] sm:$0xff]
                  %1522 = vst [vmem:[%s1244 + $0x450] sm:$0xff] %v1521
                  %v1523 = vld [vmem:[%s1243 + $0x7b8] sm:$0xff]
                  %1524 = vst [vmem:[%s1244 + $0x458] sm:$0xff] %v1523
                  %v1525 = vld [vmem:[%s1243 + $0x7c0] sm:$0xff]
                  %1526 = vst [vmem:[%s1244 + $0x460] sm:$0xff] %v1525
                  %v1527 = vld [vmem:[%s1243 + $0x7c8] sm:$0xff]
                  %1528 = vst [vmem:[%s1244 + $0x468] sm:$0xff] %v1527
                  %v1529 = vld [vmem:[%s1243 + $0x7d0] sm:$0xff]
                  %1530 = vst [vmem:[%s1244 + $0x470] sm:$0xff] %v1529
                  %v1531 = vld [vmem:[%s1243 + $0x7d8] sm:$0xff]
                  %1532 = vst [vmem:[%s1244 + $0x478] sm:$0xff] %v1531
                $region118: #{forward.1} parent=112 // loop_footer
                  %s1242 = sadd.s32 1, %s1238
                $region119: #{forward.1} parent=112 // loop_footer_branch
                  %1237 = sbr.rel target = $region115
                $region120: #{forward.1} parent=112 // loop_exit
                  _
              $region113: #{forward.1} parent=97 // pred_fallthru
                _
              // Predicated region
              $region121: #{forward.1} parent=97 // pred_check
                _
              $region122: #{forward.1} parent=97 // pred_check_branch
                %1534 = sbr.rel target = $region124
              $region123: #{forward.1} parent=97 // pred_region
                _
              $region124: #{forward.1} parent=97 // pred_fallthru
                _
            $region98: #{forward.1} parent=93 // pred_fallthru
              _
            // Predicated region
            $region99: #{forward.1} parent=93 // pred_check
              _
            $region100: #{forward.1} parent=93 // pred_check_branch
              %937 = sbr.rel target = $region102
            $region101: #{forward.1} parent=93 // pred_region
              loop: start=0, step=1, limit=1
              $region103: #{forward.1} parent=101 // loop_pre_header
                _
              $region104: #{forward.1} parent=101 // loop_header
                %s940 = sphi 0, %s944
                %p941 = scmp.ge.s32.totalorder %s940, 1
                %s945 = sphi %s931, %s931
                %s946 = sphi %s928, %s928
              $region105: #{forward.1} parent=101 // loop_header_branch
                %943 = sbr.rel (%p941) target = $region109
              $region106: #{forward.1} parent=101 // loop_body
                %v947 = vld [vmem:[%s945] sm:$0xff]
                %948 = vst [vmem:[%s946] sm:$0xff] %v947
                %v949 = vld [vmem:[%s945 + $0x8] sm:$0xff]
                %950 = vst [vmem:[%s946 + $0x8] sm:$0xff] %v949
                %v951 = vld [vmem:[%s945 + $0x10] sm:$0xff]
                %952 = vst [vmem:[%s946 + $0x10] sm:$0xff] %v951
                %v953 = vld [vmem:[%s945 + $0x18] sm:$0xff]
                %954 = vst [vmem:[%s946 + $0x18] sm:$0xff] %v953
                %v955 = vld [vmem:[%s945 + $0x20] sm:$0xff]
                %956 = vst [vmem:[%s946 + $0x20] sm:$0xff] %v955
                %v957 = vld [vmem:[%s945 + $0x28] sm:$0xff]
                %958 = vst [vmem:[%s946 + $0x28] sm:$0xff] %v957
                %v959 = vld [vmem:[%s945 + $0x30] sm:$0xff]
                %960 = vst [vmem:[%s946 + $0x30] sm:$0xff] %v959
                %v961 = vld [vmem:[%s945 + $0x38] sm:$0xff]
                %962 = vst [vmem:[%s946 + $0x38] sm:$0xff] %v961
                %v963 = vld [vmem:[%s945 + $0x40] sm:$0xff]
                %964 = vst [vmem:[%s946 + $0x40] sm:$0xff] %v963
                %v965 = vld [vmem:[%s945 + $0x48] sm:$0xff]
                %966 = vst [vmem:[%s946 + $0x48] sm:$0xff] %v965
                %v967 = vld [vmem:[%s945 + $0x50] sm:$0xff]
                %968 = vst [vmem:[%s946 + $0x50] sm:$0xff] %v967
                %v969 = vld [vmem:[%s945 + $0x58] sm:$0xff]
                %970 = vst [vmem:[%s946 + $0x58] sm:$0xff] %v969
                %v971 = vld [vmem:[%s945 + $0x60] sm:$0xff]
                %972 = vst [vmem:[%s946 + $0x60] sm:$0xff] %v971
                %v973 = vld [vmem:[%s945 + $0x68] sm:$0xff]
                %974 = vst [vmem:[%s946 + $0x68] sm:$0xff] %v973
                %v975 = vld [vmem:[%s945 + $0x70] sm:$0xff]
                %976 = vst [vmem:[%s946 + $0x70] sm:$0xff] %v975
                %v977 = vld [vmem:[%s945 + $0x78] sm:$0xff]
                %978 = vst [vmem:[%s946 + $0x78] sm:$0xff] %v977
                %v979 = vld [vmem:[%s945 + $0x80] sm:$0xff]
                %980 = vst [vmem:[%s946 + $0x80] sm:$0xff] %v979
                %v981 = vld [vmem:[%s945 + $0x88] sm:$0xff]
                %982 = vst [vmem:[%s946 + $0x88] sm:$0xff] %v981
                %v983 = vld [vmem:[%s945 + $0x90] sm:$0xff]
                %984 = vst [vmem:[%s946 + $0x90] sm:$0xff] %v983
                %v985 = vld [vmem:[%s945 + $0x98] sm:$0xff]
                %986 = vst [vmem:[%s946 + $0x98] sm:$0xff] %v985
                %v987 = vld [vmem:[%s945 + $0xa0] sm:$0xff]
                %988 = vst [vmem:[%s946 + $0xa0] sm:$0xff] %v987
                %v989 = vld [vmem:[%s945 + $0xa8] sm:$0xff]
                %990 = vst [vmem:[%s946 + $0xa8] sm:$0xff] %v989
                %v991 = vld [vmem:[%s945 + $0xb0] sm:$0xff]
                %992 = vst [vmem:[%s946 + $0xb0] sm:$0xff] %v991
                %v993 = vld [vmem:[%s945 + $0xb8] sm:$0xff]
                %994 = vst [vmem:[%s946 + $0xb8] sm:$0xff] %v993
                %v995 = vld [vmem:[%s945 + $0xc0] sm:$0xff]
                %996 = vst [vmem:[%s946 + $0xc0] sm:$0xff] %v995
                %v997 = vld [vmem:[%s945 + $0xc8] sm:$0xff]
                %998 = vst [vmem:[%s946 + $0xc8] sm:$0xff] %v997
                %v999 = vld [vmem:[%s945 + $0xd0] sm:$0xff]
                %1000 = vst [vmem:[%s946 + $0xd0] sm:$0xff] %v999
                %v1001 = vld [vmem:[%s945 + $0xd8] sm:$0xff]
                %1002 = vst [vmem:[%s946 + $0xd8] sm:$0xff] %v1001
                %v1003 = vld [vmem:[%s945 + $0xe0] sm:$0xff]
                %1004 = vst [vmem:[%s946 + $0xe0] sm:$0xff] %v1003
                %v1005 = vld [vmem:[%s945 + $0xe8] sm:$0xff]
                %1006 = vst [vmem:[%s946 + $0xe8] sm:$0xff] %v1005
                %v1007 = vld [vmem:[%s945 + $0xf0] sm:$0xff]
                %1008 = vst [vmem:[%s946 + $0xf0] sm:$0xff] %v1007
                %v1009 = vld [vmem:[%s945 + $0xf8] sm:$0xff]
                %1010 = vst [vmem:[%s946 + $0xf8] sm:$0xff] %v1009
                %v1011 = vld [vmem:[%s945 + $0x100] sm:$0xff]
                %1012 = vst [vmem:[%s946 + $0x100] sm:$0xff] %v1011
                %v1013 = vld [vmem:[%s945 + $0x108] sm:$0xff]
                %1014 = vst [vmem:[%s946 + $0x108] sm:$0xff] %v1013
                %v1015 = vld [vmem:[%s945 + $0x110] sm:$0xff]
                %1016 = vst [vmem:[%s946 + $0x110] sm:$0xff] %v1015
                %v1017 = vld [vmem:[%s945 + $0x118] sm:$0xff]
                %1018 = vst [vmem:[%s946 + $0x118] sm:$0xff] %v1017
                %v1019 = vld [vmem:[%s945 + $0x240] sm:$0xff]
                %1020 = vst [vmem:[%s946 + $0x120] sm:$0xff] %v1019
                %v1021 = vld [vmem:[%s945 + $0x248] sm:$0xff]
                %1022 = vst [vmem:[%s946 + $0x128] sm:$0xff] %v1021
                %v1023 = vld [vmem:[%s945 + $0x250] sm:$0xff]
                %1024 = vst [vmem:[%s946 + $0x130] sm:$0xff] %v1023
                %v1025 = vld [vmem:[%s945 + $0x258] sm:$0xff]
                %1026 = vst [vmem:[%s946 + $0x138] sm:$0xff] %v1025
                %v1027 = vld [vmem:[%s945 + $0x260] sm:$0xff]
                %1028 = vst [vmem:[%s946 + $0x140] sm:$0xff] %v1027
                %v1029 = vld [vmem:[%s945 + $0x268] sm:$0xff]
                %1030 = vst [vmem:[%s946 + $0x148] sm:$0xff] %v1029
                %v1031 = vld [vmem:[%s945 + $0x270] sm:$0xff]
                %1032 = vst [vmem:[%s946 + $0x150] sm:$0xff] %v1031
                %v1033 = vld [vmem:[%s945 + $0x278] sm:$0xff]
                %1034 = vst [vmem:[%s946 + $0x158] sm:$0xff] %v1033
                %v1035 = vld [vmem:[%s945 + $0x280] sm:$0xff]
                %1036 = vst [vmem:[%s946 + $0x160] sm:$0xff] %v1035
                %v1037 = vld [vmem:[%s945 + $0x288] sm:$0xff]
                %1038 = vst [vmem:[%s946 + $0x168] sm:$0xff] %v1037
                %v1039 = vld [vmem:[%s945 + $0x290] sm:$0xff]
                %1040 = vst [vmem:[%s946 + $0x170] sm:$0xff] %v1039
                %v1041 = vld [vmem:[%s945 + $0x298] sm:$0xff]
                %1042 = vst [vmem:[%s946 + $0x178] sm:$0xff] %v1041
                %v1043 = vld [vmem:[%s945 + $0x2a0] sm:$0xff]
                %1044 = vst [vmem:[%s946 + $0x180] sm:$0xff] %v1043
                %v1045 = vld [vmem:[%s945 + $0x2a8] sm:$0xff]
                %1046 = vst [vmem:[%s946 + $0x188] sm:$0xff] %v1045
                %v1047 = vld [vmem:[%s945 + $0x2b0] sm:$0xff]
                %1048 = vst [vmem:[%s946 + $0x190] sm:$0xff] %v1047
                %v1049 = vld [vmem:[%s945 + $0x2b8] sm:$0xff]
                %1050 = vst [vmem:[%s946 + $0x198] sm:$0xff] %v1049
                %v1051 = vld [vmem:[%s945 + $0x2c0] sm:$0xff]
                %1052 = vst [vmem:[%s946 + $0x1a0] sm:$0xff] %v1051
                %v1053 = vld [vmem:[%s945 + $0x2c8] sm:$0xff]
                %1054 = vst [vmem:[%s946 + $0x1a8] sm:$0xff] %v1053
                %v1055 = vld [vmem:[%s945 + $0x2d0] sm:$0xff]
                %1056 = vst [vmem:[%s946 + $0x1b0] sm:$0xff] %v1055
                %v1057 = vld [vmem:[%s945 + $0x2d8] sm:$0xff]
                %1058 = vst [vmem:[%s946 + $0x1b8] sm:$0xff] %v1057
                %v1059 = vld [vmem:[%s945 + $0x2e0] sm:$0xff]
                %1060 = vst [vmem:[%s946 + $0x1c0] sm:$0xff] %v1059
                %v1061 = vld [vmem:[%s945 + $0x2e8] sm:$0xff]
                %1062 = vst [vmem:[%s946 + $0x1c8] sm:$0xff] %v1061
                %v1063 = vld [vmem:[%s945 + $0x2f0] sm:$0xff]
                %1064 = vst [vmem:[%s946 + $0x1d0] sm:$0xff] %v1063
                %v1065 = vld [vmem:[%s945 + $0x2f8] sm:$0xff]
                %1066 = vst [vmem:[%s946 + $0x1d8] sm:$0xff] %v1065
                %v1067 = vld [vmem:[%s945 + $0x300] sm:$0xff]
                %1068 = vst [vmem:[%s946 + $0x1e0] sm:$0xff] %v1067
                %v1069 = vld [vmem:[%s945 + $0x308] sm:$0xff]
                %1070 = vst [vmem:[%s946 + $0x1e8] sm:$0xff] %v1069
                %v1071 = vld [vmem:[%s945 + $0x310] sm:$0xff]
                %1072 = vst [vmem:[%s946 + $0x1f0] sm:$0xff] %v1071
                %v1073 = vld [vmem:[%s945 + $0x318] sm:$0xff]
                %1074 = vst [vmem:[%s946 + $0x1f8] sm:$0xff] %v1073
                %v1075 = vld [vmem:[%s945 + $0x320] sm:$0xff]
                %1076 = vst [vmem:[%s946 + $0x200] sm:$0xff] %v1075
                %v1077 = vld [vmem:[%s945 + $0x328] sm:$0xff]
                %1078 = vst [vmem:[%s946 + $0x208] sm:$0xff] %v1077
                %v1079 = vld [vmem:[%s945 + $0x330] sm:$0xff]
                %1080 = vst [vmem:[%s946 + $0x210] sm:$0xff] %v1079
                %v1081 = vld [vmem:[%s945 + $0x338] sm:$0xff]
                %1082 = vst [vmem:[%s946 + $0x218] sm:$0xff] %v1081
                %v1083 = vld [vmem:[%s945 + $0x340] sm:$0xff]
                %1084 = vst [vmem:[%s946 + $0x220] sm:$0xff] %v1083
                %v1085 = vld [vmem:[%s945 + $0x348] sm:$0xff]
                %1086 = vst [vmem:[%s946 + $0x228] sm:$0xff] %v1085
                %v1087 = vld [vmem:[%s945 + $0x350] sm:$0xff]
                %1088 = vst [vmem:[%s946 + $0x230] sm:$0xff] %v1087
                %v1089 = vld [vmem:[%s945 + $0x358] sm:$0xff]
                %1090 = vst [vmem:[%s946 + $0x238] sm:$0xff] %v1089
                %v1091 = vld [vmem:[%s945 + $0x480] sm:$0xff]
                %1092 = vst [vmem:[%s946 + $0x240] sm:$0xff] %v1091
                %v1093 = vld [vmem:[%s945 + $0x488] sm:$0xff]
                %1094 = vst [vmem:[%s946 + $0x248] sm:$0xff] %v1093
                %v1095 = vld [vmem:[%s945 + $0x490] sm:$0xff]
                %1096 = vst [vmem:[%s946 + $0x250] sm:$0xff] %v1095
                %v1097 = vld [vmem:[%s945 + $0x498] sm:$0xff]
                %1098 = vst [vmem:[%s946 + $0x258] sm:$0xff] %v1097
                %v1099 = vld [vmem:[%s945 + $0x4a0] sm:$0xff]
                %1100 = vst [vmem:[%s946 + $0x260] sm:$0xff] %v1099
                %v1101 = vld [vmem:[%s945 + $0x4a8] sm:$0xff]
                %1102 = vst [vmem:[%s946 + $0x268] sm:$0xff] %v1101
                %v1103 = vld [vmem:[%s945 + $0x4b0] sm:$0xff]
                %1104 = vst [vmem:[%s946 + $0x270] sm:$0xff] %v1103
                %v1105 = vld [vmem:[%s945 + $0x4b8] sm:$0xff]
                %1106 = vst [vmem:[%s946 + $0x278] sm:$0xff] %v1105
                %v1107 = vld [vmem:[%s945 + $0x4c0] sm:$0xff]
                %1108 = vst [vmem:[%s946 + $0x280] sm:$0xff] %v1107
                %v1109 = vld [vmem:[%s945 + $0x4c8] sm:$0xff]
                %1110 = vst [vmem:[%s946 + $0x288] sm:$0xff] %v1109
                %v1111 = vld [vmem:[%s945 + $0x4d0] sm:$0xff]
                %1112 = vst [vmem:[%s946 + $0x290] sm:$0xff] %v1111
                %v1113 = vld [vmem:[%s945 + $0x4d8] sm:$0xff]
                %1114 = vst [vmem:[%s946 + $0x298] sm:$0xff] %v1113
                %v1115 = vld [vmem:[%s945 + $0x4e0] sm:$0xff]
                %1116 = vst [vmem:[%s946 + $0x2a0] sm:$0xff] %v1115
                %v1117 = vld [vmem:[%s945 + $0x4e8] sm:$0xff]
                %1118 = vst [vmem:[%s946 + $0x2a8] sm:$0xff] %v1117
                %v1119 = vld [vmem:[%s945 + $0x4f0] sm:$0xff]
                %1120 = vst [vmem:[%s946 + $0x2b0] sm:$0xff] %v1119
                %v1121 = vld [vmem:[%s945 + $0x4f8] sm:$0xff]
                %1122 = vst [vmem:[%s946 + $0x2b8] sm:$0xff] %v1121
                %v1123 = vld [vmem:[%s945 + $0x500] sm:$0xff]
                %1124 = vst [vmem:[%s946 + $0x2c0] sm:$0xff] %v1123
                %v1125 = vld [vmem:[%s945 + $0x508] sm:$0xff]
                %1126 = vst [vmem:[%s946 + $0x2c8] sm:$0xff] %v1125
                %v1127 = vld [vmem:[%s945 + $0x510] sm:$0xff]
                %1128 = vst [vmem:[%s946 + $0x2d0] sm:$0xff] %v1127
                %v1129 = vld [vmem:[%s945 + $0x518] sm:$0xff]
                %1130 = vst [vmem:[%s946 + $0x2d8] sm:$0xff] %v1129
                %v1131 = vld [vmem:[%s945 + $0x520] sm:$0xff]
                %1132 = vst [vmem:[%s946 + $0x2e0] sm:$0xff] %v1131
                %v1133 = vld [vmem:[%s945 + $0x528] sm:$0xff]
                %1134 = vst [vmem:[%s946 + $0x2e8] sm:$0xff] %v1133
                %v1135 = vld [vmem:[%s945 + $0x530] sm:$0xff]
                %1136 = vst [vmem:[%s946 + $0x2f0] sm:$0xff] %v1135
                %v1137 = vld [vmem:[%s945 + $0x538] sm:$0xff]
                %1138 = vst [vmem:[%s946 + $0x2f8] sm:$0xff] %v1137
                %v1139 = vld [vmem:[%s945 + $0x540] sm:$0xff]
                %1140 = vst [vmem:[%s946 + $0x300] sm:$0xff] %v1139
                %v1141 = vld [vmem:[%s945 + $0x548] sm:$0xff]
                %1142 = vst [vmem:[%s946 + $0x308] sm:$0xff] %v1141
                %v1143 = vld [vmem:[%s945 + $0x550] sm:$0xff]
                %1144 = vst [vmem:[%s946 + $0x310] sm:$0xff] %v1143
                %v1145 = vld [vmem:[%s945 + $0x558] sm:$0xff]
                %1146 = vst [vmem:[%s946 + $0x318] sm:$0xff] %v1145
                %v1147 = vld [vmem:[%s945 + $0x560] sm:$0xff]
                %1148 = vst [vmem:[%s946 + $0x320] sm:$0xff] %v1147
                %v1149 = vld [vmem:[%s945 + $0x568] sm:$0xff]
                %1150 = vst [vmem:[%s946 + $0x328] sm:$0xff] %v1149
                %v1151 = vld [vmem:[%s945 + $0x570] sm:$0xff]
                %1152 = vst [vmem:[%s946 + $0x330] sm:$0xff] %v1151
                %v1153 = vld [vmem:[%s945 + $0x578] sm:$0xff]
                %1154 = vst [vmem:[%s946 + $0x338] sm:$0xff] %v1153
                %v1155 = vld [vmem:[%s945 + $0x580] sm:$0xff]
                %1156 = vst [vmem:[%s946 + $0x340] sm:$0xff] %v1155
                %v1157 = vld [vmem:[%s945 + $0x588] sm:$0xff]
                %1158 = vst [vmem:[%s946 + $0x348] sm:$0xff] %v1157
                %v1159 = vld [vmem:[%s945 + $0x590] sm:$0xff]
                %1160 = vst [vmem:[%s946 + $0x350] sm:$0xff] %v1159
                %v1161 = vld [vmem:[%s945 + $0x598] sm:$0xff]
                %1162 = vst [vmem:[%s946 + $0x358] sm:$0xff] %v1161
                %v1163 = vld [vmem:[%s945 + $0x6c0] sm:$0xff]
                %1164 = vst [vmem:[%s946 + $0x360] sm:$0xff] %v1163
                %v1165 = vld [vmem:[%s945 + $0x6c8] sm:$0xff]
                %1166 = vst [vmem:[%s946 + $0x368] sm:$0xff] %v1165
                %v1167 = vld [vmem:[%s945 + $0x6d0] sm:$0xff]
                %1168 = vst [vmem:[%s946 + $0x370] sm:$0xff] %v1167
                %v1169 = vld [vmem:[%s945 + $0x6d8] sm:$0xff]
                %1170 = vst [vmem:[%s946 + $0x378] sm:$0xff] %v1169
                %v1171 = vld [vmem:[%s945 + $0x6e0] sm:$0xff]
                %1172 = vst [vmem:[%s946 + $0x380] sm:$0xff] %v1171
                %v1173 = vld [vmem:[%s945 + $0x6e8] sm:$0xff]
                %1174 = vst [vmem:[%s946 + $0x388] sm:$0xff] %v1173
                %v1175 = vld [vmem:[%s945 + $0x6f0] sm:$0xff]
                %1176 = vst [vmem:[%s946 + $0x390] sm:$0xff] %v1175
                %v1177 = vld [vmem:[%s945 + $0x6f8] sm:$0xff]
                %1178 = vst [vmem:[%s946 + $0x398] sm:$0xff] %v1177
                %v1179 = vld [vmem:[%s945 + $0x700] sm:$0xff]
                %1180 = vst [vmem:[%s946 + $0x3a0] sm:$0xff] %v1179
                %v1181 = vld [vmem:[%s945 + $0x708] sm:$0xff]
                %1182 = vst [vmem:[%s946 + $0x3a8] sm:$0xff] %v1181
                %v1183 = vld [vmem:[%s945 + $0x710] sm:$0xff]
                %1184 = vst [vmem:[%s946 + $0x3b0] sm:$0xff] %v1183
                %v1185 = vld [vmem:[%s945 + $0x718] sm:$0xff]
                %1186 = vst [vmem:[%s946 + $0x3b8] sm:$0xff] %v1185
                %v1187 = vld [vmem:[%s945 + $0x720] sm:$0xff]
                %1188 = vst [vmem:[%s946 + $0x3c0] sm:$0xff] %v1187
                %v1189 = vld [vmem:[%s945 + $0x728] sm:$0xff]
                %1190 = vst [vmem:[%s946 + $0x3c8] sm:$0xff] %v1189
                %v1191 = vld [vmem:[%s945 + $0x730] sm:$0xff]
                %1192 = vst [vmem:[%s946 + $0x3d0] sm:$0xff] %v1191
                %v1193 = vld [vmem:[%s945 + $0x738] sm:$0xff]
                %1194 = vst [vmem:[%s946 + $0x3d8] sm:$0xff] %v1193
                %v1195 = vld [vmem:[%s945 + $0x740] sm:$0xff]
                %1196 = vst [vmem:[%s946 + $0x3e0] sm:$0xff] %v1195
                %v1197 = vld [vmem:[%s945 + $0x748] sm:$0xff]
                %1198 = vst [vmem:[%s946 + $0x3e8] sm:$0xff] %v1197
                %v1199 = vld [vmem:[%s945 + $0x750] sm:$0xff]
                %1200 = vst [vmem:[%s946 + $0x3f0] sm:$0xff] %v1199
                %v1201 = vld [vmem:[%s945 + $0x758] sm:$0xff]
                %1202 = vst [vmem:[%s946 + $0x3f8] sm:$0xff] %v1201
                %v1203 = vld [vmem:[%s945 + $0x760] sm:$0xff]
                %1204 = vst [vmem:[%s946 + $0x400] sm:$0xff] %v1203
                %v1205 = vld [vmem:[%s945 + $0x768] sm:$0xff]
                %1206 = vst [vmem:[%s946 + $0x408] sm:$0xff] %v1205
                %v1207 = vld [vmem:[%s945 + $0x770] sm:$0xff]
                %1208 = vst [vmem:[%s946 + $0x410] sm:$0xff] %v1207
                %v1209 = vld [vmem:[%s945 + $0x778] sm:$0xff]
                %1210 = vst [vmem:[%s946 + $0x418] sm:$0xff] %v1209
                %v1211 = vld [vmem:[%s945 + $0x780] sm:$0xff]
                %1212 = vst [vmem:[%s946 + $0x420] sm:$0xff] %v1211
                %v1213 = vld [vmem:[%s945 + $0x788] sm:$0xff]
                %1214 = vst [vmem:[%s946 + $0x428] sm:$0xff] %v1213
                %v1215 = vld [vmem:[%s945 + $0x790] sm:$0xff]
                %1216 = vst [vmem:[%s946 + $0x430] sm:$0xff] %v1215
                %v1217 = vld [vmem:[%s945 + $0x798] sm:$0xff]
                %1218 = vst [vmem:[%s946 + $0x438] sm:$0xff] %v1217
                %v1219 = vld [vmem:[%s945 + $0x7a0] sm:$0xff]
                %1220 = vst [vmem:[%s946 + $0x440] sm:$0xff] %v1219
                %v1221 = vld [vmem:[%s945 + $0x7a8] sm:$0xff]
                %1222 = vst [vmem:[%s946 + $0x448] sm:$0xff] %v1221
                %v1223 = vld [vmem:[%s945 + $0x7b0] sm:$0xff]
                %1224 = vst [vmem:[%s946 + $0x450] sm:$0xff] %v1223
                %v1225 = vld [vmem:[%s945 + $0x7b8] sm:$0xff]
                %1226 = vst [vmem:[%s946 + $0x458] sm:$0xff] %v1225
                %v1227 = vld [vmem:[%s945 + $0x7c0] sm:$0xff]
                %1228 = vst [vmem:[%s946 + $0x460] sm:$0xff] %v1227
                %v1229 = vld [vmem:[%s945 + $0x7c8] sm:$0xff]
                %1230 = vst [vmem:[%s946 + $0x468] sm:$0xff] %v1229
                %v1231 = vld [vmem:[%s945 + $0x7d0] sm:$0xff]
                %1232 = vst [vmem:[%s946 + $0x470] sm:$0xff] %v1231
                %v1233 = vld [vmem:[%s945 + $0x7d8] sm:$0xff]
                %1234 = vst [vmem:[%s946 + $0x478] sm:$0xff] %v1233
              $region107: #{forward.1} parent=101 // loop_footer
                %s944 = sadd.s32 1, %s940
              $region108: #{forward.1} parent=101 // loop_footer_branch
                %939 = sbr.rel target = $region104
              $region109: #{forward.1} parent=101 // loop_exit
                _
            $region102: #{forward.1} parent=93 // pred_fallthru
              _
          $region94: #{forward.1} parent=89 // pred_fallthru
            _
          %1535 = vnop
        $region90: #{forward.1} parent=47 // pred_fallthru
          _
      $region48: #{forward.1} parent=5 // pred_fallthru
        _
      %p1536 = scmp.le.s32.totalorder 1, %s19
      %p1537 = scmp.lt.s32.totalorder %s19, 3
      %p1538 = pnand %p1536, %p1537
      %p1539 = pneg %p1538
      // Predicated region
      $region125: #{forward.1} parent=5 // pred_check
        _
      $region126: #{forward.1} parent=5 // pred_check_branch
        %1541 = sbr.rel (%p1538) target = $region128
      $region127: #{forward.1} parent=5 // pred_region
        %s1542 = ssub.s32 %s19, 1
        %s1543 = sand.u32 %s32, 1
        %s1544 = sand.u32 %s32, 1
        %s1545 = smul.addr %s1544, 1152
        %s1546 = scalar_lea.vmem [#allocation2], %s1545
        // Predicated region
        $region129: #{forward.1} parent=127 // pred_check
          %p1547 = pneg %p45
        $region130: #{forward.1} parent=127 // pred_check_branch
          %1549 = sbr.rel (%p1547) target = $region132
        $region131: #{forward.1} parent=127 // pred_region
          _
        $region132: #{forward.1} parent=127 // pred_fallthru
          _
        %s1550 = sand.u32 %s58, 1
        %s1551 = sand.u32 %s58, 1
        %s1552 = smul.addr %s1551, 1152
        %s1553 = scalar_lea.vmem [#allocation3], %s1552
        // Predicated region
        $region133: #{forward.1} parent=127 // pred_check
          %p1554 = pneg %p71
        $region134: #{forward.1} parent=127 // pred_check_branch
          %1556 = sbr.rel (%p1554) target = $region136
        $region135: #{forward.1} parent=127 // pred_region
          _
        $region136: #{forward.1} parent=127 // pred_fallthru
          _
        %s1557 = sand.u32 %s32, 1
        %s1558 = sand.u32 %s32, 1
        %s1559 = smul.addr %s1558, 1152
        %s1560 = scalar_lea.vmem [#allocation2], %s1559
        %p1561 = pneg %p45
        %p1562 = pneg %p42
        %s1563 = sand.u32 %s58, 1
        %s1564 = sand.u32 %s58, 1
        %s1565 = smul.addr %s1564, 1152
        %s1566 = scalar_lea.vmem [#allocation3], %s1565
        %p1567 = pneg %p71
        %p1568 = pneg %p68
        %p1569 = pneg %p92
        %p1570 = pneg %p89
        %p1571 = pneg %p113
        %p1572 = pneg %p110
        %p1573 = pneg %p134
        %p1574 = pneg %p131
        %p1575 = pneg %p155
        %p1576 = pneg %p152
        %p1577 = pneg %p176
        %p1578 = pneg %p173
        %p1579 = pneg %p197
        %p1580 = pneg %p194
        %p1581 = pneg %p218
        %p1582 = pneg %p215
        %p1583 = pneg %p239
        %p1584 = pneg %p236
        %p1585 = pneg %p265
        %p1586 = pneg %p262
        %s1587 = sand.u32 %s252, 1
        %s1588 = scalar_lea.sflag [#allocation5], %s1587
        %s1589 = sand.u32 %s252, 1
        %s1590 = smul.addr %s1589, 2
        %s1591 = scalar_lea.vmem [#allocation4], %s1590
        %s1592 = smul.u32 36, %s24
        %s1593 = smul.u32 36, %s24
        %v1594 = vld [vmem:[%s1546] sm:$0xff]
        %v1595 = vld [vmem:[%s1546 + $0x8] sm:$0xff]
        %v1596 = vld [vmem:[%s1546 + $0x10] sm:$0xff]
        %v1597 = vld [vmem:[%s1546 + $0x18] sm:$0xff]
        %v1598 = vld [vmem:[%s1546 + $0x20] sm:$0xff]
        %v1599 = vld [vmem:[%s1546 + $0x28] sm:$0xff]
        %v1600 = vld [vmem:[%s1546 + $0x30] sm:$0xff]
        %v1601 = vld [vmem:[%s1546 + $0x38] sm:$0xff]
        %v1602 = vld [vmem:[%s1546 + $0x40] sm:$0xff]
        %v1603 = vld [vmem:[%s1546 + $0x48] sm:$0xff]
        %v1604 = vld [vmem:[%s1546 + $0x50] sm:$0xff]
        %v1605 = vld [vmem:[%s1546 + $0x58] sm:$0xff]
        %v1606 = vld [vmem:[%s1546 + $0x60] sm:$0xff]
        %v1607 = vld [vmem:[%s1546 + $0x68] sm:$0xff]
        %v1608 = vld [vmem:[%s1546 + $0x70] sm:$0xff]
        %v1609 = vld [vmem:[%s1546 + $0x78] sm:$0xff]
        %v1610 = vld [vmem:[%s1546 + $0x80] sm:$0xff]
        %v1611 = vld [vmem:[%s1546 + $0x88] sm:$0xff]
        %v1612 = vld [vmem:[%s1546 + $0x90] sm:$0xff]
        %v1613 = vld [vmem:[%s1546 + $0x98] sm:$0xff]
        %v1614 = vld [vmem:[%s1546 + $0xa0] sm:$0xff]
        %v1615 = vld [vmem:[%s1546 + $0xa8] sm:$0xff]
        %v1616 = vld [vmem:[%s1546 + $0xb0] sm:$0xff]
        %v1617 = vld [vmem:[%s1546 + $0xb8] sm:$0xff]
        %v1618 = vld [vmem:[%s1546 + $0xc0] sm:$0xff]
        %v1619 = vld [vmem:[%s1546 + $0xc8] sm:$0xff]
        %v1620 = vld [vmem:[%s1546 + $0xd0] sm:$0xff]
        %v1621 = vld [vmem:[%s1546 + $0xd8] sm:$0xff]
        %v1622 = vld [vmem:[%s1546 + $0xe0] sm:$0xff]
        %v1623 = vld [vmem:[%s1546 + $0xe8] sm:$0xff]
        %v1624 = vld [vmem:[%s1546 + $0xf0] sm:$0xff]
        %v1625 = vld [vmem:[%s1546 + $0xf8] sm:$0xff]
        %v1626 = vld [vmem:[%s1546 + $0x100] sm:$0xff]
        %v1627 = vld [vmem:[%s1546 + $0x108] sm:$0xff]
        %v1628 = vld [vmem:[%s1546 + $0x110] sm:$0xff]
        %v1629 = vld [vmem:[%s1546 + $0x118] sm:$0xff]
        %v1630 = vld [vmem:[%s1546 + $0x120] sm:$0xff]
        %v1631 = vld [vmem:[%s1546 + $0x128] sm:$0xff]
        %v1632 = vld [vmem:[%s1546 + $0x130] sm:$0xff]
        %v1633 = vld [vmem:[%s1546 + $0x138] sm:$0xff]
        %v1634 = vld [vmem:[%s1546 + $0x140] sm:$0xff]
        %v1635 = vld [vmem:[%s1546 + $0x148] sm:$0xff]
        %v1636 = vld [vmem:[%s1546 + $0x150] sm:$0xff]
        %v1637 = vld [vmem:[%s1546 + $0x158] sm:$0xff]
        %v1638 = vld [vmem:[%s1546 + $0x160] sm:$0xff]
        %v1639 = vld [vmem:[%s1546 + $0x168] sm:$0xff]
        %v1640 = vld [vmem:[%s1546 + $0x170] sm:$0xff]
        %v1641 = vld [vmem:[%s1546 + $0x178] sm:$0xff]
        %v1642 = vld [vmem:[%s1546 + $0x180] sm:$0xff]
        %v1643 = vld [vmem:[%s1546 + $0x188] sm:$0xff]
        %v1644 = vld [vmem:[%s1546 + $0x190] sm:$0xff]
        %v1645 = vld [vmem:[%s1546 + $0x198] sm:$0xff]
        %v1646 = vld [vmem:[%s1546 + $0x1a0] sm:$0xff]
        %v1647 = vld [vmem:[%s1546 + $0x1a8] sm:$0xff]
        %v1648 = vld [vmem:[%s1546 + $0x1b0] sm:$0xff]
        %v1649 = vld [vmem:[%s1546 + $0x1b8] sm:$0xff]
        %v1650 = vld [vmem:[%s1546 + $0x1c0] sm:$0xff]
        %v1651 = vld [vmem:[%s1546 + $0x1c8] sm:$0xff]
        %v1652 = vld [vmem:[%s1546 + $0x1d0] sm:$0xff]
        %v1653 = vld [vmem:[%s1546 + $0x1d8] sm:$0xff]
        %v1654 = vld [vmem:[%s1546 + $0x1e0] sm:$0xff]
        %v1655 = vld [vmem:[%s1546 + $0x1e8] sm:$0xff]
        %v1656 = vld [vmem:[%s1546 + $0x1f0] sm:$0xff]
        %v1657 = vld [vmem:[%s1546 + $0x1f8] sm:$0xff]
        %v1658 = vld [vmem:[%s1546 + $0x200] sm:$0xff]
        %v1659 = vld [vmem:[%s1546 + $0x208] sm:$0xff]
        %v1660 = vld [vmem:[%s1546 + $0x210] sm:$0xff]
        %v1661 = vld [vmem:[%s1546 + $0x218] sm:$0xff]
        %v1662 = vld [vmem:[%s1546 + $0x220] sm:$0xff]
        %v1663 = vld [vmem:[%s1546 + $0x228] sm:$0xff]
        %v1664 = vld [vmem:[%s1546 + $0x230] sm:$0xff]
        %v1665 = vld [vmem:[%s1546 + $0x238] sm:$0xff]
        %v1666 = vld [vmem:[%s1546 + $0x240] sm:$0xff]
        %v1667 = vld [vmem:[%s1546 + $0x248] sm:$0xff]
        %v1668 = vld [vmem:[%s1546 + $0x250] sm:$0xff]
        %v1669 = vld [vmem:[%s1546 + $0x258] sm:$0xff]
        %v1670 = vld [vmem:[%s1546 + $0x260] sm:$0xff]
        %v1671 = vld [vmem:[%s1546 + $0x268] sm:$0xff]
        %v1672 = vld [vmem:[%s1546 + $0x270] sm:$0xff]
        %v1673 = vld [vmem:[%s1546 + $0x278] sm:$0xff]
        %v1674 = vld [vmem:[%s1546 + $0x280] sm:$0xff]
        %v1675 = vld [vmem:[%s1546 + $0x288] sm:$0xff]
        %v1676 = vld [vmem:[%s1546 + $0x290] sm:$0xff]
        %v1677 = vld [vmem:[%s1546 + $0x298] sm:$0xff]
        %v1678 = vld [vmem:[%s1546 + $0x2a0] sm:$0xff]
        %v1679 = vld [vmem:[%s1546 + $0x2a8] sm:$0xff]
        %v1680 = vld [vmem:[%s1546 + $0x2b0] sm:$0xff]
        %v1681 = vld [vmem:[%s1546 + $0x2b8] sm:$0xff]
        %v1682 = vld [vmem:[%s1546 + $0x2c0] sm:$0xff]
        %v1683 = vld [vmem:[%s1546 + $0x2c8] sm:$0xff]
        %v1684 = vld [vmem:[%s1546 + $0x2d0] sm:$0xff]
        %v1685 = vld [vmem:[%s1546 + $0x2d8] sm:$0xff]
        %v1686 = vld [vmem:[%s1546 + $0x2e0] sm:$0xff]
        %v1687 = vld [vmem:[%s1546 + $0x2e8] sm:$0xff]
        %v1688 = vld [vmem:[%s1546 + $0x2f0] sm:$0xff]
        %v1689 = vld [vmem:[%s1546 + $0x2f8] sm:$0xff]
        %v1690 = vld [vmem:[%s1546 + $0x300] sm:$0xff]
        %v1691 = vld [vmem:[%s1546 + $0x308] sm:$0xff]
        %v1692 = vld [vmem:[%s1546 + $0x310] sm:$0xff]
        %v1693 = vld [vmem:[%s1546 + $0x318] sm:$0xff]
        %v1694 = vld [vmem:[%s1546 + $0x320] sm:$0xff]
        %v1695 = vld [vmem:[%s1546 + $0x328] sm:$0xff]
        %v1696 = vld [vmem:[%s1546 + $0x330] sm:$0xff]
        %v1697 = vld [vmem:[%s1546 + $0x338] sm:$0xff]
        %v1698 = vld [vmem:[%s1546 + $0x340] sm:$0xff]
        %v1699 = vld [vmem:[%s1546 + $0x348] sm:$0xff]
        %v1700 = vld [vmem:[%s1546 + $0x350] sm:$0xff]
        %v1701 = vld [vmem:[%s1546 + $0x358] sm:$0xff]
        %v1702 = vld [vmem:[%s1546 + $0x360] sm:$0xff]
        %v1703 = vld [vmem:[%s1546 + $0x368] sm:$0xff]
        %v1704 = vld [vmem:[%s1546 + $0x370] sm:$0xff]
        %v1705 = vld [vmem:[%s1546 + $0x378] sm:$0xff]
        %v1706 = vld [vmem:[%s1546 + $0x380] sm:$0xff]
        %v1707 = vld [vmem:[%s1546 + $0x388] sm:$0xff]
        %v1708 = vld [vmem:[%s1546 + $0x390] sm:$0xff]
        %v1709 = vld [vmem:[%s1546 + $0x398] sm:$0xff]
        %v1710 = vld [vmem:[%s1546 + $0x3a0] sm:$0xff]
        %v1711 = vld [vmem:[%s1546 + $0x3a8] sm:$0xff]
        %v1712 = vld [vmem:[%s1546 + $0x3b0] sm:$0xff]
        %v1713 = vld [vmem:[%s1546 + $0x3b8] sm:$0xff]
        %v1714 = vld [vmem:[%s1546 + $0x3c0] sm:$0xff]
        %v1715 = vld [vmem:[%s1546 + $0x3c8] sm:$0xff]
        %v1716 = vld [vmem:[%s1546 + $0x3d0] sm:$0xff]
        %v1717 = vld [vmem:[%s1546 + $0x3d8] sm:$0xff]
        %v1718 = vld [vmem:[%s1546 + $0x3e0] sm:$0xff]
        %v1719 = vld [vmem:[%s1546 + $0x3e8] sm:$0xff]
        %v1720 = vld [vmem:[%s1546 + $0x3f0] sm:$0xff]
        %v1721 = vld [vmem:[%s1546 + $0x3f8] sm:$0xff]
        %v1722 = vld [vmem:[%s1546 + $0x400] sm:$0xff]
        %v1723 = vld [vmem:[%s1546 + $0x408] sm:$0xff]
        %v1724 = vld [vmem:[%s1546 + $0x410] sm:$0xff]
        %v1725 = vld [vmem:[%s1546 + $0x418] sm:$0xff]
        %v1726 = vld [vmem:[%s1546 + $0x420] sm:$0xff]
        %v1727 = vld [vmem:[%s1546 + $0x428] sm:$0xff]
        %v1728 = vld [vmem:[%s1546 + $0x430] sm:$0xff]
        %v1729 = vld [vmem:[%s1546 + $0x438] sm:$0xff]
        %v1730 = vld [vmem:[%s1546 + $0x440] sm:$0xff]
        %v1731 = vld [vmem:[%s1546 + $0x448] sm:$0xff]
        %v1732 = vld [vmem:[%s1546 + $0x450] sm:$0xff]
        %v1733 = vld [vmem:[%s1546 + $0x458] sm:$0xff]
        %v1734 = vld [vmem:[%s1546 + $0x460] sm:$0xff]
        %v1735 = vld [vmem:[%s1546 + $0x468] sm:$0xff]
        %v1736 = vld [vmem:[%s1546 + $0x470] sm:$0xff]
        %v1737 = vld [vmem:[%s1546 + $0x478] sm:$0xff]
        %v1738 = vld [vmem:[%s1553] sm:$0xff]
        %v1739 = vld [vmem:[%s1553 + $0x8] sm:$0xff]
        %v1740 = vld [vmem:[%s1553 + $0x10] sm:$0xff]
        %v1741 = vld [vmem:[%s1553 + $0x18] sm:$0xff]
        %v1742 = vld [vmem:[%s1553 + $0x20] sm:$0xff]
        %v1743 = vld [vmem:[%s1553 + $0x28] sm:$0xff]
        %v1744 = vld [vmem:[%s1553 + $0x30] sm:$0xff]
        %v1745 = vld [vmem:[%s1553 + $0x38] sm:$0xff]
        %v1746 = vld [vmem:[%s1553 + $0x40] sm:$0xff]
        %v1747 = vld [vmem:[%s1553 + $0x48] sm:$0xff]
        %v1748 = vld [vmem:[%s1553 + $0x50] sm:$0xff]
        %v1749 = vld [vmem:[%s1553 + $0x58] sm:$0xff]
        %v1750 = vld [vmem:[%s1553 + $0x60] sm:$0xff]
        %v1751 = vld [vmem:[%s1553 + $0x68] sm:$0xff]
        %v1752 = vld [vmem:[%s1553 + $0x70] sm:$0xff]
        %v1753 = vld [vmem:[%s1553 + $0x78] sm:$0xff]
        %v1754 = vld [vmem:[%s1553 + $0x80] sm:$0xff]
        %v1755 = vld [vmem:[%s1553 + $0x88] sm:$0xff]
        %v1756 = vld [vmem:[%s1553 + $0x90] sm:$0xff]
        %v1757 = vld [vmem:[%s1553 + $0x98] sm:$0xff]
        %v1758 = vld [vmem:[%s1553 + $0xa0] sm:$0xff]
        %v1759 = vld [vmem:[%s1553 + $0xa8] sm:$0xff]
        %v1760 = vld [vmem:[%s1553 + $0xb0] sm:$0xff]
        %v1761 = vld [vmem:[%s1553 + $0xb8] sm:$0xff]
        %v1762 = vld [vmem:[%s1553 + $0xc0] sm:$0xff]
        %v1763 = vld [vmem:[%s1553 + $0xc8] sm:$0xff]
        %v1764 = vld [vmem:[%s1553 + $0xd0] sm:$0xff]
        %v1765 = vld [vmem:[%s1553 + $0xd8] sm:$0xff]
        %v1766 = vld [vmem:[%s1553 + $0xe0] sm:$0xff]
        %v1767 = vld [vmem:[%s1553 + $0xe8] sm:$0xff]
        %v1768 = vld [vmem:[%s1553 + $0xf0] sm:$0xff]
        %v1769 = vld [vmem:[%s1553 + $0xf8] sm:$0xff]
        %v1770 = vld [vmem:[%s1553 + $0x100] sm:$0xff]
        %v1771 = vld [vmem:[%s1553 + $0x108] sm:$0xff]
        %v1772 = vld [vmem:[%s1553 + $0x110] sm:$0xff]
        %v1773 = vld [vmem:[%s1553 + $0x118] sm:$0xff]
        %v1774 = vld [vmem:[%s1553 + $0x120] sm:$0xff]
        %v1775 = vld [vmem:[%s1553 + $0x128] sm:$0xff]
        %v1776 = vld [vmem:[%s1553 + $0x130] sm:$0xff]
        %v1777 = vld [vmem:[%s1553 + $0x138] sm:$0xff]
        %v1778 = vld [vmem:[%s1553 + $0x140] sm:$0xff]
        %v1779 = vld [vmem:[%s1553 + $0x148] sm:$0xff]
        %v1780 = vld [vmem:[%s1553 + $0x150] sm:$0xff]
        %v1781 = vld [vmem:[%s1553 + $0x158] sm:$0xff]
        %v1782 = vld [vmem:[%s1553 + $0x160] sm:$0xff]
        %v1783 = vld [vmem:[%s1553 + $0x168] sm:$0xff]
        %v1784 = vld [vmem:[%s1553 + $0x170] sm:$0xff]
        %v1785 = vld [vmem:[%s1553 + $0x178] sm:$0xff]
        %v1786 = vld [vmem:[%s1553 + $0x180] sm:$0xff]
        %v1787 = vld [vmem:[%s1553 + $0x188] sm:$0xff]
        %v1788 = vld [vmem:[%s1553 + $0x190] sm:$0xff]
        %v1789 = vld [vmem:[%s1553 + $0x198] sm:$0xff]
        %v1790 = vld [vmem:[%s1553 + $0x1a0] sm:$0xff]
        %v1791 = vld [vmem:[%s1553 + $0x1a8] sm:$0xff]
        %v1792 = vld [vmem:[%s1553 + $0x1b0] sm:$0xff]
        %v1793 = vld [vmem:[%s1553 + $0x1b8] sm:$0xff]
        %v1794 = vld [vmem:[%s1553 + $0x1c0] sm:$0xff]
        %v1795 = vld [vmem:[%s1553 + $0x1c8] sm:$0xff]
        %v1796 = vld [vmem:[%s1553 + $0x1d0] sm:$0xff]
        %v1797 = vld [vmem:[%s1553 + $0x1d8] sm:$0xff]
        %v1798 = vld [vmem:[%s1553 + $0x1e0] sm:$0xff]
        %v1799 = vld [vmem:[%s1553 + $0x1e8] sm:$0xff]
        %v1800 = vld [vmem:[%s1553 + $0x1f0] sm:$0xff]
        %v1801 = vld [vmem:[%s1553 + $0x1f8] sm:$0xff]
        %v1802 = vld [vmem:[%s1553 + $0x200] sm:$0xff]
        %v1803 = vld [vmem:[%s1553 + $0x208] sm:$0xff]
        %v1804 = vld [vmem:[%s1553 + $0x210] sm:$0xff]
        %v1805 = vld [vmem:[%s1553 + $0x218] sm:$0xff]
        %v1806 = vld [vmem:[%s1553 + $0x220] sm:$0xff]
        %v1807 = vld [vmem:[%s1553 + $0x228] sm:$0xff]
        %v1808 = vld [vmem:[%s1553 + $0x230] sm:$0xff]
        %v1809 = vld [vmem:[%s1553 + $0x238] sm:$0xff]
        %v1810 = vld [vmem:[%s1553 + $0x240] sm:$0xff]
        %v1811 = vld [vmem:[%s1553 + $0x248] sm:$0xff]
        %v1812 = vld [vmem:[%s1553 + $0x250] sm:$0xff]
        %v1813 = vld [vmem:[%s1553 + $0x258] sm:$0xff]
        %v1814 = vld [vmem:[%s1553 + $0x260] sm:$0xff]
        %v1815 = vld [vmem:[%s1553 + $0x268] sm:$0xff]
        %v1816 = vld [vmem:[%s1553 + $0x270] sm:$0xff]
        %v1817 = vld [vmem:[%s1553 + $0x278] sm:$0xff]
        %v1818 = vld [vmem:[%s1553 + $0x280] sm:$0xff]
        %v1819 = vld [vmem:[%s1553 + $0x288] sm:$0xff]
        %v1820 = vld [vmem:[%s1553 + $0x290] sm:$0xff]
        %v1821 = vld [vmem:[%s1553 + $0x298] sm:$0xff]
        %v1822 = vld [vmem:[%s1553 + $0x2a0] sm:$0xff]
        %v1823 = vld [vmem:[%s1553 + $0x2a8] sm:$0xff]
        %v1824 = vld [vmem:[%s1553 + $0x2b0] sm:$0xff]
        %v1825 = vld [vmem:[%s1553 + $0x2b8] sm:$0xff]
        %v1826 = vld [vmem:[%s1553 + $0x2c0] sm:$0xff]
        %v1827 = vld [vmem:[%s1553 + $0x2c8] sm:$0xff]
        %v1828 = vld [vmem:[%s1553 + $0x2d0] sm:$0xff]
        %v1829 = vld [vmem:[%s1553 + $0x2d8] sm:$0xff]
        %v1830 = vld [vmem:[%s1553 + $0x2e0] sm:$0xff]
        %v1831 = vld [vmem:[%s1553 + $0x2e8] sm:$0xff]
        %v1832 = vld [vmem:[%s1553 + $0x2f0] sm:$0xff]
        %v1833 = vld [vmem:[%s1553 + $0x2f8] sm:$0xff]
        %v1834 = vld [vmem:[%s1553 + $0x300] sm:$0xff]
        %v1835 = vld [vmem:[%s1553 + $0x308] sm:$0xff]
        %v1836 = vld [vmem:[%s1553 + $0x310] sm:$0xff]
        %v1837 = vld [vmem:[%s1553 + $0x318] sm:$0xff]
        %v1838 = vld [vmem:[%s1553 + $0x320] sm:$0xff]
        %v1839 = vld [vmem:[%s1553 + $0x328] sm:$0xff]
        %v1840 = vld [vmem:[%s1553 + $0x330] sm:$0xff]
        %v1841 = vld [vmem:[%s1553 + $0x338] sm:$0xff]
        %v1842 = vld [vmem:[%s1553 + $0x340] sm:$0xff]
        %v1843 = vld [vmem:[%s1553 + $0x348] sm:$0xff]
        %v1844 = vld [vmem:[%s1553 + $0x350] sm:$0xff]
        %v1845 = vld [vmem:[%s1553 + $0x358] sm:$0xff]
        %v1846 = vld [vmem:[%s1553 + $0x360] sm:$0xff]
        %v1847 = vld [vmem:[%s1553 + $0x368] sm:$0xff]
        %v1848 = vld [vmem:[%s1553 + $0x370] sm:$0xff]
        %v1849 = vld [vmem:[%s1553 + $0x378] sm:$0xff]
        %v1850 = vld [vmem:[%s1553 + $0x380] sm:$0xff]
        %v1851 = vld [vmem:[%s1553 + $0x388] sm:$0xff]
        %v1852 = vld [vmem:[%s1553 + $0x390] sm:$0xff]
        %v1853 = vld [vmem:[%s1553 + $0x398] sm:$0xff]
        %v1854 = vld [vmem:[%s1553 + $0x3a0] sm:$0xff]
        %v1855 = vld [vmem:[%s1553 + $0x3a8] sm:$0xff]
        %v1856 = vld [vmem:[%s1553 + $0x3b0] sm:$0xff]
        %v1857 = vld [vmem:[%s1553 + $0x3b8] sm:$0xff]
        %v1858 = vld [vmem:[%s1553 + $0x3c0] sm:$0xff]
        %v1859 = vld [vmem:[%s1553 + $0x3c8] sm:$0xff]
        %v1860 = vld [vmem:[%s1553 + $0x3d0] sm:$0xff]
        %v1861 = vld [vmem:[%s1553 + $0x3d8] sm:$0xff]
        %v1862 = vld [vmem:[%s1553 + $0x3e0] sm:$0xff]
        %v1863 = vld [vmem:[%s1553 + $0x3e8] sm:$0xff]
        %v1864 = vld [vmem:[%s1553 + $0x3f0] sm:$0xff]
        %v1865 = vld [vmem:[%s1553 + $0x3f8] sm:$0xff]
        %v1866 = vld [vmem:[%s1553 + $0x400] sm:$0xff]
        %v1867 = vld [vmem:[%s1553 + $0x408] sm:$0xff]
        %v1868 = vld [vmem:[%s1553 + $0x410] sm:$0xff]
        %v1869 = vld [vmem:[%s1553 + $0x418] sm:$0xff]
        %v1870 = vld [vmem:[%s1553 + $0x420] sm:$0xff]
        %v1871 = vld [vmem:[%s1553 + $0x428] sm:$0xff]
        %v1872 = vld [vmem:[%s1553 + $0x430] sm:$0xff]
        %v1873 = vld [vmem:[%s1553 + $0x438] sm:$0xff]
        %v1874 = vld [vmem:[%s1553 + $0x440] sm:$0xff]
        %v1875 = vld [vmem:[%s1553 + $0x448] sm:$0xff]
        %v1876 = vld [vmem:[%s1553 + $0x450] sm:$0xff]
        %v1877 = vld [vmem:[%s1553 + $0x458] sm:$0xff]
        %v1878 = vld [vmem:[%s1553 + $0x460] sm:$0xff]
        %v1879 = vld [vmem:[%s1553 + $0x468] sm:$0xff]
        %v1880 = vld [vmem:[%s1553 + $0x470] sm:$0xff]
        %v1881 = vld [vmem:[%s1553 + $0x478] sm:$0xff]
        %v1882 = vld [vmem:[%s2] sm:$0xff]
        %v1883 = vld [vmem:[%s2 + $0x8] sm:$0xff]
        %v1884 = vld [vmem:[%s2 + $0x10] sm:$0xff]
        %v1885 = vld [vmem:[%s2 + $0x18] sm:$0xff]
        %v1886 = vld [vmem:[%s2 + $0x20] sm:$0xff]
        %v1887 = vld [vmem:[%s2 + $0x28] sm:$0xff]
        %v1888 = vld [vmem:[%s2 + $0x30] sm:$0x3]
        %1925 = vrot.lane.b32.xlu0 %v1738, 25
        %v1926 = vpop.permute.xlu0 %1925
        %1927 = vrot.lane.b32.xlu0 %v1739, 25
        %v1928 = vpop.permute.xlu0 %1927
        %1929 = vrot.lane.b32.xlu0 %v1740, 25
        %v1930 = vpop.permute.xlu0 %1929
        %1931 = vrot.lane.b32.xlu0 %v1741, 25
        %v1932 = vpop.permute.xlu0 %1931
        %1933 = vrot.lane.b32.xlu0 %v1742, 25
        %v1934 = vpop.permute.xlu0 %1933
        %1935 = vrot.lane.b32.xlu0 %v1743, 25
        %v1936 = vpop.permute.xlu0 %1935
        %1937 = vrot.lane.b32.xlu0 %v1744, 25
        %v1938 = vpop.permute.xlu0 %1937
        %1939 = vrot.lane.b32.xlu0 %v1745, 25
        %v1940 = vpop.permute.xlu0 %1939
        %1941 = vrot.lane.b32.xlu0 %v1746, 25
        %v1942 = vpop.permute.xlu0 %1941
        %1943 = vrot.lane.b32.xlu0 %v1747, 25
        %v1944 = vpop.permute.xlu0 %1943
        %1945 = vrot.lane.b32.xlu0 %v1748, 25
        %v1946 = vpop.permute.xlu0 %1945
        %1947 = vrot.lane.b32.xlu0 %v1749, 25
        %v1948 = vpop.permute.xlu0 %1947
        %1949 = vrot.lane.b32.xlu0 %v1750, 25
        %v1950 = vpop.permute.xlu0 %1949
        %1951 = vrot.lane.b32.xlu0 %v1751, 25
        %v1952 = vpop.permute.xlu0 %1951
        %1953 = vrot.lane.b32.xlu0 %v1752, 25
        %v1954 = vpop.permute.xlu0 %1953
        %1955 = vrot.lane.b32.xlu0 %v1753, 25
        %v1956 = vpop.permute.xlu0 %1955
        %1957 = vrot.lane.b32.xlu0 %v1754, 25
        %v1958 = vpop.permute.xlu0 %1957
        %1959 = vrot.lane.b32.xlu0 %v1755, 25
        %v1960 = vpop.permute.xlu0 %1959
        %1961 = vrot.lane.b32.xlu0 %v1756, 25
        %v1962 = vpop.permute.xlu0 %1961
        %1963 = vrot.lane.b32.xlu0 %v1757, 25
        %v1964 = vpop.permute.xlu0 %1963
        %1965 = vrot.lane.b32.xlu0 %v1758, 25
        %v1966 = vpop.permute.xlu0 %1965
        %1967 = vrot.lane.b32.xlu0 %v1759, 25
        %v1968 = vpop.permute.xlu0 %1967
        %1969 = vrot.lane.b32.xlu0 %v1760, 25
        %v1970 = vpop.permute.xlu0 %1969
        %1971 = vrot.lane.b32.xlu0 %v1761, 25
        %v1972 = vpop.permute.xlu0 %1971
        %1973 = vrot.lane.b32.xlu0 %v1762, 25
        %v1974 = vpop.permute.xlu0 %1973
        %1975 = vrot.lane.b32.xlu0 %v1763, 25
        %v1976 = vpop.permute.xlu0 %1975
        %1977 = vrot.lane.b32.xlu0 %v1764, 25
        %v1978 = vpop.permute.xlu0 %1977
        %1979 = vrot.lane.b32.xlu0 %v1765, 25
        %v1980 = vpop.permute.xlu0 %1979
        %1981 = vrot.lane.b32.xlu0 %v1766, 25
        %v1982 = vpop.permute.xlu0 %1981
        %1983 = vrot.lane.b32.xlu0 %v1767, 25
        %v1984 = vpop.permute.xlu0 %1983
        %1985 = vrot.lane.b32.xlu0 %v1768, 25
        %v1986 = vpop.permute.xlu0 %1985
        %1987 = vrot.lane.b32.xlu0 %v1769, 25
        %v1988 = vpop.permute.xlu0 %1987
        %1989 = vrot.lane.b32.xlu0 %v1770, 25
        %v1990 = vpop.permute.xlu0 %1989
        %1991 = vrot.lane.b32.xlu0 %v1771, 25
        %v1992 = vpop.permute.xlu0 %1991
        %1993 = vrot.lane.b32.xlu0 %v1772, 25
        %v1994 = vpop.permute.xlu0 %1993
        %1995 = vrot.lane.b32.xlu0 %v1773, 25
        %v1996 = vpop.permute.xlu0 %1995
        %vm2033 = vcmask 203776
        %v2034 = vsel %vm2033, %v1594, %v1926
        %v2035 = vsel %vm2033, %v1595, %v1928
        %v2036 = vsel %vm2033, %v1596, %v1930
        %v2037 = vsel %vm2033, %v1597, %v1932
        %v2038 = vsel %vm2033, %v1598, %v1934
        %v2039 = vsel %vm2033, %v1599, %v1936
        %v2040 = vsel %vm2033, %v1600, %v1938
        %v2041 = vsel %vm2033, %v1601, %v1940
        %v2042 = vsel %vm2033, %v1602, %v1942
        %v2043 = vsel %vm2033, %v1603, %v1944
        %v2044 = vsel %vm2033, %v1604, %v1946
        %v2045 = vsel %vm2033, %v1605, %v1948
        %v2046 = vsel %vm2033, %v1606, %v1950
        %v2047 = vsel %vm2033, %v1607, %v1952
        %v2048 = vsel %vm2033, %v1608, %v1954
        %v2049 = vsel %vm2033, %v1609, %v1956
        %v2050 = vsel %vm2033, %v1610, %v1958
        %v2051 = vsel %vm2033, %v1611, %v1960
        %v2052 = vsel %vm2033, %v1612, %v1962
        %v2053 = vsel %vm2033, %v1613, %v1964
        %v2054 = vsel %vm2033, %v1614, %v1966
        %v2055 = vsel %vm2033, %v1615, %v1968
        %v2056 = vsel %vm2033, %v1616, %v1970
        %v2057 = vsel %vm2033, %v1617, %v1972
        %v2058 = vsel %vm2033, %v1618, %v1974
        %v2059 = vsel %vm2033, %v1619, %v1976
        %v2060 = vsel %vm2033, %v1620, %v1978
        %v2061 = vsel %vm2033, %v1621, %v1980
        %v2062 = vsel %vm2033, %v1622, %v1982
        %v2063 = vsel %vm2033, %v1623, %v1984
        %v2064 = vsel %vm2033, %v1624, %v1986
        %v2065 = vsel %vm2033, %v1625, %v1988
        %v2066 = vsel %vm2033, %v1626, %v1990
        %v2067 = vsel %vm2033, %v1627, %v1992
        %v2068 = vsel %vm2033, %v1628, %v1994
        %v2069 = vsel %vm2033, %v1629, %v1996
        %vm2070 = vcmask 408576
        %v2072 = vsel %vm2070, %v2034, 0
        %v2075 = vsel %vm2070, %v2035, 0
        %v2078 = vsel %vm2070, %v2036, 0
        %v2081 = vsel %vm2070, %v2037, 0
        %v2084 = vsel %vm2070, %v2038, 0
        %v2087 = vsel %vm2070, %v2039, 0
        %v2090 = vsel %vm2070, %v2040, 0
        %v2093 = vsel %vm2070, %v2041, 0
        %v2096 = vsel %vm2070, %v2042, 0
        %v2099 = vsel %vm2070, %v2043, 0
        %v2102 = vsel %vm2070, %v2044, 0
        %v2105 = vsel %vm2070, %v2045, 0
        %v2108 = vsel %vm2070, %v2046, 0
        %v2111 = vsel %vm2070, %v2047, 0
        %v2114 = vsel %vm2070, %v2048, 0
        %v2117 = vsel %vm2070, %v2049, 0
        %v2120 = vsel %vm2070, %v2050, 0
        %v2123 = vsel %vm2070, %v2051, 0
        %v2126 = vsel %vm2070, %v2052, 0
        %v2129 = vsel %vm2070, %v2053, 0
        %v2132 = vsel %vm2070, %v2054, 0
        %v2135 = vsel %vm2070, %v2055, 0
        %v2138 = vsel %vm2070, %v2056, 0
        %v2141 = vsel %vm2070, %v2057, 0
        %v2144 = vsel %vm2070, %v2058, 0
        %v2147 = vsel %vm2070, %v2059, 0
        %v2150 = vsel %vm2070, %v2060, 0
        %v2153 = vsel %vm2070, %v2061, 0
        %v2156 = vsel %vm2070, %v2062, 0
        %v2159 = vsel %vm2070, %v2063, 0
        %v2162 = vsel %vm2070, %v2064, 0
        %v2165 = vsel %vm2070, %v2065, 0
        %v2168 = vsel %vm2070, %v2066, 0
        %v2171 = vsel %vm2070, %v2067, 0
        %v2174 = vsel %vm2070, %v2068, 0
        %v2177 = vsel %vm2070, %v2069, 0
        %vm2179 = vcmask 1041408
        %v2181 = vsel %vm2179, %v1888, 0
        %2183 = vmatprep.subr.mxu0 0.0
        %2184 = vmatpush1.msra.mxu0 %v1882
        %2185 = vmatprep.subr.mxu0 0.0
        %2186 = vmatpush1.msra.mxu0 %v1883
        %2187 = vmatprep.subr.mxu0 0.0
        %2188 = vmatpush1.msra.mxu0 %v1884
        %2189 = vmatprep.subr.mxu0 0.0
        %2190 = vmatpush1.msra.mxu0 %v1885
        %2191 = vmatprep.subr.mxu0 0.0
        %2192 = vmatpush1.msra.mxu0 %v1886
        %2193 = vmatprep.subr.mxu0 0.0
        %2194 = vmatpush1.msra.mxu0 %v1887
        %2195 = vmatprep.subr.mxu0 0.0
        %2196 = vmatpush1.msra.mxu0 %v2181
        %2197 = vmatprep.subr.mxu0 0.0
        %2198 = vmatpush1.msra.mxu0 0.0
        %2199 = vmatprep.subr.mxu0 0.0
        %2200 = vmatpush1.msra.mxu0 0.0
        %2201 = vmatprep.subr.mxu0 0.0
        %2202 = vmatpush1.msra.mxu0 0.0
        %2203 = vmatprep.subr.mxu0 0.0
        %2204 = vmatpush1.msra.mxu0 0.0
        %2205 = vmatprep.subr.mxu0 0.0
        %2206 = vmatpush1.msra.mxu0 0.0
        %2207 = vmatprep.subr.mxu0 0.0
        %2208 = vmatpush1.msra.mxu0 0.0
        %2209 = vmatprep.subr.mxu0 0.0
        %2210 = vmatpush1.msra.mxu0 0.0
        %2211 = vmatprep.subr.mxu0 0.0
        %2212 = vmatpush1.msra.mxu0 0.0
        %2213 = vmatprep.subr.mxu0 0.0
        %2214 = vmatpush1.msra.mxu0 0.0
        %2215 = vmatprep.subr.mxu0 0.0
        %2216 = vmatpush1.msra.mxu0 0.0
        %2217 = vmatprep.subr.mxu0 0.0
        %2218 = vmatpush1.msra.mxu0 0.0
        %2219 = vmatprep.subr.mxu0 0.0
        %2220 = vmatpush1.msra.mxu0 0.0
        %2221 = vmatprep.subr.mxu0 0.0
        %2222 = vmatpush1.msra.mxu0 0.0
        %2223 = vmatprep.subr.mxu0 0.0
        %2224 = vmatpush1.msra.mxu0 0.0
        %2225 = vmatprep.subr.mxu0 0.0
        %2226 = vmatpush1.msra.mxu0 0.0
        %2227 = vmatprep.subr.mxu0 0.0
        %2228 = vmatpush1.msra.mxu0 0.0
        %2229 = vmatprep.subr.mxu0 0.0
        %2230 = vmatpush1.msra.mxu0 0.0
        %2231 = vmatprep.subr.mxu0 0.0
        %2232 = vmatpush1.msra.mxu0 0.0
        %2233 = vmatprep.subr.mxu0 0.0
        %2234 = vmatpush1.msra.mxu0 0.0
        %2235 = vmatprep.subr.mxu0 0.0
        %2236 = vmatpush1.msra.mxu0 0.0
        %2237 = vmatprep.subr.mxu0 0.0
        %2238 = vmatpush1.msra.mxu0 0.0
        %2239 = vmatprep.subr.mxu0 0.0
        %2240 = vmatpush1.msra.mxu0 0.0
        %2241 = vmatprep.subr.mxu0 0.0
        %2242 = vmatpush1.msra.mxu0 0.0
        %2243 = vmatprep.subr.mxu0 0.0
        %2244 = vmatpush1.msra.mxu0 0.0
        %2245 = vmatprep.subr.mxu0 0.0
        %2246 = vmatpush1.msra.mxu0 0.0
        %2247 = vmatprep.mubr.f32.mxu0 0.0
        %2248 = vmatmul.mubr.f32.gmra.mrb[0].mxu0 %v2072
        %v2249 = vpop.f32.mrb[0].mxu0
        %v2250 = vadd.f32 0.0, %v2249
        %v2251 = vpop.f32.mrb[0].mxu0
        %2252 = vmatprep.mubr.f32.mxu0 0.0
        %2253 = vmatmul.mubr.f32.gmra.mrb[0].mxu0 %v2075
        %v2254 = vpop.f32.mrb[0].mxu0
        %v2255 = vadd.f32 0.0, %v2254
        %v2256 = vpop.f32.mrb[0].mxu0
        %2257 = vmatprep.mubr.f32.mxu0 0.0
        %2258 = vmatmul.mubr.f32.gmra.mrb[0].mxu0 %v2078
        %v2259 = vpop.f32.mrb[0].mxu0
        %v2260 = vadd.f32 0.0, %v2259
        %v2261 = vpop.f32.mrb[0].mxu0
        %2262 = vmatprep.mubr.f32.mxu0 0.0
        %2263 = vmatmul.mubr.f32.gmra.mrb[0].mxu0 %v2081
        %v2264 = vpop.f32.mrb[0].mxu0
        %v2265 = vadd.f32 0.0, %v2264
        %v2266 = vpop.f32.mrb[0].mxu0
        %2267 = vmatprep.mubr.f32.mxu0 0.0
        %2268 = vmatmul.mubr.f32.gmra.mrb[0].mxu0 %v2084
        %v2269 = vpop.f32.mrb[0].mxu0
        %v2270 = vadd.f32 0.0, %v2269
        %v2271 = vpop.f32.mrb[0].mxu0
        %2272 = vmatprep.mubr.f32.mxu0 0.0
        %2273 = vmatmul.mubr.f32.gmra.mrb[0].mxu0 %v2087
        %v2274 = vpop.f32.mrb[0].mxu0
        %v2275 = vadd.f32 0.0, %v2274
        %v2276 = vpop.f32.mrb[0].mxu0
        %2277 = vmatprep.mubr.f32.mxu0 0.0
        %2278 = vmatmul.mubr.f32.gmra.mrb[0].mxu0 %v2090
        %v2279 = vpop.f32.mrb[0].mxu0
        %v2280 = vadd.f32 0.0, %v2279
        %v2281 = vpop.f32.mrb[0].mxu0
        %2282 = vmatprep.mubr.f32.mxu0 0.0
        %2283 = vmatmul.mubr.f32.gmra.mrb[0].mxu0 %v2093
        %v2284 = vpop.f32.mrb[0].mxu0
        %v2285 = vadd.f32 0.0, %v2284
        %v2286 = vpop.f32.mrb[0].mxu0
        %2287 = vmatprep.mubr.f32.mxu0 0.0
        %2288 = vmatmul.mubr.f32.gmra.mrb[0].mxu0 %v2096
        %v2289 = vpop.f32.mrb[0].mxu0
        %v2290 = vadd.f32 0.0, %v2289
        %v2291 = vpop.f32.mrb[0].mxu0
        %2292 = vmatprep.mubr.f32.mxu0 0.0
        %2293 = vmatmul.mubr.f32.gmra.mrb[0].mxu0 %v2099
        %v2294 = vpop.f32.mrb[0].mxu0
        %v2295 = vadd.f32 0.0, %v2294
        %v2296 = vpop.f32.mrb[0].mxu0
        %2297 = vmatprep.mubr.f32.mxu0 0.0
        %2298 = vmatmul.mubr.f32.gmra.mrb[0].mxu0 %v2102
        %v2299 = vpop.f32.mrb[0].mxu0
        %v2300 = vadd.f32 0.0, %v2299
        %v2301 = vpop.f32.mrb[0].mxu0
        %2302 = vmatprep.mubr.f32.mxu0 0.0
        %2303 = vmatmul.mubr.f32.gmra.mrb[0].mxu0 %v2105
        %v2304 = vpop.f32.mrb[0].mxu0
        %v2305 = vadd.f32 0.0, %v2304
        %v2306 = vpop.f32.mrb[0].mxu0
        %2307 = vmatprep.mubr.f32.mxu0 0.0
        %2308 = vmatmul.mubr.f32.gmra.mrb[0].mxu0 %v2108
        %v2309 = vpop.f32.mrb[0].mxu0
        %v2310 = vadd.f32 0.0, %v2309
        %v2311 = vpop.f32.mrb[0].mxu0
        %2312 = vmatprep.mubr.f32.mxu0 0.0
        %2313 = vmatmul.mubr.f32.gmra.mrb[0].mxu0 %v2111
        %v2314 = vpop.f32.mrb[0].mxu0
        %v2315 = vadd.f32 0.0, %v2314
        %v2316 = vpop.f32.mrb[0].mxu0
        %2317 = vmatprep.mubr.f32.mxu0 0.0
        %2318 = vmatmul.mubr.f32.gmra.mrb[0].mxu0 %v2114
        %v2319 = vpop.f32.mrb[0].mxu0
        %v2320 = vadd.f32 0.0, %v2319
        %v2321 = vpop.f32.mrb[0].mxu0
        %2322 = vmatprep.mubr.f32.mxu0 0.0
        %2323 = vmatmul.mubr.f32.gmra.mrb[0].mxu0 %v2117
        %v2324 = vpop.f32.mrb[0].mxu0
        %v2325 = vadd.f32 0.0, %v2324
        %v2326 = vpop.f32.mrb[0].mxu0
        %2327 = vmatprep.mubr.f32.mxu0 0.0
        %2328 = vmatmul.mubr.f32.gmra.mrb[0].mxu0 %v2120
        %v2329 = vpop.f32.mrb[0].mxu0
        %v2330 = vadd.f32 0.0, %v2329
        %v2331 = vpop.f32.mrb[0].mxu0
        %2332 = vmatprep.mubr.f32.mxu0 0.0
        %2333 = vmatmul.mubr.f32.gmra.mrb[0].mxu0 %v2123
        %v2334 = vpop.f32.mrb[0].mxu0
        %v2335 = vadd.f32 0.0, %v2334
        %v2336 = vpop.f32.mrb[0].mxu0
        %2337 = vmatprep.mubr.f32.mxu0 0.0
        %2338 = vmatmul.mubr.f32.gmra.mrb[0].mxu0 %v2126
        %v2339 = vpop.f32.mrb[0].mxu0
        %v2340 = vadd.f32 0.0, %v2339
        %v2341 = vpop.f32.mrb[0].mxu0
        %2342 = vmatprep.mubr.f32.mxu0 0.0
        %2343 = vmatmul.mubr.f32.gmra.mrb[0].mxu0 %v2129
        %v2344 = vpop.f32.mrb[0].mxu0
        %v2345 = vadd.f32 0.0, %v2344
        %v2346 = vpop.f32.mrb[0].mxu0
        %2347 = vmatprep.mubr.f32.mxu0 0.0
        %2348 = vmatmul.mubr.f32.gmra.mrb[0].mxu0 %v2132
        %v2349 = vpop.f32.mrb[0].mxu0
        %v2350 = vadd.f32 0.0, %v2349
        %v2351 = vpop.f32.mrb[0].mxu0
        %2352 = vmatprep.mubr.f32.mxu0 0.0
        %2353 = vmatmul.mubr.f32.gmra.mrb[0].mxu0 %v2135
        %v2354 = vpop.f32.mrb[0].mxu0
        %v2355 = vadd.f32 0.0, %v2354
        %v2356 = vpop.f32.mrb[0].mxu0
        %2357 = vmatprep.mubr.f32.mxu0 0.0
        %2358 = vmatmul.mubr.f32.gmra.mrb[0].mxu0 %v2138
        %v2359 = vpop.f32.mrb[0].mxu0
        %v2360 = vadd.f32 0.0, %v2359
        %v2361 = vpop.f32.mrb[0].mxu0
        %2362 = vmatprep.mubr.f32.mxu0 0.0
        %2363 = vmatmul.mubr.f32.gmra.mrb[0].mxu0 %v2141
        %v2364 = vpop.f32.mrb[0].mxu0
        %v2365 = vadd.f32 0.0, %v2364
        %v2366 = vpop.f32.mrb[0].mxu0
        %2367 = vmatprep.mubr.f32.mxu0 0.0
        %2368 = vmatmul.mubr.f32.gmra.mrb[0].mxu0 %v2144
        %v2369 = vpop.f32.mrb[0].mxu0
        %v2370 = vadd.f32 0.0, %v2369
        %v2371 = vpop.f32.mrb[0].mxu0
        %2372 = vmatprep.mubr.f32.mxu0 0.0
        %2373 = vmatmul.mubr.f32.gmra.mrb[0].mxu0 %v2147
        %v2374 = vpop.f32.mrb[0].mxu0
        %v2375 = vadd.f32 0.0, %v2374
        %v2376 = vpop.f32.mrb[0].mxu0
        %2377 = vmatprep.mubr.f32.mxu0 0.0
        %2378 = vmatmul.mubr.f32.gmra.mrb[0].mxu0 %v2150
        %v2379 = vpop.f32.mrb[0].mxu0
        %v2380 = vadd.f32 0.0, %v2379
        %v2381 = vpop.f32.mrb[0].mxu0
        %2382 = vmatprep.mubr.f32.mxu0 0.0
        %2383 = vmatmul.mubr.f32.gmra.mrb[0].mxu0 %v2153
        %v2384 = vpop.f32.mrb[0].mxu0
        %v2385 = vadd.f32 0.0, %v2384
        %v2386 = vpop.f32.mrb[0].mxu0
        %2387 = vmatprep.mubr.f32.mxu0 0.0
        %2388 = vmatmul.mubr.f32.gmra.mrb[0].mxu0 %v2156
        %v2389 = vpop.f32.mrb[0].mxu0
        %v2390 = vadd.f32 0.0, %v2389
        %v2391 = vpop.f32.mrb[0].mxu0
        %2392 = vmatprep.mubr.f32.mxu0 0.0
        %2393 = vmatmul.mubr.f32.gmra.mrb[0].mxu0 %v2159
        %v2394 = vpop.f32.mrb[0].mxu0
        %v2395 = vadd.f32 0.0, %v2394
        %v2396 = vpop.f32.mrb[0].mxu0
        %2397 = vmatprep.mubr.f32.mxu0 0.0
        %2398 = vmatmul.mubr.f32.gmra.mrb[0].mxu0 %v2162
        %v2399 = vpop.f32.mrb[0].mxu0
        %v2400 = vadd.f32 0.0, %v2399
        %v2401 = vpop.f32.mrb[0].mxu0
        %2402 = vmatprep.mubr.f32.mxu0 0.0
        %2403 = vmatmul.mubr.f32.gmra.mrb[0].mxu0 %v2165
        %v2404 = vpop.f32.mrb[0].mxu0
        %v2405 = vadd.f32 0.0, %v2404
        %v2406 = vpop.f32.mrb[0].mxu0
        %2407 = vmatprep.mubr.f32.mxu0 0.0
        %2408 = vmatmul.mubr.f32.gmra.mrb[0].mxu0 %v2168
        %v2409 = vpop.f32.mrb[0].mxu0
        %v2410 = vadd.f32 0.0, %v2409
        %v2411 = vpop.f32.mrb[0].mxu0
        %2412 = vmatprep.mubr.f32.mxu0 0.0
        %2413 = vmatmul.mubr.f32.gmra.mrb[0].mxu0 %v2171
        %v2414 = vpop.f32.mrb[0].mxu0
        %v2415 = vadd.f32 0.0, %v2414
        %v2416 = vpop.f32.mrb[0].mxu0
        %2417 = vmatprep.mubr.f32.mxu0 0.0
        %2418 = vmatmul.mubr.f32.gmra.mrb[0].mxu0 %v2174
        %v2419 = vpop.f32.mrb[0].mxu0
        %v2420 = vadd.f32 0.0, %v2419
        %v2421 = vpop.f32.mrb[0].mxu0
        %2422 = vmatprep.mubr.f32.mxu0 0.0
        %2423 = vmatmul.mubr.f32.gmra.mrb[0].mxu0 %v2177
        %v2424 = vpop.f32.mrb[0].mxu0
        %v2425 = vadd.f32 0.0, %v2424
        %v2426 = vpop.f32.mrb[0].mxu0
        %2427 = vdwg.mxu0
        %2464 = vrot.lane.b32.xlu0 %v1774, 25
        %v2465 = vpop.permute.xlu0 %2464
        %2466 = vrot.lane.b32.xlu0 %v1775, 25
        %v2467 = vpop.permute.xlu0 %2466
        %2468 = vrot.lane.b32.xlu0 %v1776, 25
        %v2469 = vpop.permute.xlu0 %2468
        %2470 = vrot.lane.b32.xlu0 %v1777, 25
        %v2471 = vpop.permute.xlu0 %2470
        %2472 = vrot.lane.b32.xlu0 %v1778, 25
        %v2473 = vpop.permute.xlu0 %2472
        %2474 = vrot.lane.b32.xlu0 %v1779, 25
        %v2475 = vpop.permute.xlu0 %2474
        %2476 = vrot.lane.b32.xlu0 %v1780, 25
        %v2477 = vpop.permute.xlu0 %2476
        %2478 = vrot.lane.b32.xlu0 %v1781, 25
        %v2479 = vpop.permute.xlu0 %2478
        %2480 = vrot.lane.b32.xlu0 %v1782, 25
        %v2481 = vpop.permute.xlu0 %2480
        %2482 = vrot.lane.b32.xlu0 %v1783, 25
        %v2483 = vpop.permute.xlu0 %2482
        %2484 = vrot.lane.b32.xlu0 %v1784, 25
        %v2485 = vpop.permute.xlu0 %2484
        %2486 = vrot.lane.b32.xlu0 %v1785, 25
        %v2487 = vpop.permute.xlu0 %2486
        %2488 = vrot.lane.b32.xlu0 %v1786, 25
        %v2489 = vpop.permute.xlu0 %2488
        %2490 = vrot.lane.b32.xlu0 %v1787, 25
        %v2491 = vpop.permute.xlu0 %2490
        %2492 = vrot.lane.b32.xlu0 %v1788, 25
        %v2493 = vpop.permute.xlu0 %2492
        %2494 = vrot.lane.b32.xlu0 %v1789, 25
        %v2495 = vpop.permute.xlu0 %2494
        %2496 = vrot.lane.b32.xlu0 %v1790, 25
        %v2497 = vpop.permute.xlu0 %2496
        %2498 = vrot.lane.b32.xlu0 %v1791, 25
        %v2499 = vpop.permute.xlu0 %2498
        %2500 = vrot.lane.b32.xlu0 %v1792, 25
        %v2501 = vpop.permute.xlu0 %2500
        %2502 = vrot.lane.b32.xlu0 %v1793, 25
        %v2503 = vpop.permute.xlu0 %2502
        %2504 = vrot.lane.b32.xlu0 %v1794, 25
        %v2505 = vpop.permute.xlu0 %2504
        %2506 = vrot.lane.b32.xlu0 %v1795, 25
        %v2507 = vpop.permute.xlu0 %2506
        %2508 = vrot.lane.b32.xlu0 %v1796, 25
        %v2509 = vpop.permute.xlu0 %2508
        %2510 = vrot.lane.b32.xlu0 %v1797, 25
        %v2511 = vpop.permute.xlu0 %2510
        %2512 = vrot.lane.b32.xlu0 %v1798, 25
        %v2513 = vpop.permute.xlu0 %2512
        %2514 = vrot.lane.b32.xlu0 %v1799, 25
        %v2515 = vpop.permute.xlu0 %2514
        %2516 = vrot.lane.b32.xlu0 %v1800, 25
        %v2517 = vpop.permute.xlu0 %2516
        %2518 = vrot.lane.b32.xlu0 %v1801, 25
        %v2519 = vpop.permute.xlu0 %2518
        %2520 = vrot.lane.b32.xlu0 %v1802, 25
        %v2521 = vpop.permute.xlu0 %2520
        %2522 = vrot.lane.b32.xlu0 %v1803, 25
        %v2523 = vpop.permute.xlu0 %2522
        %2524 = vrot.lane.b32.xlu0 %v1804, 25
        %v2525 = vpop.permute.xlu0 %2524
        %2526 = vrot.lane.b32.xlu0 %v1805, 25
        %v2527 = vpop.permute.xlu0 %2526
        %2528 = vrot.lane.b32.xlu0 %v1806, 25
        %v2529 = vpop.permute.xlu0 %2528
        %2530 = vrot.lane.b32.xlu0 %v1807, 25
        %v2531 = vpop.permute.xlu0 %2530
        %2532 = vrot.lane.b32.xlu0 %v1808, 25
        %v2533 = vpop.permute.xlu0 %2532
        %2534 = vrot.lane.b32.xlu0 %v1809, 25
        %v2535 = vpop.permute.xlu0 %2534
        %v2572 = vsel %vm2033, %v1630, %v2465
        %v2573 = vsel %vm2033, %v1631, %v2467
        %v2574 = vsel %vm2033, %v1632, %v2469
        %v2575 = vsel %vm2033, %v1633, %v2471
        %v2576 = vsel %vm2033, %v1634, %v2473
        %v2577 = vsel %vm2033, %v1635, %v2475
        %v2578 = vsel %vm2033, %v1636, %v2477
        %v2579 = vsel %vm2033, %v1637, %v2479
        %v2580 = vsel %vm2033, %v1638, %v2481
        %v2581 = vsel %vm2033, %v1639, %v2483
        %v2582 = vsel %vm2033, %v1640, %v2485
        %v2583 = vsel %vm2033, %v1641, %v2487
        %v2584 = vsel %vm2033, %v1642, %v2489
        %v2585 = vsel %vm2033, %v1643, %v2491
        %v2586 = vsel %vm2033, %v1644, %v2493
        %v2587 = vsel %vm2033, %v1645, %v2495
        %v2588 = vsel %vm2033, %v1646, %v2497
        %v2589 = vsel %vm2033, %v1647, %v2499
        %v2590 = vsel %vm2033, %v1648, %v2501
        %v2591 = vsel %vm2033, %v1649, %v2503
        %v2592 = vsel %vm2033, %v1650, %v2505
        %v2593 = vsel %vm2033, %v1651, %v2507
        %v2594 = vsel %vm2033, %v1652, %v2509
        %v2595 = vsel %vm2033, %v1653, %v2511
        %v2596 = vsel %vm2033, %v1654, %v2513
        %v2597 = vsel %vm2033, %v1655, %v2515
        %v2598 = vsel %vm2033, %v1656, %v2517
        %v2599 = vsel %vm2033, %v1657, %v2519
        %v2600 = vsel %vm2033, %v1658, %v2521
        %v2601 = vsel %vm2033, %v1659, %v2523
        %v2602 = vsel %vm2033, %v1660, %v2525
        %v2603 = vsel %vm2033, %v1661, %v2527
        %v2604 = vsel %vm2033, %v1662, %v2529
        %v2605 = vsel %vm2033, %v1663, %v2531
        %v2606 = vsel %vm2033, %v1664, %v2533
        %v2607 = vsel %vm2033, %v1665, %v2535
        %v2609 = vsel %vm2070, %v2572, 0
        %v2612 = vsel %vm2070, %v2573, 0
        %v2615 = vsel %vm2070, %v2574, 0
        %v2618 = vsel %vm2070, %v2575, 0
        %v2621 = vsel %vm2070, %v2576, 0
        %v2624 = vsel %vm2070, %v2577, 0
        %v2627 = vsel %vm2070, %v2578, 0
        %v2630 = vsel %vm2070, %v2579, 0
        %v2633 = vsel %vm2070, %v2580, 0
        %v2636 = vsel %vm2070, %v2581, 0
        %v2639 = vsel %vm2070, %v2582, 0
        %v2642 = vsel %vm2070, %v2583, 0
        %v2645 = vsel %vm2070, %v2584, 0
        %v2648 = vsel %vm2070, %v2585, 0
        %v2651 = vsel %vm2070, %v2586, 0
        %v2654 = vsel %vm2070, %v2587, 0
        %v2657 = vsel %vm2070, %v2588, 0
        %v2660 = vsel %vm2070, %v2589, 0
        %v2663 = vsel %vm2070, %v2590, 0
        %v2666 = vsel %vm2070, %v2591, 0
        %v2669 = vsel %vm2070, %v2592, 0
        %v2672 = vsel %vm2070, %v2593, 0
        %v2675 = vsel %vm2070, %v2594, 0
        %v2678 = vsel %vm2070, %v2595, 0
        %v2681 = vsel %vm2070, %v2596, 0
        %v2684 = vsel %vm2070, %v2597, 0
        %v2687 = vsel %vm2070, %v2598, 0
        %v2690 = vsel %vm2070, %v2599, 0
        %v2693 = vsel %vm2070, %v2600, 0
        %v2696 = vsel %vm2070, %v2601, 0
        %v2699 = vsel %vm2070, %v2602, 0
        %v2702 = vsel %vm2070, %v2603, 0
        %v2705 = vsel %vm2070, %v2604, 0
        %v2708 = vsel %vm2070, %v2605, 0
        %v2711 = vsel %vm2070, %v2606, 0
        %v2714 = vsel %vm2070, %v2607, 0
        %2716 = vmatprep.subr.mxu0 0.0
        %2717 = vmatpush1.msra.mxu0 %v1882
        %2718 = vmatprep.subr.mxu0 0.0
        %2719 = vmatpush1.msra.mxu0 %v1883
        %2720 = vmatprep.subr.mxu0 0.0
        %2721 = vmatpush1.msra.mxu0 %v1884
        %2722 = vmatprep.subr.mxu0 0.0
        %2723 = vmatpush1.msra.mxu0 %v1885
        %2724 = vmatprep.subr.mxu0 0.0
        %2725 = vmatpush1.msra.mxu0 %v1886
        %2726 = vmatprep.subr.mxu0 0.0
        %2727 = vmatpush1.msra.mxu0 %v1887
        %2728 = vmatprep.subr.mxu0 0.0
        %2729 = vmatpush1.msra.mxu0 %v2181
        %2730 = vmatprep.subr.mxu0 0.0
        %2731 = vmatpush1.msra.mxu0 0.0
        %2732 = vmatprep.subr.mxu0 0.0
        %2733 = vmatpush1.msra.mxu0 0.0
        %2734 = vmatprep.subr.mxu0 0.0
        %2735 = vmatpush1.msra.mxu0 0.0
        %2736 = vmatprep.subr.mxu0 0.0
        %2737 = vmatpush1.msra.mxu0 0.0
        %2738 = vmatprep.subr.mxu0 0.0
        %2739 = vmatpush1.msra.mxu0 0.0
        %2740 = vmatprep.subr.mxu0 0.0
        %2741 = vmatpush1.msra.mxu0 0.0
        %2742 = vmatprep.subr.mxu0 0.0
        %2743 = vmatpush1.msra.mxu0 0.0
        %2744 = vmatprep.subr.mxu0 0.0
        %2745 = vmatpush1.msra.mxu0 0.0
        %2746 = vmatprep.subr.mxu0 0.0
        %2747 = vmatpush1.msra.mxu0 0.0
        %2748 = vmatprep.subr.mxu0 0.0
        %2749 = vmatpush1.msra.mxu0 0.0
        %2750 = vmatprep.subr.mxu0 0.0
        %2751 = vmatpush1.msra.mxu0 0.0
        %2752 = vmatprep.subr.mxu0 0.0
        %2753 = vmatpush1.msra.mxu0 0.0
        %2754 = vmatprep.subr.mxu0 0.0
        %2755 = vmatpush1.msra.mxu0 0.0
        %2756 = vmatprep.subr.mxu0 0.0
        %2757 = vmatpush1.msra.mxu0 0.0
        %2758 = vmatprep.subr.mxu0 0.0
        %2759 = vmatpush1.msra.mxu0 0.0
        %2760 = vmatprep.subr.mxu0 0.0
        %2761 = vmatpush1.msra.mxu0 0.0
        %2762 = vmatprep.subr.mxu0 0.0
        %2763 = vmatpush1.msra.mxu0 0.0
        %2764 = vmatprep.subr.mxu0 0.0
        %2765 = vmatpush1.msra.mxu0 0.0
        %2766 = vmatprep.subr.mxu0 0.0
        %2767 = vmatpush1.msra.mxu0 0.0
        %2768 = vmatprep.subr.mxu0 0.0
        %2769 = vmatpush1.msra.mxu0 0.0
        %2770 = vmatprep.subr.mxu0 0.0
        %2771 = vmatpush1.msra.mxu0 0.0
        %2772 = vmatprep.subr.mxu0 0.0
        %2773 = vmatpush1.msra.mxu0 0.0
        %2774 = vmatprep.subr.mxu0 0.0
        %2775 = vmatpush1.msra.mxu0 0.0
        %2776 = vmatprep.subr.mxu0 0.0
        %2777 = vmatpush1.msra.mxu0 0.0
        %2778 = vmatprep.subr.mxu0 0.0
        %2779 = vmatpush1.msra.mxu0 0.0
        %2780 = vmatprep.mubr.f32.mxu0 0.0
        %2781 = vmatmul.mubr.f32.gmra.mrb[0].mxu0 %v2609
        %v2782 = vpop.f32.mrb[0].mxu0
        %v2783 = vadd.f32 0.0, %v2782
        %v2784 = vpop.f32.mrb[0].mxu0
        %2785 = vmatprep.mubr.f32.mxu0 0.0
        %2786 = vmatmul.mubr.f32.gmra.mrb[0].mxu0 %v2612
        %v2787 = vpop.f32.mrb[0].mxu0
        %v2788 = vadd.f32 0.0, %v2787
        %v2789 = vpop.f32.mrb[0].mxu0
        %2790 = vmatprep.mubr.f32.mxu0 0.0
        %2791 = vmatmul.mubr.f32.gmra.mrb[0].mxu0 %v2615
        %v2792 = vpop.f32.mrb[0].mxu0
        %v2793 = vadd.f32 0.0, %v2792
        %v2794 = vpop.f32.mrb[0].mxu0
        %2795 = vmatprep.mubr.f32.mxu0 0.0
        %2796 = vmatmul.mubr.f32.gmra.mrb[0].mxu0 %v2618
        %v2797 = vpop.f32.mrb[0].mxu0
        %v2798 = vadd.f32 0.0, %v2797
        %v2799 = vpop.f32.mrb[0].mxu0
        %2800 = vmatprep.mubr.f32.mxu0 0.0
        %2801 = vmatmul.mubr.f32.gmra.mrb[0].mxu0 %v2621
        %v2802 = vpop.f32.mrb[0].mxu0
        %v2803 = vadd.f32 0.0, %v2802
        %v2804 = vpop.f32.mrb[0].mxu0
        %2805 = vmatprep.mubr.f32.mxu0 0.0
        %2806 = vmatmul.mubr.f32.gmra.mrb[0].mxu0 %v2624
        %v2807 = vpop.f32.mrb[0].mxu0
        %v2808 = vadd.f32 0.0, %v2807
        %v2809 = vpop.f32.mrb[0].mxu0
        %2810 = vmatprep.mubr.f32.mxu0 0.0
        %2811 = vmatmul.mubr.f32.gmra.mrb[0].mxu0 %v2627
        %v2812 = vpop.f32.mrb[0].mxu0
        %v2813 = vadd.f32 0.0, %v2812
        %v2814 = vpop.f32.mrb[0].mxu0
        %2815 = vmatprep.mubr.f32.mxu0 0.0
        %2816 = vmatmul.mubr.f32.gmra.mrb[0].mxu0 %v2630
        %v2817 = vpop.f32.mrb[0].mxu0
        %v2818 = vadd.f32 0.0, %v2817
        %v2819 = vpop.f32.mrb[0].mxu0
        %2820 = vmatprep.mubr.f32.mxu0 0.0
        %2821 = vmatmul.mubr.f32.gmra.mrb[0].mxu0 %v2633
        %v2822 = vpop.f32.mrb[0].mxu0
        %v2823 = vadd.f32 0.0, %v2822
        %v2824 = vpop.f32.mrb[0].mxu0
        %2825 = vmatprep.mubr.f32.mxu0 0.0
        %2826 = vmatmul.mubr.f32.gmra.mrb[0].mxu0 %v2636
        %v2827 = vpop.f32.mrb[0].mxu0
        %v2828 = vadd.f32 0.0, %v2827
        %v2829 = vpop.f32.mrb[0].mxu0
        %2830 = vmatprep.mubr.f32.mxu0 0.0
        %2831 = vmatmul.mubr.f32.gmra.mrb[0].mxu0 %v2639
        %v2832 = vpop.f32.mrb[0].mxu0
        %v2833 = vadd.f32 0.0, %v2832
        %v2834 = vpop.f32.mrb[0].mxu0
        %2835 = vmatprep.mubr.f32.mxu0 0.0
        %2836 = vmatmul.mubr.f32.gmra.mrb[0].mxu0 %v2642
        %v2837 = vpop.f32.mrb[0].mxu0
        %v2838 = vadd.f32 0.0, %v2837
        %v2839 = vpop.f32.mrb[0].mxu0
        %2840 = vmatprep.mubr.f32.mxu0 0.0
        %2841 = vmatmul.mubr.f32.gmra.mrb[0].mxu0 %v2645
        %v2842 = vpop.f32.mrb[0].mxu0
        %v2843 = vadd.f32 0.0, %v2842
        %v2844 = vpop.f32.mrb[0].mxu0
        %2845 = vmatprep.mubr.f32.mxu0 0.0
        %2846 = vmatmul.mubr.f32.gmra.mrb[0].mxu0 %v2648
        %v2847 = vpop.f32.mrb[0].mxu0
        %v2848 = vadd.f32 0.0, %v2847
        %v2849 = vpop.f32.mrb[0].mxu0
        %2850 = vmatprep.mubr.f32.mxu0 0.0
        %2851 = vmatmul.mubr.f32.gmra.mrb[0].mxu0 %v2651
        %v2852 = vpop.f32.mrb[0].mxu0
        %v2853 = vadd.f32 0.0, %v2852
        %v2854 = vpop.f32.mrb[0].mxu0
        %2855 = vmatprep.mubr.f32.mxu0 0.0
        %2856 = vmatmul.mubr.f32.gmra.mrb[0].mxu0 %v2654
        %v2857 = vpop.f32.mrb[0].mxu0
        %v2858 = vadd.f32 0.0, %v2857
        %v2859 = vpop.f32.mrb[0].mxu0
        %2860 = vmatprep.mubr.f32.mxu0 0.0
        %2861 = vmatmul.mubr.f32.gmra.mrb[0].mxu0 %v2657
        %v2862 = vpop.f32.mrb[0].mxu0
        %v2863 = vadd.f32 0.0, %v2862
        %v2864 = vpop.f32.mrb[0].mxu0
        %2865 = vmatprep.mubr.f32.mxu0 0.0
        %2866 = vmatmul.mubr.f32.gmra.mrb[0].mxu0 %v2660
        %v2867 = vpop.f32.mrb[0].mxu0
        %v2868 = vadd.f32 0.0, %v2867
        %v2869 = vpop.f32.mrb[0].mxu0
        %2870 = vmatprep.mubr.f32.mxu0 0.0
        %2871 = vmatmul.mubr.f32.gmra.mrb[0].mxu0 %v2663
        %v2872 = vpop.f32.mrb[0].mxu0
        %v2873 = vadd.f32 0.0, %v2872
        %v2874 = vpop.f32.mrb[0].mxu0
        %2875 = vmatprep.mubr.f32.mxu0 0.0
        %2876 = vmatmul.mubr.f32.gmra.mrb[0].mxu0 %v2666
        %v2877 = vpop.f32.mrb[0].mxu0
        %v2878 = vadd.f32 0.0, %v2877
        %v2879 = vpop.f32.mrb[0].mxu0
        %2880 = vmatprep.mubr.f32.mxu0 0.0
        %2881 = vmatmul.mubr.f32.gmra.mrb[0].mxu0 %v2669
        %v2882 = vpop.f32.mrb[0].mxu0
        %v2883 = vadd.f32 0.0, %v2882
        %v2884 = vpop.f32.mrb[0].mxu0
        %2885 = vmatprep.mubr.f32.mxu0 0.0
        %2886 = vmatmul.mubr.f32.gmra.mrb[0].mxu0 %v2672
        %v2887 = vpop.f32.mrb[0].mxu0
        %v2888 = vadd.f32 0.0, %v2887
        %v2889 = vpop.f32.mrb[0].mxu0
        %2890 = vmatprep.mubr.f32.mxu0 0.0
        %2891 = vmatmul.mubr.f32.gmra.mrb[0].mxu0 %v2675
        %v2892 = vpop.f32.mrb[0].mxu0
        %v2893 = vadd.f32 0.0, %v2892
        %v2894 = vpop.f32.mrb[0].mxu0
        %2895 = vmatprep.mubr.f32.mxu0 0.0
        %2896 = vmatmul.mubr.f32.gmra.mrb[0].mxu0 %v2678
        %v2897 = vpop.f32.mrb[0].mxu0
        %v2898 = vadd.f32 0.0, %v2897
        %v2899 = vpop.f32.mrb[0].mxu0
        %2900 = vmatprep.mubr.f32.mxu0 0.0
        %2901 = vmatmul.mubr.f32.gmra.mrb[0].mxu0 %v2681
        %v2902 = vpop.f32.mrb[0].mxu0
        %v2903 = vadd.f32 0.0, %v2902
        %v2904 = vpop.f32.mrb[0].mxu0
        %2905 = vmatprep.mubr.f32.mxu0 0.0
        %2906 = vmatmul.mubr.f32.gmra.mrb[0].mxu0 %v2684
        %v2907 = vpop.f32.mrb[0].mxu0
        %v2908 = vadd.f32 0.0, %v2907
        %v2909 = vpop.f32.mrb[0].mxu0
        %2910 = vmatprep.mubr.f32.mxu0 0.0
        %2911 = vmatmul.mubr.f32.gmra.mrb[0].mxu0 %v2687
        %v2912 = vpop.f32.mrb[0].mxu0
        %v2913 = vadd.f32 0.0, %v2912
        %v2914 = vpop.f32.mrb[0].mxu0
        %2915 = vmatprep.mubr.f32.mxu0 0.0
        %2916 = vmatmul.mubr.f32.gmra.mrb[0].mxu0 %v2690
        %v2917 = vpop.f32.mrb[0].mxu0
        %v2918 = vadd.f32 0.0, %v2917
        %v2919 = vpop.f32.mrb[0].mxu0
        %2920 = vmatprep.mubr.f32.mxu0 0.0
        %2921 = vmatmul.mubr.f32.gmra.mrb[0].mxu0 %v2693
        %v2922 = vpop.f32.mrb[0].mxu0
        %v2923 = vadd.f32 0.0, %v2922
        %v2924 = vpop.f32.mrb[0].mxu0
        %2925 = vmatprep.mubr.f32.mxu0 0.0
        %2926 = vmatmul.mubr.f32.gmra.mrb[0].mxu0 %v2696
        %v2927 = vpop.f32.mrb[0].mxu0
        %v2928 = vadd.f32 0.0, %v2927
        %v2929 = vpop.f32.mrb[0].mxu0
        %2930 = vmatprep.mubr.f32.mxu0 0.0
        %2931 = vmatmul.mubr.f32.gmra.mrb[0].mxu0 %v2699
        %v2932 = vpop.f32.mrb[0].mxu0
        %v2933 = vadd.f32 0.0, %v2932
        %v2934 = vpop.f32.mrb[0].mxu0
        %2935 = vmatprep.mubr.f32.mxu0 0.0
        %2936 = vmatmul.mubr.f32.gmra.mrb[0].mxu0 %v2702
        %v2937 = vpop.f32.mrb[0].mxu0
        %v2938 = vadd.f32 0.0, %v2937
        %v2939 = vpop.f32.mrb[0].mxu0
        %2940 = vmatprep.mubr.f32.mxu0 0.0
        %2941 = vmatmul.mubr.f32.gmra.mrb[0].mxu0 %v2705
        %v2942 = vpop.f32.mrb[0].mxu0
        %v2943 = vadd.f32 0.0, %v2942
        %v2944 = vpop.f32.mrb[0].mxu0
        %2945 = vmatprep.mubr.f32.mxu0 0.0
        %2946 = vmatmul.mubr.f32.gmra.mrb[0].mxu0 %v2708
        %v2947 = vpop.f32.mrb[0].mxu0
        %v2948 = vadd.f32 0.0, %v2947
        %v2949 = vpop.f32.mrb[0].mxu0
        %2950 = vmatprep.mubr.f32.mxu0 0.0
        %2951 = vmatmul.mubr.f32.gmra.mrb[0].mxu0 %v2711
        %v2952 = vpop.f32.mrb[0].mxu0
        %v2953 = vadd.f32 0.0, %v2952
        %v2954 = vpop.f32.mrb[0].mxu0
        %2955 = vmatprep.mubr.f32.mxu0 0.0
        %2956 = vmatmul.mubr.f32.gmra.mrb[0].mxu0 %v2714
        %v2957 = vpop.f32.mrb[0].mxu0
        %v2958 = vadd.f32 0.0, %v2957
        %v2959 = vpop.f32.mrb[0].mxu0
        %2960 = vdwg.mxu0
        %2997 = vrot.lane.b32.xlu0 %v1810, 25
        %v2998 = vpop.permute.xlu0 %2997
        %2999 = vrot.lane.b32.xlu0 %v1811, 25
        %v3000 = vpop.permute.xlu0 %2999
        %3001 = vrot.lane.b32.xlu0 %v1812, 25
        %v3002 = vpop.permute.xlu0 %3001
        %3003 = vrot.lane.b32.xlu0 %v1813, 25
        %v3004 = vpop.permute.xlu0 %3003
        %3005 = vrot.lane.b32.xlu0 %v1814, 25
        %v3006 = vpop.permute.xlu0 %3005
        %3007 = vrot.lane.b32.xlu0 %v1815, 25
        %v3008 = vpop.permute.xlu0 %3007
        %3009 = vrot.lane.b32.xlu0 %v1816, 25
        %v3010 = vpop.permute.xlu0 %3009
        %3011 = vrot.lane.b32.xlu0 %v1817, 25
        %v3012 = vpop.permute.xlu0 %3011
        %3013 = vrot.lane.b32.xlu0 %v1818, 25
        %v3014 = vpop.permute.xlu0 %3013
        %3015 = vrot.lane.b32.xlu0 %v1819, 25
        %v3016 = vpop.permute.xlu0 %3015
        %3017 = vrot.lane.b32.xlu0 %v1820, 25
        %v3018 = vpop.permute.xlu0 %3017
        %3019 = vrot.lane.b32.xlu0 %v1821, 25
        %v3020 = vpop.permute.xlu0 %3019
        %3021 = vrot.lane.b32.xlu0 %v1822, 25
        %v3022 = vpop.permute.xlu0 %3021
        %3023 = vrot.lane.b32.xlu0 %v1823, 25
        %v3024 = vpop.permute.xlu0 %3023
        %3025 = vrot.lane.b32.xlu0 %v1824, 25
        %v3026 = vpop.permute.xlu0 %3025
        %3027 = vrot.lane.b32.xlu0 %v1825, 25
        %v3028 = vpop.permute.xlu0 %3027
        %3029 = vrot.lane.b32.xlu0 %v1826, 25
        %v3030 = vpop.permute.xlu0 %3029
        %3031 = vrot.lane.b32.xlu0 %v1827, 25
        %v3032 = vpop.permute.xlu0 %3031
        %3033 = vrot.lane.b32.xlu0 %v1828, 25
        %v3034 = vpop.permute.xlu0 %3033
        %3035 = vrot.lane.b32.xlu0 %v1829, 25
        %v3036 = vpop.permute.xlu0 %3035
        %3037 = vrot.lane.b32.xlu0 %v1830, 25
        %v3038 = vpop.permute.xlu0 %3037
        %3039 = vrot.lane.b32.xlu0 %v1831, 25
        %v3040 = vpop.permute.xlu0 %3039
        %3041 = vrot.lane.b32.xlu0 %v1832, 25
        %v3042 = vpop.permute.xlu0 %3041
        %3043 = vrot.lane.b32.xlu0 %v1833, 25
        %v3044 = vpop.permute.xlu0 %3043
        %3045 = vrot.lane.b32.xlu0 %v1834, 25
        %v3046 = vpop.permute.xlu0 %3045
        %3047 = vrot.lane.b32.xlu0 %v1835, 25
        %v3048 = vpop.permute.xlu0 %3047
        %3049 = vrot.lane.b32.xlu0 %v1836, 25
        %v3050 = vpop.permute.xlu0 %3049
        %3051 = vrot.lane.b32.xlu0 %v1837, 25
        %v3052 = vpop.permute.xlu0 %3051
        %3053 = vrot.lane.b32.xlu0 %v1838, 25
        %v3054 = vpop.permute.xlu0 %3053
        %3055 = vrot.lane.b32.xlu0 %v1839, 25
        %v3056 = vpop.permute.xlu0 %3055
        %3057 = vrot.lane.b32.xlu0 %v1840, 25
        %v3058 = vpop.permute.xlu0 %3057
        %3059 = vrot.lane.b32.xlu0 %v1841, 25
        %v3060 = vpop.permute.xlu0 %3059
        %3061 = vrot.lane.b32.xlu0 %v1842, 25
        %v3062 = vpop.permute.xlu0 %3061
        %3063 = vrot.lane.b32.xlu0 %v1843, 25
        %v3064 = vpop.permute.xlu0 %3063
        %3065 = vrot.lane.b32.xlu0 %v1844, 25
        %v3066 = vpop.permute.xlu0 %3065
        %3067 = vrot.lane.b32.xlu0 %v1845, 25
        %v3068 = vpop.permute.xlu0 %3067
        %v3105 = vsel %vm2033, %v1666, %v2998
        %v3106 = vsel %vm2033, %v1667, %v3000
        %v3107 = vsel %vm2033, %v1668, %v3002
        %v3108 = vsel %vm2033, %v1669, %v3004
        %v3109 = vsel %vm2033, %v1670, %v3006
        %v3110 = vsel %vm2033, %v1671, %v3008
        %v3111 = vsel %vm2033, %v1672, %v3010
        %v3112 = vsel %vm2033, %v1673, %v3012
        %v3113 = vsel %vm2033, %v1674, %v3014
        %v3114 = vsel %vm2033, %v1675, %v3016
        %v3115 = vsel %vm2033, %v1676, %v3018
        %v3116 = vsel %vm2033, %v1677, %v3020
        %v3117 = vsel %vm2033, %v1678, %v3022
        %v3118 = vsel %vm2033, %v1679, %v3024
        %v3119 = vsel %vm2033, %v1680, %v3026
        %v3120 = vsel %vm2033, %v1681, %v3028
        %v3121 = vsel %vm2033, %v1682, %v3030
        %v3122 = vsel %vm2033, %v1683, %v3032
        %v3123 = vsel %vm2033, %v1684, %v3034
        %v3124 = vsel %vm2033, %v1685, %v3036
        %v3125 = vsel %vm2033, %v1686, %v3038
        %v3126 = vsel %vm2033, %v1687, %v3040
        %v3127 = vsel %vm2033, %v1688, %v3042
        %v3128 = vsel %vm2033, %v1689, %v3044
        %v3129 = vsel %vm2033, %v1690, %v3046
        %v3130 = vsel %vm2033, %v1691, %v3048
        %v3131 = vsel %vm2033, %v1692, %v3050
        %v3132 = vsel %vm2033, %v1693, %v3052
        %v3133 = vsel %vm2033, %v1694, %v3054
        %v3134 = vsel %vm2033, %v1695, %v3056
        %v3135 = vsel %vm2033, %v1696, %v3058
        %v3136 = vsel %vm2033, %v1697, %v3060
        %v3137 = vsel %vm2033, %v1698, %v3062
        %v3138 = vsel %vm2033, %v1699, %v3064
        %v3139 = vsel %vm2033, %v1700, %v3066
        %v3140 = vsel %vm2033, %v1701, %v3068
        %v3142 = vsel %vm2070, %v3105, 0
        %v3145 = vsel %vm2070, %v3106, 0
        %v3148 = vsel %vm2070, %v3107, 0
        %v3151 = vsel %vm2070, %v3108, 0
        %v3154 = vsel %vm2070, %v3109, 0
        %v3157 = vsel %vm2070, %v3110, 0
        %v3160 = vsel %vm2070, %v3111, 0
        %v3163 = vsel %vm2070, %v3112, 0
        %v3166 = vsel %vm2070, %v3113, 0
        %v3169 = vsel %vm2070, %v3114, 0
        %v3172 = vsel %vm2070, %v3115, 0
        %v3175 = vsel %vm2070, %v3116, 0
        %v3178 = vsel %vm2070, %v3117, 0
        %v3181 = vsel %vm2070, %v3118, 0
        %v3184 = vsel %vm2070, %v3119, 0
        %v3187 = vsel %vm2070, %v3120, 0
        %v3190 = vsel %vm2070, %v3121, 0
        %v3193 = vsel %vm2070, %v3122, 0
        %v3196 = vsel %vm2070, %v3123, 0
        %v3199 = vsel %vm2070, %v3124, 0
        %v3202 = vsel %vm2070, %v3125, 0
        %v3205 = vsel %vm2070, %v3126, 0
        %v3208 = vsel %vm2070, %v3127, 0
        %v3211 = vsel %vm2070, %v3128, 0
        %v3214 = vsel %vm2070, %v3129, 0
        %v3217 = vsel %vm2070, %v3130, 0
        %v3220 = vsel %vm2070, %v3131, 0
        %v3223 = vsel %vm2070, %v3132, 0
        %v3226 = vsel %vm2070, %v3133, 0
        %v3229 = vsel %vm2070, %v3134, 0
        %v3232 = vsel %vm2070, %v3135, 0
        %v3235 = vsel %vm2070, %v3136, 0
        %v3238 = vsel %vm2070, %v3137, 0
        %v3241 = vsel %vm2070, %v3138, 0
        %v3244 = vsel %vm2070, %v3139, 0
        %v3247 = vsel %vm2070, %v3140, 0
        %3249 = vmatprep.subr.mxu0 0.0
        %3250 = vmatpush1.msra.mxu0 %v1882
        %3251 = vmatprep.subr.mxu0 0.0
        %3252 = vmatpush1.msra.mxu0 %v1883
        %3253 = vmatprep.subr.mxu0 0.0
        %3254 = vmatpush1.msra.mxu0 %v1884
        %3255 = vmatprep.subr.mxu0 0.0
        %3256 = vmatpush1.msra.mxu0 %v1885
        %3257 = vmatprep.subr.mxu0 0.0
        %3258 = vmatpush1.msra.mxu0 %v1886
        %3259 = vmatprep.subr.mxu0 0.0
        %3260 = vmatpush1.msra.mxu0 %v1887
        %3261 = vmatprep.subr.mxu0 0.0
        %3262 = vmatpush1.msra.mxu0 %v2181
        %3263 = vmatprep.subr.mxu0 0.0
        %3264 = vmatpush1.msra.mxu0 0.0
        %3265 = vmatprep.subr.mxu0 0.0
        %3266 = vmatpush1.msra.mxu0 0.0
        %3267 = vmatprep.subr.mxu0 0.0
        %3268 = vmatpush1.msra.mxu0 0.0
        %3269 = vmatprep.subr.mxu0 0.0
        %3270 = vmatpush1.msra.mxu0 0.0
        %3271 = vmatprep.subr.mxu0 0.0
        %3272 = vmatpush1.msra.mxu0 0.0
        %3273 = vmatprep.subr.mxu0 0.0
        %3274 = vmatpush1.msra.mxu0 0.0
        %3275 = vmatprep.subr.mxu0 0.0
        %3276 = vmatpush1.msra.mxu0 0.0
        %3277 = vmatprep.subr.mxu0 0.0
        %3278 = vmatpush1.msra.mxu0 0.0
        %3279 = vmatprep.subr.mxu0 0.0
        %3280 = vmatpush1.msra.mxu0 0.0
        %3281 = vmatprep.subr.mxu0 0.0
        %3282 = vmatpush1.msra.mxu0 0.0
        %3283 = vmatprep.subr.mxu0 0.0
        %3284 = vmatpush1.msra.mxu0 0.0
        %3285 = vmatprep.subr.mxu0 0.0
        %3286 = vmatpush1.msra.mxu0 0.0
        %3287 = vmatprep.subr.mxu0 0.0
        %3288 = vmatpush1.msra.mxu0 0.0
        %3289 = vmatprep.subr.mxu0 0.0
        %3290 = vmatpush1.msra.mxu0 0.0
        %3291 = vmatprep.subr.mxu0 0.0
        %3292 = vmatpush1.msra.mxu0 0.0
        %3293 = vmatprep.subr.mxu0 0.0
        %3294 = vmatpush1.msra.mxu0 0.0
        %3295 = vmatprep.subr.mxu0 0.0
        %3296 = vmatpush1.msra.mxu0 0.0
        %3297 = vmatprep.subr.mxu0 0.0
        %3298 = vmatpush1.msra.mxu0 0.0
        %3299 = vmatprep.subr.mxu0 0.0
        %3300 = vmatpush1.msra.mxu0 0.0
        %3301 = vmatprep.subr.mxu0 0.0
        %3302 = vmatpush1.msra.mxu0 0.0
        %3303 = vmatprep.subr.mxu0 0.0
        %3304 = vmatpush1.msra.mxu0 0.0
        %3305 = vmatprep.subr.mxu0 0.0
        %3306 = vmatpush1.msra.mxu0 0.0
        %3307 = vmatprep.subr.mxu0 0.0
        %3308 = vmatpush1.msra.mxu0 0.0
        %3309 = vmatprep.subr.mxu0 0.0
        %3310 = vmatpush1.msra.mxu0 0.0
        %3311 = vmatprep.subr.mxu0 0.0
        %3312 = vmatpush1.msra.mxu0 0.0
        %3313 = vmatprep.mubr.f32.mxu0 0.0
        %3314 = vmatmul.mubr.f32.gmra.mrb[0].mxu0 %v3142
        %v3315 = vpop.f32.mrb[0].mxu0
        %v3316 = vadd.f32 0.0, %v3315
        %v3317 = vpop.f32.mrb[0].mxu0
        %3318 = vmatprep.mubr.f32.mxu0 0.0
        %3319 = vmatmul.mubr.f32.gmra.mrb[0].mxu0 %v3145
        %v3320 = vpop.f32.mrb[0].mxu0
        %v3321 = vadd.f32 0.0, %v3320
        %v3322 = vpop.f32.mrb[0].mxu0
        %3323 = vmatprep.mubr.f32.mxu0 0.0
        %3324 = vmatmul.mubr.f32.gmra.mrb[0].mxu0 %v3148
        %v3325 = vpop.f32.mrb[0].mxu0
        %v3326 = vadd.f32 0.0, %v3325
        %v3327 = vpop.f32.mrb[0].mxu0
        %3328 = vmatprep.mubr.f32.mxu0 0.0
        %3329 = vmatmul.mubr.f32.gmra.mrb[0].mxu0 %v3151
        %v3330 = vpop.f32.mrb[0].mxu0
        %v3331 = vadd.f32 0.0, %v3330
        %v3332 = vpop.f32.mrb[0].mxu0
        %3333 = vmatprep.mubr.f32.mxu0 0.0
        %3334 = vmatmul.mubr.f32.gmra.mrb[0].mxu0 %v3154
        %v3335 = vpop.f32.mrb[0].mxu0
        %v3336 = vadd.f32 0.0, %v3335
        %v3337 = vpop.f32.mrb[0].mxu0
        %3338 = vmatprep.mubr.f32.mxu0 0.0
        %3339 = vmatmul.mubr.f32.gmra.mrb[0].mxu0 %v3157
        %v3340 = vpop.f32.mrb[0].mxu0
        %v3341 = vadd.f32 0.0, %v3340
        %v3342 = vpop.f32.mrb[0].mxu0
        %3343 = vmatprep.mubr.f32.mxu0 0.0
        %3344 = vmatmul.mubr.f32.gmra.mrb[0].mxu0 %v3160
        %v3345 = vpop.f32.mrb[0].mxu0
        %v3346 = vadd.f32 0.0, %v3345
        %v3347 = vpop.f32.mrb[0].mxu0
        %3348 = vmatprep.mubr.f32.mxu0 0.0
        %3349 = vmatmul.mubr.f32.gmra.mrb[0].mxu0 %v3163
        %v3350 = vpop.f32.mrb[0].mxu0
        %v3351 = vadd.f32 0.0, %v3350
        %v3352 = vpop.f32.mrb[0].mxu0
        %3353 = vmatprep.mubr.f32.mxu0 0.0
        %3354 = vmatmul.mubr.f32.gmra.mrb[0].mxu0 %v3166
        %v3355 = vpop.f32.mrb[0].mxu0
        %v3356 = vadd.f32 0.0, %v3355
        %v3357 = vpop.f32.mrb[0].mxu0
        %3358 = vmatprep.mubr.f32.mxu0 0.0
        %3359 = vmatmul.mubr.f32.gmra.mrb[0].mxu0 %v3169
        %v3360 = vpop.f32.mrb[0].mxu0
        %v3361 = vadd.f32 0.0, %v3360
        %v3362 = vpop.f32.mrb[0].mxu0
        %3363 = vmatprep.mubr.f32.mxu0 0.0
        %3364 = vmatmul.mubr.f32.gmra.mrb[0].mxu0 %v3172
        %v3365 = vpop.f32.mrb[0].mxu0
        %v3366 = vadd.f32 0.0, %v3365
        %v3367 = vpop.f32.mrb[0].mxu0
        %3368 = vmatprep.mubr.f32.mxu0 0.0
        %3369 = vmatmul.mubr.f32.gmra.mrb[0].mxu0 %v3175
        %v3370 = vpop.f32.mrb[0].mxu0
        %v3371 = vadd.f32 0.0, %v3370
        %v3372 = vpop.f32.mrb[0].mxu0
        %3373 = vmatprep.mubr.f32.mxu0 0.0
        %3374 = vmatmul.mubr.f32.gmra.mrb[0].mxu0 %v3178
        %v3375 = vpop.f32.mrb[0].mxu0
        %v3376 = vadd.f32 0.0, %v3375
        %v3377 = vpop.f32.mrb[0].mxu0
        %3378 = vmatprep.mubr.f32.mxu0 0.0
        %3379 = vmatmul.mubr.f32.gmra.mrb[0].mxu0 %v3181
        %v3380 = vpop.f32.mrb[0].mxu0
        %v3381 = vadd.f32 0.0, %v3380
        %v3382 = vpop.f32.mrb[0].mxu0
        %3383 = vmatprep.mubr.f32.mxu0 0.0
        %3384 = vmatmul.mubr.f32.gmra.mrb[0].mxu0 %v3184
        %v3385 = vpop.f32.mrb[0].mxu0
        %v3386 = vadd.f32 0.0, %v3385
        %v3387 = vpop.f32.mrb[0].mxu0
        %3388 = vmatprep.mubr.f32.mxu0 0.0
        %3389 = vmatmul.mubr.f32.gmra.mrb[0].mxu0 %v3187
        %v3390 = vpop.f32.mrb[0].mxu0
        %v3391 = vadd.f32 0.0, %v3390
        %v3392 = vpop.f32.mrb[0].mxu0
        %3393 = vmatprep.mubr.f32.mxu0 0.0
        %3394 = vmatmul.mubr.f32.gmra.mrb[0].mxu0 %v3190
        %v3395 = vpop.f32.mrb[0].mxu0
        %v3396 = vadd.f32 0.0, %v3395
        %v3397 = vpop.f32.mrb[0].mxu0
        %3398 = vmatprep.mubr.f32.mxu0 0.0
        %3399 = vmatmul.mubr.f32.gmra.mrb[0].mxu0 %v3193
        %v3400 = vpop.f32.mrb[0].mxu0
        %v3401 = vadd.f32 0.0, %v3400
        %v3402 = vpop.f32.mrb[0].mxu0
        %3403 = vmatprep.mubr.f32.mxu0 0.0
        %3404 = vmatmul.mubr.f32.gmra.mrb[0].mxu0 %v3196
        %v3405 = vpop.f32.mrb[0].mxu0
        %v3406 = vadd.f32 0.0, %v3405
        %v3407 = vpop.f32.mrb[0].mxu0
        %3408 = vmatprep.mubr.f32.mxu0 0.0
        %3409 = vmatmul.mubr.f32.gmra.mrb[0].mxu0 %v3199
        %v3410 = vpop.f32.mrb[0].mxu0
        %v3411 = vadd.f32 0.0, %v3410
        %v3412 = vpop.f32.mrb[0].mxu0
        %3413 = vmatprep.mubr.f32.mxu0 0.0
        %3414 = vmatmul.mubr.f32.gmra.mrb[0].mxu0 %v3202
        %v3415 = vpop.f32.mrb[0].mxu0
        %v3416 = vadd.f32 0.0, %v3415
        %v3417 = vpop.f32.mrb[0].mxu0
        %3418 = vmatprep.mubr.f32.mxu0 0.0
        %3419 = vmatmul.mubr.f32.gmra.mrb[0].mxu0 %v3205
        %v3420 = vpop.f32.mrb[0].mxu0
        %v3421 = vadd.f32 0.0, %v3420
        %v3422 = vpop.f32.mrb[0].mxu0
        %3423 = vmatprep.mubr.f32.mxu0 0.0
        %3424 = vmatmul.mubr.f32.gmra.mrb[0].mxu0 %v3208
        %v3425 = vpop.f32.mrb[0].mxu0
        %v3426 = vadd.f32 0.0, %v3425
        %v3427 = vpop.f32.mrb[0].mxu0
        %3428 = vmatprep.mubr.f32.mxu0 0.0
        %3429 = vmatmul.mubr.f32.gmra.mrb[0].mxu0 %v3211
        %v3430 = vpop.f32.mrb[0].mxu0
        %v3431 = vadd.f32 0.0, %v3430
        %v3432 = vpop.f32.mrb[0].mxu0
        %3433 = vmatprep.mubr.f32.mxu0 0.0
        %3434 = vmatmul.mubr.f32.gmra.mrb[0].mxu0 %v3214
        %v3435 = vpop.f32.mrb[0].mxu0
        %v3436 = vadd.f32 0.0, %v3435
        %v3437 = vpop.f32.mrb[0].mxu0
        %3438 = vmatprep.mubr.f32.mxu0 0.0
        %3439 = vmatmul.mubr.f32.gmra.mrb[0].mxu0 %v3217
        %v3440 = vpop.f32.mrb[0].mxu0
        %v3441 = vadd.f32 0.0, %v3440
        %v3442 = vpop.f32.mrb[0].mxu0
        %3443 = vmatprep.mubr.f32.mxu0 0.0
        %3444 = vmatmul.mubr.f32.gmra.mrb[0].mxu0 %v3220
        %v3445 = vpop.f32.mrb[0].mxu0
        %v3446 = vadd.f32 0.0, %v3445
        %v3447 = vpop.f32.mrb[0].mxu0
        %3448 = vmatprep.mubr.f32.mxu0 0.0
        %3449 = vmatmul.mubr.f32.gmra.mrb[0].mxu0 %v3223
        %v3450 = vpop.f32.mrb[0].mxu0
        %v3451 = vadd.f32 0.0, %v3450
        %v3452 = vpop.f32.mrb[0].mxu0
        %3453 = vmatprep.mubr.f32.mxu0 0.0
        %3454 = vmatmul.mubr.f32.gmra.mrb[0].mxu0 %v3226
        %v3455 = vpop.f32.mrb[0].mxu0
        %v3456 = vadd.f32 0.0, %v3455
        %v3457 = vpop.f32.mrb[0].mxu0
        %3458 = vmatprep.mubr.f32.mxu0 0.0
        %3459 = vmatmul.mubr.f32.gmra.mrb[0].mxu0 %v3229
        %v3460 = vpop.f32.mrb[0].mxu0
        %v3461 = vadd.f32 0.0, %v3460
        %v3462 = vpop.f32.mrb[0].mxu0
        %3463 = vmatprep.mubr.f32.mxu0 0.0
        %3464 = vmatmul.mubr.f32.gmra.mrb[0].mxu0 %v3232
        %v3465 = vpop.f32.mrb[0].mxu0
        %v3466 = vadd.f32 0.0, %v3465
        %v3467 = vpop.f32.mrb[0].mxu0
        %3468 = vmatprep.mubr.f32.mxu0 0.0
        %3469 = vmatmul.mubr.f32.gmra.mrb[0].mxu0 %v3235
        %v3470 = vpop.f32.mrb[0].mxu0
        %v3471 = vadd.f32 0.0, %v3470
        %v3472 = vpop.f32.mrb[0].mxu0
        %3473 = vmatprep.mubr.f32.mxu0 0.0
        %3474 = vmatmul.mubr.f32.gmra.mrb[0].mxu0 %v3238
        %v3475 = vpop.f32.mrb[0].mxu0
        %v3476 = vadd.f32 0.0, %v3475
        %v3477 = vpop.f32.mrb[0].mxu0
        %3478 = vmatprep.mubr.f32.mxu0 0.0
        %3479 = vmatmul.mubr.f32.gmra.mrb[0].mxu0 %v3241
        %v3480 = vpop.f32.mrb[0].mxu0
        %v3481 = vadd.f32 0.0, %v3480
        %v3482 = vpop.f32.mrb[0].mxu0
        %3483 = vmatprep.mubr.f32.mxu0 0.0
        %3484 = vmatmul.mubr.f32.gmra.mrb[0].mxu0 %v3244
        %v3485 = vpop.f32.mrb[0].mxu0
        %v3486 = vadd.f32 0.0, %v3485
        %v3487 = vpop.f32.mrb[0].mxu0
        %3488 = vmatprep.mubr.f32.mxu0 0.0
        %3489 = vmatmul.mubr.f32.gmra.mrb[0].mxu0 %v3247
        %v3490 = vpop.f32.mrb[0].mxu0
        %v3491 = vadd.f32 0.0, %v3490
        %v3492 = vpop.f32.mrb[0].mxu0
        %3493 = vdwg.mxu0
        %3530 = vrot.lane.b32.xlu0 %v1846, 25
        %v3531 = vpop.permute.xlu0 %3530
        %3532 = vrot.lane.b32.xlu0 %v1847, 25
        %v3533 = vpop.permute.xlu0 %3532
        %3534 = vrot.lane.b32.xlu0 %v1848, 25
        %v3535 = vpop.permute.xlu0 %3534
        %3536 = vrot.lane.b32.xlu0 %v1849, 25
        %v3537 = vpop.permute.xlu0 %3536
        %3538 = vrot.lane.b32.xlu0 %v1850, 25
        %v3539 = vpop.permute.xlu0 %3538
        %3540 = vrot.lane.b32.xlu0 %v1851, 25
        %v3541 = vpop.permute.xlu0 %3540
        %3542 = vrot.lane.b32.xlu0 %v1852, 25
        %v3543 = vpop.permute.xlu0 %3542
        %3544 = vrot.lane.b32.xlu0 %v1853, 25
        %v3545 = vpop.permute.xlu0 %3544
        %3546 = vrot.lane.b32.xlu0 %v1854, 25
        %v3547 = vpop.permute.xlu0 %3546
        %3548 = vrot.lane.b32.xlu0 %v1855, 25
        %v3549 = vpop.permute.xlu0 %3548
        %3550 = vrot.lane.b32.xlu0 %v1856, 25
        %v3551 = vpop.permute.xlu0 %3550
        %3552 = vrot.lane.b32.xlu0 %v1857, 25
        %v3553 = vpop.permute.xlu0 %3552
        %3554 = vrot.lane.b32.xlu0 %v1858, 25
        %v3555 = vpop.permute.xlu0 %3554
        %3556 = vrot.lane.b32.xlu0 %v1859, 25
        %v3557 = vpop.permute.xlu0 %3556
        %3558 = vrot.lane.b32.xlu0 %v1860, 25
        %v3559 = vpop.permute.xlu0 %3558
        %3560 = vrot.lane.b32.xlu0 %v1861, 25
        %v3561 = vpop.permute.xlu0 %3560
        %3562 = vrot.lane.b32.xlu0 %v1862, 25
        %v3563 = vpop.permute.xlu0 %3562
        %3564 = vrot.lane.b32.xlu0 %v1863, 25
        %v3565 = vpop.permute.xlu0 %3564
        %3566 = vrot.lane.b32.xlu0 %v1864, 25
        %v3567 = vpop.permute.xlu0 %3566
        %3568 = vrot.lane.b32.xlu0 %v1865, 25
        %v3569 = vpop.permute.xlu0 %3568
        %3570 = vrot.lane.b32.xlu0 %v1866, 25
        %v3571 = vpop.permute.xlu0 %3570
        %3572 = vrot.lane.b32.xlu0 %v1867, 25
        %v3573 = vpop.permute.xlu0 %3572
        %3574 = vrot.lane.b32.xlu0 %v1868, 25
        %v3575 = vpop.permute.xlu0 %3574
        %3576 = vrot.lane.b32.xlu0 %v1869, 25
        %v3577 = vpop.permute.xlu0 %3576
        %3578 = vrot.lane.b32.xlu0 %v1870, 25
        %v3579 = vpop.permute.xlu0 %3578
        %3580 = vrot.lane.b32.xlu0 %v1871, 25
        %v3581 = vpop.permute.xlu0 %3580
        %3582 = vrot.lane.b32.xlu0 %v1872, 25
        %v3583 = vpop.permute.xlu0 %3582
        %3584 = vrot.lane.b32.xlu0 %v1873, 25
        %v3585 = vpop.permute.xlu0 %3584
        %3586 = vrot.lane.b32.xlu0 %v1874, 25
        %v3587 = vpop.permute.xlu0 %3586
        %3588 = vrot.lane.b32.xlu0 %v1875, 25
        %v3589 = vpop.permute.xlu0 %3588
        %3590 = vrot.lane.b32.xlu0 %v1876, 25
        %v3591 = vpop.permute.xlu0 %3590
        %3592 = vrot.lane.b32.xlu0 %v1877, 25
        %v3593 = vpop.permute.xlu0 %3592
        %3594 = vrot.lane.b32.xlu0 %v1878, 25
        %v3595 = vpop.permute.xlu0 %3594
        %3596 = vrot.lane.b32.xlu0 %v1879, 25
        %v3597 = vpop.permute.xlu0 %3596
        %3598 = vrot.lane.b32.xlu0 %v1880, 25
        %v3599 = vpop.permute.xlu0 %3598
        %3600 = vrot.lane.b32.xlu0 %v1881, 25
        %v3601 = vpop.permute.xlu0 %3600
        %v3638 = vsel %vm2033, %v1702, %v3531
        %v3639 = vsel %vm2033, %v1703, %v3533
        %v3640 = vsel %vm2033, %v1704, %v3535
        %v3641 = vsel %vm2033, %v1705, %v3537
        %v3642 = vsel %vm2033, %v1706, %v3539
        %v3643 = vsel %vm2033, %v1707, %v3541
        %v3644 = vsel %vm2033, %v1708, %v3543
        %v3645 = vsel %vm2033, %v1709, %v3545
        %v3646 = vsel %vm2033, %v1710, %v3547
        %v3647 = vsel %vm2033, %v1711, %v3549
        %v3648 = vsel %vm2033, %v1712, %v3551
        %v3649 = vsel %vm2033, %v1713, %v3553
        %v3650 = vsel %vm2033, %v1714, %v3555
        %v3651 = vsel %vm2033, %v1715, %v3557
        %v3652 = vsel %vm2033, %v1716, %v3559
        %v3653 = vsel %vm2033, %v1717, %v3561
        %v3654 = vsel %vm2033, %v1718, %v3563
        %v3655 = vsel %vm2033, %v1719, %v3565
        %v3656 = vsel %vm2033, %v1720, %v3567
        %v3657 = vsel %vm2033, %v1721, %v3569
        %v3658 = vsel %vm2033, %v1722, %v3571
        %v3659 = vsel %vm2033, %v1723, %v3573
        %v3660 = vsel %vm2033, %v1724, %v3575
        %v3661 = vsel %vm2033, %v1725, %v3577
        %v3662 = vsel %vm2033, %v1726, %v3579
        %v3663 = vsel %vm2033, %v1727, %v3581
        %v3664 = vsel %vm2033, %v1728, %v3583
        %v3665 = vsel %vm2033, %v1729, %v3585
        %v3666 = vsel %vm2033, %v1730, %v3587
        %v3667 = vsel %vm2033, %v1731, %v3589
        %v3668 = vsel %vm2033, %v1732, %v3591
        %v3669 = vsel %vm2033, %v1733, %v3593
        %v3670 = vsel %vm2033, %v1734, %v3595
        %v3671 = vsel %vm2033, %v1735, %v3597
        %v3672 = vsel %vm2033, %v1736, %v3599
        %v3673 = vsel %vm2033, %v1737, %v3601
        %v3675 = vsel %vm2070, %v3638, 0
        %v3678 = vsel %vm2070, %v3639, 0
        %v3681 = vsel %vm2070, %v3640, 0
        %v3684 = vsel %vm2070, %v3641, 0
        %v3687 = vsel %vm2070, %v3642, 0
        %v3690 = vsel %vm2070, %v3643, 0
        %v3693 = vsel %vm2070, %v3644, 0
        %v3696 = vsel %vm2070, %v3645, 0
        %v3699 = vsel %vm2070, %v3646, 0
        %v3702 = vsel %vm2070, %v3647, 0
        %v3705 = vsel %vm2070, %v3648, 0
        %v3708 = vsel %vm2070, %v3649, 0
        %v3711 = vsel %vm2070, %v3650, 0
        %v3714 = vsel %vm2070, %v3651, 0
        %v3717 = vsel %vm2070, %v3652, 0
        %v3720 = vsel %vm2070, %v3653, 0
        %v3723 = vsel %vm2070, %v3654, 0
        %v3726 = vsel %vm2070, %v3655, 0
        %v3729 = vsel %vm2070, %v3656, 0
        %v3732 = vsel %vm2070, %v3657, 0
        %v3735 = vsel %vm2070, %v3658, 0
        %v3738 = vsel %vm2070, %v3659, 0
        %v3741 = vsel %vm2070, %v3660, 0
        %v3744 = vsel %vm2070, %v3661, 0
        %v3747 = vsel %vm2070, %v3662, 0
        %v3750 = vsel %vm2070, %v3663, 0
        %v3753 = vsel %vm2070, %v3664, 0
        %v3756 = vsel %vm2070, %v3665, 0
        %v3759 = vsel %vm2070, %v3666, 0
        %v3762 = vsel %vm2070, %v3667, 0
        %v3765 = vsel %vm2070, %v3668, 0
        %v3768 = vsel %vm2070, %v3669, 0
        %v3771 = vsel %vm2070, %v3670, 0
        %v3774 = vsel %vm2070, %v3671, 0
        %v3777 = vsel %vm2070, %v3672, 0
        %v3780 = vsel %vm2070, %v3673, 0
        %3782 = vmatprep.subr.mxu0 0.0
        %3783 = vmatpush1.msra.mxu0 %v1882
        %3784 = vmatprep.subr.mxu0 0.0
        %3785 = vmatpush1.msra.mxu0 %v1883
        %3786 = vmatprep.subr.mxu0 0.0
        %3787 = vmatpush1.msra.mxu0 %v1884
        %3788 = vmatprep.subr.mxu0 0.0
        %3789 = vmatpush1.msra.mxu0 %v1885
        %3790 = vmatprep.subr.mxu0 0.0
        %3791 = vmatpush1.msra.mxu0 %v1886
        %3792 = vmatprep.subr.mxu0 0.0
        %3793 = vmatpush1.msra.mxu0 %v1887
        %3794 = vmatprep.subr.mxu0 0.0
        %3795 = vmatpush1.msra.mxu0 %v2181
        %3796 = vmatprep.subr.mxu0 0.0
        %3797 = vmatpush1.msra.mxu0 0.0
        %3798 = vmatprep.subr.mxu0 0.0
        %3799 = vmatpush1.msra.mxu0 0.0
        %3800 = vmatprep.subr.mxu0 0.0
        %3801 = vmatpush1.msra.mxu0 0.0
        %3802 = vmatprep.subr.mxu0 0.0
        %3803 = vmatpush1.msra.mxu0 0.0
        %3804 = vmatprep.subr.mxu0 0.0
        %3805 = vmatpush1.msra.mxu0 0.0
        %3806 = vmatprep.subr.mxu0 0.0
        %3807 = vmatpush1.msra.mxu0 0.0
        %3808 = vmatprep.subr.mxu0 0.0
        %3809 = vmatpush1.msra.mxu0 0.0
        %3810 = vmatprep.subr.mxu0 0.0
        %3811 = vmatpush1.msra.mxu0 0.0
        %3812 = vmatprep.subr.mxu0 0.0
        %3813 = vmatpush1.msra.mxu0 0.0
        %3814 = vmatprep.subr.mxu0 0.0
        %3815 = vmatpush1.msra.mxu0 0.0
        %3816 = vmatprep.subr.mxu0 0.0
        %3817 = vmatpush1.msra.mxu0 0.0
        %3818 = vmatprep.subr.mxu0 0.0
        %3819 = vmatpush1.msra.mxu0 0.0
        %3820 = vmatprep.subr.mxu0 0.0
        %3821 = vmatpush1.msra.mxu0 0.0
        %3822 = vmatprep.subr.mxu0 0.0
        %3823 = vmatpush1.msra.mxu0 0.0
        %3824 = vmatprep.subr.mxu0 0.0
        %3825 = vmatpush1.msra.mxu0 0.0
        %3826 = vmatprep.subr.mxu0 0.0
        %3827 = vmatpush1.msra.mxu0 0.0
        %3828 = vmatprep.subr.mxu0 0.0
        %3829 = vmatpush1.msra.mxu0 0.0
        %3830 = vmatprep.subr.mxu0 0.0
        %3831 = vmatpush1.msra.mxu0 0.0
        %3832 = vmatprep.subr.mxu0 0.0
        %3833 = vmatpush1.msra.mxu0 0.0
        %3834 = vmatprep.subr.mxu0 0.0
        %3835 = vmatpush1.msra.mxu0 0.0
        %3836 = vmatprep.subr.mxu0 0.0
        %3837 = vmatpush1.msra.mxu0 0.0
        %3838 = vmatprep.subr.mxu0 0.0
        %3839 = vmatpush1.msra.mxu0 0.0
        %3840 = vmatprep.subr.mxu0 0.0
        %3841 = vmatpush1.msra.mxu0 0.0
        %3842 = vmatprep.subr.mxu0 0.0
        %3843 = vmatpush1.msra.mxu0 0.0
        %3844 = vmatprep.subr.mxu0 0.0
        %3845 = vmatpush1.msra.mxu0 0.0
        %3846 = vmatprep.mubr.f32.mxu0 0.0
        %3847 = vmatmul.mubr.f32.gmra.mrb[0].mxu0 %v3675
        %v3848 = vpop.f32.mrb[0].mxu0
        %v3849 = vadd.f32 0.0, %v3848
        %v3850 = vpop.f32.mrb[0].mxu0
        %3851 = vmatprep.mubr.f32.mxu0 0.0
        %3852 = vmatmul.mubr.f32.gmra.mrb[0].mxu0 %v3678
        %v3853 = vpop.f32.mrb[0].mxu0
        %v3854 = vadd.f32 0.0, %v3853
        %v3855 = vpop.f32.mrb[0].mxu0
        %3856 = vmatprep.mubr.f32.mxu0 0.0
        %3857 = vmatmul.mubr.f32.gmra.mrb[0].mxu0 %v3681
        %v3858 = vpop.f32.mrb[0].mxu0
        %v3859 = vadd.f32 0.0, %v3858
        %v3860 = vpop.f32.mrb[0].mxu0
        %3861 = vmatprep.mubr.f32.mxu0 0.0
        %3862 = vmatmul.mubr.f32.gmra.mrb[0].mxu0 %v3684
        %v3863 = vpop.f32.mrb[0].mxu0
        %v3864 = vadd.f32 0.0, %v3863
        %v3865 = vpop.f32.mrb[0].mxu0
        %3866 = vmatprep.mubr.f32.mxu0 0.0
        %3867 = vmatmul.mubr.f32.gmra.mrb[0].mxu0 %v3687
        %v3868 = vpop.f32.mrb[0].mxu0
        %v3869 = vadd.f32 0.0, %v3868
        %v3870 = vpop.f32.mrb[0].mxu0
        %3871 = vmatprep.mubr.f32.mxu0 0.0
        %3872 = vmatmul.mubr.f32.gmra.mrb[0].mxu0 %v3690
        %v3873 = vpop.f32.mrb[0].mxu0
        %v3874 = vadd.f32 0.0, %v3873
        %v3875 = vpop.f32.mrb[0].mxu0
        %3876 = vmatprep.mubr.f32.mxu0 0.0
        %3877 = vmatmul.mubr.f32.gmra.mrb[0].mxu0 %v3693
        %v3878 = vpop.f32.mrb[0].mxu0
        %v3879 = vadd.f32 0.0, %v3878
        %v3880 = vpop.f32.mrb[0].mxu0
        %3881 = vmatprep.mubr.f32.mxu0 0.0
        %3882 = vmatmul.mubr.f32.gmra.mrb[0].mxu0 %v3696
        %v3883 = vpop.f32.mrb[0].mxu0
        %v3884 = vadd.f32 0.0, %v3883
        %v3885 = vpop.f32.mrb[0].mxu0
        %3886 = vmatprep.mubr.f32.mxu0 0.0
        %3887 = vmatmul.mubr.f32.gmra.mrb[0].mxu0 %v3699
        %v3888 = vpop.f32.mrb[0].mxu0
        %v3889 = vadd.f32 0.0, %v3888
        %v3890 = vpop.f32.mrb[0].mxu0
        %3891 = vmatprep.mubr.f32.mxu0 0.0
        %3892 = vmatmul.mubr.f32.gmra.mrb[0].mxu0 %v3702
        %v3893 = vpop.f32.mrb[0].mxu0
        %v3894 = vadd.f32 0.0, %v3893
        %v3895 = vpop.f32.mrb[0].mxu0
        %3896 = vmatprep.mubr.f32.mxu0 0.0
        %3897 = vmatmul.mubr.f32.gmra.mrb[0].mxu0 %v3705
        %v3898 = vpop.f32.mrb[0].mxu0
        %v3899 = vadd.f32 0.0, %v3898
        %v3900 = vpop.f32.mrb[0].mxu0
        %3901 = vmatprep.mubr.f32.mxu0 0.0
        %3902 = vmatmul.mubr.f32.gmra.mrb[0].mxu0 %v3708
        %v3903 = vpop.f32.mrb[0].mxu0
        %v3904 = vadd.f32 0.0, %v3903
        %v3905 = vpop.f32.mrb[0].mxu0
        %3906 = vmatprep.mubr.f32.mxu0 0.0
        %3907 = vmatmul.mubr.f32.gmra.mrb[0].mxu0 %v3711
        %v3908 = vpop.f32.mrb[0].mxu0
        %v3909 = vadd.f32 0.0, %v3908
        %v3910 = vpop.f32.mrb[0].mxu0
        %3911 = vmatprep.mubr.f32.mxu0 0.0
        %3912 = vmatmul.mubr.f32.gmra.mrb[0].mxu0 %v3714
        %v3913 = vpop.f32.mrb[0].mxu0
        %v3914 = vadd.f32 0.0, %v3913
        %v3915 = vpop.f32.mrb[0].mxu0
        %3916 = vmatprep.mubr.f32.mxu0 0.0
        %3917 = vmatmul.mubr.f32.gmra.mrb[0].mxu0 %v3717
        %v3918 = vpop.f32.mrb[0].mxu0
        %v3919 = vadd.f32 0.0, %v3918
        %v3920 = vpop.f32.mrb[0].mxu0
        %3921 = vmatprep.mubr.f32.mxu0 0.0
        %3922 = vmatmul.mubr.f32.gmra.mrb[0].mxu0 %v3720
        %v3923 = vpop.f32.mrb[0].mxu0
        %v3924 = vadd.f32 0.0, %v3923
        %v3925 = vpop.f32.mrb[0].mxu0
        %3926 = vmatprep.mubr.f32.mxu0 0.0
        %3927 = vmatmul.mubr.f32.gmra.mrb[0].mxu0 %v3723
        %v3928 = vpop.f32.mrb[0].mxu0
        %v3929 = vadd.f32 0.0, %v3928
        %v3930 = vpop.f32.mrb[0].mxu0
        %3931 = vmatprep.mubr.f32.mxu0 0.0
        %3932 = vmatmul.mubr.f32.gmra.mrb[0].mxu0 %v3726
        %v3933 = vpop.f32.mrb[0].mxu0
        %v3934 = vadd.f32 0.0, %v3933
        %v3935 = vpop.f32.mrb[0].mxu0
        %3936 = vmatprep.mubr.f32.mxu0 0.0
        %3937 = vmatmul.mubr.f32.gmra.mrb[0].mxu0 %v3729
        %v3938 = vpop.f32.mrb[0].mxu0
        %v3939 = vadd.f32 0.0, %v3938
        %v3940 = vpop.f32.mrb[0].mxu0
        %3941 = vmatprep.mubr.f32.mxu0 0.0
        %3942 = vmatmul.mubr.f32.gmra.mrb[0].mxu0 %v3732
        %v3943 = vpop.f32.mrb[0].mxu0
        %v3944 = vadd.f32 0.0, %v3943
        %v3945 = vpop.f32.mrb[0].mxu0
        %3946 = vmatprep.mubr.f32.mxu0 0.0
        %3947 = vmatmul.mubr.f32.gmra.mrb[0].mxu0 %v3735
        %v3948 = vpop.f32.mrb[0].mxu0
        %v3949 = vadd.f32 0.0, %v3948
        %v3950 = vpop.f32.mrb[0].mxu0
        %3951 = vmatprep.mubr.f32.mxu0 0.0
        %3952 = vmatmul.mubr.f32.gmra.mrb[0].mxu0 %v3738
        %v3953 = vpop.f32.mrb[0].mxu0
        %v3954 = vadd.f32 0.0, %v3953
        %v3955 = vpop.f32.mrb[0].mxu0
        %3956 = vmatprep.mubr.f32.mxu0 0.0
        %3957 = vmatmul.mubr.f32.gmra.mrb[0].mxu0 %v3741
        %v3958 = vpop.f32.mrb[0].mxu0
        %v3959 = vadd.f32 0.0, %v3958
        %v3960 = vpop.f32.mrb[0].mxu0
        %3961 = vmatprep.mubr.f32.mxu0 0.0
        %3962 = vmatmul.mubr.f32.gmra.mrb[0].mxu0 %v3744
        %v3963 = vpop.f32.mrb[0].mxu0
        %v3964 = vadd.f32 0.0, %v3963
        %v3965 = vpop.f32.mrb[0].mxu0
        %3966 = vmatprep.mubr.f32.mxu0 0.0
        %3967 = vmatmul.mubr.f32.gmra.mrb[0].mxu0 %v3747
        %v3968 = vpop.f32.mrb[0].mxu0
        %v3969 = vadd.f32 0.0, %v3968
        %v3970 = vpop.f32.mrb[0].mxu0
        %3971 = vmatprep.mubr.f32.mxu0 0.0
        %3972 = vmatmul.mubr.f32.gmra.mrb[0].mxu0 %v3750
        %v3973 = vpop.f32.mrb[0].mxu0
        %v3974 = vadd.f32 0.0, %v3973
        %v3975 = vpop.f32.mrb[0].mxu0
        %3976 = vmatprep.mubr.f32.mxu0 0.0
        %3977 = vmatmul.mubr.f32.gmra.mrb[0].mxu0 %v3753
        %v3978 = vpop.f32.mrb[0].mxu0
        %v3979 = vadd.f32 0.0, %v3978
        %v3980 = vpop.f32.mrb[0].mxu0
        %3981 = vmatprep.mubr.f32.mxu0 0.0
        %3982 = vmatmul.mubr.f32.gmra.mrb[0].mxu0 %v3756
        %v3983 = vpop.f32.mrb[0].mxu0
        %v3984 = vadd.f32 0.0, %v3983
        %v3985 = vpop.f32.mrb[0].mxu0
        %3986 = vmatprep.mubr.f32.mxu0 0.0
        %3987 = vmatmul.mubr.f32.gmra.mrb[0].mxu0 %v3759
        %v3988 = vpop.f32.mrb[0].mxu0
        %v3989 = vadd.f32 0.0, %v3988
        %v3990 = vpop.f32.mrb[0].mxu0
        %3991 = vmatprep.mubr.f32.mxu0 0.0
        %3992 = vmatmul.mubr.f32.gmra.mrb[0].mxu0 %v3762
        %v3993 = vpop.f32.mrb[0].mxu0
        %v3994 = vadd.f32 0.0, %v3993
        %v3995 = vpop.f32.mrb[0].mxu0
        %3996 = vmatprep.mubr.f32.mxu0 0.0
        %3997 = vmatmul.mubr.f32.gmra.mrb[0].mxu0 %v3765
        %v3998 = vpop.f32.mrb[0].mxu0
        %v3999 = vadd.f32 0.0, %v3998
        %v4000 = vpop.f32.mrb[0].mxu0
        %4001 = vmatprep.mubr.f32.mxu0 0.0
        %4002 = vmatmul.mubr.f32.gmra.mrb[0].mxu0 %v3768
        %v4003 = vpop.f32.mrb[0].mxu0
        %v4004 = vadd.f32 0.0, %v4003
        %v4005 = vpop.f32.mrb[0].mxu0
        %4006 = vmatprep.mubr.f32.mxu0 0.0
        %4007 = vmatmul.mubr.f32.gmra.mrb[0].mxu0 %v3771
        %v4008 = vpop.f32.mrb[0].mxu0
        %v4009 = vadd.f32 0.0, %v4008
        %v4010 = vpop.f32.mrb[0].mxu0
        %4011 = vmatprep.mubr.f32.mxu0 0.0
        %4012 = vmatmul.mubr.f32.gmra.mrb[0].mxu0 %v3774
        %v4013 = vpop.f32.mrb[0].mxu0
        %v4014 = vadd.f32 0.0, %v4013
        %v4015 = vpop.f32.mrb[0].mxu0
        %4016 = vmatprep.mubr.f32.mxu0 0.0
        %4017 = vmatmul.mubr.f32.gmra.mrb[0].mxu0 %v3777
        %v4018 = vpop.f32.mrb[0].mxu0
        %v4019 = vadd.f32 0.0, %v4018
        %v4020 = vpop.f32.mrb[0].mxu0
        %4021 = vmatprep.mubr.f32.mxu0 0.0
        %4022 = vmatmul.mubr.f32.gmra.mrb[0].mxu0 %v3780
        %v4023 = vpop.f32.mrb[0].mxu0
        %v4024 = vadd.f32 0.0, %v4023
        %v4025 = vpop.f32.mrb[0].mxu0
        %4026 = vdwg.mxu0
        %v4027 = vmax.f32 %v2250, %v2783
        %v4028 = vmax.f32 %v2255, %v2788
        %v4029 = vmax.f32 %v2260, %v2793
        %v4030 = vmax.f32 %v2265, %v2798
        %v4031 = vmax.f32 %v2270, %v2803
        %v4032 = vmax.f32 %v2275, %v2808
        %v4033 = vmax.f32 %v2280, %v2813
        %v4034 = vmax.f32 %v2285, %v2818
        %v4035 = vmax.f32 %v2290, %v2823
        %v4036 = vmax.f32 %v2295, %v2828
        %v4037 = vmax.f32 %v2300, %v2833
        %v4038 = vmax.f32 %v2305, %v2838
        %v4039 = vmax.f32 %v2310, %v2843
        %v4040 = vmax.f32 %v2315, %v2848
        %v4041 = vmax.f32 %v2320, %v2853
        %v4042 = vmax.f32 %v2325, %v2858
        %v4043 = vmax.f32 %v2330, %v2863
        %v4044 = vmax.f32 %v2335, %v2868
        %v4045 = vmax.f32 %v2340, %v2873
        %v4046 = vmax.f32 %v2345, %v2878
        %v4047 = vmax.f32 %v2350, %v2883
        %v4048 = vmax.f32 %v2355, %v2888
        %v4049 = vmax.f32 %v2360, %v2893
        %v4050 = vmax.f32 %v2365, %v2898
        %v4051 = vmax.f32 %v2370, %v2903
        %v4052 = vmax.f32 %v2375, %v2908
        %v4053 = vmax.f32 %v2380, %v2913
        %v4054 = vmax.f32 %v2385, %v2918
        %v4055 = vmax.f32 %v2390, %v2923
        %v4056 = vmax.f32 %v2395, %v2928
        %v4057 = vmax.f32 %v2400, %v2933
        %v4058 = vmax.f32 %v2405, %v2938
        %v4059 = vmax.f32 %v2410, %v2943
        %v4060 = vmax.f32 %v2415, %v2948
        %v4061 = vmax.f32 %v2420, %v2953
        %v4062 = vmax.f32 %v2425, %v2958
        %v4063 = vmax.f32 %v3316, %v3849
        %v4064 = vmax.f32 %v3321, %v3854
        %v4065 = vmax.f32 %v3326, %v3859
        %v4066 = vmax.f32 %v3331, %v3864
        %v4067 = vmax.f32 %v3336, %v3869
        %v4068 = vmax.f32 %v3341, %v3874
        %v4069 = vmax.f32 %v3346, %v3879
        %v4070 = vmax.f32 %v3351, %v3884
        %v4071 = vmax.f32 %v3356, %v3889
        %v4072 = vmax.f32 %v3361, %v3894
        %v4073 = vmax.f32 %v3366, %v3899
        %v4074 = vmax.f32 %v3371, %v3904
        %v4075 = vmax.f32 %v3376, %v3909
        %v4076 = vmax.f32 %v3381, %v3914
        %v4077 = vmax.f32 %v3386, %v3919
        %v4078 = vmax.f32 %v3391, %v3924
        %v4079 = vmax.f32 %v3396, %v3929
        %v4080 = vmax.f32 %v3401, %v3934
        %v4081 = vmax.f32 %v3406, %v3939
        %v4082 = vmax.f32 %v3411, %v3944
        %v4083 = vmax.f32 %v3416, %v3949
        %v4084 = vmax.f32 %v3421, %v3954
        %v4085 = vmax.f32 %v3426, %v3959
        %v4086 = vmax.f32 %v3431, %v3964
        %v4087 = vmax.f32 %v3436, %v3969
        %v4088 = vmax.f32 %v3441, %v3974
        %v4089 = vmax.f32 %v3446, %v3979
        %v4090 = vmax.f32 %v3451, %v3984
        %v4091 = vmax.f32 %v3456, %v3989
        %v4092 = vmax.f32 %v3461, %v3994
        %v4093 = vmax.f32 %v3466, %v3999
        %v4094 = vmax.f32 %v3471, %v4004
        %v4095 = vmax.f32 %v3476, %v4009
        %v4096 = vmax.f32 %v3481, %v4014
        %v4097 = vmax.f32 %v3486, %v4019
        %v4098 = vmax.f32 %v3491, %v4024
        %v4099 = vmax.f32 %v4027, %v4063
        %v4100 = vmax.f32 %v4028, %v4064
        %v4101 = vmax.f32 %v4029, %v4065
        %v4102 = vmax.f32 %v4030, %v4066
        %v4103 = vmax.f32 %v4031, %v4067
        %v4104 = vmax.f32 %v4032, %v4068
        %v4105 = vmax.f32 %v4033, %v4069
        %v4106 = vmax.f32 %v4034, %v4070
        %v4107 = vmax.f32 %v4035, %v4071
        %v4108 = vmax.f32 %v4036, %v4072
        %v4109 = vmax.f32 %v4037, %v4073
        %v4110 = vmax.f32 %v4038, %v4074
        %v4111 = vmax.f32 %v4039, %v4075
        %v4112 = vmax.f32 %v4040, %v4076
        %v4113 = vmax.f32 %v4041, %v4077
        %v4114 = vmax.f32 %v4042, %v4078
        %v4115 = vmax.f32 %v4043, %v4079
        %v4116 = vmax.f32 %v4044, %v4080
        %v4117 = vmax.f32 %v4045, %v4081
        %v4118 = vmax.f32 %v4046, %v4082
        %v4119 = vmax.f32 %v4047, %v4083
        %v4120 = vmax.f32 %v4048, %v4084
        %v4121 = vmax.f32 %v4049, %v4085
        %v4122 = vmax.f32 %v4050, %v4086
        %v4123 = vmax.f32 %v4051, %v4087
        %v4124 = vmax.f32 %v4052, %v4088
        %v4125 = vmax.f32 %v4053, %v4089
        %v4126 = vmax.f32 %v4054, %v4090
        %v4127 = vmax.f32 %v4055, %v4091
        %v4128 = vmax.f32 %v4056, %v4092
        %v4129 = vmax.f32 %v4057, %v4093
        %v4130 = vmax.f32 %v4058, %v4094
        %v4131 = vmax.f32 %v4059, %v4095
        %v4132 = vmax.f32 %v4060, %v4096
        %v4133 = vmax.f32 %v4061, %v4097
        %v4134 = vmax.f32 %v4062, %v4098
        %v4135 = vld [vmem:[%s3] sm:$0x1]
        %v4137 = vlaneseq
        %v4138 = vshrl.u32 %v4137, 7
        %v4139 = vsub.s32 0, %v4138
        %v4140 = vrot.slane %v4135, %v4139
        %v4142 = vadd.f32 %v4099, %v4140
        %v4143 = vadd.f32 %v4100, %v4140
        %v4144 = vadd.f32 %v4101, %v4140
        %v4145 = vadd.f32 %v4102, %v4140
        %v4146 = vadd.f32 %v4103, %v4140
        %v4147 = vadd.f32 %v4104, %v4140
        %v4148 = vadd.f32 %v4105, %v4140
        %v4149 = vadd.f32 %v4106, %v4140
        %v4150 = vadd.f32 %v4107, %v4140
        %v4151 = vadd.f32 %v4108, %v4140
        %v4152 = vadd.f32 %v4109, %v4140
        %v4153 = vadd.f32 %v4110, %v4140
        %v4154 = vadd.f32 %v4111, %v4140
        %v4155 = vadd.f32 %v4112, %v4140
        %v4156 = vadd.f32 %v4113, %v4140
        %v4157 = vadd.f32 %v4114, %v4140
        %v4158 = vadd.f32 %v4115, %v4140
        %v4159 = vadd.f32 %v4116, %v4140
        %v4160 = vadd.f32 %v4117, %v4140
        %v4161 = vadd.f32 %v4118, %v4140
        %v4162 = vadd.f32 %v4119, %v4140
        %v4163 = vadd.f32 %v4120, %v4140
        %v4164 = vadd.f32 %v4121, %v4140
        %v4165 = vadd.f32 %v4122, %v4140
        %v4166 = vadd.f32 %v4123, %v4140
        %v4167 = vadd.f32 %v4124, %v4140
        %v4168 = vadd.f32 %v4125, %v4140
        %v4169 = vadd.f32 %v4126, %v4140
        %v4170 = vadd.f32 %v4127, %v4140
        %v4171 = vadd.f32 %v4128, %v4140
        %v4172 = vadd.f32 %v4129, %v4140
        %v4173 = vadd.f32 %v4130, %v4140
        %v4174 = vadd.f32 %v4131, %v4140
        %v4175 = vadd.f32 %v4132, %v4140
        %v4176 = vadd.f32 %v4133, %v4140
        %v4177 = vadd.f32 %v4134, %v4140
        %v4178 = vmax.f32 %v4142, 0.0
        %v4179 = vmax.f32 %v4143, 0.0
        %v4180 = vmax.f32 %v4144, 0.0
        %v4181 = vmax.f32 %v4145, 0.0
        %v4182 = vmax.f32 %v4146, 0.0
        %v4183 = vmax.f32 %v4147, 0.0
        %v4184 = vmax.f32 %v4148, 0.0
        %v4185 = vmax.f32 %v4149, 0.0
        %v4186 = vmax.f32 %v4150, 0.0
        %v4187 = vmax.f32 %v4151, 0.0
        %v4188 = vmax.f32 %v4152, 0.0
        %v4189 = vmax.f32 %v4153, 0.0
        %v4190 = vmax.f32 %v4154, 0.0
        %v4191 = vmax.f32 %v4155, 0.0
        %v4192 = vmax.f32 %v4156, 0.0
        %v4193 = vmax.f32 %v4157, 0.0
        %v4194 = vmax.f32 %v4158, 0.0
        %v4195 = vmax.f32 %v4159, 0.0
        %v4196 = vmax.f32 %v4160, 0.0
        %v4197 = vmax.f32 %v4161, 0.0
        %v4198 = vmax.f32 %v4162, 0.0
        %v4199 = vmax.f32 %v4163, 0.0
        %v4200 = vmax.f32 %v4164, 0.0
        %v4201 = vmax.f32 %v4165, 0.0
        %v4202 = vmax.f32 %v4166, 0.0
        %v4203 = vmax.f32 %v4167, 0.0
        %v4204 = vmax.f32 %v4168, 0.0
        %v4205 = vmax.f32 %v4169, 0.0
        %v4206 = vmax.f32 %v4170, 0.0
        %v4207 = vmax.f32 %v4171, 0.0
        %v4208 = vmax.f32 %v4172, 0.0
        %v4209 = vmax.f32 %v4173, 0.0
        %v4210 = vmax.f32 %v4174, 0.0
        %v4211 = vmax.f32 %v4175, 0.0
        %v4212 = vmax.f32 %v4176, 0.0
        %v4213 = vmax.f32 %v4177, 0.0
        %4250 = vrot.lane.b32.xlu0 %v4178, 118
        %v4251 = vpop.permute.xlu0 %4250
        %4252 = vrot.lane.b32.xlu0 %v4179, 118
        %v4253 = vpop.permute.xlu0 %4252
        %4254 = vrot.lane.b32.xlu0 %v4180, 118
        %v4255 = vpop.permute.xlu0 %4254
        %4256 = vrot.lane.b32.xlu0 %v4181, 118
        %v4257 = vpop.permute.xlu0 %4256
        %4258 = vrot.lane.b32.xlu0 %v4182, 118
        %v4259 = vpop.permute.xlu0 %4258
        %4260 = vrot.lane.b32.xlu0 %v4183, 118
        %v4261 = vpop.permute.xlu0 %4260
        %4262 = vrot.lane.b32.xlu0 %v4184, 118
        %v4263 = vpop.permute.xlu0 %4262
        %4264 = vrot.lane.b32.xlu0 %v4185, 118
        %v4265 = vpop.permute.xlu0 %4264
        %4266 = vrot.lane.b32.xlu0 %v4186, 118
        %v4267 = vpop.permute.xlu0 %4266
        %4268 = vrot.lane.b32.xlu0 %v4187, 118
        %v4269 = vpop.permute.xlu0 %4268
        %4270 = vrot.lane.b32.xlu0 %v4188, 118
        %v4271 = vpop.permute.xlu0 %4270
        %4272 = vrot.lane.b32.xlu0 %v4189, 118
        %v4273 = vpop.permute.xlu0 %4272
        %4274 = vrot.lane.b32.xlu0 %v4190, 118
        %v4275 = vpop.permute.xlu0 %4274
        %4276 = vrot.lane.b32.xlu0 %v4191, 118
        %v4277 = vpop.permute.xlu0 %4276
        %4278 = vrot.lane.b32.xlu0 %v4192, 118
        %v4279 = vpop.permute.xlu0 %4278
        %4280 = vrot.lane.b32.xlu0 %v4193, 118
        %v4281 = vpop.permute.xlu0 %4280
        %4282 = vrot.lane.b32.xlu0 %v4194, 118
        %v4283 = vpop.permute.xlu0 %4282
        %4284 = vrot.lane.b32.xlu0 %v4195, 118
        %v4285 = vpop.permute.xlu0 %4284
        %4286 = vrot.lane.b32.xlu0 %v4196, 118
        %v4287 = vpop.permute.xlu0 %4286
        %4288 = vrot.lane.b32.xlu0 %v4197, 118
        %v4289 = vpop.permute.xlu0 %4288
        %4290 = vrot.lane.b32.xlu0 %v4198, 118
        %v4291 = vpop.permute.xlu0 %4290
        %4292 = vrot.lane.b32.xlu0 %v4199, 118
        %v4293 = vpop.permute.xlu0 %4292
        %4294 = vrot.lane.b32.xlu0 %v4200, 118
        %v4295 = vpop.permute.xlu0 %4294
        %4296 = vrot.lane.b32.xlu0 %v4201, 118
        %v4297 = vpop.permute.xlu0 %4296
        %4298 = vrot.lane.b32.xlu0 %v4202, 118
        %v4299 = vpop.permute.xlu0 %4298
        %4300 = vrot.lane.b32.xlu0 %v4203, 118
        %v4301 = vpop.permute.xlu0 %4300
        %4302 = vrot.lane.b32.xlu0 %v4204, 118
        %v4303 = vpop.permute.xlu0 %4302
        %4304 = vrot.lane.b32.xlu0 %v4205, 118
        %v4305 = vpop.permute.xlu0 %4304
        %4306 = vrot.lane.b32.xlu0 %v4206, 118
        %v4307 = vpop.permute.xlu0 %4306
        %4308 = vrot.lane.b32.xlu0 %v4207, 118
        %v4309 = vpop.permute.xlu0 %4308
        %4310 = vrot.lane.b32.xlu0 %v4208, 118
        %v4311 = vpop.permute.xlu0 %4310
        %4312 = vrot.lane.b32.xlu0 %v4209, 118
        %v4313 = vpop.permute.xlu0 %4312
        %4314 = vrot.lane.b32.xlu0 %v4210, 118
        %v4315 = vpop.permute.xlu0 %4314
        %4316 = vrot.lane.b32.xlu0 %v4211, 118
        %v4317 = vpop.permute.xlu0 %4316
        %4318 = vrot.lane.b32.xlu0 %v4212, 118
        %v4319 = vpop.permute.xlu0 %4318
        %4320 = vrot.lane.b32.xlu0 %v4213, 118
        %v4321 = vpop.permute.xlu0 %4320
        %v4358 = vadd.f32 %v4178, %v4251
        %v4359 = vadd.f32 %v4179, %v4253
        %v4360 = vadd.f32 %v4180, %v4255
        %v4361 = vadd.f32 %v4181, %v4257
        %v4362 = vadd.f32 %v4182, %v4259
        %v4363 = vadd.f32 %v4183, %v4261
        %v4364 = vadd.f32 %v4184, %v4263
        %v4365 = vadd.f32 %v4185, %v4265
        %v4366 = vadd.f32 %v4186, %v4267
        %v4367 = vadd.f32 %v4187, %v4269
        %v4368 = vadd.f32 %v4188, %v4271
        %v4369 = vadd.f32 %v4189, %v4273
        %v4370 = vadd.f32 %v4190, %v4275
        %v4371 = vadd.f32 %v4191, %v4277
        %v4372 = vadd.f32 %v4192, %v4279
        %v4373 = vadd.f32 %v4193, %v4281
        %v4374 = vadd.f32 %v4194, %v4283
        %v4375 = vadd.f32 %v4195, %v4285
        %v4376 = vadd.f32 %v4196, %v4287
        %v4377 = vadd.f32 %v4197, %v4289
        %v4378 = vadd.f32 %v4198, %v4291
        %v4379 = vadd.f32 %v4199, %v4293
        %v4380 = vadd.f32 %v4200, %v4295
        %v4381 = vadd.f32 %v4201, %v4297
        %v4382 = vadd.f32 %v4202, %v4299
        %v4383 = vadd.f32 %v4203, %v4301
        %v4384 = vadd.f32 %v4204, %v4303
        %v4385 = vadd.f32 %v4205, %v4305
        %v4386 = vadd.f32 %v4206, %v4307
        %v4387 = vadd.f32 %v4207, %v4309
        %v4388 = vadd.f32 %v4208, %v4311
        %v4389 = vadd.f32 %v4209, %v4313
        %v4390 = vadd.f32 %v4210, %v4315
        %v4391 = vadd.f32 %v4211, %v4317
        %v4392 = vadd.f32 %v4212, %v4319
        %v4393 = vadd.f32 %v4213, %v4321
        %vm4398 = vcmask 1043456
        %v4399 = vrot.slane %v4359, 4
        %v4400 = vrot.slane %v4360, 4
        %v4401 = vsel %vm4398, %v4399, %v4400
        %v4402 = vrot.slane %v4377, 4
        %v4403 = vrot.slane %v4378, 4
        %v4404 = vsel %vm4398, %v4402, %v4403
        %v4411 = vrot.slane %v4362, 4
        %v4412 = vrot.slane %v4363, 4
        %v4413 = vsel %vm4398, %v4411, %v4412
        %v4414 = vrot.slane %v4380, 4
        %v4415 = vrot.slane %v4381, 4
        %v4416 = vsel %vm4398, %v4414, %v4415
        %v4423 = vrot.slane %v4365, 4
        %v4424 = vrot.slane %v4366, 4
        %v4425 = vsel %vm4398, %v4423, %v4424
        %v4426 = vrot.slane %v4383, 4
        %v4427 = vrot.slane %v4384, 4
        %v4428 = vsel %vm4398, %v4426, %v4427
        %v4435 = vrot.slane %v4368, 4
        %v4436 = vrot.slane %v4369, 4
        %v4437 = vsel %vm4398, %v4435, %v4436
        %v4438 = vrot.slane %v4386, 4
        %v4439 = vrot.slane %v4387, 4
        %v4440 = vsel %vm4398, %v4438, %v4439
        %vm4445 = vcmask 1046528
        %v4446 = vrot.slane %v4358, 1
        %v4447 = vrot.slane %v4359, 1
        %v4448 = vsel %vm4445, %v4446, %v4447
        %v4449 = vrot.slane %v4376, 1
        %v4450 = vrot.slane %v4377, 1
        %v4451 = vsel %vm4445, %v4449, %v4450
        %vm4452 = vcmask 1042432
        %v4453 = vrot.slane %v4359, 5
        %v4454 = vrot.slane %v4360, 5
        %v4455 = vsel %vm4452, %v4453, %v4454
        %v4456 = vrot.slane %v4377, 5
        %v4457 = vrot.slane %v4378, 5
        %v4458 = vsel %vm4452, %v4456, %v4457
        %v4461 = vrot.slane %v4361, 1
        %v4462 = vrot.slane %v4362, 1
        %v4463 = vsel %vm4445, %v4461, %v4462
        %v4464 = vrot.slane %v4379, 1
        %v4465 = vrot.slane %v4380, 1
        %v4466 = vsel %vm4445, %v4464, %v4465
        %v4467 = vrot.slane %v4362, 5
        %v4468 = vrot.slane %v4363, 5
        %v4469 = vsel %vm4452, %v4467, %v4468
        %v4470 = vrot.slane %v4380, 5
        %v4471 = vrot.slane %v4381, 5
        %v4472 = vsel %vm4452, %v4470, %v4471
        %v4475 = vrot.slane %v4364, 1
        %v4476 = vrot.slane %v4365, 1
        %v4477 = vsel %vm4445, %v4475, %v4476
        %v4478 = vrot.slane %v4382, 1
        %v4479 = vrot.slane %v4383, 1
        %v4480 = vsel %vm4445, %v4478, %v4479
        %v4481 = vrot.slane %v4365, 5
        %v4482 = vrot.slane %v4366, 5
        %v4483 = vsel %vm4452, %v4481, %v4482
        %v4484 = vrot.slane %v4383, 5
        %v4485 = vrot.slane %v4384, 5
        %v4486 = vsel %vm4452, %v4484, %v4485
        %v4489 = vrot.slane %v4367, 1
        %v4490 = vrot.slane %v4368, 1
        %v4491 = vsel %vm4445, %v4489, %v4490
        %v4492 = vrot.slane %v4385, 1
        %v4493 = vrot.slane %v4386, 1
        %v4494 = vsel %vm4445, %v4492, %v4493
        %v4495 = vrot.slane %v4368, 5
        %v4496 = vrot.slane %v4369, 5
        %v4497 = vsel %vm4452, %v4495, %v4496
        %v4498 = vrot.slane %v4386, 5
        %v4499 = vrot.slane %v4387, 5
        %v4500 = vsel %vm4452, %v4498, %v4499
        %vm4501 = vcmask 1045504
        %v4502 = vrot.slane %v4358, 2
        %v4503 = vrot.slane %v4359, 2
        %v4504 = vsel %vm4501, %v4502, %v4503
        %v4505 = vrot.slane %v4376, 2
        %v4506 = vrot.slane %v4377, 2
        %v4507 = vsel %vm4501, %v4505, %v4506
        %v4508 = vrot.slane %v4359, 6
        %v4509 = vrot.slane %v4360, 6
        %v4510 = vsel %vm2179, %v4508, %v4509
        %v4511 = vrot.slane %v4377, 6
        %v4512 = vrot.slane %v4378, 6
        %v4513 = vsel %vm2179, %v4511, %v4512
        %v4514 = vrot.slane %v4361, 2
        %v4515 = vrot.slane %v4362, 2
        %v4516 = vsel %vm4501, %v4514, %v4515
        %v4517 = vrot.slane %v4379, 2
        %v4518 = vrot.slane %v4380, 2
        %v4519 = vsel %vm4501, %v4517, %v4518
        %v4520 = vrot.slane %v4362, 6
        %v4521 = vrot.slane %v4363, 6
        %v4522 = vsel %vm2179, %v4520, %v4521
        %v4523 = vrot.slane %v4380, 6
        %v4524 = vrot.slane %v4381, 6
        %v4525 = vsel %vm2179, %v4523, %v4524
        %v4526 = vrot.slane %v4364, 2
        %v4527 = vrot.slane %v4365, 2
        %v4528 = vsel %vm4501, %v4526, %v4527
        %v4529 = vrot.slane %v4382, 2
        %v4530 = vrot.slane %v4383, 2
        %v4531 = vsel %vm4501, %v4529, %v4530
        %v4532 = vrot.slane %v4365, 6
        %v4533 = vrot.slane %v4366, 6
        %v4534 = vsel %vm2179, %v4532, %v4533
        %v4535 = vrot.slane %v4383, 6
        %v4536 = vrot.slane %v4384, 6
        %v4537 = vsel %vm2179, %v4535, %v4536
        %v4538 = vrot.slane %v4367, 2
        %v4539 = vrot.slane %v4368, 2
        %v4540 = vsel %vm4501, %v4538, %v4539
        %v4541 = vrot.slane %v4385, 2
        %v4542 = vrot.slane %v4386, 2
        %v4543 = vsel %vm4501, %v4541, %v4542
        %v4544 = vrot.slane %v4368, 6
        %v4545 = vrot.slane %v4369, 6
        %v4546 = vsel %vm2179, %v4544, %v4545
        %v4547 = vrot.slane %v4386, 6
        %v4548 = vrot.slane %v4387, 6
        %v4549 = vsel %vm2179, %v4547, %v4548
        %vm4550 = vcmask 1044480
        %v4551 = vrot.slane %v4358, 3
        %v4552 = vrot.slane %v4359, 3
        %v4553 = vsel %vm4550, %v4551, %v4552
        %v4554 = vrot.slane %v4376, 3
        %v4555 = vrot.slane %v4377, 3
        %v4556 = vsel %vm4550, %v4554, %v4555
        %vm4557 = vcmask 1040384
        %v4558 = vrot.slane %v4359, 7
        %v4559 = vrot.slane %v4360, 7
        %v4560 = vsel %vm4557, %v4558, %v4559
        %v4561 = vrot.slane %v4377, 7
        %v4562 = vrot.slane %v4378, 7
        %v4563 = vsel %vm4557, %v4561, %v4562
        %v4564 = vrot.slane %v4361, 3
        %v4565 = vrot.slane %v4362, 3
        %v4566 = vsel %vm4550, %v4564, %v4565
        %v4567 = vrot.slane %v4379, 3
        %v4568 = vrot.slane %v4380, 3
        %v4569 = vsel %vm4550, %v4567, %v4568
        %v4570 = vrot.slane %v4362, 7
        %v4571 = vrot.slane %v4363, 7
        %v4572 = vsel %vm4557, %v4570, %v4571
        %v4573 = vrot.slane %v4380, 7
        %v4574 = vrot.slane %v4381, 7
        %v4575 = vsel %vm4557, %v4573, %v4574
        %v4576 = vrot.slane %v4364, 3
        %v4577 = vrot.slane %v4365, 3
        %v4578 = vsel %vm4550, %v4576, %v4577
        %v4579 = vrot.slane %v4382, 3
        %v4580 = vrot.slane %v4383, 3
        %v4581 = vsel %vm4550, %v4579, %v4580
        %v4582 = vrot.slane %v4365, 7
        %v4583 = vrot.slane %v4366, 7
        %v4584 = vsel %vm4557, %v4582, %v4583
        %v4585 = vrot.slane %v4383, 7
        %v4586 = vrot.slane %v4384, 7
        %v4587 = vsel %vm4557, %v4585, %v4586
        %v4588 = vrot.slane %v4367, 3
        %v4589 = vrot.slane %v4368, 3
        %v4590 = vsel %vm4550, %v4588, %v4589
        %v4591 = vrot.slane %v4385, 3
        %v4592 = vrot.slane %v4386, 3
        %v4593 = vsel %vm4550, %v4591, %v4592
        %v4594 = vrot.slane %v4368, 7
        %v4595 = vrot.slane %v4369, 7
        %v4596 = vsel %vm4557, %v4594, %v4595
        %v4597 = vrot.slane %v4386, 7
        %v4598 = vrot.slane %v4387, 7
        %v4599 = vsel %vm4557, %v4597, %v4598
        %v4600 = vrot.slane %v4358, 4
        %v4601 = vsel %vm4398, %v4600, %v4399
        %v4602 = vrot.slane %v4376, 4
        %v4603 = vsel %vm4398, %v4602, %v4402
        %v4604 = vrot.slane %v4361, 4
        %v4605 = vsel %vm4398, %v4604, %v4411
        %v4606 = vrot.slane %v4379, 4
        %v4607 = vsel %vm4398, %v4606, %v4414
        %v4608 = vrot.slane %v4364, 4
        %v4609 = vsel %vm4398, %v4608, %v4423
        %v4610 = vrot.slane %v4382, 4
        %v4611 = vsel %vm4398, %v4610, %v4426
        %v4612 = vrot.slane %v4367, 4
        %v4613 = vsel %vm4398, %v4612, %v4435
        %v4614 = vrot.slane %v4385, 4
        %v4615 = vsel %vm4398, %v4614, %v4438
        %v4620 = vrot.slane %v4370, 1
        %v4621 = vrot.slane %v4371, 1
        %v4622 = vsel %vm4445, %v4620, %v4621
        %v4623 = vrot.slane %v4388, 1
        %v4624 = vrot.slane %v4389, 1
        %v4625 = vsel %vm4445, %v4623, %v4624
        %v4626 = vrot.slane %v4370, 2
        %v4627 = vrot.slane %v4371, 2
        %v4628 = vsel %vm4501, %v4626, %v4627
        %v4629 = vrot.slane %v4388, 2
        %v4630 = vrot.slane %v4389, 2
        %v4631 = vsel %vm4501, %v4629, %v4630
        %v4632 = vrot.slane %v4370, 3
        %v4633 = vrot.slane %v4371, 3
        %v4634 = vsel %vm4550, %v4632, %v4633
        %v4635 = vrot.slane %v4388, 3
        %v4636 = vrot.slane %v4389, 3
        %v4637 = vsel %vm4550, %v4635, %v4636
        %v4638 = vrot.slane %v4370, 4
        %v4639 = vrot.slane %v4371, 4
        %v4640 = vsel %vm4398, %v4638, %v4639
        %v4641 = vrot.slane %v4388, 4
        %v4642 = vrot.slane %v4389, 4
        %v4643 = vsel %vm4398, %v4641, %v4642
        %v4646 = vrot.slane %v4372, 4
        %v4647 = vsel %vm4398, %v4639, %v4646
        %v4648 = vrot.slane %v4390, 4
        %v4649 = vsel %vm4398, %v4642, %v4648
        %v4650 = vrot.slane %v4371, 5
        %v4651 = vrot.slane %v4372, 5
        %v4652 = vsel %vm4452, %v4650, %v4651
        %v4653 = vrot.slane %v4389, 5
        %v4654 = vrot.slane %v4390, 5
        %v4655 = vsel %vm4452, %v4653, %v4654
        %v4656 = vrot.slane %v4371, 6
        %v4657 = vrot.slane %v4372, 6
        %v4658 = vsel %vm2179, %v4656, %v4657
        %v4659 = vrot.slane %v4389, 6
        %v4660 = vrot.slane %v4390, 6
        %v4661 = vsel %vm2179, %v4659, %v4660
        %v4662 = vrot.slane %v4371, 7
        %v4663 = vrot.slane %v4372, 7
        %v4664 = vsel %vm4557, %v4662, %v4663
        %v4665 = vrot.slane %v4389, 7
        %v4666 = vrot.slane %v4390, 7
        %v4667 = vsel %vm4557, %v4665, %v4666
        %v4686 = vrot.slane %v4373, 1
        %v4687 = vrot.slane %v4374, 1
        %v4688 = vsel %vm4445, %v4686, %v4687
        %v4689 = vrot.slane %v4391, 1
        %v4690 = vrot.slane %v4392, 1
        %v4691 = vsel %vm4445, %v4689, %v4690
        %v4694 = vrot.slane %v4373, 2
        %v4695 = vrot.slane %v4374, 2
        %v4696 = vsel %vm4501, %v4694, %v4695
        %v4697 = vrot.slane %v4391, 2
        %v4698 = vrot.slane %v4392, 2
        %v4699 = vsel %vm4501, %v4697, %v4698
        %v4700 = vrot.slane %v4373, 3
        %v4701 = vrot.slane %v4374, 3
        %v4702 = vsel %vm4550, %v4700, %v4701
        %v4703 = vrot.slane %v4391, 3
        %v4704 = vrot.slane %v4392, 3
        %v4705 = vsel %vm4550, %v4703, %v4704
        %v4706 = vrot.slane %v4373, 4
        %v4707 = vrot.slane %v4374, 4
        %v4708 = vsel %vm4398, %v4706, %v4707
        %v4709 = vrot.slane %v4391, 4
        %v4710 = vrot.slane %v4392, 4
        %v4711 = vsel %vm4398, %v4709, %v4710
        %v4714 = vrot.slane %v4375, 4
        %v4715 = vsel %vm4398, %v4707, %v4714
        %v4716 = vrot.slane %v4393, 4
        %v4717 = vsel %vm4398, %v4710, %v4716
        %v4718 = vrot.slane %v4374, 5
        %v4719 = vrot.slane %v4375, 5
        %v4720 = vsel %vm4452, %v4718, %v4719
        %v4721 = vrot.slane %v4392, 5
        %v4722 = vrot.slane %v4393, 5
        %v4723 = vsel %vm4452, %v4721, %v4722
        %v4724 = vrot.slane %v4374, 6
        %v4725 = vrot.slane %v4375, 6
        %v4726 = vsel %vm2179, %v4724, %v4725
        %v4727 = vrot.slane %v4392, 6
        %v4728 = vrot.slane %v4393, 6
        %v4729 = vsel %vm2179, %v4727, %v4728
        %v4730 = vrot.slane %v4374, 7
        %v4731 = vrot.slane %v4375, 7
        %v4732 = vsel %vm4557, %v4730, %v4731
        %v4733 = vrot.slane %v4392, 7
        %v4734 = vrot.slane %v4393, 7
        %v4735 = vsel %vm4557, %v4733, %v4734
        %4736 = vrot.lane.b32.xlu0 %v4448, 10
        %v4737 = vpop.permute.xlu0 %4736
        %4738 = vrot.lane.b32.xlu0 %v4455, 10
        %v4739 = vpop.permute.xlu0 %4738
        %4740 = vrot.lane.b32.xlu0 %v4463, 10
        %v4741 = vpop.permute.xlu0 %4740
        %4742 = vrot.lane.b32.xlu0 %v4469, 10
        %v4743 = vpop.permute.xlu0 %4742
        %4744 = vrot.lane.b32.xlu0 %v4477, 10
        %v4745 = vpop.permute.xlu0 %4744
        %4746 = vrot.lane.b32.xlu0 %v4483, 10
        %v4747 = vpop.permute.xlu0 %4746
        %4748 = vrot.lane.b32.xlu0 %v4491, 10
        %v4749 = vpop.permute.xlu0 %4748
        %4750 = vrot.lane.b32.xlu0 %v4497, 10
        %v4751 = vpop.permute.xlu0 %4750
        %4752 = vrot.lane.b32.xlu0 %v4451, 10
        %v4753 = vpop.permute.xlu0 %4752
        %4754 = vrot.lane.b32.xlu0 %v4458, 10
        %v4755 = vpop.permute.xlu0 %4754
        %4756 = vrot.lane.b32.xlu0 %v4466, 10
        %v4757 = vpop.permute.xlu0 %4756
        %4758 = vrot.lane.b32.xlu0 %v4472, 10
        %v4759 = vpop.permute.xlu0 %4758
        %4760 = vrot.lane.b32.xlu0 %v4480, 10
        %v4761 = vpop.permute.xlu0 %4760
        %4762 = vrot.lane.b32.xlu0 %v4486, 10
        %v4763 = vpop.permute.xlu0 %4762
        %4764 = vrot.lane.b32.xlu0 %v4494, 10
        %v4765 = vpop.permute.xlu0 %4764
        %4766 = vrot.lane.b32.xlu0 %v4500, 10
        %v4767 = vpop.permute.xlu0 %4766
        %4784 = vrot.lane.b32.xlu0 %v4504, 20
        %v4785 = vpop.permute.xlu0 %4784
        %4786 = vrot.lane.b32.xlu0 %v4510, 20
        %v4787 = vpop.permute.xlu0 %4786
        %4788 = vrot.lane.b32.xlu0 %v4516, 20
        %v4789 = vpop.permute.xlu0 %4788
        %4790 = vrot.lane.b32.xlu0 %v4522, 20
        %v4791 = vpop.permute.xlu0 %4790
        %4792 = vrot.lane.b32.xlu0 %v4528, 20
        %v4793 = vpop.permute.xlu0 %4792
        %4794 = vrot.lane.b32.xlu0 %v4534, 20
        %v4795 = vpop.permute.xlu0 %4794
        %4796 = vrot.lane.b32.xlu0 %v4540, 20
        %v4797 = vpop.permute.xlu0 %4796
        %4798 = vrot.lane.b32.xlu0 %v4546, 20
        %v4799 = vpop.permute.xlu0 %4798
        %4800 = vrot.lane.b32.xlu0 %v4507, 20
        %v4801 = vpop.permute.xlu0 %4800
        %4802 = vrot.lane.b32.xlu0 %v4513, 20
        %v4803 = vpop.permute.xlu0 %4802
        %4804 = vrot.lane.b32.xlu0 %v4519, 20
        %v4805 = vpop.permute.xlu0 %4804
        %4806 = vrot.lane.b32.xlu0 %v4525, 20
        %v4807 = vpop.permute.xlu0 %4806
        %4808 = vrot.lane.b32.xlu0 %v4531, 20
        %v4809 = vpop.permute.xlu0 %4808
        %4810 = vrot.lane.b32.xlu0 %v4537, 20
        %v4811 = vpop.permute.xlu0 %4810
        %4812 = vrot.lane.b32.xlu0 %v4543, 20
        %v4813 = vpop.permute.xlu0 %4812
        %4814 = vrot.lane.b32.xlu0 %v4549, 20
        %v4815 = vpop.permute.xlu0 %4814
        %4832 = vrot.lane.b32.xlu0 %v4553, 30
        %v4833 = vpop.permute.xlu0 %4832
        %4834 = vrot.lane.b32.xlu0 %v4560, 30
        %v4835 = vpop.permute.xlu0 %4834
        %4836 = vrot.lane.b32.xlu0 %v4566, 30
        %v4837 = vpop.permute.xlu0 %4836
        %4838 = vrot.lane.b32.xlu0 %v4572, 30
        %v4839 = vpop.permute.xlu0 %4838
        %4840 = vrot.lane.b32.xlu0 %v4578, 30
        %v4841 = vpop.permute.xlu0 %4840
        %4842 = vrot.lane.b32.xlu0 %v4584, 30
        %v4843 = vpop.permute.xlu0 %4842
        %4844 = vrot.lane.b32.xlu0 %v4590, 30
        %v4845 = vpop.permute.xlu0 %4844
        %4846 = vrot.lane.b32.xlu0 %v4596, 30
        %v4847 = vpop.permute.xlu0 %4846
        %4848 = vrot.lane.b32.xlu0 %v4556, 30
        %v4849 = vpop.permute.xlu0 %4848
        %4850 = vrot.lane.b32.xlu0 %v4563, 30
        %v4851 = vpop.permute.xlu0 %4850
        %4852 = vrot.lane.b32.xlu0 %v4569, 30
        %v4853 = vpop.permute.xlu0 %4852
        %4854 = vrot.lane.b32.xlu0 %v4575, 30
        %v4855 = vpop.permute.xlu0 %4854
        %4856 = vrot.lane.b32.xlu0 %v4581, 30
        %v4857 = vpop.permute.xlu0 %4856
        %4858 = vrot.lane.b32.xlu0 %v4587, 30
        %v4859 = vpop.permute.xlu0 %4858
        %4860 = vrot.lane.b32.xlu0 %v4593, 30
        %v4861 = vpop.permute.xlu0 %4860
        %4862 = vrot.lane.b32.xlu0 %v4599, 30
        %v4863 = vpop.permute.xlu0 %4862
        %4880 = vrot.lane.b32.xlu0 %v4601, 40
        %v4881 = vpop.permute.xlu0 %4880
        %4882 = vrot.lane.b32.xlu0 %v4360, 40
        %v4883 = vpop.permute.xlu0 %4882
        %4884 = vrot.lane.b32.xlu0 %v4605, 40
        %v4885 = vpop.permute.xlu0 %4884
        %4886 = vrot.lane.b32.xlu0 %v4363, 40
        %v4887 = vpop.permute.xlu0 %4886
        %4888 = vrot.lane.b32.xlu0 %v4609, 40
        %v4889 = vpop.permute.xlu0 %4888
        %4890 = vrot.lane.b32.xlu0 %v4366, 40
        %v4891 = vpop.permute.xlu0 %4890
        %4892 = vrot.lane.b32.xlu0 %v4613, 40
        %v4893 = vpop.permute.xlu0 %4892
        %4894 = vrot.lane.b32.xlu0 %v4369, 40
        %v4895 = vpop.permute.xlu0 %4894
        %4896 = vrot.lane.b32.xlu0 %v4603, 40
        %v4897 = vpop.permute.xlu0 %4896
        %4898 = vrot.lane.b32.xlu0 %v4378, 40
        %v4899 = vpop.permute.xlu0 %4898
        %4900 = vrot.lane.b32.xlu0 %v4607, 40
        %v4901 = vpop.permute.xlu0 %4900
        %4902 = vrot.lane.b32.xlu0 %v4381, 40
        %v4903 = vpop.permute.xlu0 %4902
        %4904 = vrot.lane.b32.xlu0 %v4611, 40
        %v4905 = vpop.permute.xlu0 %4904
        %4906 = vrot.lane.b32.xlu0 %v4384, 40
        %v4907 = vpop.permute.xlu0 %4906
        %4908 = vrot.lane.b32.xlu0 %v4615, 40
        %v4909 = vpop.permute.xlu0 %4908
        %4910 = vrot.lane.b32.xlu0 %v4387, 40
        %v4911 = vpop.permute.xlu0 %4910
        %4928 = vrot.lane.b32.xlu0 %v4401, 50
        %v4929 = vpop.permute.xlu0 %4928
        %4930 = vrot.lane.b32.xlu0 %v4361, 50
        %v4931 = vpop.permute.xlu0 %4930
        %4932 = vrot.lane.b32.xlu0 %v4413, 50
        %v4933 = vpop.permute.xlu0 %4932
        %4934 = vrot.lane.b32.xlu0 %v4364, 50
        %v4935 = vpop.permute.xlu0 %4934
        %4936 = vrot.lane.b32.xlu0 %v4425, 50
        %v4937 = vpop.permute.xlu0 %4936
        %4938 = vrot.lane.b32.xlu0 %v4367, 50
        %v4939 = vpop.permute.xlu0 %4938
        %4940 = vrot.lane.b32.xlu0 %v4437, 50
        %v4941 = vpop.permute.xlu0 %4940
        %4942 = vrot.lane.b32.xlu0 %v4370, 50
        %v4943 = vpop.permute.xlu0 %4942
        %4944 = vrot.lane.b32.xlu0 %v4404, 50
        %v4945 = vpop.permute.xlu0 %4944
        %4946 = vrot.lane.b32.xlu0 %v4379, 50
        %v4947 = vpop.permute.xlu0 %4946
        %4948 = vrot.lane.b32.xlu0 %v4416, 50
        %v4949 = vpop.permute.xlu0 %4948
        %4950 = vrot.lane.b32.xlu0 %v4382, 50
        %v4951 = vpop.permute.xlu0 %4950
        %4952 = vrot.lane.b32.xlu0 %v4428, 50
        %v4953 = vpop.permute.xlu0 %4952
        %4954 = vrot.lane.b32.xlu0 %v4385, 50
        %v4955 = vpop.permute.xlu0 %4954
        %4956 = vrot.lane.b32.xlu0 %v4440, 50
        %v4957 = vpop.permute.xlu0 %4956
        %4958 = vrot.lane.b32.xlu0 %v4388, 50
        %v4959 = vpop.permute.xlu0 %4958
        %4976 = vrot.lane.b32.xlu0 %v4455, 60
        %v4977 = vpop.permute.xlu0 %4976
        %4978 = vrot.lane.b32.xlu0 %v4463, 60
        %v4979 = vpop.permute.xlu0 %4978
        %4980 = vrot.lane.b32.xlu0 %v4469, 60
        %v4981 = vpop.permute.xlu0 %4980
        %4982 = vrot.lane.b32.xlu0 %v4477, 60
        %v4983 = vpop.permute.xlu0 %4982
        %4984 = vrot.lane.b32.xlu0 %v4483, 60
        %v4985 = vpop.permute.xlu0 %4984
        %4986 = vrot.lane.b32.xlu0 %v4491, 60
        %v4987 = vpop.permute.xlu0 %4986
        %4988 = vrot.lane.b32.xlu0 %v4497, 60
        %v4989 = vpop.permute.xlu0 %4988
        %4990 = vrot.lane.b32.xlu0 %v4622, 60
        %v4991 = vpop.permute.xlu0 %4990
        %4992 = vrot.lane.b32.xlu0 %v4458, 60
        %v4993 = vpop.permute.xlu0 %4992
        %4994 = vrot.lane.b32.xlu0 %v4466, 60
        %v4995 = vpop.permute.xlu0 %4994
        %4996 = vrot.lane.b32.xlu0 %v4472, 60
        %v4997 = vpop.permute.xlu0 %4996
        %4998 = vrot.lane.b32.xlu0 %v4480, 60
        %v4999 = vpop.permute.xlu0 %4998
        %5000 = vrot.lane.b32.xlu0 %v4486, 60
        %v5001 = vpop.permute.xlu0 %5000
        %5002 = vrot.lane.b32.xlu0 %v4494, 60
        %v5003 = vpop.permute.xlu0 %5002
        %5004 = vrot.lane.b32.xlu0 %v4500, 60
        %v5005 = vpop.permute.xlu0 %5004
        %5006 = vrot.lane.b32.xlu0 %v4625, 60
        %v5007 = vpop.permute.xlu0 %5006
        %5024 = vrot.lane.b32.xlu0 %v4510, 70
        %v5025 = vpop.permute.xlu0 %5024
        %5026 = vrot.lane.b32.xlu0 %v4516, 70
        %v5027 = vpop.permute.xlu0 %5026
        %5028 = vrot.lane.b32.xlu0 %v4522, 70
        %v5029 = vpop.permute.xlu0 %5028
        %5030 = vrot.lane.b32.xlu0 %v4528, 70
        %v5031 = vpop.permute.xlu0 %5030
        %5032 = vrot.lane.b32.xlu0 %v4534, 70
        %v5033 = vpop.permute.xlu0 %5032
        %5034 = vrot.lane.b32.xlu0 %v4540, 70
        %v5035 = vpop.permute.xlu0 %5034
        %5036 = vrot.lane.b32.xlu0 %v4546, 70
        %v5037 = vpop.permute.xlu0 %5036
        %5038 = vrot.lane.b32.xlu0 %v4628, 70
        %v5039 = vpop.permute.xlu0 %5038
        %5040 = vrot.lane.b32.xlu0 %v4513, 70
        %v5041 = vpop.permute.xlu0 %5040
        %5042 = vrot.lane.b32.xlu0 %v4519, 70
        %v5043 = vpop.permute.xlu0 %5042
        %5044 = vrot.lane.b32.xlu0 %v4525, 70
        %v5045 = vpop.permute.xlu0 %5044
        %5046 = vrot.lane.b32.xlu0 %v4531, 70
        %v5047 = vpop.permute.xlu0 %5046
        %5048 = vrot.lane.b32.xlu0 %v4537, 70
        %v5049 = vpop.permute.xlu0 %5048
        %5050 = vrot.lane.b32.xlu0 %v4543, 70
        %v5051 = vpop.permute.xlu0 %5050
        %5052 = vrot.lane.b32.xlu0 %v4549, 70
        %v5053 = vpop.permute.xlu0 %5052
        %5054 = vrot.lane.b32.xlu0 %v4631, 70
        %v5055 = vpop.permute.xlu0 %5054
        %5072 = vrot.lane.b32.xlu0 %v4560, 80
        %v5073 = vpop.permute.xlu0 %5072
        %5074 = vrot.lane.b32.xlu0 %v4566, 80
        %v5075 = vpop.permute.xlu0 %5074
        %5076 = vrot.lane.b32.xlu0 %v4572, 80
        %v5077 = vpop.permute.xlu0 %5076
        %5078 = vrot.lane.b32.xlu0 %v4578, 80
        %v5079 = vpop.permute.xlu0 %5078
        %5080 = vrot.lane.b32.xlu0 %v4584, 80
        %v5081 = vpop.permute.xlu0 %5080
        %5082 = vrot.lane.b32.xlu0 %v4590, 80
        %v5083 = vpop.permute.xlu0 %5082
        %5084 = vrot.lane.b32.xlu0 %v4596, 80
        %v5085 = vpop.permute.xlu0 %5084
        %5086 = vrot.lane.b32.xlu0 %v4634, 80
        %v5087 = vpop.permute.xlu0 %5086
        %5088 = vrot.lane.b32.xlu0 %v4563, 80
        %v5089 = vpop.permute.xlu0 %5088
        %5090 = vrot.lane.b32.xlu0 %v4569, 80
        %v5091 = vpop.permute.xlu0 %5090
        %5092 = vrot.lane.b32.xlu0 %v4575, 80
        %v5093 = vpop.permute.xlu0 %5092
        %5094 = vrot.lane.b32.xlu0 %v4581, 80
        %v5095 = vpop.permute.xlu0 %5094
        %5096 = vrot.lane.b32.xlu0 %v4587, 80
        %v5097 = vpop.permute.xlu0 %5096
        %5098 = vrot.lane.b32.xlu0 %v4593, 80
        %v5099 = vpop.permute.xlu0 %5098
        %5100 = vrot.lane.b32.xlu0 %v4599, 80
        %v5101 = vpop.permute.xlu0 %5100
        %5102 = vrot.lane.b32.xlu0 %v4637, 80
        %v5103 = vpop.permute.xlu0 %5102
        %5120 = vrot.lane.b32.xlu0 %v4360, 90
        %v5121 = vpop.permute.xlu0 %5120
        %5122 = vrot.lane.b32.xlu0 %v4605, 90
        %v5123 = vpop.permute.xlu0 %5122
        %5124 = vrot.lane.b32.xlu0 %v4363, 90
        %v5125 = vpop.permute.xlu0 %5124
        %5126 = vrot.lane.b32.xlu0 %v4609, 90
        %v5127 = vpop.permute.xlu0 %5126
        %5128 = vrot.lane.b32.xlu0 %v4366, 90
        %v5129 = vpop.permute.xlu0 %5128
        %5130 = vrot.lane.b32.xlu0 %v4613, 90
        %v5131 = vpop.permute.xlu0 %5130
        %5132 = vrot.lane.b32.xlu0 %v4369, 90
        %v5133 = vpop.permute.xlu0 %5132
        %5134 = vrot.lane.b32.xlu0 %v4640, 90
        %v5135 = vpop.permute.xlu0 %5134
        %5136 = vrot.lane.b32.xlu0 %v4378, 90
        %v5137 = vpop.permute.xlu0 %5136
        %5138 = vrot.lane.b32.xlu0 %v4607, 90
        %v5139 = vpop.permute.xlu0 %5138
        %5140 = vrot.lane.b32.xlu0 %v4381, 90
        %v5141 = vpop.permute.xlu0 %5140
        %5142 = vrot.lane.b32.xlu0 %v4611, 90
        %v5143 = vpop.permute.xlu0 %5142
        %5144 = vrot.lane.b32.xlu0 %v4384, 90
        %v5145 = vpop.permute.xlu0 %5144
        %5146 = vrot.lane.b32.xlu0 %v4615, 90
        %v5147 = vpop.permute.xlu0 %5146
        %5148 = vrot.lane.b32.xlu0 %v4387, 90
        %v5149 = vpop.permute.xlu0 %5148
        %5150 = vrot.lane.b32.xlu0 %v4643, 90
        %v5151 = vpop.permute.xlu0 %5150
        %5168 = vrot.lane.b32.xlu0 %v4361, 100
        %v5169 = vpop.permute.xlu0 %5168
        %5170 = vrot.lane.b32.xlu0 %v4413, 100
        %v5171 = vpop.permute.xlu0 %5170
        %5172 = vrot.lane.b32.xlu0 %v4364, 100
        %v5173 = vpop.permute.xlu0 %5172
        %5174 = vrot.lane.b32.xlu0 %v4425, 100
        %v5175 = vpop.permute.xlu0 %5174
        %5176 = vrot.lane.b32.xlu0 %v4367, 100
        %v5177 = vpop.permute.xlu0 %5176
        %5178 = vrot.lane.b32.xlu0 %v4437, 100
        %v5179 = vpop.permute.xlu0 %5178
        %5180 = vrot.lane.b32.xlu0 %v4370, 100
        %v5181 = vpop.permute.xlu0 %5180
        %5182 = vrot.lane.b32.xlu0 %v4647, 100
        %v5183 = vpop.permute.xlu0 %5182
        %5184 = vrot.lane.b32.xlu0 %v4379, 100
        %v5185 = vpop.permute.xlu0 %5184
        %5186 = vrot.lane.b32.xlu0 %v4416, 100
        %v5187 = vpop.permute.xlu0 %5186
        %5188 = vrot.lane.b32.xlu0 %v4382, 100
        %v5189 = vpop.permute.xlu0 %5188
        %5190 = vrot.lane.b32.xlu0 %v4428, 100
        %v5191 = vpop.permute.xlu0 %5190
        %5192 = vrot.lane.b32.xlu0 %v4385, 100
        %v5193 = vpop.permute.xlu0 %5192
        %5194 = vrot.lane.b32.xlu0 %v4440, 100
        %v5195 = vpop.permute.xlu0 %5194
        %5196 = vrot.lane.b32.xlu0 %v4388, 100
        %v5197 = vpop.permute.xlu0 %5196
        %5198 = vrot.lane.b32.xlu0 %v4649, 100
        %v5199 = vpop.permute.xlu0 %5198
        %5216 = vrot.lane.b32.xlu0 %v4463, 110
        %v5217 = vpop.permute.xlu0 %5216
        %5218 = vrot.lane.b32.xlu0 %v4469, 110
        %v5219 = vpop.permute.xlu0 %5218
        %5220 = vrot.lane.b32.xlu0 %v4477, 110
        %v5221 = vpop.permute.xlu0 %5220
        %5222 = vrot.lane.b32.xlu0 %v4483, 110
        %v5223 = vpop.permute.xlu0 %5222
        %5224 = vrot.lane.b32.xlu0 %v4491, 110
        %v5225 = vpop.permute.xlu0 %5224
        %5226 = vrot.lane.b32.xlu0 %v4497, 110
        %v5227 = vpop.permute.xlu0 %5226
        %5228 = vrot.lane.b32.xlu0 %v4622, 110
        %v5229 = vpop.permute.xlu0 %5228
        %5230 = vrot.lane.b32.xlu0 %v4652, 110
        %v5231 = vpop.permute.xlu0 %5230
        %5232 = vrot.lane.b32.xlu0 %v4466, 110
        %v5233 = vpop.permute.xlu0 %5232
        %5234 = vrot.lane.b32.xlu0 %v4472, 110
        %v5235 = vpop.permute.xlu0 %5234
        %5236 = vrot.lane.b32.xlu0 %v4480, 110
        %v5237 = vpop.permute.xlu0 %5236
        %5238 = vrot.lane.b32.xlu0 %v4486, 110
        %v5239 = vpop.permute.xlu0 %5238
        %5240 = vrot.lane.b32.xlu0 %v4494, 110
        %v5241 = vpop.permute.xlu0 %5240
        %5242 = vrot.lane.b32.xlu0 %v4500, 110
        %v5243 = vpop.permute.xlu0 %5242
        %5244 = vrot.lane.b32.xlu0 %v4625, 110
        %v5245 = vpop.permute.xlu0 %5244
        %5246 = vrot.lane.b32.xlu0 %v4655, 110
        %v5247 = vpop.permute.xlu0 %5246
        %5264 = vrot.lane.b32.xlu0 %v4516, 120
        %v5265 = vpop.permute.xlu0 %5264
        %5266 = vrot.lane.b32.xlu0 %v4522, 120
        %v5267 = vpop.permute.xlu0 %5266
        %5268 = vrot.lane.b32.xlu0 %v4528, 120
        %v5269 = vpop.permute.xlu0 %5268
        %5270 = vrot.lane.b32.xlu0 %v4534, 120
        %v5271 = vpop.permute.xlu0 %5270
        %5272 = vrot.lane.b32.xlu0 %v4540, 120
        %v5273 = vpop.permute.xlu0 %5272
        %5274 = vrot.lane.b32.xlu0 %v4546, 120
        %v5275 = vpop.permute.xlu0 %5274
        %5276 = vrot.lane.b32.xlu0 %v4628, 120
        %v5277 = vpop.permute.xlu0 %5276
        %5278 = vrot.lane.b32.xlu0 %v4658, 120
        %v5279 = vpop.permute.xlu0 %5278
        %5280 = vrot.lane.b32.xlu0 %v4519, 120
        %v5281 = vpop.permute.xlu0 %5280
        %5282 = vrot.lane.b32.xlu0 %v4525, 120
        %v5283 = vpop.permute.xlu0 %5282
        %5284 = vrot.lane.b32.xlu0 %v4531, 120
        %v5285 = vpop.permute.xlu0 %5284
        %5286 = vrot.lane.b32.xlu0 %v4537, 120
        %v5287 = vpop.permute.xlu0 %5286
        %5288 = vrot.lane.b32.xlu0 %v4543, 120
        %v5289 = vpop.permute.xlu0 %5288
        %5290 = vrot.lane.b32.xlu0 %v4549, 120
        %v5291 = vpop.permute.xlu0 %5290
        %5292 = vrot.lane.b32.xlu0 %v4631, 120
        %v5293 = vpop.permute.xlu0 %5292
        %5294 = vrot.lane.b32.xlu0 %v4661, 120
        %v5295 = vpop.permute.xlu0 %5294
        %5312 = vrot.lane.b32.xlu0 %v4566, 2
        %v5313 = vpop.permute.xlu0 %5312
        %5314 = vrot.lane.b32.xlu0 %v4572, 2
        %v5315 = vpop.permute.xlu0 %5314
        %5316 = vrot.lane.b32.xlu0 %v4578, 2
        %v5317 = vpop.permute.xlu0 %5316
        %5318 = vrot.lane.b32.xlu0 %v4584, 2
        %v5319 = vpop.permute.xlu0 %5318
        %5320 = vrot.lane.b32.xlu0 %v4590, 2
        %v5321 = vpop.permute.xlu0 %5320
        %5322 = vrot.lane.b32.xlu0 %v4596, 2
        %v5323 = vpop.permute.xlu0 %5322
        %5324 = vrot.lane.b32.xlu0 %v4634, 2
        %v5325 = vpop.permute.xlu0 %5324
        %5326 = vrot.lane.b32.xlu0 %v4664, 2
        %v5327 = vpop.permute.xlu0 %5326
        %5328 = vrot.lane.b32.xlu0 %v4569, 2
        %v5329 = vpop.permute.xlu0 %5328
        %5330 = vrot.lane.b32.xlu0 %v4575, 2
        %v5331 = vpop.permute.xlu0 %5330
        %5332 = vrot.lane.b32.xlu0 %v4581, 2
        %v5333 = vpop.permute.xlu0 %5332
        %5334 = vrot.lane.b32.xlu0 %v4587, 2
        %v5335 = vpop.permute.xlu0 %5334
        %5336 = vrot.lane.b32.xlu0 %v4593, 2
        %v5337 = vpop.permute.xlu0 %5336
        %5338 = vrot.lane.b32.xlu0 %v4599, 2
        %v5339 = vpop.permute.xlu0 %5338
        %5340 = vrot.lane.b32.xlu0 %v4637, 2
        %v5341 = vpop.permute.xlu0 %5340
        %5342 = vrot.lane.b32.xlu0 %v4667, 2
        %v5343 = vpop.permute.xlu0 %5342
        %5360 = vrot.lane.b32.xlu0 %v4605, 12
        %v5361 = vpop.permute.xlu0 %5360
        %5362 = vrot.lane.b32.xlu0 %v4363, 12
        %v5363 = vpop.permute.xlu0 %5362
        %5364 = vrot.lane.b32.xlu0 %v4609, 12
        %v5365 = vpop.permute.xlu0 %5364
        %5366 = vrot.lane.b32.xlu0 %v4366, 12
        %v5367 = vpop.permute.xlu0 %5366
        %5368 = vrot.lane.b32.xlu0 %v4613, 12
        %v5369 = vpop.permute.xlu0 %5368
        %5370 = vrot.lane.b32.xlu0 %v4369, 12
        %v5371 = vpop.permute.xlu0 %5370
        %5372 = vrot.lane.b32.xlu0 %v4640, 12
        %v5373 = vpop.permute.xlu0 %5372
        %5374 = vrot.lane.b32.xlu0 %v4372, 12
        %v5375 = vpop.permute.xlu0 %5374
        %5376 = vrot.lane.b32.xlu0 %v4607, 12
        %v5377 = vpop.permute.xlu0 %5376
        %5378 = vrot.lane.b32.xlu0 %v4381, 12
        %v5379 = vpop.permute.xlu0 %5378
        %5380 = vrot.lane.b32.xlu0 %v4611, 12
        %v5381 = vpop.permute.xlu0 %5380
        %5382 = vrot.lane.b32.xlu0 %v4384, 12
        %v5383 = vpop.permute.xlu0 %5382
        %5384 = vrot.lane.b32.xlu0 %v4615, 12
        %v5385 = vpop.permute.xlu0 %5384
        %5386 = vrot.lane.b32.xlu0 %v4387, 12
        %v5387 = vpop.permute.xlu0 %5386
        %5388 = vrot.lane.b32.xlu0 %v4643, 12
        %v5389 = vpop.permute.xlu0 %5388
        %5390 = vrot.lane.b32.xlu0 %v4390, 12
        %v5391 = vpop.permute.xlu0 %5390
        %5408 = vrot.lane.b32.xlu0 %v4413, 22
        %v5409 = vpop.permute.xlu0 %5408
        %5410 = vrot.lane.b32.xlu0 %v4364, 22
        %v5411 = vpop.permute.xlu0 %5410
        %5412 = vrot.lane.b32.xlu0 %v4425, 22
        %v5413 = vpop.permute.xlu0 %5412
        %5414 = vrot.lane.b32.xlu0 %v4367, 22
        %v5415 = vpop.permute.xlu0 %5414
        %5416 = vrot.lane.b32.xlu0 %v4437, 22
        %v5417 = vpop.permute.xlu0 %5416
        %5418 = vrot.lane.b32.xlu0 %v4370, 22
        %v5419 = vpop.permute.xlu0 %5418
        %5420 = vrot.lane.b32.xlu0 %v4647, 22
        %v5421 = vpop.permute.xlu0 %5420
        %5422 = vrot.lane.b32.xlu0 %v4373, 22
        %v5423 = vpop.permute.xlu0 %5422
        %5424 = vrot.lane.b32.xlu0 %v4416, 22
        %v5425 = vpop.permute.xlu0 %5424
        %5426 = vrot.lane.b32.xlu0 %v4382, 22
        %v5427 = vpop.permute.xlu0 %5426
        %5428 = vrot.lane.b32.xlu0 %v4428, 22
        %v5429 = vpop.permute.xlu0 %5428
        %5430 = vrot.lane.b32.xlu0 %v4385, 22
        %v5431 = vpop.permute.xlu0 %5430
        %5432 = vrot.lane.b32.xlu0 %v4440, 22
        %v5433 = vpop.permute.xlu0 %5432
        %5434 = vrot.lane.b32.xlu0 %v4388, 22
        %v5435 = vpop.permute.xlu0 %5434
        %5436 = vrot.lane.b32.xlu0 %v4649, 22
        %v5437 = vpop.permute.xlu0 %5436
        %5438 = vrot.lane.b32.xlu0 %v4391, 22
        %v5439 = vpop.permute.xlu0 %5438
        %vm5456 = vcmask 80896
        %v5457 = vsel %vm5456, %v4358, %v4737
        %v5458 = vsel %vm5456, %v4401, %v4739
        %v5459 = vsel %vm5456, %v4361, %v4741
        %v5460 = vsel %vm5456, %v4413, %v4743
        %v5461 = vsel %vm5456, %v4364, %v4745
        %v5462 = vsel %vm5456, %v4425, %v4747
        %v5463 = vsel %vm5456, %v4367, %v4749
        %v5464 = vsel %vm5456, %v4437, %v4751
        %v5465 = vsel %vm5456, %v4376, %v4753
        %v5466 = vsel %vm5456, %v4404, %v4755
        %v5467 = vsel %vm5456, %v4379, %v4757
        %v5468 = vsel %vm5456, %v4416, %v4759
        %v5469 = vsel %vm5456, %v4382, %v4761
        %v5470 = vsel %vm5456, %v4428, %v4763
        %v5471 = vsel %vm5456, %v4385, %v4765
        %v5472 = vsel %vm5456, %v4440, %v4767
        %vm5473 = vcmask 162816
        %v5474 = vsel %vm5473, %v5457, %v4785
        %v5475 = vsel %vm5473, %v5458, %v4787
        %v5476 = vsel %vm5473, %v5459, %v4789
        %v5477 = vsel %vm5473, %v5460, %v4791
        %v5478 = vsel %vm5473, %v5461, %v4793
        %v5479 = vsel %vm5473, %v5462, %v4795
        %v5480 = vsel %vm5473, %v5463, %v4797
        %v5481 = vsel %vm5473, %v5464, %v4799
        %v5482 = vsel %vm5473, %v5465, %v4801
        %v5483 = vsel %vm5473, %v5466, %v4803
        %v5484 = vsel %vm5473, %v5467, %v4805
        %v5485 = vsel %vm5473, %v5468, %v4807
        %v5486 = vsel %vm5473, %v5469, %v4809
        %v5487 = vsel %vm5473, %v5470, %v4811
        %v5488 = vsel %vm5473, %v5471, %v4813
        %v5489 = vsel %vm5473, %v5472, %v4815
        %vm5490 = vcmask 244736
        %v5491 = vsel %vm5490, %v5474, %v4833
        %v5492 = vsel %vm5490, %v5475, %v4835
        %v5493 = vsel %vm5490, %v5476, %v4837
        %v5494 = vsel %vm5490, %v5477, %v4839
        %v5495 = vsel %vm5490, %v5478, %v4841
        %v5496 = vsel %vm5490, %v5479, %v4843
        %v5497 = vsel %vm5490, %v5480, %v4845
        %v5498 = vsel %vm5490, %v5481, %v4847
        %v5499 = vsel %vm5490, %v5482, %v4849
        %v5500 = vsel %vm5490, %v5483, %v4851
        %v5501 = vsel %vm5490, %v5484, %v4853
        %v5502 = vsel %vm5490, %v5485, %v4855
        %v5503 = vsel %vm5490, %v5486, %v4857
        %v5504 = vsel %vm5490, %v5487, %v4859
        %v5505 = vsel %vm5490, %v5488, %v4861
        %v5506 = vsel %vm5490, %v5489, %v4863
        %vm5507 = vcmask 326656
        %v5508 = vsel %vm5507, %v5491, %v4881
        %v5509 = vsel %vm5507, %v5492, %v4883
        %v5510 = vsel %vm5507, %v5493, %v4885
        %v5511 = vsel %vm5507, %v5494, %v4887
        %v5512 = vsel %vm5507, %v5495, %v4889
        %v5513 = vsel %vm5507, %v5496, %v4891
        %v5514 = vsel %vm5507, %v5497, %v4893
        %v5515 = vsel %vm5507, %v5498, %v4895
        %v5516 = vsel %vm5507, %v5499, %v4897
        %v5517 = vsel %vm5507, %v5500, %v4899
        %v5518 = vsel %vm5507, %v5501, %v4901
        %v5519 = vsel %vm5507, %v5502, %v4903
        %v5520 = vsel %vm5507, %v5503, %v4905
        %v5521 = vsel %vm5507, %v5504, %v4907
        %v5522 = vsel %vm5507, %v5505, %v4909
        %v5523 = vsel %vm5507, %v5506, %v4911
        %v5524 = vsel %vm2070, %v5508, %v4929
        %v5525 = vsel %vm2070, %v5509, %v4931
        %v5526 = vsel %vm2070, %v5510, %v4933
        %v5527 = vsel %vm2070, %v5511, %v4935
        %v5528 = vsel %vm2070, %v5512, %v4937
        %v5529 = vsel %vm2070, %v5513, %v4939
        %v5530 = vsel %vm2070, %v5514, %v4941
        %v5531 = vsel %vm2070, %v5515, %v4943
        %v5532 = vsel %vm2070, %v5516, %v4945
        %v5533 = vsel %vm2070, %v5517, %v4947
        %v5534 = vsel %vm2070, %v5518, %v4949
        %v5535 = vsel %vm2070, %v5519, %v4951
        %v5536 = vsel %vm2070, %v5520, %v4953
        %v5537 = vsel %vm2070, %v5521, %v4955
        %v5538 = vsel %vm2070, %v5522, %v4957
        %v5539 = vsel %vm2070, %v5523, %v4959
        %vm5540 = vcmask 490496
        %v5541 = vsel %vm5540, %v5524, %v4977
        %v5542 = vsel %vm5540, %v5525, %v4979
        %v5543 = vsel %vm5540, %v5526, %v4981
        %v5544 = vsel %vm5540, %v5527, %v4983
        %v5545 = vsel %vm5540, %v5528, %v4985
        %v5546 = vsel %vm5540, %v5529, %v4987
        %v5547 = vsel %vm5540, %v5530, %v4989
        %v5548 = vsel %vm5540, %v5531, %v4991
        %v5549 = vsel %vm5540, %v5532, %v4993
        %v5550 = vsel %vm5540, %v5533, %v4995
        %v5551 = vsel %vm5540, %v5534, %v4997
        %v5552 = vsel %vm5540, %v5535, %v4999
        %v5553 = vsel %vm5540, %v5536, %v5001
        %v5554 = vsel %vm5540, %v5537, %v5003
        %v5555 = vsel %vm5540, %v5538, %v5005
        %v5556 = vsel %vm5540, %v5539, %v5007
        %vm5557 = vcmask 572416
        %v5558 = vsel %vm5557, %v5541, %v5025
        %v5559 = vsel %vm5557, %v5542, %v5027
        %v5560 = vsel %vm5557, %v5543, %v5029
        %v5561 = vsel %vm5557, %v5544, %v5031
        %v5562 = vsel %vm5557, %v5545, %v5033
        %v5563 = vsel %vm5557, %v5546, %v5035
        %v5564 = vsel %vm5557, %v5547, %v5037
        %v5565 = vsel %vm5557, %v5548, %v5039
        %v5566 = vsel %vm5557, %v5549, %v5041
        %v5567 = vsel %vm5557, %v5550, %v5043
        %v5568 = vsel %vm5557, %v5551, %v5045
        %v5569 = vsel %vm5557, %v5552, %v5047
        %v5570 = vsel %vm5557, %v5553, %v5049
        %v5571 = vsel %vm5557, %v5554, %v5051
        %v5572 = vsel %vm5557, %v5555, %v5053
        %v5573 = vsel %vm5557, %v5556, %v5055
        %vm5574 = vcmask 654336
        %v5575 = vsel %vm5574, %v5558, %v5073
        %v5576 = vsel %vm5574, %v5559, %v5075
        %v5577 = vsel %vm5574, %v5560, %v5077
        %v5578 = vsel %vm5574, %v5561, %v5079
        %v5579 = vsel %vm5574, %v5562, %v5081
        %v5580 = vsel %vm5574, %v5563, %v5083
        %v5581 = vsel %vm5574, %v5564, %v5085
        %v5582 = vsel %vm5574, %v5565, %v5087
        %v5583 = vsel %vm5574, %v5566, %v5089
        %v5584 = vsel %vm5574, %v5567, %v5091
        %v5585 = vsel %vm5574, %v5568, %v5093
        %v5586 = vsel %vm5574, %v5569, %v5095
        %v5587 = vsel %vm5574, %v5570, %v5097
        %v5588 = vsel %vm5574, %v5571, %v5099
        %v5589 = vsel %vm5574, %v5572, %v5101
        %v5590 = vsel %vm5574, %v5573, %v5103
        %vm5591 = vcmask 736256
        %v5592 = vsel %vm5591, %v5575, %v5121
        %v5593 = vsel %vm5591, %v5576, %v5123
        %v5594 = vsel %vm5591, %v5577, %v5125
        %v5595 = vsel %vm5591, %v5578, %v5127
        %v5596 = vsel %vm5591, %v5579, %v5129
        %v5597 = vsel %vm5591, %v5580, %v5131
        %v5598 = vsel %vm5591, %v5581, %v5133
        %v5599 = vsel %vm5591, %v5582, %v5135
        %v5600 = vsel %vm5591, %v5583, %v5137
        %v5601 = vsel %vm5591, %v5584, %v5139
        %v5602 = vsel %vm5591, %v5585, %v5141
        %v5603 = vsel %vm5591, %v5586, %v5143
        %v5604 = vsel %vm5591, %v5587, %v5145
        %v5605 = vsel %vm5591, %v5588, %v5147
        %v5606 = vsel %vm5591, %v5589, %v5149
        %v5607 = vsel %vm5591, %v5590, %v5151
        %vm5608 = vcmask 818176
        %v5609 = vsel %vm5608, %v5592, %v5169
        %v5610 = vsel %vm5608, %v5593, %v5171
        %v5611 = vsel %vm5608, %v5594, %v5173
        %v5612 = vsel %vm5608, %v5595, %v5175
        %v5613 = vsel %vm5608, %v5596, %v5177
        %v5614 = vsel %vm5608, %v5597, %v5179
        %v5615 = vsel %vm5608, %v5598, %v5181
        %v5616 = vsel %vm5608, %v5599, %v5183
        %v5617 = vsel %vm5608, %v5600, %v5185
        %v5618 = vsel %vm5608, %v5601, %v5187
        %v5619 = vsel %vm5608, %v5602, %v5189
        %v5620 = vsel %vm5608, %v5603, %v5191
        %v5621 = vsel %vm5608, %v5604, %v5193
        %v5622 = vsel %vm5608, %v5605, %v5195
        %v5623 = vsel %vm5608, %v5606, %v5197
        %v5624 = vsel %vm5608, %v5607, %v5199
        %vm5625 = vcmask 900096
        %v5626 = vsel %vm5625, %v5609, %v5217
        %v5627 = vsel %vm5625, %v5610, %v5219
        %v5628 = vsel %vm5625, %v5611, %v5221
        %v5629 = vsel %vm5625, %v5612, %v5223
        %v5630 = vsel %vm5625, %v5613, %v5225
        %v5631 = vsel %vm5625, %v5614, %v5227
        %v5632 = vsel %vm5625, %v5615, %v5229
        %v5633 = vsel %vm5625, %v5616, %v5231
        %v5634 = vsel %vm5625, %v5617, %v5233
        %v5635 = vsel %vm5625, %v5618, %v5235
        %v5636 = vsel %vm5625, %v5619, %v5237
        %v5637 = vsel %vm5625, %v5620, %v5239
        %v5638 = vsel %vm5625, %v5621, %v5241
        %v5639 = vsel %vm5625, %v5622, %v5243
        %v5640 = vsel %vm5625, %v5623, %v5245
        %v5641 = vsel %vm5625, %v5624, %v5247
        %vm5642 = vcmask 982016
        %v5643 = vsel %vm5642, %v5626, %v5265
        %v5644 = vsel %vm5642, %v5627, %v5267
        %v5645 = vsel %vm5642, %v5628, %v5269
        %v5646 = vsel %vm5642, %v5629, %v5271
        %v5647 = vsel %vm5642, %v5630, %v5273
        %v5648 = vsel %vm5642, %v5631, %v5275
        %v5649 = vsel %vm5642, %v5632, %v5277
        %v5650 = vsel %vm5642, %v5633, %v5279
        %v5651 = vsel %vm5642, %v5634, %v5281
        %v5652 = vsel %vm5642, %v5635, %v5283
        %v5653 = vsel %vm5642, %v5636, %v5285
        %v5654 = vsel %vm5642, %v5637, %v5287
        %v5655 = vsel %vm5642, %v5638, %v5289
        %v5656 = vsel %vm5642, %v5639, %v5291
        %v5657 = vsel %vm5642, %v5640, %v5293
        %v5658 = vsel %vm5642, %v5641, %v5295
        %vm5659 = vcmask 15360
        %v5660 = vsel %vm5659, %v5265, %v5313
        %v5661 = vsel %vm5659, %v5267, %v5315
        %v5662 = vsel %vm5659, %v5269, %v5317
        %v5663 = vsel %vm5659, %v5271, %v5319
        %v5664 = vsel %vm5659, %v5273, %v5321
        %v5665 = vsel %vm5659, %v5275, %v5323
        %v5666 = vsel %vm5659, %v5277, %v5325
        %v5667 = vsel %vm5659, %v5279, %v5327
        %v5668 = vsel %vm5659, %v5281, %v5329
        %v5669 = vsel %vm5659, %v5283, %v5331
        %v5670 = vsel %vm5659, %v5285, %v5333
        %v5671 = vsel %vm5659, %v5287, %v5335
        %v5672 = vsel %vm5659, %v5289, %v5337
        %v5673 = vsel %vm5659, %v5291, %v5339
        %v5674 = vsel %vm5659, %v5293, %v5341
        %v5675 = vsel %vm5659, %v5295, %v5343
        %vm5676 = vcmask 97280
        %v5677 = vsel %vm5676, %v5660, %v5361
        %v5678 = vsel %vm5676, %v5661, %v5363
        %v5679 = vsel %vm5676, %v5662, %v5365
        %v5680 = vsel %vm5676, %v5663, %v5367
        %v5681 = vsel %vm5676, %v5664, %v5369
        %v5682 = vsel %vm5676, %v5665, %v5371
        %v5683 = vsel %vm5676, %v5666, %v5373
        %v5684 = vsel %vm5676, %v5667, %v5375
        %v5685 = vsel %vm5676, %v5668, %v5377
        %v5686 = vsel %vm5676, %v5669, %v5379
        %v5687 = vsel %vm5676, %v5670, %v5381
        %v5688 = vsel %vm5676, %v5671, %v5383
        %v5689 = vsel %vm5676, %v5672, %v5385
        %v5690 = vsel %vm5676, %v5673, %v5387
        %v5691 = vsel %vm5676, %v5674, %v5389
        %v5692 = vsel %vm5676, %v5675, %v5391
        %vm5693 = vcmask 179200
        %v5694 = vsel %vm5693, %v5677, %v5409
        %v5695 = vsel %vm5693, %v5678, %v5411
        %v5696 = vsel %vm5693, %v5679, %v5413
        %v5697 = vsel %vm5693, %v5680, %v5415
        %v5698 = vsel %vm5693, %v5681, %v5417
        %v5699 = vsel %vm5693, %v5682, %v5419
        %v5700 = vsel %vm5693, %v5683, %v5421
        %v5701 = vsel %vm5693, %v5684, %v5423
        %v5702 = vsel %vm5693, %v5685, %v5425
        %v5703 = vsel %vm5693, %v5686, %v5427
        %v5704 = vsel %vm5693, %v5687, %v5429
        %v5705 = vsel %vm5693, %v5688, %v5431
        %v5706 = vsel %vm5693, %v5689, %v5433
        %v5707 = vsel %vm5693, %v5690, %v5435
        %v5708 = vsel %vm5693, %v5691, %v5437
        %v5709 = vsel %vm5693, %v5692, %v5439
        %5710 = vrot.lane.b32.xlu0 %v4522, 10
        %v5711 = vpop.permute.xlu0 %5710
        %5712 = vrot.lane.b32.xlu0 %v4528, 10
        %v5713 = vpop.permute.xlu0 %5712
        %5714 = vrot.lane.b32.xlu0 %v4534, 10
        %v5715 = vpop.permute.xlu0 %5714
        %5716 = vrot.lane.b32.xlu0 %v4540, 10
        %v5717 = vpop.permute.xlu0 %5716
        %5718 = vrot.lane.b32.xlu0 %v4546, 10
        %v5719 = vpop.permute.xlu0 %5718
        %5720 = vrot.lane.b32.xlu0 %v4628, 10
        %v5721 = vpop.permute.xlu0 %5720
        %5722 = vrot.lane.b32.xlu0 %v4658, 10
        %v5723 = vpop.permute.xlu0 %5722
        %5724 = vrot.lane.b32.xlu0 %v4696, 10
        %v5725 = vpop.permute.xlu0 %5724
        %5726 = vrot.lane.b32.xlu0 %v4525, 10
        %v5727 = vpop.permute.xlu0 %5726
        %5728 = vrot.lane.b32.xlu0 %v4531, 10
        %v5729 = vpop.permute.xlu0 %5728
        %5730 = vrot.lane.b32.xlu0 %v4537, 10
        %v5731 = vpop.permute.xlu0 %5730
        %5732 = vrot.lane.b32.xlu0 %v4543, 10
        %v5733 = vpop.permute.xlu0 %5732
        %5734 = vrot.lane.b32.xlu0 %v4549, 10
        %v5735 = vpop.permute.xlu0 %5734
        %5736 = vrot.lane.b32.xlu0 %v4631, 10
        %v5737 = vpop.permute.xlu0 %5736
        %5738 = vrot.lane.b32.xlu0 %v4661, 10
        %v5739 = vpop.permute.xlu0 %5738
        %5740 = vrot.lane.b32.xlu0 %v4699, 10
        %v5741 = vpop.permute.xlu0 %5740
        %5758 = vrot.lane.b32.xlu0 %v4572, 20
        %v5759 = vpop.permute.xlu0 %5758
        %5760 = vrot.lane.b32.xlu0 %v4578, 20
        %v5761 = vpop.permute.xlu0 %5760
        %5762 = vrot.lane.b32.xlu0 %v4584, 20
        %v5763 = vpop.permute.xlu0 %5762
        %5764 = vrot.lane.b32.xlu0 %v4590, 20
        %v5765 = vpop.permute.xlu0 %5764
        %5766 = vrot.lane.b32.xlu0 %v4596, 20
        %v5767 = vpop.permute.xlu0 %5766
        %5768 = vrot.lane.b32.xlu0 %v4634, 20
        %v5769 = vpop.permute.xlu0 %5768
        %5770 = vrot.lane.b32.xlu0 %v4664, 20
        %v5771 = vpop.permute.xlu0 %5770
        %5772 = vrot.lane.b32.xlu0 %v4702, 20
        %v5773 = vpop.permute.xlu0 %5772
        %5774 = vrot.lane.b32.xlu0 %v4575, 20
        %v5775 = vpop.permute.xlu0 %5774
        %5776 = vrot.lane.b32.xlu0 %v4581, 20
        %v5777 = vpop.permute.xlu0 %5776
        %5778 = vrot.lane.b32.xlu0 %v4587, 20
        %v5779 = vpop.permute.xlu0 %5778
        %5780 = vrot.lane.b32.xlu0 %v4593, 20
        %v5781 = vpop.permute.xlu0 %5780
        %5782 = vrot.lane.b32.xlu0 %v4599, 20
        %v5783 = vpop.permute.xlu0 %5782
        %5784 = vrot.lane.b32.xlu0 %v4637, 20
        %v5785 = vpop.permute.xlu0 %5784
        %5786 = vrot.lane.b32.xlu0 %v4667, 20
        %v5787 = vpop.permute.xlu0 %5786
        %5788 = vrot.lane.b32.xlu0 %v4705, 20
        %v5789 = vpop.permute.xlu0 %5788
        %5806 = vrot.lane.b32.xlu0 %v4363, 30
        %v5807 = vpop.permute.xlu0 %5806
        %5808 = vrot.lane.b32.xlu0 %v4609, 30
        %v5809 = vpop.permute.xlu0 %5808
        %5810 = vrot.lane.b32.xlu0 %v4366, 30
        %v5811 = vpop.permute.xlu0 %5810
        %5812 = vrot.lane.b32.xlu0 %v4613, 30
        %v5813 = vpop.permute.xlu0 %5812
        %5814 = vrot.lane.b32.xlu0 %v4369, 30
        %v5815 = vpop.permute.xlu0 %5814
        %5816 = vrot.lane.b32.xlu0 %v4640, 30
        %v5817 = vpop.permute.xlu0 %5816
        %5818 = vrot.lane.b32.xlu0 %v4372, 30
        %v5819 = vpop.permute.xlu0 %5818
        %5820 = vrot.lane.b32.xlu0 %v4708, 30
        %v5821 = vpop.permute.xlu0 %5820
        %5822 = vrot.lane.b32.xlu0 %v4381, 30
        %v5823 = vpop.permute.xlu0 %5822
        %5824 = vrot.lane.b32.xlu0 %v4611, 30
        %v5825 = vpop.permute.xlu0 %5824
        %5826 = vrot.lane.b32.xlu0 %v4384, 30
        %v5827 = vpop.permute.xlu0 %5826
        %5828 = vrot.lane.b32.xlu0 %v4615, 30
        %v5829 = vpop.permute.xlu0 %5828
        %5830 = vrot.lane.b32.xlu0 %v4387, 30
        %v5831 = vpop.permute.xlu0 %5830
        %5832 = vrot.lane.b32.xlu0 %v4643, 30
        %v5833 = vpop.permute.xlu0 %5832
        %5834 = vrot.lane.b32.xlu0 %v4390, 30
        %v5835 = vpop.permute.xlu0 %5834
        %5836 = vrot.lane.b32.xlu0 %v4711, 30
        %v5837 = vpop.permute.xlu0 %5836
        %5854 = vrot.lane.b32.xlu0 %v4364, 40
        %v5855 = vpop.permute.xlu0 %5854
        %5856 = vrot.lane.b32.xlu0 %v4425, 40
        %v5857 = vpop.permute.xlu0 %5856
        %5858 = vrot.lane.b32.xlu0 %v4367, 40
        %v5859 = vpop.permute.xlu0 %5858
        %5860 = vrot.lane.b32.xlu0 %v4437, 40
        %v5861 = vpop.permute.xlu0 %5860
        %5862 = vrot.lane.b32.xlu0 %v4370, 40
        %v5863 = vpop.permute.xlu0 %5862
        %5864 = vrot.lane.b32.xlu0 %v4647, 40
        %v5865 = vpop.permute.xlu0 %5864
        %5866 = vrot.lane.b32.xlu0 %v4373, 40
        %v5867 = vpop.permute.xlu0 %5866
        %5868 = vrot.lane.b32.xlu0 %v4715, 40
        %v5869 = vpop.permute.xlu0 %5868
        %5870 = vrot.lane.b32.xlu0 %v4382, 40
        %v5871 = vpop.permute.xlu0 %5870
        %5872 = vrot.lane.b32.xlu0 %v4428, 40
        %v5873 = vpop.permute.xlu0 %5872
        %5874 = vrot.lane.b32.xlu0 %v4385, 40
        %v5875 = vpop.permute.xlu0 %5874
        %5876 = vrot.lane.b32.xlu0 %v4440, 40
        %v5877 = vpop.permute.xlu0 %5876
        %5878 = vrot.lane.b32.xlu0 %v4388, 40
        %v5879 = vpop.permute.xlu0 %5878
        %5880 = vrot.lane.b32.xlu0 %v4649, 40
        %v5881 = vpop.permute.xlu0 %5880
        %5882 = vrot.lane.b32.xlu0 %v4391, 40
        %v5883 = vpop.permute.xlu0 %5882
        %5884 = vrot.lane.b32.xlu0 %v4717, 40
        %v5885 = vpop.permute.xlu0 %5884
        %5902 = vrot.lane.b32.xlu0 %v4477, 50
        %v5903 = vpop.permute.xlu0 %5902
        %5904 = vrot.lane.b32.xlu0 %v4483, 50
        %v5905 = vpop.permute.xlu0 %5904
        %5906 = vrot.lane.b32.xlu0 %v4491, 50
        %v5907 = vpop.permute.xlu0 %5906
        %5908 = vrot.lane.b32.xlu0 %v4497, 50
        %v5909 = vpop.permute.xlu0 %5908
        %5910 = vrot.lane.b32.xlu0 %v4622, 50
        %v5911 = vpop.permute.xlu0 %5910
        %5912 = vrot.lane.b32.xlu0 %v4652, 50
        %v5913 = vpop.permute.xlu0 %5912
        %5914 = vrot.lane.b32.xlu0 %v4688, 50
        %v5915 = vpop.permute.xlu0 %5914
        %5916 = vrot.lane.b32.xlu0 %v4720, 50
        %v5917 = vpop.permute.xlu0 %5916
        %5918 = vrot.lane.b32.xlu0 %v4480, 50
        %v5919 = vpop.permute.xlu0 %5918
        %5920 = vrot.lane.b32.xlu0 %v4486, 50
        %v5921 = vpop.permute.xlu0 %5920
        %5922 = vrot.lane.b32.xlu0 %v4494, 50
        %v5923 = vpop.permute.xlu0 %5922
        %5924 = vrot.lane.b32.xlu0 %v4500, 50
        %v5925 = vpop.permute.xlu0 %5924
        %5926 = vrot.lane.b32.xlu0 %v4625, 50
        %v5927 = vpop.permute.xlu0 %5926
        %5928 = vrot.lane.b32.xlu0 %v4655, 50
        %v5929 = vpop.permute.xlu0 %5928
        %5930 = vrot.lane.b32.xlu0 %v4691, 50
        %v5931 = vpop.permute.xlu0 %5930
        %5932 = vrot.lane.b32.xlu0 %v4723, 50
        %v5933 = vpop.permute.xlu0 %5932
        %5950 = vrot.lane.b32.xlu0 %v4528, 60
        %v5951 = vpop.permute.xlu0 %5950
        %5952 = vrot.lane.b32.xlu0 %v4534, 60
        %v5953 = vpop.permute.xlu0 %5952
        %5954 = vrot.lane.b32.xlu0 %v4540, 60
        %v5955 = vpop.permute.xlu0 %5954
        %5956 = vrot.lane.b32.xlu0 %v4546, 60
        %v5957 = vpop.permute.xlu0 %5956
        %5958 = vrot.lane.b32.xlu0 %v4628, 60
        %v5959 = vpop.permute.xlu0 %5958
        %5960 = vrot.lane.b32.xlu0 %v4658, 60
        %v5961 = vpop.permute.xlu0 %5960
        %5962 = vrot.lane.b32.xlu0 %v4696, 60
        %v5963 = vpop.permute.xlu0 %5962
        %5964 = vrot.lane.b32.xlu0 %v4726, 60
        %v5965 = vpop.permute.xlu0 %5964
        %5966 = vrot.lane.b32.xlu0 %v4531, 60
        %v5967 = vpop.permute.xlu0 %5966
        %5968 = vrot.lane.b32.xlu0 %v4537, 60
        %v5969 = vpop.permute.xlu0 %5968
        %5970 = vrot.lane.b32.xlu0 %v4543, 60
        %v5971 = vpop.permute.xlu0 %5970
        %5972 = vrot.lane.b32.xlu0 %v4549, 60
        %v5973 = vpop.permute.xlu0 %5972
        %5974 = vrot.lane.b32.xlu0 %v4631, 60
        %v5975 = vpop.permute.xlu0 %5974
        %5976 = vrot.lane.b32.xlu0 %v4661, 60
        %v5977 = vpop.permute.xlu0 %5976
        %5978 = vrot.lane.b32.xlu0 %v4699, 60
        %v5979 = vpop.permute.xlu0 %5978
        %5980 = vrot.lane.b32.xlu0 %v4729, 60
        %v5981 = vpop.permute.xlu0 %5980
        %5998 = vrot.lane.b32.xlu0 %v4578, 70
        %v5999 = vpop.permute.xlu0 %5998
        %6000 = vrot.lane.b32.xlu0 %v4584, 70
        %v6001 = vpop.permute.xlu0 %6000
        %6002 = vrot.lane.b32.xlu0 %v4590, 70
        %v6003 = vpop.permute.xlu0 %6002
        %6004 = vrot.lane.b32.xlu0 %v4596, 70
        %v6005 = vpop.permute.xlu0 %6004
        %6006 = vrot.lane.b32.xlu0 %v4634, 70
        %v6007 = vpop.permute.xlu0 %6006
        %6008 = vrot.lane.b32.xlu0 %v4664, 70
        %v6009 = vpop.permute.xlu0 %6008
        %6010 = vrot.lane.b32.xlu0 %v4702, 70
        %v6011 = vpop.permute.xlu0 %6010
        %6012 = vrot.lane.b32.xlu0 %v4732, 70
        %v6013 = vpop.permute.xlu0 %6012
        %6014 = vrot.lane.b32.xlu0 %v4581, 70
        %v6015 = vpop.permute.xlu0 %6014
        %6016 = vrot.lane.b32.xlu0 %v4587, 70
        %v6017 = vpop.permute.xlu0 %6016
        %6018 = vrot.lane.b32.xlu0 %v4593, 70
        %v6019 = vpop.permute.xlu0 %6018
        %6020 = vrot.lane.b32.xlu0 %v4599, 70
        %v6021 = vpop.permute.xlu0 %6020
        %6022 = vrot.lane.b32.xlu0 %v4637, 70
        %v6023 = vpop.permute.xlu0 %6022
        %6024 = vrot.lane.b32.xlu0 %v4667, 70
        %v6025 = vpop.permute.xlu0 %6024
        %6026 = vrot.lane.b32.xlu0 %v4705, 70
        %v6027 = vpop.permute.xlu0 %6026
        %6028 = vrot.lane.b32.xlu0 %v4735, 70
        %v6029 = vpop.permute.xlu0 %6028
        %6046 = vrot.lane.b32.xlu0 %v4609, 80
        %v6047 = vpop.permute.xlu0 %6046
        %6048 = vrot.lane.b32.xlu0 %v4366, 80
        %v6049 = vpop.permute.xlu0 %6048
        %6050 = vrot.lane.b32.xlu0 %v4613, 80
        %v6051 = vpop.permute.xlu0 %6050
        %6052 = vrot.lane.b32.xlu0 %v4369, 80
        %v6053 = vpop.permute.xlu0 %6052
        %6054 = vrot.lane.b32.xlu0 %v4640, 80
        %v6055 = vpop.permute.xlu0 %6054
        %6056 = vrot.lane.b32.xlu0 %v4372, 80
        %v6057 = vpop.permute.xlu0 %6056
        %6058 = vrot.lane.b32.xlu0 %v4708, 80
        %v6059 = vpop.permute.xlu0 %6058
        %6060 = vrot.lane.b32.xlu0 %v4375, 80
        %v6061 = vpop.permute.xlu0 %6060
        %6062 = vrot.lane.b32.xlu0 %v4611, 80
        %v6063 = vpop.permute.xlu0 %6062
        %6064 = vrot.lane.b32.xlu0 %v4384, 80
        %v6065 = vpop.permute.xlu0 %6064
        %6066 = vrot.lane.b32.xlu0 %v4615, 80
        %v6067 = vpop.permute.xlu0 %6066
        %6068 = vrot.lane.b32.xlu0 %v4387, 80
        %v6069 = vpop.permute.xlu0 %6068
        %6070 = vrot.lane.b32.xlu0 %v4643, 80
        %v6071 = vpop.permute.xlu0 %6070
        %6072 = vrot.lane.b32.xlu0 %v4390, 80
        %v6073 = vpop.permute.xlu0 %6072
        %6074 = vrot.lane.b32.xlu0 %v4711, 80
        %v6075 = vpop.permute.xlu0 %6074
        %6076 = vrot.lane.b32.xlu0 %v4393, 80
        %v6077 = vpop.permute.xlu0 %6076
        %v6094 = vsel %vm5456, %v4469, %v5711
        %v6095 = vsel %vm5456, %v4477, %v5713
        %v6096 = vsel %vm5456, %v4483, %v5715
        %v6097 = vsel %vm5456, %v4491, %v5717
        %v6098 = vsel %vm5456, %v4497, %v5719
        %v6099 = vsel %vm5456, %v4622, %v5721
        %v6100 = vsel %vm5456, %v4652, %v5723
        %v6101 = vsel %vm5456, %v4688, %v5725
        %v6102 = vsel %vm5456, %v4472, %v5727
        %v6103 = vsel %vm5456, %v4480, %v5729
        %v6104 = vsel %vm5456, %v4486, %v5731
        %v6105 = vsel %vm5456, %v4494, %v5733
        %v6106 = vsel %vm5456, %v4500, %v5735
        %v6107 = vsel %vm5456, %v4625, %v5737
        %v6108 = vsel %vm5456, %v4655, %v5739
        %v6109 = vsel %vm5456, %v4691, %v5741
        %v6110 = vsel %vm5473, %v6094, %v5759
        %v6111 = vsel %vm5473, %v6095, %v5761
        %v6112 = vsel %vm5473, %v6096, %v5763
        %v6113 = vsel %vm5473, %v6097, %v5765
        %v6114 = vsel %vm5473, %v6098, %v5767
        %v6115 = vsel %vm5473, %v6099, %v5769
        %v6116 = vsel %vm5473, %v6100, %v5771
        %v6117 = vsel %vm5473, %v6101, %v5773
        %v6118 = vsel %vm5473, %v6102, %v5775
        %v6119 = vsel %vm5473, %v6103, %v5777
        %v6120 = vsel %vm5473, %v6104, %v5779
        %v6121 = vsel %vm5473, %v6105, %v5781
        %v6122 = vsel %vm5473, %v6106, %v5783
        %v6123 = vsel %vm5473, %v6107, %v5785
        %v6124 = vsel %vm5473, %v6108, %v5787
        %v6125 = vsel %vm5473, %v6109, %v5789
        %v6126 = vsel %vm5490, %v6110, %v5807
        %v6127 = vsel %vm5490, %v6111, %v5809
        %v6128 = vsel %vm5490, %v6112, %v5811
        %v6129 = vsel %vm5490, %v6113, %v5813
        %v6130 = vsel %vm5490, %v6114, %v5815
        %v6131 = vsel %vm5490, %v6115, %v5817
        %v6132 = vsel %vm5490, %v6116, %v5819
        %v6133 = vsel %vm5490, %v6117, %v5821
        %v6134 = vsel %vm5490, %v6118, %v5823
        %v6135 = vsel %vm5490, %v6119, %v5825
        %v6136 = vsel %vm5490, %v6120, %v5827
        %v6137 = vsel %vm5490, %v6121, %v5829
        %v6138 = vsel %vm5490, %v6122, %v5831
        %v6139 = vsel %vm5490, %v6123, %v5833
        %v6140 = vsel %vm5490, %v6124, %v5835
        %v6141 = vsel %vm5490, %v6125, %v5837
        %v6142 = vsel %vm5507, %v6126, %v5855
        %v6143 = vsel %vm5507, %v6127, %v5857
        %v6144 = vsel %vm5507, %v6128, %v5859
        %v6145 = vsel %vm5507, %v6129, %v5861
        %v6146 = vsel %vm5507, %v6130, %v5863
        %v6147 = vsel %vm5507, %v6131, %v5865
        %v6148 = vsel %vm5507, %v6132, %v5867
        %v6149 = vsel %vm5507, %v6133, %v5869
        %v6150 = vsel %vm5507, %v6134, %v5871
        %v6151 = vsel %vm5507, %v6135, %v5873
        %v6152 = vsel %vm5507, %v6136, %v5875
        %v6153 = vsel %vm5507, %v6137, %v5877
        %v6154 = vsel %vm5507, %v6138, %v5879
        %v6155 = vsel %vm5507, %v6139, %v5881
        %v6156 = vsel %vm5507, %v6140, %v5883
        %v6157 = vsel %vm5507, %v6141, %v5885
        %v6158 = vsel %vm2070, %v6142, %v5903
        %v6159 = vsel %vm2070, %v6143, %v5905
        %v6160 = vsel %vm2070, %v6144, %v5907
        %v6161 = vsel %vm2070, %v6145, %v5909
        %v6162 = vsel %vm2070, %v6146, %v5911
        %v6163 = vsel %vm2070, %v6147, %v5913
        %v6164 = vsel %vm2070, %v6148, %v5915
        %v6165 = vsel %vm2070, %v6149, %v5917
        %v6166 = vsel %vm2070, %v6150, %v5919
        %v6167 = vsel %vm2070, %v6151, %v5921
        %v6168 = vsel %vm2070, %v6152, %v5923
        %v6169 = vsel %vm2070, %v6153, %v5925
        %v6170 = vsel %vm2070, %v6154, %v5927
        %v6171 = vsel %vm2070, %v6155, %v5929
        %v6172 = vsel %vm2070, %v6156, %v5931
        %v6173 = vsel %vm2070, %v6157, %v5933
        %v6174 = vsel %vm5540, %v6158, %v5951
        %v6175 = vsel %vm5540, %v6159, %v5953
        %v6176 = vsel %vm5540, %v6160, %v5955
        %v6177 = vsel %vm5540, %v6161, %v5957
        %v6178 = vsel %vm5540, %v6162, %v5959
        %v6179 = vsel %vm5540, %v6163, %v5961
        %v6180 = vsel %vm5540, %v6164, %v5963
        %v6181 = vsel %vm5540, %v6165, %v5965
        %v6182 = vsel %vm5540, %v6166, %v5967
        %v6183 = vsel %vm5540, %v6167, %v5969
        %v6184 = vsel %vm5540, %v6168, %v5971
        %v6185 = vsel %vm5540, %v6169, %v5973
        %v6186 = vsel %vm5540, %v6170, %v5975
        %v6187 = vsel %vm5540, %v6171, %v5977
        %v6188 = vsel %vm5540, %v6172, %v5979
        %v6189 = vsel %vm5540, %v6173, %v5981
        %v6190 = vsel %vm5557, %v6174, %v5999
        %v6191 = vsel %vm5557, %v6175, %v6001
        %v6192 = vsel %vm5557, %v6176, %v6003
        %v6193 = vsel %vm5557, %v6177, %v6005
        %v6194 = vsel %vm5557, %v6178, %v6007
        %v6195 = vsel %vm5557, %v6179, %v6009
        %v6196 = vsel %vm5557, %v6180, %v6011
        %v6197 = vsel %vm5557, %v6181, %v6013
        %v6198 = vsel %vm5557, %v6182, %v6015
        %v6199 = vsel %vm5557, %v6183, %v6017
        %v6200 = vsel %vm5557, %v6184, %v6019
        %v6201 = vsel %vm5557, %v6185, %v6021
        %v6202 = vsel %vm5557, %v6186, %v6023
        %v6203 = vsel %vm5557, %v6187, %v6025
        %v6204 = vsel %vm5557, %v6188, %v6027
        %v6205 = vsel %vm5557, %v6189, %v6029
        %v6206 = vsel %vm5574, %v6190, %v6047
        %v6207 = vsel %vm5574, %v6191, %v6049
        %v6208 = vsel %vm5574, %v6192, %v6051
        %v6209 = vsel %vm5574, %v6193, %v6053
        %v6210 = vsel %vm5574, %v6194, %v6055
        %v6211 = vsel %vm5574, %v6195, %v6057
        %v6212 = vsel %vm5574, %v6196, %v6059
        %v6213 = vsel %vm5574, %v6197, %v6061
        %v6214 = vsel %vm5574, %v6198, %v6063
        %v6215 = vsel %vm5574, %v6199, %v6065
        %v6216 = vsel %vm5574, %v6200, %v6067
        %v6217 = vsel %vm5574, %v6201, %v6069
        %v6218 = vsel %vm5574, %v6202, %v6071
        %v6219 = vsel %vm5574, %v6203, %v6073
        %v6220 = vsel %vm5574, %v6204, %v6075
        %v6221 = vsel %vm5574, %v6205, %v6077
        %6238 = vrot.lane.b32.xlu0 %v6206, 32
        %v6239 = vpop.permute.xlu0 %6238
        %6240 = vrot.lane.b32.xlu0 %v6207, 32
        %v6241 = vpop.permute.xlu0 %6240
        %6242 = vrot.lane.b32.xlu0 %v6208, 32
        %v6243 = vpop.permute.xlu0 %6242
        %6244 = vrot.lane.b32.xlu0 %v6209, 32
        %v6245 = vpop.permute.xlu0 %6244
        %6246 = vrot.lane.b32.xlu0 %v6210, 32
        %v6247 = vpop.permute.xlu0 %6246
        %6248 = vrot.lane.b32.xlu0 %v6211, 32
        %v6249 = vpop.permute.xlu0 %6248
        %6250 = vrot.lane.b32.xlu0 %v6212, 32
        %v6251 = vpop.permute.xlu0 %6250
        %6252 = vrot.lane.b32.xlu0 %v6213, 32
        %v6253 = vpop.permute.xlu0 %6252
        %6254 = vrot.lane.b32.xlu0 %v6214, 32
        %v6255 = vpop.permute.xlu0 %6254
        %6256 = vrot.lane.b32.xlu0 %v6215, 32
        %v6257 = vpop.permute.xlu0 %6256
        %6258 = vrot.lane.b32.xlu0 %v6216, 32
        %v6259 = vpop.permute.xlu0 %6258
        %6260 = vrot.lane.b32.xlu0 %v6217, 32
        %v6261 = vpop.permute.xlu0 %6260
        %6262 = vrot.lane.b32.xlu0 %v6218, 32
        %v6263 = vpop.permute.xlu0 %6262
        %6264 = vrot.lane.b32.xlu0 %v6219, 32
        %v6265 = vpop.permute.xlu0 %6264
        %6266 = vrot.lane.b32.xlu0 %v6220, 32
        %v6267 = vpop.permute.xlu0 %6266
        %6268 = vrot.lane.b32.xlu0 %v6221, 32
        %v6269 = vpop.permute.xlu0 %6268
        %vm6286 = vcmask 261120
        %v6287 = vsel %vm6286, %v5694, %v6239
        %v6288 = vsel %vm6286, %v5695, %v6241
        %v6289 = vsel %vm6286, %v5696, %v6243
        %v6290 = vsel %vm6286, %v5697, %v6245
        %v6291 = vsel %vm6286, %v5698, %v6247
        %v6292 = vsel %vm6286, %v5699, %v6249
        %v6293 = vsel %vm6286, %v5700, %v6251
        %v6294 = vsel %vm6286, %v5701, %v6253
        %v6295 = vsel %vm6286, %v5702, %v6255
        %v6296 = vsel %vm6286, %v5703, %v6257
        %v6297 = vsel %vm6286, %v5704, %v6259
        %v6298 = vsel %vm6286, %v5705, %v6261
        %v6299 = vsel %vm6286, %v5706, %v6263
        %v6300 = vsel %vm6286, %v5707, %v6265
        %v6301 = vsel %vm6286, %v5708, %v6267
        %v6302 = vsel %vm6286, %v5709, %v6269
        %v6303 = vld [vmem:[%s4] sm:$0xff]
        %v6304 = vld [vmem:[%s4 + $0x8] sm:$0xff]
        %v6305 = vld [vmem:[%s4 + $0x10] sm:$0xff]
        %v6306 = vld [vmem:[%s4 + $0x18] sm:$0xff]
        %v6307 = vld [vmem:[%s4 + $0x20] sm:$0xff]
        %v6308 = vld [vmem:[%s4 + $0x28] sm:$0xff]
        %v6309 = vld [vmem:[%s4 + $0x30] sm:$0xff]
        %v6310 = vld [vmem:[%s4 + $0x38] sm:$0xff]
        %v6311 = vld [vmem:[%s4 + $0x40] sm:$0xff]
        %v6312 = vld [vmem:[%s4 + $0x48] sm:$0xff]
        %v6313 = vld [vmem:[%s4 + $0x50] sm:$0xff]
        %v6314 = vld [vmem:[%s4 + $0x58] sm:$0xff]
        %v6315 = vld [vmem:[%s4 + $0x60] sm:$0xff]
        %v6316 = vld [vmem:[%s4 + $0x68] sm:$0xff]
        %v6317 = vld [vmem:[%s4 + $0x70] sm:$0xff]
        %v6318 = vld [vmem:[%s4 + $0x78] sm:$0xff]
        %v6319 = vld [vmem:[%s4 + $0x80] sm:$0xff]
        %v6320 = vld [vmem:[%s4 + $0x88] sm:$0xff]
        %v6321 = vld [vmem:[%s4 + $0x90] sm:$0xff]
        %v6322 = vld [vmem:[%s4 + $0x98] sm:$0xff]
        %v6323 = vld [vmem:[%s4 + $0xa0] sm:$0xff]
        %v6324 = vld [vmem:[%s4 + $0xa8] sm:$0xff]
        %v6325 = vld [vmem:[%s4 + $0xb0] sm:$0xff]
        %v6326 = vld [vmem:[%s4 + $0xb8] sm:$0xff]
        %v6327 = vld [vmem:[%s4 + $0xc0] sm:$0xff]
        %v6328 = vld [vmem:[%s4 + $0xc8] sm:$0xff]
        %v6329 = vld [vmem:[%s4 + $0xd0] sm:$0xff]
        %v6330 = vld [vmem:[%s4 + $0xd8] sm:$0xff]
        %v6331 = vld [vmem:[%s4 + $0xe0] sm:$0xff]
        %v6332 = vld [vmem:[%s4 + $0xe8] sm:$0xff]
        %v6333 = vld [vmem:[%s4 + $0xf0] sm:$0xff]
        %v6334 = vld [vmem:[%s4 + $0xf8] sm:$0x3]
        %v6335 = vld [vmem:[%s5] sm:$0x1]
        %v6337 = vlaneseq
        %v6338 = vshrl.u32 %v6337, 7
        %v6339 = vsub.s32 0, %v6338
        %v6340 = vrot.slane %v6335, %v6339
        %vm6342 = vcmask 998400
        %v6344 = vsel %vm6342, %v6287, 0
        %v6347 = vsel %vm6342, %v6288, 0
        %v6350 = vsel %vm6342, %v6289, 0
        %v6353 = vsel %vm6342, %v6290, 0
        %v6356 = vsel %vm6342, %v6291, 0
        %v6359 = vsel %vm6342, %v6292, 0
        %v6362 = vsel %vm6342, %v6293, 0
        %v6365 = vsel %vm6342, %v6294, 0
        %v6368 = vsel %vm6342, %v6295, 0
        %v6371 = vsel %vm6342, %v6296, 0
        %v6374 = vsel %vm6342, %v6297, 0
        %v6377 = vsel %vm6342, %v6298, 0
        %v6380 = vsel %vm6342, %v6299, 0
        %v6383 = vsel %vm6342, %v6300, 0
        %v6386 = vsel %vm6342, %v6301, 0
        %v6389 = vsel %vm6342, %v6302, 0
        %v6392 = vsel %vm2179, %v6334, 0
        %6394 = vmatprep.subr.mxu0 0.0
        %6395 = vmatpush1.msra.mxu0 %v6303
        %6396 = vmatprep.subr.mxu0 0.0
        %6397 = vmatpush1.msra.mxu0 %v6304
        %6398 = vmatprep.subr.mxu0 0.0
        %6399 = vmatpush1.msra.mxu0 %v6305
        %6400 = vmatprep.subr.mxu0 0.0
        %6401 = vmatpush1.msra.mxu0 %v6306
        %6402 = vmatprep.subr.mxu0 0.0
        %6403 = vmatpush1.msra.mxu0 %v6307
        %6404 = vmatprep.subr.mxu0 0.0
        %6405 = vmatpush1.msra.mxu0 %v6308
        %6406 = vmatprep.subr.mxu0 0.0
        %6407 = vmatpush1.msra.mxu0 %v6309
        %6408 = vmatprep.subr.mxu0 0.0
        %6409 = vmatpush1.msra.mxu0 %v6310
        %6410 = vmatprep.subr.mxu0 0.0
        %6411 = vmatpush1.msra.mxu0 %v6311
        %6412 = vmatprep.subr.mxu0 0.0
        %6413 = vmatpush1.msra.mxu0 %v6312
        %6414 = vmatprep.subr.mxu0 0.0
        %6415 = vmatpush1.msra.mxu0 %v6313
        %6416 = vmatprep.subr.mxu0 0.0
        %6417 = vmatpush1.msra.mxu0 %v6314
        %6418 = vmatprep.subr.mxu0 0.0
        %6419 = vmatpush1.msra.mxu0 %v6315
        %6420 = vmatprep.subr.mxu0 0.0
        %6421 = vmatpush1.msra.mxu0 %v6316
        %6422 = vmatprep.subr.mxu0 0.0
        %6423 = vmatpush1.msra.mxu0 %v6317
        %6424 = vmatprep.subr.mxu0 0.0
        %6425 = vmatpush1.msra.mxu0 %v6318
        %6426 = vmatprep.subr.mxu0 0.0
        %6427 = vmatpush1.msra.mxu0 %v6319
        %6428 = vmatprep.subr.mxu0 0.0
        %6429 = vmatpush1.msra.mxu0 %v6320
        %6430 = vmatprep.subr.mxu0 0.0
        %6431 = vmatpush1.msra.mxu0 %v6321
        %6432 = vmatprep.subr.mxu0 0.0
        %6433 = vmatpush1.msra.mxu0 %v6322
        %6434 = vmatprep.subr.mxu0 0.0
        %6435 = vmatpush1.msra.mxu0 %v6323
        %6436 = vmatprep.subr.mxu0 0.0
        %6437 = vmatpush1.msra.mxu0 %v6324
        %6438 = vmatprep.subr.mxu0 0.0
        %6439 = vmatpush1.msra.mxu0 %v6325
        %6440 = vmatprep.subr.mxu0 0.0
        %6441 = vmatpush1.msra.mxu0 %v6326
        %6442 = vmatprep.subr.mxu0 0.0
        %6443 = vmatpush1.msra.mxu0 %v6327
        %6444 = vmatprep.subr.mxu0 0.0
        %6445 = vmatpush1.msra.mxu0 %v6328
        %6446 = vmatprep.subr.mxu0 0.0
        %6447 = vmatpush1.msra.mxu0 %v6329
        %6448 = vmatprep.subr.mxu0 0.0
        %6449 = vmatpush1.msra.mxu0 %v6330
        %6450 = vmatprep.subr.mxu0 0.0
        %6451 = vmatpush1.msra.mxu0 %v6331
        %6452 = vmatprep.subr.mxu0 0.0
        %6453 = vmatpush1.msra.mxu0 %v6332
        %6454 = vmatprep.subr.mxu0 0.0
        %6455 = vmatpush1.msra.mxu0 %v6333
        %6456 = vmatprep.subr.mxu0 0.0
        %6457 = vmatpush1.msra.mxu0 %v6392
        %6458 = vmatprep.mubr.f32.mxu0 %v6344
        %6459 = vmatmul.mubr.f32.gmra.mrb[0].mxu0 %v5643
        %v6460 = vpop.f32.mrb[0].mxu0
        %v6461 = vadd.f32 %v6340, %v6460
        %v6462 = vpop.f32.mrb[0].mxu0
        %6463 = vmatprep.mubr.f32.mxu0 %v6347
        %6464 = vmatmul.mubr.f32.gmra.mrb[0].mxu0 %v5644
        %v6465 = vpop.f32.mrb[0].mxu0
        %v6466 = vadd.f32 %v6340, %v6465
        %v6467 = vpop.f32.mrb[0].mxu0
        %6468 = vmatprep.mubr.f32.mxu0 %v6350
        %6469 = vmatmul.mubr.f32.gmra.mrb[0].mxu0 %v5645
        %v6470 = vpop.f32.mrb[0].mxu0
        %v6471 = vadd.f32 %v6340, %v6470
        %v6472 = vpop.f32.mrb[0].mxu0
        %6473 = vmatprep.mubr.f32.mxu0 %v6353
        %6474 = vmatmul.mubr.f32.gmra.mrb[0].mxu0 %v5646
        %v6475 = vpop.f32.mrb[0].mxu0
        %v6476 = vadd.f32 %v6340, %v6475
        %v6477 = vpop.f32.mrb[0].mxu0
        %6478 = vmatprep.mubr.f32.mxu0 %v6356
        %6479 = vmatmul.mubr.f32.gmra.mrb[0].mxu0 %v5647
        %v6480 = vpop.f32.mrb[0].mxu0
        %v6481 = vadd.f32 %v6340, %v6480
        %v6482 = vpop.f32.mrb[0].mxu0
        %6483 = vmatprep.mubr.f32.mxu0 %v6359
        %6484 = vmatmul.mubr.f32.gmra.mrb[0].mxu0 %v5648
        %v6485 = vpop.f32.mrb[0].mxu0
        %v6486 = vadd.f32 %v6340, %v6485
        %v6487 = vpop.f32.mrb[0].mxu0
        %6488 = vmatprep.mubr.f32.mxu0 %v6362
        %6489 = vmatmul.mubr.f32.gmra.mrb[0].mxu0 %v5649
        %v6490 = vpop.f32.mrb[0].mxu0
        %v6491 = vadd.f32 %v6340, %v6490
        %v6492 = vpop.f32.mrb[0].mxu0
        %6493 = vmatprep.mubr.f32.mxu0 %v6365
        %6494 = vmatmul.mubr.f32.gmra.mrb[0].mxu0 %v5650
        %v6495 = vpop.f32.mrb[0].mxu0
        %v6496 = vadd.f32 %v6340, %v6495
        %v6497 = vpop.f32.mrb[0].mxu0
        %6498 = vmatprep.mubr.f32.mxu0 %v6368
        %6499 = vmatmul.mubr.f32.gmra.mrb[0].mxu0 %v5651
        %v6500 = vpop.f32.mrb[0].mxu0
        %v6501 = vadd.f32 %v6340, %v6500
        %v6502 = vpop.f32.mrb[0].mxu0
        %6503 = vmatprep.mubr.f32.mxu0 %v6371
        %6504 = vmatmul.mubr.f32.gmra.mrb[0].mxu0 %v5652
        %v6505 = vpop.f32.mrb[0].mxu0
        %v6506 = vadd.f32 %v6340, %v6505
        %v6507 = vpop.f32.mrb[0].mxu0
        %6508 = vmatprep.mubr.f32.mxu0 %v6374
        %6509 = vmatmul.mubr.f32.gmra.mrb[0].mxu0 %v5653
        %v6510 = vpop.f32.mrb[0].mxu0
        %v6511 = vadd.f32 %v6340, %v6510
        %v6512 = vpop.f32.mrb[0].mxu0
        %6513 = vmatprep.mubr.f32.mxu0 %v6377
        %6514 = vmatmul.mubr.f32.gmra.mrb[0].mxu0 %v5654
        %v6515 = vpop.f32.mrb[0].mxu0
        %v6516 = vadd.f32 %v6340, %v6515
        %v6517 = vpop.f32.mrb[0].mxu0
        %6518 = vmatprep.mubr.f32.mxu0 %v6380
        %6519 = vmatmul.mubr.f32.gmra.mrb[0].mxu0 %v5655
        %v6520 = vpop.f32.mrb[0].mxu0
        %v6521 = vadd.f32 %v6340, %v6520
        %v6522 = vpop.f32.mrb[0].mxu0
        %6523 = vmatprep.mubr.f32.mxu0 %v6383
        %6524 = vmatmul.mubr.f32.gmra.mrb[0].mxu0 %v5656
        %v6525 = vpop.f32.mrb[0].mxu0
        %v6526 = vadd.f32 %v6340, %v6525
        %v6527 = vpop.f32.mrb[0].mxu0
        %6528 = vmatprep.mubr.f32.mxu0 %v6386
        %6529 = vmatmul.mubr.f32.gmra.mrb[0].mxu0 %v5657
        %v6530 = vpop.f32.mrb[0].mxu0
        %v6531 = vadd.f32 %v6340, %v6530
        %v6532 = vpop.f32.mrb[0].mxu0
        %6533 = vmatprep.mubr.f32.mxu0 %v6389
        %6534 = vmatmul.mubr.f32.gmra.mrb[0].mxu0 %v5658
        %v6535 = vpop.f32.mrb[0].mxu0
        %v6536 = vadd.f32 %v6340, %v6535
        %v6537 = vpop.f32.mrb[0].mxu0
        %6538 = vdwg.mxu0
        %v6541 = vrot.slane %v6461, 1
        %v6542 = vrot.slane %v6501, 1
        %v6545 = vmax.f32 %v6461, %v6541
        %v6546 = vmax.f32 %v6501, %v6542
        %v6549 = vrot.slane %v6466, 1
        %v6550 = vrot.slane %v6506, 1
        %v6553 = vmax.f32 %v6466, %v6549
        %v6554 = vmax.f32 %v6506, %v6550
        %v6555 = vmax.f32 %v6545, %v6553
        %v6556 = vmax.f32 %v6546, %v6554
        %v6557 = vmax.f32 %v6555, 0.0
        %v6558 = vmax.f32 %v6556, 0.0
        %v6561 = vrot.slane %v6471, 1
        %v6562 = vrot.slane %v6511, 1
        %v6565 = vmax.f32 %v6471, %v6561
        %v6566 = vmax.f32 %v6511, %v6562
        %v6569 = vrot.slane %v6476, 1
        %v6570 = vrot.slane %v6516, 1
        %v6573 = vmax.f32 %v6476, %v6569
        %v6574 = vmax.f32 %v6516, %v6570
        %v6575 = vmax.f32 %v6565, %v6573
        %v6576 = vmax.f32 %v6566, %v6574
        %v6577 = vmax.f32 %v6575, 0.0
        %v6578 = vmax.f32 %v6576, 0.0
        %v6581 = vrot.slane %v6481, 1
        %v6582 = vrot.slane %v6521, 1
        %v6585 = vmax.f32 %v6481, %v6581
        %v6586 = vmax.f32 %v6521, %v6582
        %v6589 = vrot.slane %v6486, 1
        %v6590 = vrot.slane %v6526, 1
        %v6593 = vmax.f32 %v6486, %v6589
        %v6594 = vmax.f32 %v6526, %v6590
        %v6595 = vmax.f32 %v6585, %v6593
        %v6596 = vmax.f32 %v6586, %v6594
        %v6597 = vmax.f32 %v6595, 0.0
        %v6598 = vmax.f32 %v6596, 0.0
        %v6601 = vrot.slane %v6491, 1
        %v6602 = vrot.slane %v6531, 1
        %v6605 = vmax.f32 %v6491, %v6601
        %v6606 = vmax.f32 %v6531, %v6602
        %v6609 = vrot.slane %v6496, 1
        %v6610 = vrot.slane %v6536, 1
        %v6613 = vmax.f32 %v6496, %v6609
        %v6614 = vmax.f32 %v6536, %v6610
        %v6615 = vmax.f32 %v6605, %v6613
        %v6616 = vmax.f32 %v6606, %v6614
        %v6617 = vmax.f32 %v6615, 0.0
        %v6618 = vmax.f32 %v6616, 0.0
        %v6621 = vrot.slane %v6558, 7
        %vm6622 = vcmask 1041409
        %v6623 = vsel %vm6622, %v6621, %v6557
        %v6625 = vrot.slane %v6557, 2
        %v6626 = vrot.slane %v6558, 1
        %v6627 = vsel %vm6622, %v6626, %v6625
        %6628 = vrot.lane.b32.xlu0 %v6627, 20
        %v6629 = vpop.permute.xlu0 %6628
        %v6631 = vrot.slane %v6557, 4
        %v6632 = vrot.slane %v6558, 3
        %v6633 = vsel %vm6622, %v6632, %v6631
        %6634 = vrot.lane.b32.xlu0 %v6633, 40
        %v6635 = vpop.permute.xlu0 %6634
        %v6637 = vrot.slane %v6557, 6
        %v6638 = vrot.slane %v6558, 5
        %v6639 = vsel %vm6622, %v6638, %v6637
        %6640 = vrot.lane.b32.xlu0 %v6639, 60
        %v6641 = vpop.permute.xlu0 %6640
        %v6645 = vrot.slane %v6578, 7
        %v6646 = vsel %vm6622, %v6645, %v6577
        %6647 = vrot.lane.b32.xlu0 %v6646, 80
        %v6648 = vpop.permute.xlu0 %6647
        %v6650 = vrot.slane %v6577, 2
        %v6651 = vrot.slane %v6578, 1
        %v6652 = vsel %vm6622, %v6651, %v6650
        %6653 = vrot.lane.b32.xlu0 %v6652, 100
        %v6654 = vpop.permute.xlu0 %6653
        %v6656 = vrot.slane %v6577, 4
        %v6657 = vrot.slane %v6578, 3
        %v6658 = vsel %vm6622, %v6657, %v6656
        %6659 = vrot.lane.b32.xlu0 %v6658, 120
        %v6660 = vpop.permute.xlu0 %6659
        %v6662 = vrot.slane %v6577, 6
        %v6663 = vrot.slane %v6578, 5
        %v6664 = vsel %vm6622, %v6663, %v6662
        %6665 = vrot.lane.b32.xlu0 %v6664, 12
        %v6666 = vpop.permute.xlu0 %6665
        %v6670 = vrot.slane %v6598, 7
        %v6671 = vsel %vm6622, %v6670, %v6597
        %6672 = vrot.lane.b32.xlu0 %v6671, 32
        %v6673 = vpop.permute.xlu0 %6672
        %v6675 = vrot.slane %v6597, 2
        %v6676 = vrot.slane %v6598, 1
        %v6677 = vsel %vm6622, %v6676, %v6675
        %6678 = vrot.lane.b32.xlu0 %v6677, 52
        %v6679 = vpop.permute.xlu0 %6678
        %v6681 = vrot.slane %v6597, 4
        %v6682 = vrot.slane %v6598, 3
        %v6683 = vsel %vm6622, %v6682, %v6681
        %6684 = vrot.lane.b32.xlu0 %v6683, 72
        %v6685 = vpop.permute.xlu0 %6684
        %v6687 = vrot.slane %v6597, 6
        %v6688 = vrot.slane %v6598, 5
        %v6689 = vsel %vm6622, %v6688, %v6687
        %6690 = vrot.lane.b32.xlu0 %v6689, 92
        %v6691 = vpop.permute.xlu0 %6690
        %v6695 = vrot.slane %v6618, 7
        %v6696 = vsel %vm6622, %v6695, %v6617
        %6697 = vrot.lane.b32.xlu0 %v6696, 112
        %v6698 = vpop.permute.xlu0 %6697
        %v6700 = vrot.slane %v6617, 2
        %v6701 = vrot.slane %v6618, 1
        %v6702 = vsel %vm6622, %v6701, %v6700
        %6703 = vrot.lane.b32.xlu0 %v6702, 4
        %v6704 = vpop.permute.xlu0 %6703
        %v6706 = vrot.slane %v6617, 4
        %v6707 = vrot.slane %v6618, 3
        %v6708 = vsel %vm6622, %v6707, %v6706
        %6709 = vrot.lane.b32.xlu0 %v6708, 24
        %v6710 = vpop.permute.xlu0 %6709
        %v6712 = vrot.slane %v6617, 6
        %v6713 = vrot.slane %v6618, 5
        %v6714 = vsel %vm6622, %v6713, %v6712
        %6715 = vrot.lane.b32.xlu0 %v6714, 44
        %v6716 = vpop.permute.xlu0 %6715
        %v6718 = vsel %vm5473, %v6623, %v6629
        %v6719 = vsel %vm5507, %v6718, %v6635
        %v6720 = vsel %vm5540, %v6719, %v6641
        %v6721 = vsel %vm5574, %v6720, %v6648
        %v6722 = vsel %vm5608, %v6721, %v6654
        %v6723 = vsel %vm5642, %v6722, %v6660
        %v6724 = vsel %vm5676, %v6660, %v6666
        %v6725 = vsel %vm6286, %v6724, %v6673
        %vm6726 = vcmask 424960
        %v6727 = vsel %vm6726, %v6725, %v6679
        %vm6728 = vcmask 588800
        %v6729 = vsel %vm6728, %v6727, %v6685
        %vm6730 = vcmask 752640
        %v6731 = vsel %vm6730, %v6729, %v6691
        %vm6732 = vcmask 916480
        %v6733 = vsel %vm6732, %v6731, %v6698
        %vm6734 = vcmask 31744
        %v6735 = vsel %vm6734, %v6698, %v6704
        %vm6736 = vcmask 195584
        %v6737 = vsel %vm6736, %v6735, %v6710
        %vm6738 = vcmask 359424
        %v6739 = vsel %vm6738, %v6737, %v6716
        %v6740 = vld [vmem:[%s6] sm:$0xff]
        %v6741 = vld [vmem:[%s6 + $0x8] sm:$0xff]
        %v6742 = vld [vmem:[%s6 + $0x10] sm:$0xff]
        %v6743 = vld [vmem:[%s6 + $0x18] sm:$0xff]
        %v6744 = vld [vmem:[%s6 + $0x20] sm:$0xff]
        %v6745 = vld [vmem:[%s6 + $0x28] sm:$0xff]
        %v6746 = vld [vmem:[%s6 + $0x30] sm:$0xff]
        %v6747 = vld [vmem:[%s6 + $0x38] sm:$0xff]
        %v6748 = vld [vmem:[%s6 + $0x40] sm:$0xff]
        %v6749 = vld [vmem:[%s6 + $0x48] sm:$0xff]
        %v6750 = vld [vmem:[%s6 + $0x50] sm:$0xff]
        %v6751 = vld [vmem:[%s6 + $0x58] sm:$0xff]
        %v6752 = vld [vmem:[%s6 + $0x60] sm:$0xff]
        %v6753 = vld [vmem:[%s6 + $0x68] sm:$0xff]
        %v6754 = vld [vmem:[%s6 + $0x70] sm:$0xff]
        %v6755 = vld [vmem:[%s6 + $0x78] sm:$0xff]
        %v6756 = vld [vmem:[%s6 + $0x80] sm:$0xff]
        %v6757 = vld [vmem:[%s6 + $0x88] sm:$0xff]
        %v6758 = vld [vmem:[%s6 + $0x90] sm:$0xff]
        %v6759 = vld [vmem:[%s6 + $0x98] sm:$0xff]
        %v6760 = vld [vmem:[%s6 + $0xa0] sm:$0xff]
        %v6761 = vld [vmem:[%s6 + $0xa8] sm:$0xff]
        %v6762 = vld [vmem:[%s6 + $0xb0] sm:$0xff]
        %v6763 = vld [vmem:[%s6 + $0xb8] sm:$0xff]
        %v6764 = vld [vmem:[%s6 + $0xc0] sm:$0xff]
        %v6765 = vld [vmem:[%s6 + $0xc8] sm:$0xff]
        %v6766 = vld [vmem:[%s6 + $0xd0] sm:$0xff]
        %v6767 = vld [vmem:[%s6 + $0xd8] sm:$0xff]
        %v6768 = vld [vmem:[%s6 + $0xe0] sm:$0xff]
        %v6769 = vld [vmem:[%s6 + $0xe8] sm:$0xff]
        %v6770 = vld [vmem:[%s6 + $0xf0] sm:$0xff]
        %v6771 = vld [vmem:[%s6 + $0xf8] sm:$0xff]
        %v6772 = vld [vmem:[%s6 + $0x100] sm:$0xff]
        %v6773 = vld [vmem:[%s6 + $0x108] sm:$0xff]
        %v6774 = vld [vmem:[%s6 + $0x110] sm:$0xff]
        %v6775 = vld [vmem:[%s6 + $0x118] sm:$0xff]
        %v6776 = vld [vmem:[%s6 + $0x120] sm:$0xff]
        %v6777 = vld [vmem:[%s6 + $0x128] sm:$0xff]
        %v6778 = vld [vmem:[%s6 + $0x130] sm:$0xff]
        %v6779 = vld [vmem:[%s6 + $0x138] sm:$0xff]
        %v6780 = vld [vmem:[%s7] sm:$0x1]
        %v6782 = vlaneseq
        %v6783 = vshrl.u32 %v6782, 7
        %v6784 = vsub.s32 0, %v6783
        %v6785 = vrot.slane %v6780, %v6784
        %vm6787 = vcmask 523264
        %v6789 = vsel %vm6787, %v6739, 0
        %6791 = vmatprep.subr.mxu0 0.0
        %6792 = vmatpush1.msra.mxu0 %v6740
        %6793 = vmatprep.subr.mxu0 0.0
        %6794 = vmatpush1.msra.mxu0 %v6741
        %6795 = vmatprep.subr.mxu0 0.0
        %6796 = vmatpush1.msra.mxu0 %v6742
        %6797 = vmatprep.subr.mxu0 0.0
        %6798 = vmatpush1.msra.mxu0 %v6743
        %6799 = vmatprep.subr.mxu0 0.0
        %6800 = vmatpush1.msra.mxu0 %v6744
        %6801 = vmatprep.subr.mxu0 0.0
        %6802 = vmatpush1.msra.mxu0 %v6745
        %6803 = vmatprep.subr.mxu0 0.0
        %6804 = vmatpush1.msra.mxu0 %v6746
        %6805 = vmatprep.subr.mxu0 0.0
        %6806 = vmatpush1.msra.mxu0 %v6747
        %6807 = vmatprep.subr.mxu0 0.0
        %6808 = vmatpush1.msra.mxu0 %v6748
        %6809 = vmatprep.subr.mxu0 0.0
        %6810 = vmatpush1.msra.mxu0 %v6749
        %6811 = vmatprep.subr.mxu0 0.0
        %6812 = vmatpush1.msra.mxu0 %v6750
        %6813 = vmatprep.subr.mxu0 0.0
        %6814 = vmatpush1.msra.mxu0 %v6751
        %6815 = vmatprep.subr.mxu0 0.0
        %6816 = vmatpush1.msra.mxu0 %v6752
        %6817 = vmatprep.subr.mxu0 0.0
        %6818 = vmatpush1.msra.mxu0 %v6753
        %6819 = vmatprep.subr.mxu0 0.0
        %6820 = vmatpush1.msra.mxu0 %v6754
        %6821 = vmatprep.subr.mxu0 0.0
        %6822 = vmatpush1.msra.mxu0 %v6755
        %6823 = vmatprep.subr.mxu0 0.0
        %6824 = vmatpush1.msra.mxu0 %v6756
        %6825 = vmatprep.subr.mxu0 0.0
        %6826 = vmatpush1.msra.mxu0 %v6757
        %6827 = vmatprep.subr.mxu0 0.0
        %6828 = vmatpush1.msra.mxu0 %v6758
        %6829 = vmatprep.subr.mxu0 0.0
        %6830 = vmatpush1.msra.mxu0 %v6759
        %6831 = vmatprep.subr.mxu0 0.0
        %6832 = vmatpush1.msra.mxu0 %v6760
        %6833 = vmatprep.subr.mxu0 0.0
        %6834 = vmatpush1.msra.mxu0 %v6761
        %6835 = vmatprep.subr.mxu0 0.0
        %6836 = vmatpush1.msra.mxu0 %v6762
        %6837 = vmatprep.subr.mxu0 0.0
        %6838 = vmatpush1.msra.mxu0 %v6763
        %6839 = vmatprep.subr.mxu0 0.0
        %6840 = vmatpush1.msra.mxu0 %v6764
        %6841 = vmatprep.subr.mxu0 0.0
        %6842 = vmatpush1.msra.mxu0 %v6765
        %6843 = vmatprep.subr.mxu0 0.0
        %6844 = vmatpush1.msra.mxu0 %v6766
        %6845 = vmatprep.subr.mxu0 0.0
        %6846 = vmatpush1.msra.mxu0 %v6767
        %6847 = vmatprep.subr.mxu0 0.0
        %6848 = vmatpush1.msra.mxu0 %v6768
        %6849 = vmatprep.subr.mxu0 0.0
        %6850 = vmatpush1.msra.mxu0 %v6769
        %6851 = vmatprep.subr.mxu0 0.0
        %6852 = vmatpush1.msra.mxu0 %v6770
        %6853 = vmatprep.subr.mxu0 0.0
        %6854 = vmatpush1.msra.mxu0 %v6771
        %6855 = vmatprep.mubr.f32.mxu0 %v6733
        %6856 = vmatmul.mubr.f32.gmra.mrb[0].mxu0 %v6723
        %v6857 = vpop.f32.mrb[0].mxu0
        %v6858 = vadd.f32 %v6785, %v6857
        %v6859 = vpop.f32.mrb[0].mxu0
        %6860 = vdwg.mxu0
        %6861 = vmatprep.subr.mxu0 0.0
        %6862 = vmatpush1.msra.mxu0 %v6772
        %6863 = vmatprep.subr.mxu0 0.0
        %6864 = vmatpush1.msra.mxu0 %v6773
        %6865 = vmatprep.subr.mxu0 0.0
        %6866 = vmatpush1.msra.mxu0 %v6774
        %6867 = vmatprep.subr.mxu0 0.0
        %6868 = vmatpush1.msra.mxu0 %v6775
        %6869 = vmatprep.subr.mxu0 0.0
        %6870 = vmatpush1.msra.mxu0 %v6776
        %6871 = vmatprep.subr.mxu0 0.0
        %6872 = vmatpush1.msra.mxu0 %v6777
        %6873 = vmatprep.subr.mxu0 0.0
        %6874 = vmatpush1.msra.mxu0 %v6778
        %6875 = vmatprep.subr.mxu0 0.0
        %6876 = vmatpush1.msra.mxu0 %v6779
        %6877 = vmatprep.subr.mxu0 0.0
        %6878 = vmatpush1.msra.mxu0 0.0
        %6879 = vmatprep.subr.mxu0 0.0
        %6880 = vmatpush1.msra.mxu0 0.0
        %6881 = vmatprep.subr.mxu0 0.0
        %6882 = vmatpush1.msra.mxu0 0.0
        %6883 = vmatprep.subr.mxu0 0.0
        %6884 = vmatpush1.msra.mxu0 0.0
        %6885 = vmatprep.subr.mxu0 0.0
        %6886 = vmatpush1.msra.mxu0 0.0
        %6887 = vmatprep.subr.mxu0 0.0
        %6888 = vmatpush1.msra.mxu0 0.0
        %6889 = vmatprep.subr.mxu0 0.0
        %6890 = vmatpush1.msra.mxu0 0.0
        %6891 = vmatprep.subr.mxu0 0.0
        %6892 = vmatpush1.msra.mxu0 0.0
        %6893 = vmatprep.subr.mxu0 0.0
        %6894 = vmatpush1.msra.mxu0 0.0
        %6895 = vmatprep.subr.mxu0 0.0
        %6896 = vmatpush1.msra.mxu0 0.0
        %6897 = vmatprep.subr.mxu0 0.0
        %6898 = vmatpush1.msra.mxu0 0.0
        %6899 = vmatprep.subr.mxu0 0.0
        %6900 = vmatpush1.msra.mxu0 0.0
        %6901 = vmatprep.subr.mxu0 0.0
        %6902 = vmatpush1.msra.mxu0 0.0
        %6903 = vmatprep.subr.mxu0 0.0
        %6904 = vmatpush1.msra.mxu0 0.0
        %6905 = vmatprep.subr.mxu0 0.0
        %6906 = vmatpush1.msra.mxu0 0.0
        %6907 = vmatprep.subr.mxu0 0.0
        %6908 = vmatpush1.msra.mxu0 0.0
        %6909 = vmatprep.subr.mxu0 0.0
        %6910 = vmatpush1.msra.mxu0 0.0
        %6911 = vmatprep.subr.mxu0 0.0
        %6912 = vmatpush1.msra.mxu0 0.0
        %6913 = vmatprep.subr.mxu0 0.0
        %6914 = vmatpush1.msra.mxu0 0.0
        %6915 = vmatprep.subr.mxu0 0.0
        %6916 = vmatpush1.msra.mxu0 0.0
        %6917 = vmatprep.subr.mxu0 0.0
        %6918 = vmatpush1.msra.mxu0 0.0
        %6919 = vmatprep.subr.mxu0 0.0
        %6920 = vmatpush1.msra.mxu0 0.0
        %6921 = vmatprep.subr.mxu0 0.0
        %6922 = vmatpush1.msra.mxu0 0.0
        %6923 = vmatprep.subr.mxu0 0.0
        %6924 = vmatpush1.msra.mxu0 0.0
        %6925 = vmatprep.mubr.f32.mxu0 0.0
        %6926 = vmatmul.mubr.f32.gmra.mrb[0].mxu0 %v6789
        %v6927 = vpop.f32.mrb[0].mxu0
        %v6928 = vadd.f32 %v6858, %v6927
        %v6929 = vpop.f32.mrb[0].mxu0
        %6930 = vdwg.mxu0
        %v6931 = vmax.f32 %v6928, 0.0
        %v6932 = vld [vmem:[%s8] sm:$0xff]
        %v6933 = vld [vmem:[%s8 + $0x8] sm:$0xff]
        %v6934 = vld [vmem:[%s8 + $0x10] sm:$0xff]
        %v6935 = vld [vmem:[%s8 + $0x18] sm:$0xff]
        %v6936 = vld [vmem:[%s8 + $0x20] sm:$0xff]
        %v6937 = vld [vmem:[%s8 + $0x28] sm:$0xff]
        %v6938 = vld [vmem:[%s8 + $0x30] sm:$0x3]
        %v6939 = vld [vmem:[%s9] sm:$0x1]
        %v6941 = vlaneseq
        %v6942 = vshrl.u32 %v6941, 7
        %v6943 = vsub.s32 0, %v6942
        %v6944 = vrot.slane %v6939, %v6943
        %v6947 = vsel %vm2070, %v6931, 0
        %v6950 = vsel %vm2179, %v6938, 0
        %6952 = vmatprep.subr.mxu0 0.0
        %6953 = vmatpush1.msra.mxu0 %v6932
        %6954 = vmatprep.subr.mxu0 0.0
        %6955 = vmatpush1.msra.mxu0 %v6933
        %6956 = vmatprep.subr.mxu0 0.0
        %6957 = vmatpush1.msra.mxu0 %v6934
        %6958 = vmatprep.subr.mxu0 0.0
        %6959 = vmatpush1.msra.mxu0 %v6935
        %6960 = vmatprep.subr.mxu0 0.0
        %6961 = vmatpush1.msra.mxu0 %v6936
        %6962 = vmatprep.subr.mxu0 0.0
        %6963 = vmatpush1.msra.mxu0 %v6937
        %6964 = vmatprep.subr.mxu0 0.0
        %6965 = vmatpush1.msra.mxu0 %v6950
        %6966 = vmatprep.subr.mxu0 0.0
        %6967 = vmatpush1.msra.mxu0 0.0
        %6968 = vmatprep.subr.mxu0 0.0
        %6969 = vmatpush1.msra.mxu0 0.0
        %6970 = vmatprep.subr.mxu0 0.0
        %6971 = vmatpush1.msra.mxu0 0.0
        %6972 = vmatprep.subr.mxu0 0.0
        %6973 = vmatpush1.msra.mxu0 0.0
        %6974 = vmatprep.subr.mxu0 0.0
        %6975 = vmatpush1.msra.mxu0 0.0
        %6976 = vmatprep.subr.mxu0 0.0
        %6977 = vmatpush1.msra.mxu0 0.0
        %6978 = vmatprep.subr.mxu0 0.0
        %6979 = vmatpush1.msra.mxu0 0.0
        %6980 = vmatprep.subr.mxu0 0.0
        %6981 = vmatpush1.msra.mxu0 0.0
        %6982 = vmatprep.subr.mxu0 0.0
        %6983 = vmatpush1.msra.mxu0 0.0
        %6984 = vmatprep.subr.mxu0 0.0
        %6985 = vmatpush1.msra.mxu0 0.0
        %6986 = vmatprep.subr.mxu0 0.0
        %6987 = vmatpush1.msra.mxu0 0.0
        %6988 = vmatprep.subr.mxu0 0.0
        %6989 = vmatpush1.msra.mxu0 0.0
        %6990 = vmatprep.subr.mxu0 0.0
        %6991 = vmatpush1.msra.mxu0 0.0
        %6992 = vmatprep.subr.mxu0 0.0
        %6993 = vmatpush1.msra.mxu0 0.0
        %6994 = vmatprep.subr.mxu0 0.0
        %6995 = vmatpush1.msra.mxu0 0.0
        %6996 = vmatprep.subr.mxu0 0.0
        %6997 = vmatpush1.msra.mxu0 0.0
        %6998 = vmatprep.subr.mxu0 0.0
        %6999 = vmatpush1.msra.mxu0 0.0
        %7000 = vmatprep.subr.mxu0 0.0
        %7001 = vmatpush1.msra.mxu0 0.0
        %7002 = vmatprep.subr.mxu0 0.0
        %7003 = vmatpush1.msra.mxu0 0.0
        %7004 = vmatprep.subr.mxu0 0.0
        %7005 = vmatpush1.msra.mxu0 0.0
        %7006 = vmatprep.subr.mxu0 0.0
        %7007 = vmatpush1.msra.mxu0 0.0
        %7008 = vmatprep.subr.mxu0 0.0
        %7009 = vmatpush1.msra.mxu0 0.0
        %7010 = vmatprep.subr.mxu0 0.0
        %7011 = vmatpush1.msra.mxu0 0.0
        %7012 = vmatprep.subr.mxu0 0.0
        %7013 = vmatpush1.msra.mxu0 0.0
        %7014 = vmatprep.subr.mxu0 0.0
        %7015 = vmatpush1.msra.mxu0 0.0
        %7016 = vmatprep.mubr.f32.mxu0 0.0
        %7017 = vmatmul.mubr.f32.gmra.mrb[0].mxu0 %v6947
        %v7018 = vpop.f32.mrb[0].mxu0
        %v7019 = vadd.f32 %v6944, %v7018
        %v7020 = vpop.f32.mrb[0].mxu0
        %7021 = vdwg.mxu0
        %vm7022 = vcmask 74752
        %v7023 = vsel %vm7022, %v7019, -inf
        %7024 = vmax.xlane.f32.xlu0 %v7023
        %v7025 = vpop.xlane.xlu0 %7024
        %v7026 = vsub.f32 %v7019, %v7025
        %v7027 = vmul.f32 %v7026, 1.442695
        %v7028 = vpow.pop %v7027
        %v7029 = vsel %vm7022, %v7028, 0.0
        %7030 = vadd.xlane.f32.xlu0 %v7029
        %v7031 = vpop.xlane.xlu0 %7030
        %v7032 = vlog2.pop %v7031
        %v7033 = vmul.f32 %v7032, 0.6931472
        %v7034 = vsub.f32 %v7026, %v7033
        %7035 = vst.msk [vmem:[%s1591] sm:$0x3] %vm7022, %v7034
        %s7036 = sand.u32 %s252, 1
        %s7037 = scalar_lea.sflag [#allocation5], %s7036
        %s7038 = sand.u32 %s252, 1
        %s7039 = smul.addr %s7038, 2
        %s7040 = scalar_lea.vmem [#allocation4], %s7039
        // Predicated region
        $region137: #{forward.1} parent=127 // pred_check
          %p7041 = pneg %p262
        $region138: #{forward.1} parent=127 // pred_check_branch
          %7043 = sbr.rel (%p7041) target = $region140
        $region139: #{forward.1} parent=127 // pred_region
          %s7045 = ssub.s32 32, 32
          %7046 = vsyncadd %s7037, %s7045
          %s7047 = smul.addr %s24, 32
          %s7048 = scalar_lea.hbm %s10, %s7047
          %s7050 = sshll.u32 %s7040, 4
          %s7051 = int_to_ptr.vmem [resolvable:$true] %s7050
          %7053 = dma.vmem_to_hbm [thread:$0]  %s7051, 32, %s7048, %s7037
        $region140: #{forward.1} parent=127 // pred_fallthru
          _
      $region128: #{forward.1} parent=5 // pred_fallthru
        _
      %p7054 = scmp.le.s32.totalorder 2, %s19
      // Predicated region
      $region141: #{forward.1} parent=5 // pred_check
        %p7055 = pneg %p7054
      $region142: #{forward.1} parent=5 // pred_check_branch
        %7057 = sbr.rel (%p7055) target = $region144
      $region143: #{forward.1} parent=5 // pred_region
        %s7058 = ssub.s32 %s19, 2
        // Predicated region
        $region145: #{forward.1} parent=143 // pred_check
          %p7059 = pneg %p268
        $region146: #{forward.1} parent=143 // pred_check_branch
          %7061 = sbr.rel (%p7059) target = $region148
        $region147: #{forward.1} parent=143 // pred_region
          %s7062 = sand.u32 %s253, 1
          %s7063 = scalar_lea.sflag [#allocation5], %s7062
          %s7064 = sand.u32 %s253, 1
          %s7065 = smul.addr %s7064, 2
          %s7066 = scalar_lea.vmem [#allocation4], %s7065
          %7067 = dma.done %s7063, 32
        $region148: #{forward.1} parent=143 // pred_fallthru
          _
      $region144: #{forward.1} parent=5 // pred_fallthru
        _
    $region6: #{forward.1} parent=1 // loop_footer
      %s23 = sadd.s32 1, %s19
    $region7: #{forward.1} parent=1 // loop_footer_branch
      %18 = sbr.rel target = $region3
    $region8: #{forward.1} parent=1 // loop_exit
      _
    %7068 = vsyncpa [#allocation5], 1
    %s7069 = scalar_lea.sflag [#allocation5], 1
    %7070 = vsyncpa %s7069, 1

</llo_original>
